<compile_context>
chip_gen: v7x
topology: tpu7x:2x2x1
jax: 0.10.0
libtpu: 0.0.40
codegen_flags: <defaults>
</compile_context>

<pallas_src>
import functools
import math

import jax
import jax.numpy as jnp
from jax.experimental import pallas as pl
from jax.experimental.pallas import tpu as pltpu

NEG_SLOPE = 0.01  # torch.nn.functional.leaky_relu default negative_slope

_VMEM = pl.BlockSpec(memory_space=pltpu.MemorySpace.VMEM)
_SMEM = pl.BlockSpec(memory_space=pltpu.MemorySpace.SMEM)


# --------------------------------------------------------------- VPU conv ----
def _rq_conv_kernel(x_ref, w_ref, b_ref, o_ref, *,
                    c_out, c_in, kh_sz, kw_sz, h_out, w_out):
    """3x3 stride-1 conv + leaky_relu as shifted multiply-accumulate on the VPU.

    x_ref : (N, c_in, H+2, W+2) f32 VMEM   (already zero padded)
    w_ref : (c_out*c_in*kh*kw,) f32 SMEM   (flattened OIHW)
    b_ref : (c_out,)            f32 SMEM
    o_ref : (c_out, N, H, W)    f32 VMEM
    """
    n = x_ref.shape[0]
    accs = [jnp.zeros((n, h_out, w_out), jnp.float32) for _ in range(c_out)]
    for ci in range(c_in):
        plane = x_ref[:, ci, :, :]                     # one load per input plane
        for kh in range(kh_sz):
            for kw in range(kw_sz):
                win = plane[:, kh:kh + h_out, kw:kw + w_out]   # shared across co
                for co in range(c_out):
                    idx = ((co * c_in + ci) * kh_sz + kh) * kw_sz + kw
                    accs[co] = accs[co] + w_ref[idx] * win
    for co in range(c_out):
        acc = accs[co] + b_ref[co]
        o_ref[co] = jnp.maximum(acc, NEG_SLOPE * acc)  # leaky_relu


def rq_conv_lrelu(x_nchw, w_oihw, b):
    """recording_queue_encoder: Conv2d(k=3, stride=1, padding=1) + leaky_relu."""
    n, c_in, h, w = x_nchw.shape
    c_out, c_in2, kh_sz, kw_sz = w_oihw.shape
    assert c_in == c_in2 and kh_sz == 3 and kw_sz == 3
    xp = jnp.pad(x_nchw.astype(jnp.float32), ((0, 0), (0, 0), (1, 1), (1, 1)))
    kern = functools.partial(_rq_conv_kernel, c_out=c_out, c_in=c_in,
                             kh_sz=kh_sz, kw_sz=kw_sz, h_out=h, w_out=w)
    return pl.pallas_call(
        kern,
        out_shape=jax.ShapeDtypeStruct((c_out, n, h, w), jnp.float32),
        in_specs=[_VMEM, _SMEM, _SMEM],
        out_specs=_VMEM,
    )(xp, w_oihw.reshape(-1).astype(jnp.float32), b.astype(jnp.float32))


# -------------------------------------------- MXU conv (in-kernel im2col) ----
def _conv_taps_kernel(x_ref, w_ref, b_ref, o_ref, *, kh_sz, kw_sz, h_out, w_out):
    """Valid stride-1 NHWC conv + bias + leaky_relu, one MXU matmul per tap.

    x_ref : (N, H, W, C_in)            f32  VMEM
    w_ref : (kh*kw, C_in, C_out)       bf16 VMEM
    b_ref : (1, C_out)                 f32  VMEM
    o_ref : (N*h_out*w_out, C_out)     f32  VMEM   (w_out is a multiple of 8)
    """
    n, _, _, c_in = x_ref.shape
    c_out = w_ref.shape[2]
    m = n * h_out * w_out
    acc = jnp.zeros((m, c_out), jnp.float32)
    for kh in range(kh_sz):
        for kw in range(kw_sz):
            tap = x_ref[:, kh:kh + h_out, kw:kw + w_out, :]
            # layout-preserving collapse (w_out % 8 == 0), then bf16 for the MXU
            tap = tap.reshape(m, c_in).astype(jnp.bfloat16)
            acc = acc + jnp.dot(tap, w_ref[kh * kw_sz + kw],
                                preferred_element_type=jnp.float32)
    acc = acc + b_ref[...]
    o_ref[...] = jnp.maximum(acc, NEG_SLOPE * acc)      # leaky_relu


def conv_taps_lrelu(x_nhwc, w_taps, b_1xc, *, kh_sz, kw_sz, h_out, w_out):
    assert w_out % 8 == 0, "padded output width must keep the reshape a layout no-op"
    n = x_nhwc.shape[0]
    c_out = w_taps.shape[2]
    kern = functools.partial(_conv_taps_kernel, kh_sz=kh_sz, kw_sz=kw_sz,
                             h_out=h_out, w_out=w_out)
    return pl.pallas_call(
        kern,
        out_shape=jax.ShapeDtypeStruct((n * h_out * w_out, c_out), jnp.float32),
        in_specs=[_VMEM, _VMEM, _VMEM],
        out_specs=_VMEM,
    )(x_nhwc.astype(jnp.float32), w_taps, b_1xc)


# ------------------- fused conv2 + conv3 + signal MLP + policy head ----------
def _conv23_tail_kernel(x2_ref, w2_ref, b2_ref, w3_ref, b3_ref,
                        art_ref, s1w_ref, s1b_ref, s2w_ref, s2b_ref,
                        wimg_ref, wsig_ref, pb_ref, vp_ref,
                        mean_ref, var_ref, buf_ref):
    """conv2 (s2d 2x2 taps) -> VMEM scratch -> conv3 (3x3 taps) -> MLP + head.

    x2_ref  : (N, 8, 9, 128)  f32  VMEM   (space-to-depth(2) conv2 input, W padded)
    w2_ref  : (4, 128, 64)    bf16        w3_ref : (9, 64, 64) bf16
    b*_ref  : (1, 64)         f32
    art_ref : (N, S)          f32         s*_ / wimg_ / wsig_ / pb_ / vp_ : head params
    buf_ref : (N, 6, 16, 64)  f32  VMEM scratch (conv2 output + zero pad columns)
    """
    n = x2_ref.shape[0]

    # ---- conv2: 4x4 / stride 2 folded into 2x2 taps on the s2d(2) input -----
    m2 = n * 6 * 8
    acc2 = jnp.zeros((m2, 64), jnp.float32)
    for kh in range(2):
        for kw in range(2):
            tap = x2_ref[:, kh:kh + 6, kw:kw + 8, :].reshape(m2, 128)
            acc2 = acc2 + jnp.dot(tap.astype(jnp.bfloat16), w2_ref[kh * 2 + kw],
                                  preferred_element_type=jnp.float32)
    acc2 = acc2 + b2_ref[...]
    acc2 = jnp.maximum(acc2, NEG_SLOPE * acc2)

    # Stage into a width-16 scratch: cols 0..7 hold conv2's output (cols 6,7
    # are dead pad lanes), cols 8..15 are the zero pad that conv3's rightmost
    # taps read.  Both stores are full 8-sublane-tile aligned static slices.
    buf_ref[:, :, 8:, :] = jnp.zeros((n, 6, 8, 64), jnp.float32)
    buf_ref[:, :, :8, :] = acc2.reshape(n, 6, 8, 64)

    # ---- conv3: 3x3 / stride 1 ----------------------------------------------
    m3 = n * 4 * 8
    acc3 = jnp.zeros((m3, 64), jnp.float32)
    for kh in range(3):
        for kw in range(3):
            tap = buf_ref[:, kh:kh + 4, kw:kw + 8, :].reshape(m3, 64)
            acc3 = acc3 + jnp.dot(tap.astype(jnp.bfloat16), w3_ref[kh * 3 + kw],
                                  preferred_element_type=jnp.float32)
    acc3 = acc3 + b3_ref[...]
    acc3 = jnp.maximum(acc3, NEG_SLOPE * acc3)
    feat = acc3.reshape(n, 4, 8, 64)      # (n, h, w_pad, c); w >= 4 is dead pad

    # ---- signal_encoder_layers: Linear + leaky_relu, twice (stays in VMEM) ---
    sig = jnp.dot(art_ref[...], s1w_ref[...],
                  preferred_element_type=jnp.float32) + s1b_ref[...]
    sig = jnp.maximum(sig, NEG_SLOPE * sig)
    sig = jnp.dot(sig, s2w_ref[...],
                  preferred_element_type=jnp.float32) + s2b_ref[...]
    sig = jnp.maximum(sig, NEG_SLOPE * sig)

    # ---- policy_to_actions_layer on concat([flatten(img), sig]) --------------
    # == split matmuls; torch's channel-major flatten is folded into wimg's
    # (position, channel, action) layout, so no concat / transpose / flatten.
    mean = jnp.dot(sig, wsig_ref[...], preferred_element_type=jnp.float32)
    mean = mean + pb_ref[...]
    for h in range(4):
        for w in range(4):
            mean = mean + jnp.dot(feat[:, h, w, :], wimg_ref[h * 4 + w],
                                  preferred_element_type=jnp.float32)
    mean_ref[...] = mean

    # pfrl GaussianHeadWithStateIndependentCovariance: var = exp(2 * var_param)
    var_ref[...] = jnp.broadcast_to(jnp.exp(2.0 * vp_ref[...]), var_ref.shape)


def conv23_tail(x2_nhwc, articulation, prep):
    n = x2_nhwc.shape[0]
    a_sz = prep["p_b"].shape[1]
    return pl.pallas_call(
        _conv23_tail_kernel,
        out_shape=(jax.ShapeDtypeStruct((n, a_sz), jnp.float32),
                   jax.ShapeDtypeStruct((n, a_sz), jnp.float32)),
        in_specs=[_VMEM] * 14,
        out_specs=(_VMEM, _VMEM),
        scratch_shapes=[pltpu.VMEM((n, 6, 16, 64), jnp.float32)],
    )(x2_nhwc.astype(jnp.float32),
      prep["c2_w"], prep["c2_b"], prep["c3_w"], prep["c3_b"],
      articulation.astype(jnp.float32),
      prep["s1_w"], prep["s1_b"], prep["s2_w"], prep["s2_b"],
      prep["w_img"], prep["w_sig"], prep["p_b"], prep["var_param"])


# ------------------------------------------------------------- parameters ----
def _conv_out(h, k, s, p=0):
    return (h + 2 * p - (k - 1) - 1) // s + 1


def init_params(key, obs_channels, in_channels, signal_dim,
                encoded_signal_shape, action_size):
    """PyTorch-layout parameters (OIHW convs, (in,out) linears), torch-style init."""
    ks = jax.random.split(key, 14)

    def u(k, shape, fan_in):
        bound = 1.0 / math.sqrt(fan_in)
        return jax.random.uniform(k, shape, jnp.float32, -bound, bound)

    params = {}
    params["rq_w"] = u(ks[0], (in_channels, obs_channels, 3, 3), obs_channels * 9)
    params["rq_b"] = u(ks[1], (in_channels,), obs_channels * 9)
    params["c1_w"] = u(ks[2], (32, in_channels, 8, 8), in_channels * 64)
    params["c1_b"] = u(ks[3], (32,), in_channels * 64)
    params["c2_w"] = u(ks[4], (64, 32, 4, 4), 32 * 16)
    params["c2_b"] = u(ks[5], (64,), 32 * 16)
    params["c3_w"] = u(ks[6], (64, 64, 3, 3), 64 * 9)
    params["c3_b"] = u(ks[7], (64,), 64 * 9)
    params["s1_w"] = u(ks[8], (signal_dim, 16), signal_dim)
    params["s1_b"] = u(ks[9], (16,), signal_dim)
    params["s2_w"] = u(ks[10], (16, encoded_signal_shape), 16)
    params["s2_b"] = u(ks[11], (encoded_signal_shape,), 16)
    h = 64
    for k_, s_ in [(8, 4), (4, 2), (3, 1)]:
        h = _conv_out(h, k_, s_)
    in_features = 64 * h * h + encoded_signal_shape       # 64*4*4 + E = 1024 + E
    params["p_w"] = u(ks[12], (in_features, action_size), in_features)
    params["p_b"] = u(ks[13], (action_size,), in_features)
    params["var_param"] = jnp.zeros((action_size,), jnp.float32)  # pfrl init 0
    return params


def prepare_params(params):
    """One-time relayout/cast of the PyTorch-layout params into kernel layouts."""
    p = {}
    cr = params["rq_w"].shape[0]                     # in_channels

    p["rq_w"] = params["rq_w"].astype(jnp.float32)   # OIHW (flattened in wrapper)
    p["rq_b"] = params["rq_b"].astype(jnp.float32)

    # conv1: 8x8 / stride 4  ->  space-to-depth(4), 2x2 / stride 1 taps
    w1 = params["c1_w"].reshape(32, cr, 2, 4, 2, 4)  # (co, ci, th, rh, tw, rw)
    w1 = w1.transpose(2, 4, 3, 5, 1, 0)              # (th, tw, rh, rw, ci, co)
    p["c1_w"] = w1.reshape(4, 16 * cr, 32).astype(jnp.bfloat16)
    p["c1_b"] = params["c1_b"].reshape(1, -1).astype(jnp.float32)

    # conv2: 4x4 / stride 2  ->  space-to-depth(2), 2x2 / stride 1 taps
    w2 = params["c2_w"].reshape(64, 32, 2, 2, 2, 2)  # (co, ci, th, rh, tw, rw)
    w2 = w2.transpose(2, 4, 3, 5, 1, 0)
    p["c2_w"] = w2.reshape(4, 128, 64).astype(jnp.bfloat16)
    p["c2_b"] = params["c2_b"].reshape(1, -1).astype(jnp.float32)

    # conv3: 3x3 / stride 1, NHWC tap-major
    p["c3_w"] = params["c3_w"].transpose(2, 3, 1, 0).reshape(9, 64, 64).astype(jnp.bfloat16)
    p["c3_b"] = params["c3_b"].reshape(1, -1).astype(jnp.float32)

    p["s1_w"] = params["s1_w"].astype(jnp.float32)
    p["s1_b"] = params["s1_b"].reshape(1, -1).astype(jnp.float32)
    p["s2_w"] = params["s2_w"].astype(jnp.float32)
    p["s2_b"] = params["s2_b"].reshape(1, -1).astype(jnp.float32)

    # policy head: rows 0..1023 are torch's channel-major (c, h, w) flatten of
    # the (64, 4, 4) image features; regroup them once into (position = h*4+w,
    # channel, action) so the kernel consumes (h, w) feature slabs directly.
    a_sz = params["p_w"].shape[1]
    n_img = 64 * 4 * 4
    assert params["p_w"].shape[0] == n_img + params["s2_w"].shape[1]
    w_img = params["p_w"][:n_img].reshape(64, 4, 4, a_sz)       # (c, h, w, a)
    p["w_img"] = w_img.transpose(1, 2, 0, 3).reshape(16, 64, a_sz).astype(jnp.float32)
    p["w_sig"] = params["p_w"][n_img:].astype(jnp.float32)
    p["p_b"] = params["p_b"].reshape(1, -1).astype(jnp.float32)
    p["var_param"] = params["var_param"].reshape(1, -1).astype(jnp.float32)
    return p


# ----------------------------------------------------------------- forward ---
def policy_forward(prep, x_img, articulation):
    """Forward pass of `Policy`; returns the Gaussian head's (mean, variance)."""
    n = x_img.shape[0]
    cr = prep["rq_w"].shape[0]
    assert x_img.shape[2] == 64 and x_img.shape[3] == 64

    # ---- recording_queue_encoder_layers: 3x3/s1/p1 conv + leaky_relu (VPU)
    y = rq_conv_lrelu(x_img, prep["rq_w"], prep["rq_b"])     # (cr, n, 64, 64)

    # ---- conv1 (8x8 / stride 4): space-to-depth(4) -> 2x2/s1 tap kernel
    y = y.reshape(cr, n, 16, 4, 16, 4)
    y = y.transpose(1, 2, 4, 3, 5, 0)                        # (n, qh, qw, rh, rw, cr)
    y = y.reshape(n, 16, 16, 16 * cr)
    y = jnp.pad(y, ((0, 0), (0, 0), (0, 1), (0, 0)))         # W 16 -> 17
    y = conv_taps_lrelu(y, prep["c1_w"], prep["c1_b"],
                        kh_sz=2, kw_sz=2, h_out=15, w_out=16)  # (n*15*16, 32); col 15 = pad

    # ---- conv2 input: space-to-depth(2) (layout plumbing stays in XLA)
    y = y.reshape(n, 15, 16, 32)
    y = jnp.pad(y, ((0, 0), (0, 1), (0, 0), (0, 0)))         # H 15 -> 16
    y = y.reshape(n, 8, 2, 8, 2, 32).transpose(0, 1, 3, 2, 4, 5).reshape(n, 8, 8, 128)
    y = jnp.pad(y, ((0, 0), (0, 0), (0, 1), (0, 0)))         # W 8 -> 9

    # ---- conv2 + conv3 + signal MLP + policy head + variance, fused in one kernel
    # TODO(synk): constructing the torch.distributions Independent(Normal) object
    # has no Pallas equivalent; the Gaussian (mean, variance) is returned instead.
    mean, var = conv23_tail(y, articulation, prep)
    return mean, var


# -------------------------------------------------------------------- main ---
if __name__ == "__main__":
    key = jax.random.PRNGKey(0)
    k_img, k_sig, k_par = jax.random.split(key, 3)

    batch = 2
    obs_channels = 3          # obs_space[0].shape[0]
    in_channels = 1
    signal_dim = 8            # obs_space[1].shape[0]
    encoded_signal_shape = 4
    action_size = 2

    # 64x64 spatial is required by the architecture (policy layer in_features)
    x_img = jax.random.normal(k_img, (batch, obs_channels, 64, 64), jnp.float32)
    articulation = jax.random.normal(k_sig, (batch, signal_dim), jnp.float32)

    params = init_params(k_par, obs_channels, in_channels, signal_dim,
                         encoded_signal_shape, action_size)
    prep = prepare_params(params)       # one-time relayout, outside the jit

    fwd = jax.jit(policy_forward)
    mean, var = fwd(prep, x_img, articulation)
    jax.block_until_ready((mean, var))

    assert mean.shape == (batch, action_size), mean.shape
    assert var.shape == (batch, action_size), var.shape
    assert bool(jnp.all(jnp.isfinite(mean))) and bool(jnp.all(jnp.isfinite(var)))
    print("KERNEL_OK")
</pallas_src>

<mosaic_0001>
module attributes {stable_mosaic.version = 11 : i64} {
  func.func @_rq_conv_kernel(%arg0: memref<2x3x66x66xf32, #tpu.memory_space<vmem>>, %arg1: memref<27xf32, #tpu.memory_space<smem>>, %arg2: memref<1xf32, #tpu.memory_space<smem>>, %arg3: memref<1x2x64x64xf32, #tpu.memory_space<vmem>>) attributes {dimension_semantics = [], scalar_prefetch = 0 : i64, scratch_operands = 0 : i64, tpu.core_type = #tpu.core_type<tc>} {
    %cst = arith.constant 0.000000e+00 : f32
    %0 = vector.broadcast %cst : f32 to vector<2x64x64xf32>
    %c0 = arith.constant 0 : index
    %c0_0 = arith.constant 0 : index
    %c0_1 = arith.constant 0 : index
    %c0_2 = arith.constant 0 : index
    %1 = vector.load %arg0[%c0, %c0_0, %c0_1, %c0_2] : memref<2x3x66x66xf32, #tpu.memory_space<vmem>>, vector<2x1x66x66xf32>
    %2 = vector.shape_cast %1 : vector<2x1x66x66xf32> to vector<2x66x66xf32>
    %3 = vector.extract_strided_slice %2 {offsets = [0, 0, 0], sizes = [2, 64, 64], strides = [1, 1, 1]} : vector<2x66x66xf32> to vector<2x64x64xf32>
    %c0_3 = arith.constant 0 : index
    %4 = memref.load %arg1[%c0_3] : memref<27xf32, #tpu.memory_space<smem>>
    %5 = vector.broadcast %4 : f32 to vector<2x64x64xf32>
    %6 = arith.mulf %5, %3 : vector<2x64x64xf32>
    %7 = arith.addf %0, %6 : vector<2x64x64xf32>
    %8 = vector.extract_strided_slice %2 {offsets = [0, 0, 1], sizes = [2, 64, 64], strides = [1, 1, 1]} : vector<2x66x66xf32> to vector<2x64x64xf32>
    %c1 = arith.constant 1 : index
    %9 = memref.load %arg1[%c1] : memref<27xf32, #tpu.memory_space<smem>>
    %10 = vector.broadcast %9 : f32 to vector<2x64x64xf32>
    %11 = arith.mulf %10, %8 : vector<2x64x64xf32>
    %12 = arith.addf %7, %11 : vector<2x64x64xf32>
    %13 = vector.extract_strided_slice %2 {offsets = [0, 0, 2], sizes = [2, 64, 64], strides = [1, 1, 1]} : vector<2x66x66xf32> to vector<2x64x64xf32>
    %c2 = arith.constant 2 : index
    %14 = memref.load %arg1[%c2] : memref<27xf32, #tpu.memory_space<smem>>
    %15 = vector.broadcast %14 : f32 to vector<2x64x64xf32>
    %16 = arith.mulf %15, %13 : vector<2x64x64xf32>
    %17 = arith.addf %12, %16 : vector<2x64x64xf32>
    %18 = vector.extract_strided_slice %2 {offsets = [0, 1, 0], sizes = [2, 64, 64], strides = [1, 1, 1]} : vector<2x66x66xf32> to vector<2x64x64xf32>
    %c3 = arith.constant 3 : index
    %19 = memref.load %arg1[%c3] : memref<27xf32, #tpu.memory_space<smem>>
    %20 = vector.broadcast %19 : f32 to vector<2x64x64xf32>
    %21 = arith.mulf %20, %18 : vector<2x64x64xf32>
    %22 = arith.addf %17, %21 : vector<2x64x64xf32>
    %23 = vector.extract_strided_slice %2 {offsets = [0, 1, 1], sizes = [2, 64, 64], strides = [1, 1, 1]} : vector<2x66x66xf32> to vector<2x64x64xf32>
    %c4 = arith.constant 4 : index
    %24 = memref.load %arg1[%c4] : memref<27xf32, #tpu.memory_space<smem>>
    %25 = vector.broadcast %24 : f32 to vector<2x64x64xf32>
    %26 = arith.mulf %25, %23 : vector<2x64x64xf32>
    %27 = arith.addf %22, %26 : vector<2x64x64xf32>
    %28 = vector.extract_strided_slice %2 {offsets = [0, 1, 2], sizes = [2, 64, 64], strides = [1, 1, 1]} : vector<2x66x66xf32> to vector<2x64x64xf32>
    %c5 = arith.constant 5 : index
    %29 = memref.load %arg1[%c5] : memref<27xf32, #tpu.memory_space<smem>>
    %30 = vector.broadcast %29 : f32 to vector<2x64x64xf32>
    %31 = arith.mulf %30, %28 : vector<2x64x64xf32>
    %32 = arith.addf %27, %31 : vector<2x64x64xf32>
    %33 = vector.extract_strided_slice %2 {offsets = [0, 2, 0], sizes = [2, 64, 64], strides = [1, 1, 1]} : vector<2x66x66xf32> to vector<2x64x64xf32>
    %c6 = arith.constant 6 : index
    %34 = memref.load %arg1[%c6] : memref<27xf32, #tpu.memory_space<smem>>
    %35 = vector.broadcast %34 : f32 to vector<2x64x64xf32>
    %36 = arith.mulf %35, %33 : vector<2x64x64xf32>
    %37 = arith.addf %32, %36 : vector<2x64x64xf32>
    %38 = vector.extract_strided_slice %2 {offsets = [0, 2, 1], sizes = [2, 64, 64], strides = [1, 1, 1]} : vector<2x66x66xf32> to vector<2x64x64xf32>
    %c7 = arith.constant 7 : index
    %39 = memref.load %arg1[%c7] : memref<27xf32, #tpu.memory_space<smem>>
    %40 = vector.broadcast %39 : f32 to vector<2x64x64xf32>
    %41 = arith.mulf %40, %38 : vector<2x64x64xf32>
    %42 = arith.addf %37, %41 : vector<2x64x64xf32>
    %43 = vector.extract_strided_slice %2 {offsets = [0, 2, 2], sizes = [2, 64, 64], strides = [1, 1, 1]} : vector<2x66x66xf32> to vector<2x64x64xf32>
    %c8 = arith.constant 8 : index
    %44 = memref.load %arg1[%c8] : memref<27xf32, #tpu.memory_space<smem>>
    %45 = vector.broadcast %44 : f32 to vector<2x64x64xf32>
    %46 = arith.mulf %45, %43 : vector<2x64x64xf32>
    %47 = arith.addf %42, %46 : vector<2x64x64xf32>
    %c0_4 = arith.constant 0 : index
    %c1_5 = arith.constant 1 : index
    %c0_6 = arith.constant 0 : index
    %c0_7 = arith.constant 0 : index
    %48 = vector.load %arg0[%c0_4, %c1_5, %c0_6, %c0_7] : memref<2x3x66x66xf32, #tpu.memory_space<vmem>>, vector<2x1x66x66xf32>
    %49 = vector.shape_cast %48 : vector<2x1x66x66xf32> to vector<2x66x66xf32>
    %50 = vector.extract_strided_slice %49 {offsets = [0, 0, 0], sizes = [2, 64, 64], strides = [1, 1, 1]} : vector<2x66x66xf32> to vector<2x64x64xf32>
    %c9 = arith.constant 9 : index
    %51 = memref.load %arg1[%c9] : memref<27xf32, #tpu.memory_space<smem>>
    %52 = vector.broadcast %51 : f32 to vector<2x64x64xf32>
    %53 = arith.mulf %52, %50 : vector<2x64x64xf32>
    %54 = arith.addf %47, %53 : vector<2x64x64xf32>
    %55 = vector.extract_strided_slice %49 {offsets = [0, 0, 1], sizes = [2, 64, 64], strides = [1, 1, 1]} : vector<2x66x66xf32> to vector<2x64x64xf32>
    %c10 = arith.constant 10 : index
    %56 = memref.load %arg1[%c10] : memref<27xf32, #tpu.memory_space<smem>>
    %57 = vector.broadcast %56 : f32 to vector<2x64x64xf32>
    %58 = arith.mulf %57, %55 : vector<2x64x64xf32>
    %59 = arith.addf %54, %58 : vector<2x64x64xf32>
    %60 = vector.extract_strided_slice %49 {offsets = [0, 0, 2], sizes = [2, 64, 64], strides = [1, 1, 1]} : vector<2x66x66xf32> to vector<2x64x64xf32>
    %c11 = arith.constant 11 : index
    %61 = memref.load %arg1[%c11] : memref<27xf32, #tpu.memory_space<smem>>
    %62 = vector.broadcast %61 : f32 to vector<2x64x64xf32>
    %63 = arith.mulf %62, %60 : vector<2x64x64xf32>
    %64 = arith.addf %59, %63 : vector<2x64x64xf32>
    %65 = vector.extract_strided_slice %49 {offsets = [0, 1, 0], sizes = [2, 64, 64], strides = [1, 1, 1]} : vector<2x66x66xf32> to vector<2x64x64xf32>
    %c12 = arith.constant 12 : index
    %66 = memref.load %arg1[%c12] : memref<27xf32, #tpu.memory_space<smem>>
    %67 = vector.broadcast %66 : f32 to vector<2x64x64xf32>
    %68 = arith.mulf %67, %65 : vector<2x64x64xf32>
    %69 = arith.addf %64, %68 : vector<2x64x64xf32>
    %70 = vector.extract_strided_slice %49 {offsets = [0, 1, 1], sizes = [2, 64, 64], strides = [1, 1, 1]} : vector<2x66x66xf32> to vector<2x64x64xf32>
    %c13 = arith.constant 13 : index
    %71 = memref.load %arg1[%c13] : memref<27xf32, #tpu.memory_space<smem>>
    %72 = vector.broadcast %71 : f32 to vector<2x64x64xf32>
    %73 = arith.mulf %72, %70 : vector<2x64x64xf32>
    %74 = arith.addf %69, %73 : vector<2x64x64xf32>
    %75 = vector.extract_strided_slice %49 {offsets = [0, 1, 2], sizes = [2, 64, 64], strides = [1, 1, 1]} : vector<2x66x66xf32> to vector<2x64x64xf32>
    %c14 = arith.constant 14 : index
    %76 = memref.load %arg1[%c14] : memref<27xf32, #tpu.memory_space<smem>>
    %77 = vector.broadcast %76 : f32 to vector<2x64x64xf32>
    %78 = arith.mulf %77, %75 : vector<2x64x64xf32>
    %79 = arith.addf %74, %78 : vector<2x64x64xf32>
    %80 = vector.extract_strided_slice %49 {offsets = [0, 2, 0], sizes = [2, 64, 64], strides = [1, 1, 1]} : vector<2x66x66xf32> to vector<2x64x64xf32>
    %c15 = arith.constant 15 : index
    %81 = memref.load %arg1[%c15] : memref<27xf32, #tpu.memory_space<smem>>
    %82 = vector.broadcast %81 : f32 to vector<2x64x64xf32>
    %83 = arith.mulf %82, %80 : vector<2x64x64xf32>
    %84 = arith.addf %79, %83 : vector<2x64x64xf32>
    %85 = vector.extract_strided_slice %49 {offsets = [0, 2, 1], sizes = [2, 64, 64], strides = [1, 1, 1]} : vector<2x66x66xf32> to vector<2x64x64xf32>
    %c16 = arith.constant 16 : index
    %86 = memref.load %arg1[%c16] : memref<27xf32, #tpu.memory_space<smem>>
    %87 = vector.broadcast %86 : f32 to vector<2x64x64xf32>
    %88 = arith.mulf %87, %85 : vector<2x64x64xf32>
    %89 = arith.addf %84, %88 : vector<2x64x64xf32>
    %90 = vector.extract_strided_slice %49 {offsets = [0, 2, 2], sizes = [2, 64, 64], strides = [1, 1, 1]} : vector<2x66x66xf32> to vector<2x64x64xf32>
    %c17 = arith.constant 17 : index
    %91 = memref.load %arg1[%c17] : memref<27xf32, #tpu.memory_space<smem>>
    %92 = vector.broadcast %91 : f32 to vector<2x64x64xf32>
    %93 = arith.mulf %92, %90 : vector<2x64x64xf32>
    %94 = arith.addf %89, %93 : vector<2x64x64xf32>
    %c0_8 = arith.constant 0 : index
    %c2_9 = arith.constant 2 : index
    %c0_10 = arith.constant 0 : index
    %c0_11 = arith.constant 0 : index
    %95 = vector.load %arg0[%c0_8, %c2_9, %c0_10, %c0_11] : memref<2x3x66x66xf32, #tpu.memory_space<vmem>>, vector<2x1x66x66xf32>
    %96 = vector.shape_cast %95 : vector<2x1x66x66xf32> to vector<2x66x66xf32>
    %97 = vector.extract_strided_slice %96 {offsets = [0, 0, 0], sizes = [2, 64, 64], strides = [1, 1, 1]} : vector<2x66x66xf32> to vector<2x64x64xf32>
    %c18 = arith.constant 18 : index
    %98 = memref.load %arg1[%c18] : memref<27xf32, #tpu.memory_space<smem>>
    %99 = vector.broadcast %98 : f32 to vector<2x64x64xf32>
    %100 = arith.mulf %99, %97 : vector<2x64x64xf32>
    %101 = arith.addf %94, %100 : vector<2x64x64xf32>
    %102 = vector.extract_strided_slice %96 {offsets = [0, 0, 1], sizes = [2, 64, 64], strides = [1, 1, 1]} : vector<2x66x66xf32> to vector<2x64x64xf32>
    %c19 = arith.constant 19 : index
    %103 = memref.load %arg1[%c19] : memref<27xf32, #tpu.memory_space<smem>>
    %104 = vector.broadcast %103 : f32 to vector<2x64x64xf32>
    %105 = arith.mulf %104, %102 : vector<2x64x64xf32>
    %106 = arith.addf %101, %105 : vector<2x64x64xf32>
    %107 = vector.extract_strided_slice %96 {offsets = [0, 0, 2], sizes = [2, 64, 64], strides = [1, 1, 1]} : vector<2x66x66xf32> to vector<2x64x64xf32>
    %c20 = arith.constant 20 : index
    %108 = memref.load %arg1[%c20] : memref<27xf32, #tpu.memory_space<smem>>
    %109 = vector.broadcast %108 : f32 to vector<2x64x64xf32>
    %110 = arith.mulf %109, %107 : vector<2x64x64xf32>
    %111 = arith.addf %106, %110 : vector<2x64x64xf32>
    %112 = vector.extract_strided_slice %96 {offsets = [0, 1, 0], sizes = [2, 64, 64], strides = [1, 1, 1]} : vector<2x66x66xf32> to vector<2x64x64xf32>
    %c21 = arith.constant 21 : index
    %113 = memref.load %arg1[%c21] : memref<27xf32, #tpu.memory_space<smem>>
    %114 = vector.broadcast %113 : f32 to vector<2x64x64xf32>
    %115 = arith.mulf %114, %112 : vector<2x64x64xf32>
    %116 = arith.addf %111, %115 : vector<2x64x64xf32>
    %117 = vector.extract_strided_slice %96 {offsets = [0, 1, 1], sizes = [2, 64, 64], strides = [1, 1, 1]} : vector<2x66x66xf32> to vector<2x64x64xf32>
    %c22 = arith.constant 22 : index
    %118 = memref.load %arg1[%c22] : memref<27xf32, #tpu.memory_space<smem>>
    %119 = vector.broadcast %118 : f32 to vector<2x64x64xf32>
    %120 = arith.mulf %119, %117 : vector<2x64x64xf32>
    %121 = arith.addf %116, %120 : vector<2x64x64xf32>
    %122 = vector.extract_strided_slice %96 {offsets = [0, 1, 2], sizes = [2, 64, 64], strides = [1, 1, 1]} : vector<2x66x66xf32> to vector<2x64x64xf32>
    %c23 = arith.constant 23 : index
    %123 = memref.load %arg1[%c23] : memref<27xf32, #tpu.memory_space<smem>>
    %124 = vector.broadcast %123 : f32 to vector<2x64x64xf32>
    %125 = arith.mulf %124, %122 : vector<2x64x64xf32>
    %126 = arith.addf %121, %125 : vector<2x64x64xf32>
    %127 = vector.extract_strided_slice %96 {offsets = [0, 2, 0], sizes = [2, 64, 64], strides = [1, 1, 1]} : vector<2x66x66xf32> to vector<2x64x64xf32>
    %c24 = arith.constant 24 : index
    %128 = memref.load %arg1[%c24] : memref<27xf32, #tpu.memory_space<smem>>
    %129 = vector.broadcast %128 : f32 to vector<2x64x64xf32>
    %130 = arith.mulf %129, %127 : vector<2x64x64xf32>
    %131 = arith.addf %126, %130 : vector<2x64x64xf32>
    %132 = vector.extract_strided_slice %96 {offsets = [0, 2, 1], sizes = [2, 64, 64], strides = [1, 1, 1]} : vector<2x66x66xf32> to vector<2x64x64xf32>
    %c25 = arith.constant 25 : index
    %133 = memref.load %arg1[%c25] : memref<27xf32, #tpu.memory_space<smem>>
    %134 = vector.broadcast %133 : f32 to vector<2x64x64xf32>
    %135 = arith.mulf %134, %132 : vector<2x64x64xf32>
    %136 = arith.addf %131, %135 : vector<2x64x64xf32>
    %137 = vector.extract_strided_slice %96 {offsets = [0, 2, 2], sizes = [2, 64, 64], strides = [1, 1, 1]} : vector<2x66x66xf32> to vector<2x64x64xf32>
    %c26 = arith.constant 26 : index
    %138 = memref.load %arg1[%c26] : memref<27xf32, #tpu.memory_space<smem>>
    %139 = vector.broadcast %138 : f32 to vector<2x64x64xf32>
    %140 = arith.mulf %139, %137 : vector<2x64x64xf32>
    %141 = arith.addf %136, %140 : vector<2x64x64xf32>
    %c0_12 = arith.constant 0 : index
    %142 = memref.load %arg2[%c0_12] : memref<1xf32, #tpu.memory_space<smem>>
    %143 = vector.broadcast %142 : f32 to vector<2x64x64xf32>
    %144 = arith.addf %141, %143 : vector<2x64x64xf32>
    %cst_13 = arith.constant 0.00999999977 : f32
    %145 = vector.broadcast %cst_13 : f32 to vector<2x64x64xf32>
    %146 = arith.mulf %145, %144 : vector<2x64x64xf32>
    %147 = arith.maximumf %144, %146 : vector<2x64x64xf32>
    %c0_14 = arith.constant 0 : index
    %c0_15 = arith.constant 0 : index
    %c0_16 = arith.constant 0 : index
    %c0_17 = arith.constant 0 : index
    %148 = vector.load %arg3[%c0_14, %c0_15, %c0_16, %c0_17] : memref<1x2x64x64xf32, #tpu.memory_space<vmem>>, vector<1x2x64x64xf32>
    %149 = vector.shape_cast %148 : vector<1x2x64x64xf32> to vector<2x64x64xf32>
    %150 = vector.shape_cast %147 : vector<2x64x64xf32> to vector<1x2x64x64xf32>
    tpu.vector_store %arg3[%c0_14, %c0_15, %c0_16, %c0_17], %150 {strides = array<i32>} : memref<1x2x64x64xf32, #tpu.memory_space<vmem>>, vector<1x2x64x64xf32>,
    return
  }
}

module attributes {stable_mosaic.version = 11 : i64} {
  func.func @_conv_taps_kernel(%arg0: memref<2x16x17x16xf32, #tpu.memory_space<vmem>>, %arg1: memref<4x16x32xbf16, #tpu.memory_space<vmem>>, %arg2: memref<1x32xf32, #tpu.memory_space<vmem>>, %arg3: memref<480x32xf32, #tpu.memory_space<vmem>>) attributes {dimension_semantics = [], scalar_prefetch = 0 : i64, scratch_operands = 0 : i64, tpu.core_type = #tpu.core_type<tc>} {
    %cst = arith.constant 0.000000e+00 : f32
    %0 = vector.broadcast %cst : f32 to vector<480x32xf32>
    %c0 = arith.constant 0 : index
    %c0_0 = arith.constant 0 : index
    %c0_1 = arith.constant 0 : index
    %c0_2 = arith.constant 0 : index
    %1 = vector.load %arg0[%c0, %c0_0, %c0_1, %c0_2] : memref<2x16x17x16xf32, #tpu.memory_space<vmem>>, vector<2x15x16x16xf32>
    %2 = vector.shape_cast %1 : vector<2x15x16x16xf32> to vector<480x16xf32>
    %3 = arith.truncf %2 : vector<480x16xf32> to vector<480x16xbf16>
    %c0_3 = arith.constant 0 : index
    %c0_4 = arith.constant 0 : index
    %c0_5 = arith.constant 0 : index
    %4 = vector.load %arg1[%c0_3, %c0_4, %c0_5] : memref<4x16x32xbf16, #tpu.memory_space<vmem>>, vector<1x16x32xbf16>
    %5 = vector.shape_cast %4 : vector<1x16x32xbf16> to vector<16x32xbf16>
    %cst_6 = arith.constant dense<0.000000e+00> : vector<480x32xf32>
    %6 = tpu.matmul %3, %5, %cst_6 {dimension_numbers = #tpu.dot_dimension_numbers<[1], [0], [0], [1], [0, 0, 1, 1], [], []>} : vector<480x16xbf16>, vector<16x32xbf16>, vector<480x32xf32> -> vector<480x32xf32>
    %7 = arith.addf %0, %6 : vector<480x32xf32>
    %c0_7 = arith.constant 0 : index
    %c0_8 = arith.constant 0 : index
    %c1 = arith.constant 1 : index
    %c0_9 = arith.constant 0 : index
    %8 = vector.load %arg0[%c0_7, %c0_8, %c1, %c0_9] : memref<2x16x17x16xf32, #tpu.memory_space<vmem>>, vector<2x15x16x16xf32>
    %9 = vector.shape_cast %8 : vector<2x15x16x16xf32> to vector<480x16xf32>
    %10 = arith.truncf %9 : vector<480x16xf32> to vector<480x16xbf16>
    %c1_10 = arith.constant 1 : index
    %c0_11 = arith.constant 0 : index
    %c0_12 = arith.constant 0 : index
    %11 = vector.load %arg1[%c1_10, %c0_11, %c0_12] : memref<4x16x32xbf16, #tpu.memory_space<vmem>>, vector<1x16x32xbf16>
    %12 = vector.shape_cast %11 : vector<1x16x32xbf16> to vector<16x32xbf16>
    %cst_13 = arith.constant dense<0.000000e+00> : vector<480x32xf32>
    %13 = tpu.matmul %10, %12, %cst_13 {dimension_numbers = #tpu.dot_dimension_numbers<[1], [0], [0], [1], [0, 0, 1, 1], [], []>} : vector<480x16xbf16>, vector<16x32xbf16>, vector<480x32xf32> -> vector<480x32xf32>
    %14 = arith.addf %7, %13 : vector<480x32xf32>
    %c0_14 = arith.constant 0 : index
    %c1_15 = arith.constant 1 : index
    %c0_16 = arith.constant 0 : index
    %c0_17 = arith.constant 0 : index
    %15 = vector.load %arg0[%c0_14, %c1_15, %c0_16, %c0_17] : memref<2x16x17x16xf32, #tpu.memory_space<vmem>>, vector<2x15x16x16xf32>
    %16 = vector.shape_cast %15 : vector<2x15x16x16xf32> to vector<480x16xf32>
    %17 = arith.truncf %16 : vector<480x16xf32> to vector<480x16xbf16>
    %c2 = arith.constant 2 : index
    %c0_18 = arith.constant 0 : index
    %c0_19 = arith.constant 0 : index
    %18 = vector.load %arg1[%c2, %c0_18, %c0_19] : memref<4x16x32xbf16, #tpu.memory_space<vmem>>, vector<1x16x32xbf16>
    %19 = vector.shape_cast %18 : vector<1x16x32xbf16> to vector<16x32xbf16>
    %cst_20 = arith.constant dense<0.000000e+00> : vector<480x32xf32>
    %20 = tpu.matmul %17, %19, %cst_20 {dimension_numbers = #tpu.dot_dimension_numbers<[1], [0], [0], [1], [0, 0, 1, 1], [], []>} : vector<480x16xbf16>, vector<16x32xbf16>, vector<480x32xf32> -> vector<480x32xf32>
    %21 = arith.addf %14, %20 : vector<480x32xf32>
    %c0_21 = arith.constant 0 : index
    %c1_22 = arith.constant 1 : index
    %c1_23 = arith.constant 1 : index
    %c0_24 = arith.constant 0 : index
    %22 = vector.load %arg0[%c0_21, %c1_22, %c1_23, %c0_24] : memref<2x16x17x16xf32, #tpu.memory_space<vmem>>, vector<2x15x16x16xf32>
    %23 = vector.shape_cast %22 : vector<2x15x16x16xf32> to vector<480x16xf32>
    %24 = arith.truncf %23 : vector<480x16xf32> to vector<480x16xbf16>
    %c3 = arith.constant 3 : index
    %c0_25 = arith.constant 0 : index
    %c0_26 = arith.constant 0 : index
    %25 = vector.load %arg1[%c3, %c0_25, %c0_26] : memref<4x16x32xbf16, #tpu.memory_space<vmem>>, vector<1x16x32xbf16>
    %26 = vector.shape_cast %25 : vector<1x16x32xbf16> to vector<16x32xbf16>
    %cst_27 = arith.constant dense<0.000000e+00> : vector<480x32xf32>
    %27 = tpu.matmul %24, %26, %cst_27 {dimension_numbers = #tpu.dot_dimension_numbers<[1], [0], [0], [1], [0, 0, 1, 1], [], []>} : vector<480x16xbf16>, vector<16x32xbf16>, vector<480x32xf32> -> vector<480x32xf32>
    %28 = arith.addf %21, %27 : vector<480x32xf32>
    %c0_28 = arith.constant 0 : index
    %c0_29 = arith.constant 0 : index
    %29 = vector.load %arg2[%c0_28, %c0_29] : memref<1x32xf32, #tpu.memory_space<vmem>>, vector<1x32xf32>
    %30 = vector.broadcast %29 : vector<1x32xf32> to vector<480x32xf32>
    %31 = arith.addf %28, %30 : vector<480x32xf32>
    %cst_30 = arith.constant 0.00999999977 : f32
    %32 = vector.broadcast %cst_30 : f32 to vector<480x32xf32>
    %33 = arith.mulf %32, %31 : vector<480x32xf32>
    %34 = arith.maximumf %31, %33 : vector<480x32xf32>
    %c0_31 = arith.constant 0 : index
    %c0_32 = arith.constant 0 : index
    %35 = vector.load %arg3[%c0_31, %c0_32] : memref<480x32xf32, #tpu.memory_space<vmem>>, vector<480x32xf32>
    tpu.vector_store %arg3[%c0_31, %c0_32], %34 {strides = array<i32>} : memref<480x32xf32, #tpu.memory_space<vmem>>, vector<480x32xf32>,
    return
  }
}

module attributes {stable_mosaic.version = 11 : i64} {
  func.func @_conv23_tail_kernel(%arg0: memref<2x8x9x128xf32, #tpu.memory_space<vmem>>, %arg1: memref<4x128x64xbf16, #tpu.memory_space<vmem>>, %arg2: memref<1x64xf32, #tpu.memory_space<vmem>>, %arg3: memref<9x64x64xbf16, #tpu.memory_space<vmem>>, %arg4: memref<1x64xf32, #tpu.memory_space<vmem>>, %arg5: memref<2x8xf32, #tpu.memory_space<vmem>>, %arg6: memref<8x16xf32, #tpu.memory_space<vmem>>, %arg7: memref<1x16xf32, #tpu.memory_space<vmem>>, %arg8: memref<16x4xf32, #tpu.memory_space<vmem>>, %arg9: memref<1x4xf32, #tpu.memory_space<vmem>>, %arg10: memref<16x64x2xf32, #tpu.memory_space<vmem>>, %arg11: memref<4x2xf32, #tpu.memory_space<vmem>>, %arg12: memref<1x2xf32, #tpu.memory_space<vmem>>, %arg13: memref<1x2xf32, #tpu.memory_space<vmem>>, %arg14: memref<2x2xf32, #tpu.memory_space<vmem>>, %arg15: memref<2x2xf32, #tpu.memory_space<vmem>>, %arg16: memref<2x6x16x64xf32, #tpu.memory_space<vmem>>) attributes {dimension_semantics = [], scalar_prefetch = 0 : i64, scratch_operands = 1 : i64, tpu.core_type = #tpu.core_type<tc>} {
    %cst = arith.constant 0.000000e+00 : f32
    %0 = vector.broadcast %cst : f32 to vector<96x64xf32>
    %c0 = arith.constant 0 : index
    %c0_0 = arith.constant 0 : index
    %c0_1 = arith.constant 0 : index
    %c0_2 = arith.constant 0 : index
    %1 = vector.load %arg0[%c0, %c0_0, %c0_1, %c0_2] : memref<2x8x9x128xf32, #tpu.memory_space<vmem>>, vector<2x6x8x128xf32>
    %2 = vector.shape_cast %1 : vector<2x6x8x128xf32> to vector<96x128xf32>
    %3 = arith.truncf %2 : vector<96x128xf32> to vector<96x128xbf16>
    %c0_3 = arith.constant 0 : index
    %c0_4 = arith.constant 0 : index
    %c0_5 = arith.constant 0 : index
    %4 = vector.load %arg1[%c0_3, %c0_4, %c0_5] : memref<4x128x64xbf16, #tpu.memory_space<vmem>>, vector<1x128x64xbf16>
    %5 = vector.shape_cast %4 : vector<1x128x64xbf16> to vector<128x64xbf16>
    %cst_6 = arith.constant dense<0.000000e+00> : vector<96x64xf32>
    %6 = tpu.matmul %3, %5, %cst_6 {dimension_numbers = #tpu.dot_dimension_numbers<[1], [0], [0], [1], [0, 0, 1, 1], [], []>} : vector<96x128xbf16>, vector<128x64xbf16>, vector<96x64xf32> -> vector<96x64xf32>
    %7 = arith.addf %0, %6 : vector<96x64xf32>
    %c0_7 = arith.constant 0 : index
    %c0_8 = arith.constant 0 : index
    %c1 = arith.constant 1 : index
    %c0_9 = arith.constant 0 : index
    %8 = vector.load %arg0[%c0_7, %c0_8, %c1, %c0_9] : memref<2x8x9x128xf32, #tpu.memory_space<vmem>>, vector<2x6x8x128xf32>
    %9 = vector.shape_cast %8 : vector<2x6x8x128xf32> to vector<96x128xf32>
    %10 = arith.truncf %9 : vector<96x128xf32> to vector<96x128xbf16>
    %c1_10 = arith.constant 1 : index
    %c0_11 = arith.constant 0 : index
    %c0_12 = arith.constant 0 : index
    %11 = vector.load %arg1[%c1_10, %c0_11, %c0_12] : memref<4x128x64xbf16, #tpu.memory_space<vmem>>, vector<1x128x64xbf16>
    %12 = vector.shape_cast %11 : vector<1x128x64xbf16> to vector<128x64xbf16>
    %cst_13 = arith.constant dense<0.000000e+00> : vector<96x64xf32>
    %13 = tpu.matmul %10, %12, %cst_13 {dimension_numbers = #tpu.dot_dimension_numbers<[1], [0], [0], [1], [0, 0, 1, 1], [], []>} : vector<96x128xbf16>, vector<128x64xbf16>, vector<96x64xf32> -> vector<96x64xf32>
    %14 = arith.addf %7, %13 : vector<96x64xf32>
    %c0_14 = arith.constant 0 : index
    %c1_15 = arith.constant 1 : index
    %c0_16 = arith.constant 0 : index
    %c0_17 = arith.constant 0 : index
    %15 = vector.load %arg0[%c0_14, %c1_15, %c0_16, %c0_17] : memref<2x8x9x128xf32, #tpu.memory_space<vmem>>, vector<2x6x8x128xf32>
    %16 = vector.shape_cast %15 : vector<2x6x8x128xf32> to vector<96x128xf32>
    %17 = arith.truncf %16 : vector<96x128xf32> to vector<96x128xbf16>
    %c2 = arith.constant 2 : index
    %c0_18 = arith.constant 0 : index
    %c0_19 = arith.constant 0 : index
    %18 = vector.load %arg1[%c2, %c0_18, %c0_19] : memref<4x128x64xbf16, #tpu.memory_space<vmem>>, vector<1x128x64xbf16>
    %19 = vector.shape_cast %18 : vector<1x128x64xbf16> to vector<128x64xbf16>
    %cst_20 = arith.constant dense<0.000000e+00> : vector<96x64xf32>
    %20 = tpu.matmul %17, %19, %cst_20 {dimension_numbers = #tpu.dot_dimension_numbers<[1], [0], [0], [1], [0, 0, 1, 1], [], []>} : vector<96x128xbf16>, vector<128x64xbf16>, vector<96x64xf32> -> vector<96x64xf32>
    %21 = arith.addf %14, %20 : vector<96x64xf32>
    %c0_21 = arith.constant 0 : index
    %c1_22 = arith.constant 1 : index
    %c1_23 = arith.constant 1 : index
    %c0_24 = arith.constant 0 : index
    %22 = vector.load %arg0[%c0_21, %c1_22, %c1_23, %c0_24] : memref<2x8x9x128xf32, #tpu.memory_space<vmem>>, vector<2x6x8x128xf32>
    %23 = vector.shape_cast %22 : vector<2x6x8x128xf32> to vector<96x128xf32>
    %24 = arith.truncf %23 : vector<96x128xf32> to vector<96x128xbf16>
    %c3 = arith.constant 3 : index
    %c0_25 = arith.constant 0 : index
    %c0_26 = arith.constant 0 : index
    %25 = vector.load %arg1[%c3, %c0_25, %c0_26] : memref<4x128x64xbf16, #tpu.memory_space<vmem>>, vector<1x128x64xbf16>
    %26 = vector.shape_cast %25 : vector<1x128x64xbf16> to vector<128x64xbf16>
    %cst_27 = arith.constant dense<0.000000e+00> : vector<96x64xf32>
    %27 = tpu.matmul %24, %26, %cst_27 {dimension_numbers = #tpu.dot_dimension_numbers<[1], [0], [0], [1], [0, 0, 1, 1], [], []>} : vector<96x128xbf16>, vector<128x64xbf16>, vector<96x64xf32> -> vector<96x64xf32>
    %28 = arith.addf %21, %27 : vector<96x64xf32>
    %c0_28 = arith.constant 0 : index
    %c0_29 = arith.constant 0 : index
    %29 = vector.load %arg2[%c0_28, %c0_29] : memref<1x64xf32, #tpu.memory_space<vmem>>, vector<1x64xf32>
    %30 = vector.broadcast %29 : vector<1x64xf32> to vector<96x64xf32>
    %31 = arith.addf %28, %30 : vector<96x64xf32>
    %cst_30 = arith.constant 0.00999999977 : f32
    %32 = vector.broadcast %cst_30 : f32 to vector<96x64xf32>
    %33 = arith.mulf %32, %31 : vector<96x64xf32>
    %34 = arith.maximumf %31, %33 : vector<96x64xf32>
    %cst_31 = arith.constant 0.000000e+00 : f32
    %35 = vector.broadcast %cst_31 : f32 to vector<2x6x8x64xf32>
    %c0_32 = arith.constant 0 : index
    %c0_33 = arith.constant 0 : index
    %c8 = arith.constant 8 : index
    %c0_34 = arith.constant 0 : index
    %36 = vector.load %arg16[%c0_32, %c0_33, %c8, %c0_34] : memref<2x6x16x64xf32, #tpu.memory_space<vmem>>, vector<2x6x8x64xf32>
    tpu.vector_store %arg16[%c0_32, %c0_33, %c8, %c0_34], %35 {strides = array<i32>} : memref<2x6x16x64xf32, #tpu.memory_space<vmem>>, vector<2x6x8x64xf32>,
    %37 = vector.shape_cast %34 : vector<96x64xf32> to vector<2x6x8x64xf32>
    %c0_35 = arith.constant 0 : index
    %c0_36 = arith.constant 0 : index
    %c0_37 = arith.constant 0 : index
    %c0_38 = arith.constant 0 : index
    %38 = vector.load %arg16[%c0_35, %c0_36, %c0_37, %c0_38] : memref<2x6x16x64xf32, #tpu.memory_space<vmem>>, vector<2x6x8x64xf32>
    tpu.vector_store %arg16[%c0_35, %c0_36, %c0_37, %c0_38], %37 {strides = array<i32>} : memref<2x6x16x64xf32, #tpu.memory_space<vmem>>, vector<2x6x8x64xf32>,
    %cst_39 = arith.constant 0.000000e+00 : f32
    %39 = vector.broadcast %cst_39 : f32 to vector<64x64xf32>
    %c0_40 = arith.constant 0 : index
    %c0_41 = arith.constant 0 : index
    %c0_42 = arith.constant 0 : index
    %c0_43 = arith.constant 0 : index
    %40 = vector.load %arg16[%c0_40, %c0_41, %c0_42, %c0_43] : memref<2x6x16x64xf32, #tpu.memory_space<vmem>>, vector<2x4x8x64xf32>
    %41 = vector.shape_cast %40 : vector<2x4x8x64xf32> to vector<64x64xf32>
    %42 = arith.truncf %41 : vector<64x64xf32> to vector<64x64xbf16>
    %c0_44 = arith.constant 0 : index
    %c0_45 = arith.constant 0 : index
    %c0_46 = arith.constant 0 : index
    %43 = vector.load %arg3[%c0_44, %c0_45, %c0_46] : memref<9x64x64xbf16, #tpu.memory_space<vmem>>, vector<1x64x64xbf16>
    %44 = vector.shape_cast %43 : vector<1x64x64xbf16> to vector<64x64xbf16>
    %cst_47 = arith.constant dense<0.000000e+00> : vector<64x64xf32>
    %45 = tpu.matmul %42, %44, %cst_47 {dimension_numbers = #tpu.dot_dimension_numbers<[1], [0], [0], [1], [0, 0, 1, 1], [], []>} : vector<64x64xbf16>, vector<64x64xbf16>, vector<64x64xf32> -> vector<64x64xf32>
    %46 = arith.addf %39, %45 : vector<64x64xf32>
    %c0_48 = arith.constant 0 : index
    %c0_49 = arith.constant 0 : index
    %c1_50 = arith.constant 1 : index
    %c0_51 = arith.constant 0 : index
    %47 = vector.load %arg16[%c0_48, %c0_49, %c1_50, %c0_51] : memref<2x6x16x64xf32, #tpu.memory_space<vmem>>, vector<2x4x8x64xf32>
    %48 = vector.shape_cast %47 : vector<2x4x8x64xf32> to vector<64x64xf32>
    %49 = arith.truncf %48 : vector<64x64xf32> to vector<64x64xbf16>
    %c1_52 = arith.constant 1 : index
    %c0_53 = arith.constant 0 : index
    %c0_54 = arith.constant 0 : index
    %50 = vector.load %arg3[%c1_52, %c0_53, %c0_54] : memref<9x64x64xbf16, #tpu.memory_space<vmem>>, vector<1x64x64xbf16>
    %51 = vector.shape_cast %50 : vector<1x64x64xbf16> to vector<64x64xbf16>
    %cst_55 = arith.constant dense<0.000000e+00> : vector<64x64xf32>
    %52 = tpu.matmul %49, %51, %cst_55 {dimension_numbers = #tpu.dot_dimension_numbers<[1], [0], [0], [1], [0, 0, 1, 1], [], []>} : vector<64x64xbf16>, vector<64x64xbf16>, vector<64x64xf32> -> vector<64x64xf32>
    %53 = arith.addf %46, %52 : vector<64x64xf32>
    %c0_56 = arith.constant 0 : index
    %c0_57 = arith.constant 0 : index
    %c2_58 = arith.constant 2 : index
    %c0_59 = arith.constant 0 : index
    %54 = vector.load %arg16[%c0_56, %c0_57, %c2_58, %c0_59] : memref<2x6x16x64xf32, #tpu.memory_space<vmem>>, vector<2x4x8x64xf32>
    %55 = vector.shape_cast %54 : vector<2x4x8x64xf32> to vector<64x64xf32>
    %56 = arith.truncf %55 : vector<64x64xf32> to vector<64x64xbf16>
    %c2_60 = arith.constant 2 : index
    %c0_61 = arith.constant 0 : index
    %c0_62 = arith.constant 0 : index
    %57 = vector.load %arg3[%c2_60, %c0_61, %c0_62] : memref<9x64x64xbf16, #tpu.memory_space<vmem>>, vector<1x64x64xbf16>
    %58 = vector.shape_cast %57 : vector<1x64x64xbf16> to vector<64x64xbf16>
    %cst_63 = arith.constant dense<0.000000e+00> : vector<64x64xf32>
    %59 = tpu.matmul %56, %58, %cst_63 {dimension_numbers = #tpu.dot_dimension_numbers<[1], [0], [0], [1], [0, 0, 1, 1], [], []>} : vector<64x64xbf16>, vector<64x64xbf16>, vector<64x64xf32> -> vector<64x64xf32>
    %60 = arith.addf %53, %59 : vector<64x64xf32>
    %c0_64 = arith.constant 0 : index
    %c1_65 = arith.constant 1 : index
    %c0_66 = arith.constant 0 : index
    %c0_67 = arith.constant 0 : index
    %61 = vector.load %arg16[%c0_64, %c1_65, %c0_66, %c0_67] : memref<2x6x16x64xf32, #tpu.memory_space<vmem>>, vector<2x4x8x64xf32>
    %62 = vector.shape_cast %61 : vector<2x4x8x64xf32> to vector<64x64xf32>
    %63 = arith.truncf %62 : vector<64x64xf32> to vector<64x64xbf16>
    %c3_68 = arith.constant 3 : index
    %c0_69 = arith.constant 0 : index
    %c0_70 = arith.constant 0 : index
    %64 = vector.load %arg3[%c3_68, %c0_69, %c0_70] : memref<9x64x64xbf16, #tpu.memory_space<vmem>>, vector<1x64x64xbf16>
    %65 = vector.shape_cast %64 : vector<1x64x64xbf16> to vector<64x64xbf16>
    %cst_71 = arith.constant dense<0.000000e+00> : vector<64x64xf32>
    %66 = tpu.matmul %63, %65, %cst_71 {dimension_numbers = #tpu.dot_dimension_numbers<[1], [0], [0], [1], [0, 0, 1, 1], [], []>} : vector<64x64xbf16>, vector<64x64xbf16>, vector<64x64xf32> -> vector<64x64xf32>
    %67 = arith.addf %60, %66 : vector<64x64xf32>
    %c0_72 = arith.constant 0 : index
    %c1_73 = arith.constant 1 : index
    %c1_74 = arith.constant 1 : index
    %c0_75 = arith.constant 0 : index
    %68 = vector.load %arg16[%c0_72, %c1_73, %c1_74, %c0_75] : memref<2x6x16x64xf32, #tpu.memory_space<vmem>>, vector<2x4x8x64xf32>
    %69 = vector.shape_cast %68 : vector<2x4x8x64xf32> to vector<64x64xf32>
    %70 = arith.truncf %69 : vector<64x64xf32> to vector<64x64xbf16>
    %c4 = arith.constant 4 : index
    %c0_76 = arith.constant 0 : index
    %c0_77 = arith.constant 0 : index
    %71 = vector.load %arg3[%c4, %c0_76, %c0_77] : memref<9x64x64xbf16, #tpu.memory_space<vmem>>, vector<1x64x64xbf16>
    %72 = vector.shape_cast %71 : vector<1x64x64xbf16> to vector<64x64xbf16>
    %cst_78 = arith.constant dense<0.000000e+00> : vector<64x64xf32>
    %73 = tpu.matmul %70, %72, %cst_78 {dimension_numbers = #tpu.dot_dimension_numbers<[1], [0], [0], [1], [0, 0, 1, 1], [], []>} : vector<64x64xbf16>, vector<64x64xbf16>, vector<64x64xf32> -> vector<64x64xf32>
    %74 = arith.addf %67, %73 : vector<64x64xf32>
    %c0_79 = arith.constant 0 : index
    %c1_80 = arith.constant 1 : index
    %c2_81 = arith.constant 2 : index
    %c0_82 = arith.constant 0 : index
    %75 = vector.load %arg16[%c0_79, %c1_80, %c2_81, %c0_82] : memref<2x6x16x64xf32, #tpu.memory_space<vmem>>, vector<2x4x8x64xf32>
    %76 = vector.shape_cast %75 : vector<2x4x8x64xf32> to vector<64x64xf32>
    %77 = arith.truncf %76 : vector<64x64xf32> to vector<64x64xbf16>
    %c5 = arith.constant 5 : index
    %c0_83 = arith.constant 0 : index
    %c0_84 = arith.constant 0 : index
    %78 = vector.load %arg3[%c5, %c0_83, %c0_84] : memref<9x64x64xbf16, #tpu.memory_space<vmem>>, vector<1x64x64xbf16>
    %79 = vector.shape_cast %78 : vector<1x64x64xbf16> to vector<64x64xbf16>
    %cst_85 = arith.constant dense<0.000000e+00> : vector<64x64xf32>
    %80 = tpu.matmul %77, %79, %cst_85 {dimension_numbers = #tpu.dot_dimension_numbers<[1], [0], [0], [1], [0, 0, 1, 1], [], []>} : vector<64x64xbf16>, vector<64x64xbf16>, vector<64x64xf32> -> vector<64x64xf32>
    %81 = arith.addf %74, %80 : vector<64x64xf32>
    %c0_86 = arith.constant 0 : index
    %c2_87 = arith.constant 2 : index
    %c0_88 = arith.constant 0 : index
    %c0_89 = arith.constant 0 : index
    %82 = vector.load %arg16[%c0_86, %c2_87, %c0_88, %c0_89] : memref<2x6x16x64xf32, #tpu.memory_space<vmem>>, vector<2x4x8x64xf32>
    %83 = vector.shape_cast %82 : vector<2x4x8x64xf32> to vector<64x64xf32>
    %84 = arith.truncf %83 : vector<64x64xf32> to vector<64x64xbf16>
    %c6 = arith.constant 6 : index
    %c0_90 = arith.constant 0 : index
    %c0_91 = arith.constant 0 : index
    %85 = vector.load %arg3[%c6, %c0_90, %c0_91] : memref<9x64x64xbf16, #tpu.memory_space<vmem>>, vector<1x64x64xbf16>
    %86 = vector.shape_cast %85 : vector<1x64x64xbf16> to vector<64x64xbf16>
    %cst_92 = arith.constant dense<0.000000e+00> : vector<64x64xf32>
    %87 = tpu.matmul %84, %86, %cst_92 {dimension_numbers = #tpu.dot_dimension_numbers<[1], [0], [0], [1], [0, 0, 1, 1], [], []>} : vector<64x64xbf16>, vector<64x64xbf16>, vector<64x64xf32> -> vector<64x64xf32>
    %88 = arith.addf %81, %87 : vector<64x64xf32>
    %c0_93 = arith.constant 0 : index
    %c2_94 = arith.constant 2 : index
    %c1_95 = arith.constant 1 : index
    %c0_96 = arith.constant 0 : index
    %89 = vector.load %arg16[%c0_93, %c2_94, %c1_95, %c0_96] : memref<2x6x16x64xf32, #tpu.memory_space<vmem>>, vector<2x4x8x64xf32>
    %90 = vector.shape_cast %89 : vector<2x4x8x64xf32> to vector<64x64xf32>
    %91 = arith.truncf %90 : vector<64x64xf32> to vector<64x64xbf16>
    %c7 = arith.constant 7 : index
    %c0_97 = arith.constant 0 : index
    %c0_98 = arith.constant 0 : index
    %92 = vector.load %arg3[%c7, %c0_97, %c0_98] : memref<9x64x64xbf16, #tpu.memory_space<vmem>>, vector<1x64x64xbf16>
    %93 = vector.shape_cast %92 : vector<1x64x64xbf16> to vector<64x64xbf16>
    %cst_99 = arith.constant dense<0.000000e+00> : vector<64x64xf32>
    %94 = tpu.matmul %91, %93, %cst_99 {dimension_numbers = #tpu.dot_dimension_numbers<[1], [0], [0], [1], [0, 0, 1, 1], [], []>} : vector<64x64xbf16>, vector<64x64xbf16>, vector<64x64xf32> -> vector<64x64xf32>
    %95 = arith.addf %88, %94 : vector<64x64xf32>
    %c0_100 = arith.constant 0 : index
    %c2_101 = arith.constant 2 : index
    %c2_102 = arith.constant 2 : index
    %c0_103 = arith.constant 0 : index
    %96 = vector.load %arg16[%c0_100, %c2_101, %c2_102, %c0_103] : memref<2x6x16x64xf32, #tpu.memory_space<vmem>>, vector<2x4x8x64xf32>
    %97 = vector.shape_cast %96 : vector<2x4x8x64xf32> to vector<64x64xf32>
    %98 = arith.truncf %97 : vector<64x64xf32> to vector<64x64xbf16>
    %c8_104 = arith.constant 8 : index
    %c0_105 = arith.constant 0 : index
    %c0_106 = arith.constant 0 : index
    %99 = vector.load %arg3[%c8_104, %c0_105, %c0_106] : memref<9x64x64xbf16, #tpu.memory_space<vmem>>, vector<1x64x64xbf16>
    %100 = vector.shape_cast %99 : vector<1x64x64xbf16> to vector<64x64xbf16>
    %cst_107 = arith.constant dense<0.000000e+00> : vector<64x64xf32>
    %101 = tpu.matmul %98, %100, %cst_107 {dimension_numbers = #tpu.dot_dimension_numbers<[1], [0], [0], [1], [0, 0, 1, 1], [], []>} : vector<64x64xbf16>, vector<64x64xbf16>, vector<64x64xf32> -> vector<64x64xf32>
    %102 = arith.addf %95, %101 : vector<64x64xf32>
    %c0_108 = arith.constant 0 : index
    %c0_109 = arith.constant 0 : index
    %103 = vector.load %arg4[%c0_108, %c0_109] : memref<1x64xf32, #tpu.memory_space<vmem>>, vector<1x64xf32>
    %104 = vector.broadcast %103 : vector<1x64xf32> to vector<64x64xf32>
    %105 = arith.addf %102, %104 : vector<64x64xf32>
    %cst_110 = arith.constant 0.00999999977 : f32
    %106 = vector.broadcast %cst_110 : f32 to vector<64x64xf32>
    %107 = arith.mulf %106, %105 : vector<64x64xf32>
    %108 = arith.maximumf %105, %107 : vector<64x64xf32>
    %109 = vector.shape_cast %108 : vector<64x64xf32> to vector<2x4x8x64xf32>
    %c0_111 = arith.constant 0 : index
    %c0_112 = arith.constant 0 : index
    %110 = vector.load %arg5[%c0_111, %c0_112] : memref<2x8xf32, #tpu.memory_space<vmem>>, vector<2x8xf32>
    %c0_113 = arith.constant 0 : index
    %c0_114 = arith.constant 0 : index
    %111 = vector.load %arg6[%c0_113, %c0_114] : memref<8x16xf32, #tpu.memory_space<vmem>>, vector<8x16xf32>
    %cst_115 = arith.constant dense<0.000000e+00> : vector<2x16xf32>
    %112 = tpu.matmul %110, %111, %cst_115 {dimension_numbers = #tpu.dot_dimension_numbers<[1], [0], [0], [1], [0, 0, 1, 1], [], []>} : vector<2x8xf32>, vector<8x16xf32>, vector<2x16xf32> -> vector<2x16xf32>
    %c0_116 = arith.constant 0 : index
    %c0_117 = arith.constant 0 : index
    %113 = vector.load %arg7[%c0_116, %c0_117] : memref<1x16xf32, #tpu.memory_space<vmem>>, vector<1x16xf32>
    %114 = vector.broadcast %113 : vector<1x16xf32> to vector<2x16xf32>
    %115 = arith.addf %112, %114 : vector<2x16xf32>
    %cst_118 = arith.constant 0.00999999977 : f32
    %116 = vector.broadcast %cst_118 : f32 to vector<2x16xf32>
    %117 = arith.mulf %116, %115 : vector<2x16xf32>
    %118 = arith.maximumf %115, %117 : vector<2x16xf32>
    %c0_119 = arith.constant 0 : index
    %c0_120 = arith.constant 0 : index
    %119 = vector.load %arg8[%c0_119, %c0_120] : memref<16x4xf32, #tpu.memory_space<vmem>>, vector<16x4xf32>
    %cst_121 = arith.constant dense<0.000000e+00> : vector<2x4xf32>
    %120 = tpu.matmul %118, %119, %cst_121 {dimension_numbers = #tpu.dot_dimension_numbers<[1], [0], [0], [1], [0, 0, 1, 1], [], []>} : vector<2x16xf32>, vector<16x4xf32>, vector<2x4xf32> -> vector<2x4xf32>
    %c0_122 = arith.constant 0 : index
    %c0_123 = arith.constant 0 : index
    %121 = vector.load %arg9[%c0_122, %c0_123] : memref<1x4xf32, #tpu.memory_space<vmem>>, vector<1x4xf32>
    %122 = vector.broadcast %121 : vector<1x4xf32> to vector<2x4xf32>
    %123 = arith.addf %120, %122 : vector<2x4xf32>
    %cst_124 = arith.constant 0.00999999977 : f32
    %124 = vector.broadcast %cst_124 : f32 to vector<2x4xf32>
    %125 = arith.mulf %124, %123 : vector<2x4xf32>
    %126 = arith.maximumf %123, %125 : vector<2x4xf32>
    %c0_125 = arith.constant 0 : index
    %c0_126 = arith.constant 0 : index
    %127 = vector.load %arg11[%c0_125, %c0_126] : memref<4x2xf32, #tpu.memory_space<vmem>>, vector<4x2xf32>
    %cst_127 = arith.constant dense<0.000000e+00> : vector<2x2xf32>
    %128 = tpu.matmul %126, %127, %cst_127 {dimension_numbers = #tpu.dot_dimension_numbers<[1], [0], [0], [1], [0, 0, 1, 1], [], []>} : vector<2x4xf32>, vector<4x2xf32>, vector<2x2xf32> -> vector<2x2xf32>
    %c0_128 = arith.constant 0 : index
    %c0_129 = arith.constant 0 : index
    %129 = vector.load %arg12[%c0_128, %c0_129] : memref<1x2xf32, #tpu.memory_space<vmem>>, vector<1x2xf32>
    %130 = vector.broadcast %129 : vector<1x2xf32> to vector<2x2xf32>
    %131 = arith.addf %128, %130 : vector<2x2xf32>
    %132 = vector.extract_strided_slice %109 {offsets = [0, 0, 0, 0], sizes = [2, 1, 1, 64], strides = [1, 1, 1, 1]} : vector<2x4x8x64xf32> to vector<2x1x1x64xf32>
    %133 = vector.shape_cast %132 : vector<2x1x1x64xf32> to vector<2x64xf32>
    %c0_130 = arith.constant 0 : index
    %c0_131 = arith.constant 0 : index
    %c0_132 = arith.constant 0 : index
    %134 = vector.load %arg10[%c0_130, %c0_131, %c0_132] : memref<16x64x2xf32, #tpu.memory_space<vmem>>, vector<1x64x2xf32>
    %135 = vector.shape_cast %134 : vector<1x64x2xf32> to vector<64x2xf32>
    %cst_133 = arith.constant dense<0.000000e+00> : vector<2x2xf32>
    %136 = tpu.matmul %133, %135, %cst_133 {dimension_numbers = #tpu.dot_dimension_numbers<[1], [0], [0], [1], [0, 0, 1, 1], [], []>} : vector<2x64xf32>, vector<64x2xf32>, vector<2x2xf32> -> vector<2x2xf32>
    %137 = arith.addf %131, %136 : vector<2x2xf32>
    %138 = vector.extract_strided_slice %109 {offsets = [0, 0, 1, 0], sizes = [2, 1, 1, 64], strides = [1, 1, 1, 1]} : vector<2x4x8x64xf32> to vector<2x1x1x64xf32>
    %139 = vector.shape_cast %138 : vector<2x1x1x64xf32> to vector<2x64xf32>
    %c1_134 = arith.constant 1 : index
    %c0_135 = arith.constant 0 : index
    %c0_136 = arith.constant 0 : index
    %140 = vector.load %arg10[%c1_134, %c0_135, %c0_136] : memref<16x64x2xf32, #tpu.memory_space<vmem>>, vector<1x64x2xf32>
    %141 = vector.shape_cast %140 : vector<1x64x2xf32> to vector<64x2xf32>
    %cst_137 = arith.constant dense<0.000000e+00> : vector<2x2xf32>
    %142 = tpu.matmul %139, %141, %cst_137 {dimension_numbers = #tpu.dot_dimension_numbers<[1], [0], [0], [1], [0, 0, 1, 1], [], []>} : vector<2x64xf32>, vector<64x2xf32>, vector<2x2xf32> -> vector<2x2xf32>
    %143 = arith.addf %137, %142 : vector<2x2xf32>
    %144 = vector.extract_strided_slice %109 {offsets = [0, 0, 2, 0], sizes = [2, 1, 1, 64], strides = [1, 1, 1, 1]} : vector<2x4x8x64xf32> to vector<2x1x1x64xf32>
    %145 = vector.shape_cast %144 : vector<2x1x1x64xf32> to vector<2x64xf32>
    %c2_138 = arith.constant 2 : index
    %c0_139 = arith.constant 0 : index
    %c0_140 = arith.constant 0 : index
    %146 = vector.load %arg10[%c2_138, %c0_139, %c0_140] : memref<16x64x2xf32, #tpu.memory_space<vmem>>, vector<1x64x2xf32>
    %147 = vector.shape_cast %146 : vector<1x64x2xf32> to vector<64x2xf32>
    %cst_141 = arith.constant dense<0.000000e+00> : vector<2x2xf32>
    %148 = tpu.matmul %145, %147, %cst_141 {dimension_numbers = #tpu.dot_dimension_numbers<[1], [0], [0], [1], [0, 0, 1, 1], [], []>} : vector<2x64xf32>, vector<64x2xf32>, vector<2x2xf32> -> vector<2x2xf32>
    %149 = arith.addf %143, %148 : vector<2x2xf32>
    %150 = vector.extract_strided_slice %109 {offsets = [0, 0, 3, 0], sizes = [2, 1, 1, 64], strides = [1, 1, 1, 1]} : vector<2x4x8x64xf32> to vector<2x1x1x64xf32>
    %151 = vector.shape_cast %150 : vector<2x1x1x64xf32> to vector<2x64xf32>
    %c3_142 = arith.constant 3 : index
    %c0_143 = arith.constant 0 : index
    %c0_144 = arith.constant 0 : index
    %152 = vector.load %arg10[%c3_142, %c0_143, %c0_144] : memref<16x64x2xf32, #tpu.memory_space<vmem>>, vector<1x64x2xf32>
    %153 = vector.shape_cast %152 : vector<1x64x2xf32> to vector<64x2xf32>
    %cst_145 = arith.constant dense<0.000000e+00> : vector<2x2xf32>
    %154 = tpu.matmul %151, %153, %cst_145 {dimension_numbers = #tpu.dot_dimension_numbers<[1], [0], [0], [1], [0, 0, 1, 1], [], []>} : vector<2x64xf32>, vector<64x2xf32>, vector<2x2xf32> -> vector<2x2xf32>
    %155 = arith.addf %149, %154 : vector<2x2xf32>
    %156 = vector.extract_strided_slice %109 {offsets = [0, 1, 0, 0], sizes = [2, 1, 1, 64], strides = [1, 1, 1, 1]} : vector<2x4x8x64xf32> to vector<2x1x1x64xf32>
    %157 = vector.shape_cast %156 : vector<2x1x1x64xf32> to vector<2x64xf32>
    %c4_146 = arith.constant 4 : index
    %c0_147 = arith.constant 0 : index
    %c0_148 = arith.constant 0 : index
    %158 = vector.load %arg10[%c4_146, %c0_147, %c0_148] : memref<16x64x2xf32, #tpu.memory_space<vmem>>, vector<1x64x2xf32>
    %159 = vector.shape_cast %158 : vector<1x64x2xf32> to vector<64x2xf32>
    %cst_149 = arith.constant dense<0.000000e+00> : vector<2x2xf32>
    %160 = tpu.matmul %157, %159, %cst_149 {dimension_numbers = #tpu.dot_dimension_numbers<[1], [0], [0], [1], [0, 0, 1, 1], [], []>} : vector<2x64xf32>, vector<64x2xf32>, vector<2x2xf32> -> vector<2x2xf32>
    %161 = arith.addf %155, %160 : vector<2x2xf32>
    %162 = vector.extract_strided_slice %109 {offsets = [0, 1, 1, 0], sizes = [2, 1, 1, 64], strides = [1, 1, 1, 1]} : vector<2x4x8x64xf32> to vector<2x1x1x64xf32>
    %163 = vector.shape_cast %162 : vector<2x1x1x64xf32> to vector<2x64xf32>
    %c5_150 = arith.constant 5 : index
    %c0_151 = arith.constant 0 : index
    %c0_152 = arith.constant 0 : index
    %164 = vector.load %arg10[%c5_150, %c0_151, %c0_152] : memref<16x64x2xf32, #tpu.memory_space<vmem>>, vector<1x64x2xf32>
    %165 = vector.shape_cast %164 : vector<1x64x2xf32> to vector<64x2xf32>
    %cst_153 = arith.constant dense<0.000000e+00> : vector<2x2xf32>
    %166 = tpu.matmul %163, %165, %cst_153 {dimension_numbers = #tpu.dot_dimension_numbers<[1], [0], [0], [1], [0, 0, 1, 1], [], []>} : vector<2x64xf32>, vector<64x2xf32>, vector<2x2xf32> -> vector<2x2xf32>
    %167 = arith.addf %161, %166 : vector<2x2xf32>
    %168 = vector.extract_strided_slice %109 {offsets = [0, 1, 2, 0], sizes = [2, 1, 1, 64], strides = [1, 1, 1, 1]} : vector<2x4x8x64xf32> to vector<2x1x1x64xf32>
    %169 = vector.shape_cast %168 : vector<2x1x1x64xf32> to vector<2x64xf32>
    %c6_154 = arith.constant 6 : index
    %c0_155 = arith.constant 0 : index
    %c0_156 = arith.constant 0 : index
    %170 = vector.load %arg10[%c6_154, %c0_155, %c0_156] : memref<16x64x2xf32, #tpu.memory_space<vmem>>, vector<1x64x2xf32>
    %171 = vector.shape_cast %170 : vector<1x64x2xf32> to vector<64x2xf32>
    %cst_157 = arith.constant dense<0.000000e+00> : vector<2x2xf32>
    %172 = tpu.matmul %169, %171, %cst_157 {dimension_numbers = #tpu.dot_dimension_numbers<[1], [0], [0], [1], [0, 0, 1, 1], [], []>} : vector<2x64xf32>, vector<64x2xf32>, vector<2x2xf32> -> vector<2x2xf32>
    %173 = arith.addf %167, %172 : vector<2x2xf32>
    %174 = vector.extract_strided_slice %109 {offsets = [0, 1, 3, 0], sizes = [2, 1, 1, 64], strides = [1, 1, 1, 1]} : vector<2x4x8x64xf32> to vector<2x1x1x64xf32>
    %175 = vector.shape_cast %174 : vector<2x1x1x64xf32> to vector<2x64xf32>
    %c7_158 = arith.constant 7 : index
    %c0_159 = arith.constant 0 : index
    %c0_160 = arith.constant 0 : index
    %176 = vector.load %arg10[%c7_158, %c0_159, %c0_160] : memref<16x64x2xf32, #tpu.memory_space<vmem>>, vector<1x64x2xf32>
    %177 = vector.shape_cast %176 : vector<1x64x2xf32> to vector<64x2xf32>
    %cst_161 = arith.constant dense<0.000000e+00> : vector<2x2xf32>
    %178 = tpu.matmul %175, %177, %cst_161 {dimension_numbers = #tpu.dot_dimension_numbers<[1], [0], [0], [1], [0, 0, 1, 1], [], []>} : vector<2x64xf32>, vector<64x2xf32>, vector<2x2xf32> -> vector<2x2xf32>
    %179 = arith.addf %173, %178 : vector<2x2xf32>
    %180 = vector.extract_strided_slice %109 {offsets = [0, 2, 0, 0], sizes = [2, 1, 1, 64], strides = [1, 1, 1, 1]} : vector<2x4x8x64xf32> to vector<2x1x1x64xf32>
    %181 = vector.shape_cast %180 : vector<2x1x1x64xf32> to vector<2x64xf32>
    %c8_162 = arith.constant 8 : index
    %c0_163 = arith.constant 0 : index
    %c0_164 = arith.constant 0 : index
    %182 = vector.load %arg10[%c8_162, %c0_163, %c0_164] : memref<16x64x2xf32, #tpu.memory_space<vmem>>, vector<1x64x2xf32>
    %183 = vector.shape_cast %182 : vector<1x64x2xf32> to vector<64x2xf32>
    %cst_165 = arith.constant dense<0.000000e+00> : vector<2x2xf32>
    %184 = tpu.matmul %181, %183, %cst_165 {dimension_numbers = #tpu.dot_dimension_numbers<[1], [0], [0], [1], [0, 0, 1, 1], [], []>} : vector<2x64xf32>, vector<64x2xf32>, vector<2x2xf32> -> vector<2x2xf32>
    %185 = arith.addf %179, %184 : vector<2x2xf32>
    %186 = vector.extract_strided_slice %109 {offsets = [0, 2, 1, 0], sizes = [2, 1, 1, 64], strides = [1, 1, 1, 1]} : vector<2x4x8x64xf32> to vector<2x1x1x64xf32>
    %187 = vector.shape_cast %186 : vector<2x1x1x64xf32> to vector<2x64xf32>
    %c9 = arith.constant 9 : index
    %c0_166 = arith.constant 0 : index
    %c0_167 = arith.constant 0 : index
    %188 = vector.load %arg10[%c9, %c0_166, %c0_167] : memref<16x64x2xf32, #tpu.memory_space<vmem>>, vector<1x64x2xf32>
    %189 = vector.shape_cast %188 : vector<1x64x2xf32> to vector<64x2xf32>
    %cst_168 = arith.constant dense<0.000000e+00> : vector<2x2xf32>
    %190 = tpu.matmul %187, %189, %cst_168 {dimension_numbers = #tpu.dot_dimension_numbers<[1], [0], [0], [1], [0, 0, 1, 1], [], []>} : vector<2x64xf32>, vector<64x2xf32>, vector<2x2xf32> -> vector<2x2xf32>
    %191 = arith.addf %185, %190 : vector<2x2xf32>
    %192 = vector.extract_strided_slice %109 {offsets = [0, 2, 2, 0], sizes = [2, 1, 1, 64], strides = [1, 1, 1, 1]} : vector<2x4x8x64xf32> to vector<2x1x1x64xf32>
    %193 = vector.shape_cast %192 : vector<2x1x1x64xf32> to vector<2x64xf32>
    %c10 = arith.constant 10 : index
    %c0_169 = arith.constant 0 : index
    %c0_170 = arith.constant 0 : index
    %194 = vector.load %arg10[%c10, %c0_169, %c0_170] : memref<16x64x2xf32, #tpu.memory_space<vmem>>, vector<1x64x2xf32>
    %195 = vector.shape_cast %194 : vector<1x64x2xf32> to vector<64x2xf32>
    %cst_171 = arith.constant dense<0.000000e+00> : vector<2x2xf32>
    %196 = tpu.matmul %193, %195, %cst_171 {dimension_numbers = #tpu.dot_dimension_numbers<[1], [0], [0], [1], [0, 0, 1, 1], [], []>} : vector<2x64xf32>, vector<64x2xf32>, vector<2x2xf32> -> vector<2x2xf32>
    %197 = arith.addf %191, %196 : vector<2x2xf32>
    %198 = vector.extract_strided_slice %109 {offsets = [0, 2, 3, 0], sizes = [2, 1, 1, 64], strides = [1, 1, 1, 1]} : vector<2x4x8x64xf32> to vector<2x1x1x64xf32>
    %199 = vector.shape_cast %198 : vector<2x1x1x64xf32> to vector<2x64xf32>
    %c11 = arith.constant 11 : index
    %c0_172 = arith.constant 0 : index
    %c0_173 = arith.constant 0 : index
    %200 = vector.load %arg10[%c11, %c0_172, %c0_173] : memref<16x64x2xf32, #tpu.memory_space<vmem>>, vector<1x64x2xf32>
    %201 = vector.shape_cast %200 : vector<1x64x2xf32> to vector<64x2xf32>
    %cst_174 = arith.constant dense<0.000000e+00> : vector<2x2xf32>
    %202 = tpu.matmul %199, %201, %cst_174 {dimension_numbers = #tpu.dot_dimension_numbers<[1], [0], [0], [1], [0, 0, 1, 1], [], []>} : vector<2x64xf32>, vector<64x2xf32>, vector<2x2xf32> -> vector<2x2xf32>
    %203 = arith.addf %197, %202 : vector<2x2xf32>
    %204 = vector.extract_strided_slice %109 {offsets = [0, 3, 0, 0], sizes = [2, 1, 1, 64], strides = [1, 1, 1, 1]} : vector<2x4x8x64xf32> to vector<2x1x1x64xf32>
    %205 = vector.shape_cast %204 : vector<2x1x1x64xf32> to vector<2x64xf32>
    %c12 = arith.constant 12 : index
    %c0_175 = arith.constant 0 : index
    %c0_176 = arith.constant 0 : index
    %206 = vector.load %arg10[%c12, %c0_175, %c0_176] : memref<16x64x2xf32, #tpu.memory_space<vmem>>, vector<1x64x2xf32>
    %207 = vector.shape_cast %206 : vector<1x64x2xf32> to vector<64x2xf32>
    %cst_177 = arith.constant dense<0.000000e+00> : vector<2x2xf32>
    %208 = tpu.matmul %205, %207, %cst_177 {dimension_numbers = #tpu.dot_dimension_numbers<[1], [0], [0], [1], [0, 0, 1, 1], [], []>} : vector<2x64xf32>, vector<64x2xf32>, vector<2x2xf32> -> vector<2x2xf32>
    %209 = arith.addf %203, %208 : vector<2x2xf32>
    %210 = vector.extract_strided_slice %109 {offsets = [0, 3, 1, 0], sizes = [2, 1, 1, 64], strides = [1, 1, 1, 1]} : vector<2x4x8x64xf32> to vector<2x1x1x64xf32>
    %211 = vector.shape_cast %210 : vector<2x1x1x64xf32> to vector<2x64xf32>
    %c13 = arith.constant 13 : index
    %c0_178 = arith.constant 0 : index
    %c0_179 = arith.constant 0 : index
    %212 = vector.load %arg10[%c13, %c0_178, %c0_179] : memref<16x64x2xf32, #tpu.memory_space<vmem>>, vector<1x64x2xf32>
    %213 = vector.shape_cast %212 : vector<1x64x2xf32> to vector<64x2xf32>
    %cst_180 = arith.constant dense<0.000000e+00> : vector<2x2xf32>
    %214 = tpu.matmul %211, %213, %cst_180 {dimension_numbers = #tpu.dot_dimension_numbers<[1], [0], [0], [1], [0, 0, 1, 1], [], []>} : vector<2x64xf32>, vector<64x2xf32>, vector<2x2xf32> -> vector<2x2xf32>
    %215 = arith.addf %209, %214 : vector<2x2xf32>
    %216 = vector.extract_strided_slice %109 {offsets = [0, 3, 2, 0], sizes = [2, 1, 1, 64], strides = [1, 1, 1, 1]} : vector<2x4x8x64xf32> to vector<2x1x1x64xf32>
    %217 = vector.shape_cast %216 : vector<2x1x1x64xf32> to vector<2x64xf32>
    %c14 = arith.constant 14 : index
    %c0_181 = arith.constant 0 : index
    %c0_182 = arith.constant 0 : index
    %218 = vector.load %arg10[%c14, %c0_181, %c0_182] : memref<16x64x2xf32, #tpu.memory_space<vmem>>, vector<1x64x2xf32>
    %219 = vector.shape_cast %218 : vector<1x64x2xf32> to vector<64x2xf32>
    %cst_183 = arith.constant dense<0.000000e+00> : vector<2x2xf32>
    %220 = tpu.matmul %217, %219, %cst_183 {dimension_numbers = #tpu.dot_dimension_numbers<[1], [0], [0], [1], [0, 0, 1, 1], [], []>} : vector<2x64xf32>, vector<64x2xf32>, vector<2x2xf32> -> vector<2x2xf32>
    %221 = arith.addf %215, %220 : vector<2x2xf32>
    %222 = vector.extract_strided_slice %109 {offsets = [0, 3, 3, 0], sizes = [2, 1, 1, 64], strides = [1, 1, 1, 1]} : vector<2x4x8x64xf32> to vector<2x1x1x64xf32>
    %223 = vector.shape_cast %222 : vector<2x1x1x64xf32> to vector<2x64xf32>
    %c15 = arith.constant 15 : index
    %c0_184 = arith.constant 0 : index
    %c0_185 = arith.constant 0 : index
    %224 = vector.load %arg10[%c15, %c0_184, %c0_185] : memref<16x64x2xf32, #tpu.memory_space<vmem>>, vector<1x64x2xf32>
    %225 = vector.shape_cast %224 : vector<1x64x2xf32> to vector<64x2xf32>
    %cst_186 = arith.constant dense<0.000000e+00> : vector<2x2xf32>
    %226 = tpu.matmul %223, %225, %cst_186 {dimension_numbers = #tpu.dot_dimension_numbers<[1], [0], [0], [1], [0, 0, 1, 1], [], []>} : vector<2x64xf32>, vector<64x2xf32>, vector<2x2xf32> -> vector<2x2xf32>
    %227 = arith.addf %221, %226 : vector<2x2xf32>
    %c0_187 = arith.constant 0 : index
    %c0_188 = arith.constant 0 : index
    %228 = vector.load %arg14[%c0_187, %c0_188] : memref<2x2xf32, #tpu.memory_space<vmem>>, vector<2x2xf32>
    tpu.vector_store %arg14[%c0_187, %c0_188], %227 {strides = array<i32>} : memref<2x2xf32, #tpu.memory_space<vmem>>, vector<2x2xf32>,
    %c0_189 = arith.constant 0 : index
    %c0_190 = arith.constant 0 : index
    %229 = vector.load %arg13[%c0_189, %c0_190] : memref<1x2xf32, #tpu.memory_space<vmem>>, vector<1x2xf32>
    %cst_191 = arith.constant 2.000000e+00 : f32
    %230 = vector.broadcast %cst_191 : f32 to vector<1x2xf32>
    %231 = arith.mulf %230, %229 : vector<1x2xf32>
    %232 = math.exp %231 : vector<1x2xf32>
    %233 = vector.shape_cast %232 : vector<1x2xf32> to vector<1x2xf32>
    %234 = vector.broadcast %233 : vector<1x2xf32> to vector<2x2xf32>
    %c0_192 = arith.constant 0 : index
    %c0_193 = arith.constant 0 : index
    %235 = vector.load %arg15[%c0_192, %c0_193] : memref<2x2xf32, #tpu.memory_space<vmem>>, vector<2x2xf32>
    tpu.vector_store %arg15[%c0_192, %c0_193], %234 {strides = array<i32>} : memref<2x2xf32, #tpu.memory_space<vmem>>, vector<2x2xf32>,
    return
  }
}

</mosaic_0001>

<llo_original>
// kernel: policy_forward.3
$region0: #{policy_forward.3}
  #allocation0 [shape = 'u32[]', space=smem, size = 0x4, offset = 0x4, fixed_abs, tag = 'smem constant byte address 0x4 - core index']
  #allocation1 [shape = 'u32[144,128]{1,0:T(1,128)}', space=vmem, size = 0x12000, scoped, tag = 'internal scratch']
  #allocation2 [shape = 'f32[1]{0:T(128)S(6)}', space=smem, size = 0x200, scoped, tag = 'scoped memory for policy_forward.3']
  %s0 = inlined_call_operand.vmem [shape: f32[2,3,66,66], index: 0, kind: input, shape index: {}]
  %s1 = inlined_call_operand.vmem [shape: f32[27], index: 1, kind: input, shape index: {}]
  %s2 = inlined_call_operand.<no memory space> [shape: f32[1], index: 2, kind: input, shape index: {}]
  %s3 = inlined_call_operand.vmem [shape: f32[1,2,64,64], index: 3, kind: output, shape index: {}]
  %s4 = sld [smem:[#allocation0]]
  $region26: #{policy_forward.3} parent=0
    _
  %s6 = ssub.s32 1, %s4
  %s7 = scalar_select 0, %s6, %s4
  %8 = sst [smem:[#allocation2]] %s2
  $region1: #{policy_forward.3} parent=0
    #allocation3 [shape = 'u8[512]{0}', space=smem, size = 0x200, scoped, tag = 'input window, operand 1, single buffered']
    #allocation4 [shape = 's32[1]{0}', space=sflag, size = 0x4, scoped, tag = 'scoped memory for policy_forward.3']
    %9 = vsyncpa [#allocation4], 0
    // Predicated region
    $region2: #{policy_forward.3} parent=1 // pred_check
      _
    $region3: #{policy_forward.3} parent=1 // pred_check_branch
      %11 = sbr.rel (0) target = $region5
    $region4: #{policy_forward.3} parent=1 // pred_region
      _
    $region5: #{policy_forward.3} parent=1 // pred_fallthru
      _
    // Predicated region
    $region6: #{policy_forward.3} parent=1 // pred_check
      _
    $region7: #{policy_forward.3} parent=1 // pred_check_branch
      %13 = sbr.rel (0) target = $region9
    $region8: #{policy_forward.3} parent=1 // pred_region
      %s15 = ssub.s32 16, 16
      %16 = vsyncadd [#allocation4], %s15
      %s18 = sshll.u32 %s1, 4
      %s19 = int_to_ptr.vmem [resolvable:$true] %s18
      %21 = dma.vmem_to_smem %s19, 16, [#allocation3], [#allocation4]
    $region9: #{policy_forward.3} parent=1 // pred_fallthru
      _
    // Predicated region
    $region10: #{policy_forward.3} parent=1 // pred_check
      _
    $region11: #{policy_forward.3} parent=1 // pred_check_branch
      %23 = sbr.rel (0) target = $region13
    $region12: #{policy_forward.3} parent=1 // pred_region
      _
    $region13: #{policy_forward.3} parent=1 // pred_fallthru
      _
    // Predicated region
    $region14: #{policy_forward.3} parent=1 // pred_check
      _
    $region15: #{policy_forward.3} parent=1 // pred_check_branch
      %25 = sbr.rel (0) target = $region17
    $region16: #{policy_forward.3} parent=1 // pred_region
      %26 = dma.done [#allocation4], 16
    $region17: #{policy_forward.3} parent=1 // pred_fallthru
      _
    %27 = sfence
    %v28 = vld [vmem:[%s0] sm:$0xff]
    %v29 = vld [vmem:[%s0 + $0x8] sm:$0xff]
    %v30 = vld [vmem:[%s0 + $0x10] sm:$0xff]
    %v31 = vld [vmem:[%s0 + $0x18] sm:$0xff]
    %v32 = vld [vmem:[%s0 + $0x20] sm:$0xff]
    %v33 = vld [vmem:[%s0 + $0x28] sm:$0xff]
    %v34 = vld [vmem:[%s0 + $0x30] sm:$0xff]
    %v35 = vld [vmem:[%s0 + $0x38] sm:$0xff]
    %v36 = vld [vmem:[%s0 + $0x40] sm:$0x3]
    %v37 = vld [vmem:[%s0 + $0xd8] sm:$0xff]
    %v38 = vld [vmem:[%s0 + $0xe0] sm:$0xff]
    %v39 = vld [vmem:[%s0 + $0xe8] sm:$0xff]
    %v40 = vld [vmem:[%s0 + $0xf0] sm:$0xff]
    %v41 = vld [vmem:[%s0 + $0xf8] sm:$0xff]
    %v42 = vld [vmem:[%s0 + $0x100] sm:$0xff]
    %v43 = vld [vmem:[%s0 + $0x108] sm:$0xff]
    %v44 = vld [vmem:[%s0 + $0x110] sm:$0xff]
    %v45 = vld [vmem:[%s0 + $0x118] sm:$0x3]
    %s46 = sld [smem:[#allocation3]]
    %v47 = vstv %s46
    %v48 = vmul.f32 %v47, %v28
    %v49 = vmul.f32 %v47, %v29
    %v50 = vmul.f32 %v47, %v30
    %v51 = vmul.f32 %v47, %v31
    %v52 = vmul.f32 %v47, %v32
    %v53 = vmul.f32 %v47, %v33
    %v54 = vmul.f32 %v47, %v34
    %v55 = vmul.f32 %v47, %v35
    %v56 = vmul.f32 %v47, %v37
    %v57 = vmul.f32 %v47, %v38
    %v58 = vmul.f32 %v47, %v39
    %v59 = vmul.f32 %v47, %v40
    %v60 = vmul.f32 %v47, %v41
    %v61 = vmul.f32 %v47, %v42
    %v62 = vmul.f32 %v47, %v43
    %v63 = vmul.f32 %v47, %v44
    %v64 = vadd.f32 %v48, 0.0
    %v65 = vadd.f32 %v49, 0.0
    %v66 = vadd.f32 %v50, 0.0
    %v67 = vadd.f32 %v51, 0.0
    %v68 = vadd.f32 %v52, 0.0
    %v69 = vadd.f32 %v53, 0.0
    %v70 = vadd.f32 %v54, 0.0
    %v71 = vadd.f32 %v55, 0.0
    %v72 = vadd.f32 %v56, 0.0
    %v73 = vadd.f32 %v57, 0.0
    %v74 = vadd.f32 %v58, 0.0
    %v75 = vadd.f32 %v59, 0.0
    %v76 = vadd.f32 %v60, 0.0
    %v77 = vadd.f32 %v61, 0.0
    %v78 = vadd.f32 %v62, 0.0
    %v79 = vadd.f32 %v63, 0.0
    %s80 = sld [smem:[#allocation3 + $0x1]]
    %v81 = vstv %s80
    %v82 = vmul.f32 %v81, %v28
    %v83 = vmul.f32 %v81, %v29
    %v84 = vmul.f32 %v81, %v30
    %v85 = vmul.f32 %v81, %v31
    %v86 = vmul.f32 %v81, %v32
    %v87 = vmul.f32 %v81, %v33
    %v88 = vmul.f32 %v81, %v34
    %v89 = vmul.f32 %v81, %v35
    %v90 = vmul.f32 %v81, %v37
    %v91 = vmul.f32 %v81, %v38
    %v92 = vmul.f32 %v81, %v39
    %v93 = vmul.f32 %v81, %v40
    %v94 = vmul.f32 %v81, %v41
    %v95 = vmul.f32 %v81, %v42
    %v96 = vmul.f32 %v81, %v43
    %v97 = vmul.f32 %v81, %v44
    %114 = vrot.lane.b32.xlu0 %v82, 127
    %v115 = vpop.permute.xlu0 %114
    %116 = vrot.lane.b32.xlu0 %v83, 127
    %v117 = vpop.permute.xlu0 %116
    %118 = vrot.lane.b32.xlu0 %v84, 127
    %v119 = vpop.permute.xlu0 %118
    %120 = vrot.lane.b32.xlu0 %v85, 127
    %v121 = vpop.permute.xlu0 %120
    %122 = vrot.lane.b32.xlu0 %v86, 127
    %v123 = vpop.permute.xlu0 %122
    %124 = vrot.lane.b32.xlu0 %v87, 127
    %v125 = vpop.permute.xlu0 %124
    %126 = vrot.lane.b32.xlu0 %v88, 127
    %v127 = vpop.permute.xlu0 %126
    %128 = vrot.lane.b32.xlu0 %v89, 127
    %v129 = vpop.permute.xlu0 %128
    %130 = vrot.lane.b32.xlu0 %v90, 127
    %v131 = vpop.permute.xlu0 %130
    %132 = vrot.lane.b32.xlu0 %v91, 127
    %v133 = vpop.permute.xlu0 %132
    %134 = vrot.lane.b32.xlu0 %v92, 127
    %v135 = vpop.permute.xlu0 %134
    %136 = vrot.lane.b32.xlu0 %v93, 127
    %v137 = vpop.permute.xlu0 %136
    %138 = vrot.lane.b32.xlu0 %v94, 127
    %v139 = vpop.permute.xlu0 %138
    %140 = vrot.lane.b32.xlu0 %v95, 127
    %v141 = vpop.permute.xlu0 %140
    %142 = vrot.lane.b32.xlu0 %v96, 127
    %v143 = vpop.permute.xlu0 %142
    %144 = vrot.lane.b32.xlu0 %v97, 127
    %v145 = vpop.permute.xlu0 %144
    %v162 = vadd.f32 %v64, %v115
    %v163 = vadd.f32 %v65, %v117
    %v164 = vadd.f32 %v66, %v119
    %v165 = vadd.f32 %v67, %v121
    %v166 = vadd.f32 %v68, %v123
    %v167 = vadd.f32 %v69, %v125
    %v168 = vadd.f32 %v70, %v127
    %v169 = vadd.f32 %v71, %v129
    %v170 = vadd.f32 %v72, %v131
    %v171 = vadd.f32 %v73, %v133
    %v172 = vadd.f32 %v74, %v135
    %v173 = vadd.f32 %v75, %v137
    %v174 = vadd.f32 %v76, %v139
    %v175 = vadd.f32 %v77, %v141
    %v176 = vadd.f32 %v78, %v143
    %v177 = vadd.f32 %v79, %v145
    %s178 = sld [smem:[#allocation3 + $0x2]]
    %v179 = vstv %s178
    %v180 = vmul.f32 %v179, %v28
    %v181 = vmul.f32 %v179, %v29
    %v182 = vmul.f32 %v179, %v30
    %v183 = vmul.f32 %v179, %v31
    %v184 = vmul.f32 %v179, %v32
    %v185 = vmul.f32 %v179, %v33
    %v186 = vmul.f32 %v179, %v34
    %v187 = vmul.f32 %v179, %v35
    %v188 = vmul.f32 %v179, %v37
    %v189 = vmul.f32 %v179, %v38
    %v190 = vmul.f32 %v179, %v39
    %v191 = vmul.f32 %v179, %v40
    %v192 = vmul.f32 %v179, %v41
    %v193 = vmul.f32 %v179, %v42
    %v194 = vmul.f32 %v179, %v43
    %v195 = vmul.f32 %v179, %v44
    %212 = vrot.lane.b32.xlu0 %v180, 126
    %v213 = vpop.permute.xlu0 %212
    %214 = vrot.lane.b32.xlu0 %v181, 126
    %v215 = vpop.permute.xlu0 %214
    %216 = vrot.lane.b32.xlu0 %v182, 126
    %v217 = vpop.permute.xlu0 %216
    %218 = vrot.lane.b32.xlu0 %v183, 126
    %v219 = vpop.permute.xlu0 %218
    %220 = vrot.lane.b32.xlu0 %v184, 126
    %v221 = vpop.permute.xlu0 %220
    %222 = vrot.lane.b32.xlu0 %v185, 126
    %v223 = vpop.permute.xlu0 %222
    %224 = vrot.lane.b32.xlu0 %v186, 126
    %v225 = vpop.permute.xlu0 %224
    %226 = vrot.lane.b32.xlu0 %v187, 126
    %v227 = vpop.permute.xlu0 %226
    %228 = vrot.lane.b32.xlu0 %v188, 126
    %v229 = vpop.permute.xlu0 %228
    %230 = vrot.lane.b32.xlu0 %v189, 126
    %v231 = vpop.permute.xlu0 %230
    %232 = vrot.lane.b32.xlu0 %v190, 126
    %v233 = vpop.permute.xlu0 %232
    %234 = vrot.lane.b32.xlu0 %v191, 126
    %v235 = vpop.permute.xlu0 %234
    %236 = vrot.lane.b32.xlu0 %v192, 126
    %v237 = vpop.permute.xlu0 %236
    %238 = vrot.lane.b32.xlu0 %v193, 126
    %v239 = vpop.permute.xlu0 %238
    %240 = vrot.lane.b32.xlu0 %v194, 126
    %v241 = vpop.permute.xlu0 %240
    %242 = vrot.lane.b32.xlu0 %v195, 126
    %v243 = vpop.permute.xlu0 %242
    %v260 = vadd.f32 %v162, %v213
    %v261 = vadd.f32 %v163, %v215
    %v262 = vadd.f32 %v164, %v217
    %v263 = vadd.f32 %v165, %v219
    %v264 = vadd.f32 %v166, %v221
    %v265 = vadd.f32 %v167, %v223
    %v266 = vadd.f32 %v168, %v225
    %v267 = vadd.f32 %v169, %v227
    %v268 = vadd.f32 %v170, %v229
    %v269 = vadd.f32 %v171, %v231
    %v270 = vadd.f32 %v172, %v233
    %v271 = vadd.f32 %v173, %v235
    %v272 = vadd.f32 %v174, %v237
    %v273 = vadd.f32 %v175, %v239
    %v274 = vadd.f32 %v176, %v241
    %v275 = vadd.f32 %v177, %v243
    %s276 = sld [smem:[#allocation3 + $0x3]]
    %v277 = vstv %s276
    %v278 = vmul.f32 %v277, %v28
    %v279 = vmul.f32 %v277, %v29
    %v280 = vmul.f32 %v277, %v30
    %v281 = vmul.f32 %v277, %v31
    %v282 = vmul.f32 %v277, %v32
    %v283 = vmul.f32 %v277, %v33
    %v284 = vmul.f32 %v277, %v34
    %v285 = vmul.f32 %v277, %v35
    %v286 = vmul.f32 %v277, %v36
    %v287 = vmul.f32 %v277, %v37
    %v288 = vmul.f32 %v277, %v38
    %v289 = vmul.f32 %v277, %v39
    %v290 = vmul.f32 %v277, %v40
    %v291 = vmul.f32 %v277, %v41
    %v292 = vmul.f32 %v277, %v42
    %v293 = vmul.f32 %v277, %v43
    %v294 = vmul.f32 %v277, %v44
    %v295 = vmul.f32 %v277, %v45
    %vm314 = vcmask 1046528
    %v315 = vrot.slane %v278, 1
    %v316 = vrot.slane %v279, 1
    %v317 = vsel %vm314, %v315, %v316
    %v318 = vrot.slane %v280, 1
    %v319 = vsel %vm314, %v316, %v318
    %v320 = vrot.slane %v281, 1
    %v321 = vsel %vm314, %v318, %v320
    %v322 = vrot.slane %v282, 1
    %v323 = vsel %vm314, %v320, %v322
    %v324 = vrot.slane %v283, 1
    %v325 = vsel %vm314, %v322, %v324
    %v326 = vrot.slane %v284, 1
    %v327 = vsel %vm314, %v324, %v326
    %v328 = vrot.slane %v285, 1
    %v329 = vsel %vm314, %v326, %v328
    %v330 = vrot.slane %v286, 1
    %v331 = vsel %vm314, %v328, %v330
    %v332 = vrot.slane %v287, 1
    %v333 = vrot.slane %v288, 1
    %v334 = vsel %vm314, %v332, %v333
    %v335 = vrot.slane %v289, 1
    %v336 = vsel %vm314, %v333, %v335
    %v337 = vrot.slane %v290, 1
    %v338 = vsel %vm314, %v335, %v337
    %v339 = vrot.slane %v291, 1
    %v340 = vsel %vm314, %v337, %v339
    %v341 = vrot.slane %v292, 1
    %v342 = vsel %vm314, %v339, %v341
    %v343 = vrot.slane %v293, 1
    %v344 = vsel %vm314, %v341, %v343
    %v345 = vrot.slane %v294, 1
    %v346 = vsel %vm314, %v343, %v345
    %v347 = vrot.slane %v295, 1
    %v348 = vsel %vm314, %v345, %v347
    %v365 = vadd.f32 %v260, %v317
    %v366 = vadd.f32 %v261, %v319
    %v367 = vadd.f32 %v262, %v321
    %v368 = vadd.f32 %v263, %v323
    %v369 = vadd.f32 %v264, %v325
    %v370 = vadd.f32 %v265, %v327
    %v371 = vadd.f32 %v266, %v329
    %v372 = vadd.f32 %v267, %v331
    %v373 = vadd.f32 %v268, %v334
    %v374 = vadd.f32 %v269, %v336
    %v375 = vadd.f32 %v270, %v338
    %v376 = vadd.f32 %v271, %v340
    %v377 = vadd.f32 %v272, %v342
    %v378 = vadd.f32 %v273, %v344
    %v379 = vadd.f32 %v274, %v346
    %v380 = vadd.f32 %v275, %v348
    %s381 = sld [smem:[#allocation3 + $0x4]]
    %v382 = vstv %s381
    %v383 = vmul.f32 %v382, %v28
    %v384 = vmul.f32 %v382, %v29
    %v385 = vmul.f32 %v382, %v30
    %v386 = vmul.f32 %v382, %v31
    %v387 = vmul.f32 %v382, %v32
    %v388 = vmul.f32 %v382, %v33
    %v389 = vmul.f32 %v382, %v34
    %v390 = vmul.f32 %v382, %v35
    %v391 = vmul.f32 %v382, %v36
    %v392 = vmul.f32 %v382, %v37
    %v393 = vmul.f32 %v382, %v38
    %v394 = vmul.f32 %v382, %v39
    %v395 = vmul.f32 %v382, %v40
    %v396 = vmul.f32 %v382, %v41
    %v397 = vmul.f32 %v382, %v42
    %v398 = vmul.f32 %v382, %v43
    %v399 = vmul.f32 %v382, %v44
    %v400 = vmul.f32 %v382, %v45
    %v419 = vrot.slane %v383, 1
    %v420 = vrot.slane %v384, 1
    %v421 = vsel %vm314, %v419, %v420
    %v422 = vrot.slane %v385, 1
    %v423 = vsel %vm314, %v420, %v422
    %v424 = vrot.slane %v386, 1
    %v425 = vsel %vm314, %v422, %v424
    %v426 = vrot.slane %v387, 1
    %v427 = vsel %vm314, %v424, %v426
    %v428 = vrot.slane %v388, 1
    %v429 = vsel %vm314, %v426, %v428
    %v430 = vrot.slane %v389, 1
    %v431 = vsel %vm314, %v428, %v430
    %v432 = vrot.slane %v390, 1
    %v433 = vsel %vm314, %v430, %v432
    %v434 = vrot.slane %v391, 1
    %v435 = vsel %vm314, %v432, %v434
    %v436 = vrot.slane %v392, 1
    %v437 = vrot.slane %v393, 1
    %v438 = vsel %vm314, %v436, %v437
    %v439 = vrot.slane %v394, 1
    %v440 = vsel %vm314, %v437, %v439
    %v441 = vrot.slane %v395, 1
    %v442 = vsel %vm314, %v439, %v441
    %v443 = vrot.slane %v396, 1
    %v444 = vsel %vm314, %v441, %v443
    %v445 = vrot.slane %v397, 1
    %v446 = vsel %vm314, %v443, %v445
    %v447 = vrot.slane %v398, 1
    %v448 = vsel %vm314, %v445, %v447
    %v449 = vrot.slane %v399, 1
    %v450 = vsel %vm314, %v447, %v449
    %v451 = vrot.slane %v400, 1
    %v452 = vsel %vm314, %v449, %v451
    %453 = vrot.lane.b32.xlu0 %v421, 127
    %v454 = vpop.permute.xlu0 %453
    %455 = vrot.lane.b32.xlu0 %v423, 127
    %v456 = vpop.permute.xlu0 %455
    %457 = vrot.lane.b32.xlu0 %v425, 127
    %v458 = vpop.permute.xlu0 %457
    %459 = vrot.lane.b32.xlu0 %v427, 127
    %v460 = vpop.permute.xlu0 %459
    %461 = vrot.lane.b32.xlu0 %v429, 127
    %v462 = vpop.permute.xlu0 %461
    %463 = vrot.lane.b32.xlu0 %v431, 127
    %v464 = vpop.permute.xlu0 %463
    %465 = vrot.lane.b32.xlu0 %v433, 127
    %v466 = vpop.permute.xlu0 %465
    %467 = vrot.lane.b32.xlu0 %v435, 127
    %v468 = vpop.permute.xlu0 %467
    %469 = vrot.lane.b32.xlu0 %v438, 127
    %v470 = vpop.permute.xlu0 %469
    %471 = vrot.lane.b32.xlu0 %v440, 127
    %v472 = vpop.permute.xlu0 %471
    %473 = vrot.lane.b32.xlu0 %v442, 127
    %v474 = vpop.permute.xlu0 %473
    %475 = vrot.lane.b32.xlu0 %v444, 127
    %v476 = vpop.permute.xlu0 %475
    %477 = vrot.lane.b32.xlu0 %v446, 127
    %v478 = vpop.permute.xlu0 %477
    %479 = vrot.lane.b32.xlu0 %v448, 127
    %v480 = vpop.permute.xlu0 %479
    %481 = vrot.lane.b32.xlu0 %v450, 127
    %v482 = vpop.permute.xlu0 %481
    %483 = vrot.lane.b32.xlu0 %v452, 127
    %v484 = vpop.permute.xlu0 %483
    %v501 = vadd.f32 %v365, %v454
    %v502 = vadd.f32 %v366, %v456
    %v503 = vadd.f32 %v367, %v458
    %v504 = vadd.f32 %v368, %v460
    %v505 = vadd.f32 %v369, %v462
    %v506 = vadd.f32 %v370, %v464
    %v507 = vadd.f32 %v371, %v466
    %v508 = vadd.f32 %v372, %v468
    %v509 = vadd.f32 %v373, %v470
    %v510 = vadd.f32 %v374, %v472
    %v511 = vadd.f32 %v375, %v474
    %v512 = vadd.f32 %v376, %v476
    %v513 = vadd.f32 %v377, %v478
    %v514 = vadd.f32 %v378, %v480
    %v515 = vadd.f32 %v379, %v482
    %v516 = vadd.f32 %v380, %v484
    %s517 = sld [smem:[#allocation3 + $0x5]]
    %v518 = vstv %s517
    %v519 = vmul.f32 %v518, %v28
    %v520 = vmul.f32 %v518, %v29
    %v521 = vmul.f32 %v518, %v30
    %v522 = vmul.f32 %v518, %v31
    %v523 = vmul.f32 %v518, %v32
    %v524 = vmul.f32 %v518, %v33
    %v525 = vmul.f32 %v518, %v34
    %v526 = vmul.f32 %v518, %v35
    %v527 = vmul.f32 %v518, %v36
    %v528 = vmul.f32 %v518, %v37
    %v529 = vmul.f32 %v518, %v38
    %v530 = vmul.f32 %v518, %v39
    %v531 = vmul.f32 %v518, %v40
    %v532 = vmul.f32 %v518, %v41
    %v533 = vmul.f32 %v518, %v42
    %v534 = vmul.f32 %v518, %v43
    %v535 = vmul.f32 %v518, %v44
    %v536 = vmul.f32 %v518, %v45
    %v555 = vrot.slane %v519, 1
    %v556 = vrot.slane %v520, 1
    %v557 = vsel %vm314, %v555, %v556
    %v558 = vrot.slane %v521, 1
    %v559 = vsel %vm314, %v556, %v558
    %v560 = vrot.slane %v522, 1
    %v561 = vsel %vm314, %v558, %v560
    %v562 = vrot.slane %v523, 1
    %v563 = vsel %vm314, %v560, %v562
    %v564 = vrot.slane %v524, 1
    %v565 = vsel %vm314, %v562, %v564
    %v566 = vrot.slane %v525, 1
    %v567 = vsel %vm314, %v564, %v566
    %v568 = vrot.slane %v526, 1
    %v569 = vsel %vm314, %v566, %v568
    %v570 = vrot.slane %v527, 1
    %v571 = vsel %vm314, %v568, %v570
    %v572 = vrot.slane %v528, 1
    %v573 = vrot.slane %v529, 1
    %v574 = vsel %vm314, %v572, %v573
    %v575 = vrot.slane %v530, 1
    %v576 = vsel %vm314, %v573, %v575
    %v577 = vrot.slane %v531, 1
    %v578 = vsel %vm314, %v575, %v577
    %v579 = vrot.slane %v532, 1
    %v580 = vsel %vm314, %v577, %v579
    %v581 = vrot.slane %v533, 1
    %v582 = vsel %vm314, %v579, %v581
    %v583 = vrot.slane %v534, 1
    %v584 = vsel %vm314, %v581, %v583
    %v585 = vrot.slane %v535, 1
    %v586 = vsel %vm314, %v583, %v585
    %v587 = vrot.slane %v536, 1
    %v588 = vsel %vm314, %v585, %v587
    %589 = vrot.lane.b32.xlu0 %v557, 126
    %v590 = vpop.permute.xlu0 %589
    %591 = vrot.lane.b32.xlu0 %v559, 126
    %v592 = vpop.permute.xlu0 %591
    %593 = vrot.lane.b32.xlu0 %v561, 126
    %v594 = vpop.permute.xlu0 %593
    %595 = vrot.lane.b32.xlu0 %v563, 126
    %v596 = vpop.permute.xlu0 %595
    %597 = vrot.lane.b32.xlu0 %v565, 126
    %v598 = vpop.permute.xlu0 %597
    %599 = vrot.lane.b32.xlu0 %v567, 126
    %v600 = vpop.permute.xlu0 %599
    %601 = vrot.lane.b32.xlu0 %v569, 126
    %v602 = vpop.permute.xlu0 %601
    %603 = vrot.lane.b32.xlu0 %v571, 126
    %v604 = vpop.permute.xlu0 %603
    %605 = vrot.lane.b32.xlu0 %v574, 126
    %v606 = vpop.permute.xlu0 %605
    %607 = vrot.lane.b32.xlu0 %v576, 126
    %v608 = vpop.permute.xlu0 %607
    %609 = vrot.lane.b32.xlu0 %v578, 126
    %v610 = vpop.permute.xlu0 %609
    %611 = vrot.lane.b32.xlu0 %v580, 126
    %v612 = vpop.permute.xlu0 %611
    %613 = vrot.lane.b32.xlu0 %v582, 126
    %v614 = vpop.permute.xlu0 %613
    %615 = vrot.lane.b32.xlu0 %v584, 126
    %v616 = vpop.permute.xlu0 %615
    %617 = vrot.lane.b32.xlu0 %v586, 126
    %v618 = vpop.permute.xlu0 %617
    %619 = vrot.lane.b32.xlu0 %v588, 126
    %v620 = vpop.permute.xlu0 %619
    %v637 = vadd.f32 %v501, %v590
    %v638 = vadd.f32 %v502, %v592
    %v639 = vadd.f32 %v503, %v594
    %v640 = vadd.f32 %v504, %v596
    %v641 = vadd.f32 %v505, %v598
    %v642 = vadd.f32 %v506, %v600
    %v643 = vadd.f32 %v507, %v602
    %v644 = vadd.f32 %v508, %v604
    %v645 = vadd.f32 %v509, %v606
    %v646 = vadd.f32 %v510, %v608
    %v647 = vadd.f32 %v511, %v610
    %v648 = vadd.f32 %v512, %v612
    %v649 = vadd.f32 %v513, %v614
    %v650 = vadd.f32 %v514, %v616
    %v651 = vadd.f32 %v515, %v618
    %v652 = vadd.f32 %v516, %v620
    %s653 = sld [smem:[#allocation3 + $0x6]]
    %v654 = vstv %s653
    %v655 = vmul.f32 %v654, %v28
    %v656 = vmul.f32 %v654, %v29
    %v657 = vmul.f32 %v654, %v30
    %v658 = vmul.f32 %v654, %v31
    %v659 = vmul.f32 %v654, %v32
    %v660 = vmul.f32 %v654, %v33
    %v661 = vmul.f32 %v654, %v34
    %v662 = vmul.f32 %v654, %v35
    %v663 = vmul.f32 %v654, %v36
    %v664 = vmul.f32 %v654, %v37
    %v665 = vmul.f32 %v654, %v38
    %v666 = vmul.f32 %v654, %v39
    %v667 = vmul.f32 %v654, %v40
    %v668 = vmul.f32 %v654, %v41
    %v669 = vmul.f32 %v654, %v42
    %v670 = vmul.f32 %v654, %v43
    %v671 = vmul.f32 %v654, %v44
    %v672 = vmul.f32 %v654, %v45
    %vm691 = vcmask 1045504
    %v692 = vrot.slane %v655, 2
    %v693 = vrot.slane %v656, 2
    %v694 = vsel %vm691, %v692, %v693
    %v695 = vrot.slane %v657, 2
    %v696 = vsel %vm691, %v693, %v695
    %v697 = vrot.slane %v658, 2
    %v698 = vsel %vm691, %v695, %v697
    %v699 = vrot.slane %v659, 2
    %v700 = vsel %vm691, %v697, %v699
    %v701 = vrot.slane %v660, 2
    %v702 = vsel %vm691, %v699, %v701
    %v703 = vrot.slane %v661, 2
    %v704 = vsel %vm691, %v701, %v703
    %v705 = vrot.slane %v662, 2
    %v706 = vsel %vm691, %v703, %v705
    %v707 = vrot.slane %v663, 2
    %v708 = vsel %vm691, %v705, %v707
    %v709 = vrot.slane %v664, 2
    %v710 = vrot.slane %v665, 2
    %v711 = vsel %vm691, %v709, %v710
    %v712 = vrot.slane %v666, 2
    %v713 = vsel %vm691, %v710, %v712
    %v714 = vrot.slane %v667, 2
    %v715 = vsel %vm691, %v712, %v714
    %v716 = vrot.slane %v668, 2
    %v717 = vsel %vm691, %v714, %v716
    %v718 = vrot.slane %v669, 2
    %v719 = vsel %vm691, %v716, %v718
    %v720 = vrot.slane %v670, 2
    %v721 = vsel %vm691, %v718, %v720
    %v722 = vrot.slane %v671, 2
    %v723 = vsel %vm691, %v720, %v722
    %v724 = vrot.slane %v672, 2
    %v725 = vsel %vm691, %v722, %v724
    %v742 = vadd.f32 %v637, %v694
    %v743 = vadd.f32 %v638, %v696
    %v744 = vadd.f32 %v639, %v698
    %v745 = vadd.f32 %v640, %v700
    %v746 = vadd.f32 %v641, %v702
    %v747 = vadd.f32 %v642, %v704
    %v748 = vadd.f32 %v643, %v706
    %v749 = vadd.f32 %v644, %v708
    %v750 = vadd.f32 %v645, %v711
    %v751 = vadd.f32 %v646, %v713
    %v752 = vadd.f32 %v647, %v715
    %v753 = vadd.f32 %v648, %v717
    %v754 = vadd.f32 %v649, %v719
    %v755 = vadd.f32 %v650, %v721
    %v756 = vadd.f32 %v651, %v723
    %v757 = vadd.f32 %v652, %v725
    %s758 = sld [smem:[#allocation3 + $0x7]]
    %v759 = vstv %s758
    %v760 = vmul.f32 %v759, %v28
    %v761 = vmul.f32 %v759, %v29
    %v762 = vmul.f32 %v759, %v30
    %v763 = vmul.f32 %v759, %v31
    %v764 = vmul.f32 %v759, %v32
    %v765 = vmul.f32 %v759, %v33
    %v766 = vmul.f32 %v759, %v34
    %v767 = vmul.f32 %v759, %v35
    %v768 = vmul.f32 %v759, %v36
    %v769 = vmul.f32 %v759, %v37
    %v770 = vmul.f32 %v759, %v38
    %v771 = vmul.f32 %v759, %v39
    %v772 = vmul.f32 %v759, %v40
    %v773 = vmul.f32 %v759, %v41
    %v774 = vmul.f32 %v759, %v42
    %v775 = vmul.f32 %v759, %v43
    %v776 = vmul.f32 %v759, %v44
    %v777 = vmul.f32 %v759, %v45
    %v796 = vrot.slane %v760, 2
    %v797 = vrot.slane %v761, 2
    %v798 = vsel %vm691, %v796, %v797
    %v799 = vrot.slane %v762, 2
    %v800 = vsel %vm691, %v797, %v799
    %v801 = vrot.slane %v763, 2
    %v802 = vsel %vm691, %v799, %v801
    %v803 = vrot.slane %v764, 2
    %v804 = vsel %vm691, %v801, %v803
    %v805 = vrot.slane %v765, 2
    %v806 = vsel %vm691, %v803, %v805
    %v807 = vrot.slane %v766, 2
    %v808 = vsel %vm691, %v805, %v807
    %v809 = vrot.slane %v767, 2
    %v810 = vsel %vm691, %v807, %v809
    %v811 = vrot.slane %v768, 2
    %v812 = vsel %vm691, %v809, %v811
    %v813 = vrot.slane %v769, 2
    %v814 = vrot.slane %v770, 2
    %v815 = vsel %vm691, %v813, %v814
    %v816 = vrot.slane %v771, 2
    %v817 = vsel %vm691, %v814, %v816
    %v818 = vrot.slane %v772, 2
    %v819 = vsel %vm691, %v816, %v818
    %v820 = vrot.slane %v773, 2
    %v821 = vsel %vm691, %v818, %v820
    %v822 = vrot.slane %v774, 2
    %v823 = vsel %vm691, %v820, %v822
    %v824 = vrot.slane %v775, 2
    %v825 = vsel %vm691, %v822, %v824
    %v826 = vrot.slane %v776, 2
    %v827 = vsel %vm691, %v824, %v826
    %v828 = vrot.slane %v777, 2
    %v829 = vsel %vm691, %v826, %v828
    %830 = vrot.lane.b32.xlu0 %v798, 127
    %v831 = vpop.permute.xlu0 %830
    %832 = vrot.lane.b32.xlu0 %v800, 127
    %v833 = vpop.permute.xlu0 %832
    %834 = vrot.lane.b32.xlu0 %v802, 127
    %v835 = vpop.permute.xlu0 %834
    %836 = vrot.lane.b32.xlu0 %v804, 127
    %v837 = vpop.permute.xlu0 %836
    %838 = vrot.lane.b32.xlu0 %v806, 127
    %v839 = vpop.permute.xlu0 %838
    %840 = vrot.lane.b32.xlu0 %v808, 127
    %v841 = vpop.permute.xlu0 %840
    %842 = vrot.lane.b32.xlu0 %v810, 127
    %v843 = vpop.permute.xlu0 %842
    %844 = vrot.lane.b32.xlu0 %v812, 127
    %v845 = vpop.permute.xlu0 %844
    %846 = vrot.lane.b32.xlu0 %v815, 127
    %v847 = vpop.permute.xlu0 %846
    %848 = vrot.lane.b32.xlu0 %v817, 127
    %v849 = vpop.permute.xlu0 %848
    %850 = vrot.lane.b32.xlu0 %v819, 127
    %v851 = vpop.permute.xlu0 %850
    %852 = vrot.lane.b32.xlu0 %v821, 127
    %v853 = vpop.permute.xlu0 %852
    %854 = vrot.lane.b32.xlu0 %v823, 127
    %v855 = vpop.permute.xlu0 %854
    %856 = vrot.lane.b32.xlu0 %v825, 127
    %v857 = vpop.permute.xlu0 %856
    %858 = vrot.lane.b32.xlu0 %v827, 127
    %v859 = vpop.permute.xlu0 %858
    %860 = vrot.lane.b32.xlu0 %v829, 127
    %v861 = vpop.permute.xlu0 %860
    %v878 = vadd.f32 %v742, %v831
    %v879 = vadd.f32 %v743, %v833
    %v880 = vadd.f32 %v744, %v835
    %v881 = vadd.f32 %v745, %v837
    %v882 = vadd.f32 %v746, %v839
    %v883 = vadd.f32 %v747, %v841
    %v884 = vadd.f32 %v748, %v843
    %v885 = vadd.f32 %v749, %v845
    %v886 = vadd.f32 %v750, %v847
    %v887 = vadd.f32 %v751, %v849
    %v888 = vadd.f32 %v752, %v851
    %v889 = vadd.f32 %v753, %v853
    %v890 = vadd.f32 %v754, %v855
    %v891 = vadd.f32 %v755, %v857
    %v892 = vadd.f32 %v756, %v859
    %v893 = vadd.f32 %v757, %v861
    %s894 = sld [smem:[#allocation3 + $0x8]]
    %v895 = vstv %s894
    %v896 = vmul.f32 %v895, %v28
    %v897 = vmul.f32 %v895, %v29
    %v898 = vmul.f32 %v895, %v30
    %v899 = vmul.f32 %v895, %v31
    %v900 = vmul.f32 %v895, %v32
    %v901 = vmul.f32 %v895, %v33
    %v902 = vmul.f32 %v895, %v34
    %v903 = vmul.f32 %v895, %v35
    %v904 = vmul.f32 %v895, %v36
    %v905 = vmul.f32 %v895, %v37
    %v906 = vmul.f32 %v895, %v38
    %v907 = vmul.f32 %v895, %v39
    %v908 = vmul.f32 %v895, %v40
    %v909 = vmul.f32 %v895, %v41
    %v910 = vmul.f32 %v895, %v42
    %v911 = vmul.f32 %v895, %v43
    %v912 = vmul.f32 %v895, %v44
    %v913 = vmul.f32 %v895, %v45
    %v932 = vrot.slane %v896, 2
    %v933 = vrot.slane %v897, 2
    %v934 = vsel %vm691, %v932, %v933
    %v935 = vrot.slane %v898, 2
    %v936 = vsel %vm691, %v933, %v935
    %v937 = vrot.slane %v899, 2
    %v938 = vsel %vm691, %v935, %v937
    %v939 = vrot.slane %v900, 2
    %v940 = vsel %vm691, %v937, %v939
    %v941 = vrot.slane %v901, 2
    %v942 = vsel %vm691, %v939, %v941
    %v943 = vrot.slane %v902, 2
    %v944 = vsel %vm691, %v941, %v943
    %v945 = vrot.slane %v903, 2
    %v946 = vsel %vm691, %v943, %v945
    %v947 = vrot.slane %v904, 2
    %v948 = vsel %vm691, %v945, %v947
    %v949 = vrot.slane %v905, 2
    %v950 = vrot.slane %v906, 2
    %v951 = vsel %vm691, %v949, %v950
    %v952 = vrot.slane %v907, 2
    %v953 = vsel %vm691, %v950, %v952
    %v954 = vrot.slane %v908, 2
    %v955 = vsel %vm691, %v952, %v954
    %v956 = vrot.slane %v909, 2
    %v957 = vsel %vm691, %v954, %v956
    %v958 = vrot.slane %v910, 2
    %v959 = vsel %vm691, %v956, %v958
    %v960 = vrot.slane %v911, 2
    %v961 = vsel %vm691, %v958, %v960
    %v962 = vrot.slane %v912, 2
    %v963 = vsel %vm691, %v960, %v962
    %v964 = vrot.slane %v913, 2
    %v965 = vsel %vm691, %v962, %v964
    %966 = vrot.lane.b32.xlu0 %v934, 126
    %v967 = vpop.permute.xlu0 %966
    %968 = vrot.lane.b32.xlu0 %v936, 126
    %v969 = vpop.permute.xlu0 %968
    %970 = vrot.lane.b32.xlu0 %v938, 126
    %v971 = vpop.permute.xlu0 %970
    %972 = vrot.lane.b32.xlu0 %v940, 126
    %v973 = vpop.permute.xlu0 %972
    %974 = vrot.lane.b32.xlu0 %v942, 126
    %v975 = vpop.permute.xlu0 %974
    %976 = vrot.lane.b32.xlu0 %v944, 126
    %v977 = vpop.permute.xlu0 %976
    %978 = vrot.lane.b32.xlu0 %v946, 126
    %v979 = vpop.permute.xlu0 %978
    %980 = vrot.lane.b32.xlu0 %v948, 126
    %v981 = vpop.permute.xlu0 %980
    %982 = vrot.lane.b32.xlu0 %v951, 126
    %v983 = vpop.permute.xlu0 %982
    %984 = vrot.lane.b32.xlu0 %v953, 126
    %v985 = vpop.permute.xlu0 %984
    %986 = vrot.lane.b32.xlu0 %v955, 126
    %v987 = vpop.permute.xlu0 %986
    %988 = vrot.lane.b32.xlu0 %v957, 126
    %v989 = vpop.permute.xlu0 %988
    %990 = vrot.lane.b32.xlu0 %v959, 126
    %v991 = vpop.permute.xlu0 %990
    %992 = vrot.lane.b32.xlu0 %v961, 126
    %v993 = vpop.permute.xlu0 %992
    %994 = vrot.lane.b32.xlu0 %v963, 126
    %v995 = vpop.permute.xlu0 %994
    %996 = vrot.lane.b32.xlu0 %v965, 126
    %v997 = vpop.permute.xlu0 %996
    %v1014 = vadd.f32 %v878, %v967
    %v1015 = vadd.f32 %v879, %v969
    %v1016 = vadd.f32 %v880, %v971
    %v1017 = vadd.f32 %v881, %v973
    %v1018 = vadd.f32 %v882, %v975
    %v1019 = vadd.f32 %v883, %v977
    %v1020 = vadd.f32 %v884, %v979
    %v1021 = vadd.f32 %v885, %v981
    %v1022 = vadd.f32 %v886, %v983
    %v1023 = vadd.f32 %v887, %v985
    %v1024 = vadd.f32 %v888, %v987
    %v1025 = vadd.f32 %v889, %v989
    %v1026 = vadd.f32 %v890, %v991
    %v1027 = vadd.f32 %v891, %v993
    %v1028 = vadd.f32 %v892, %v995
    %v1029 = vadd.f32 %v893, %v997
    %s1030 = scalar_lea.vmem %s0, 72
    %v1031 = vld [vmem:[%s1030] sm:$0xff]
    %v1032 = vld [vmem:[%s1030 + $0x8] sm:$0xff]
    %v1033 = vld [vmem:[%s1030 + $0x10] sm:$0xff]
    %v1034 = vld [vmem:[%s1030 + $0x18] sm:$0xff]
    %v1035 = vld [vmem:[%s1030 + $0x20] sm:$0xff]
    %v1036 = vld [vmem:[%s1030 + $0x28] sm:$0xff]
    %v1037 = vld [vmem:[%s1030 + $0x30] sm:$0xff]
    %v1038 = vld [vmem:[%s1030 + $0x38] sm:$0xff]
    %v1039 = vld [vmem:[%s1030 + $0x40] sm:$0x3]
    %v1040 = vld [vmem:[%s1030 + $0xd8] sm:$0xff]
    %v1041 = vld [vmem:[%s1030 + $0xe0] sm:$0xff]
    %v1042 = vld [vmem:[%s1030 + $0xe8] sm:$0xff]
    %v1043 = vld [vmem:[%s1030 + $0xf0] sm:$0xff]
    %v1044 = vld [vmem:[%s1030 + $0xf8] sm:$0xff]
    %v1045 = vld [vmem:[%s1030 + $0x100] sm:$0xff]
    %v1046 = vld [vmem:[%s1030 + $0x108] sm:$0xff]
    %v1047 = vld [vmem:[%s1030 + $0x110] sm:$0xff]
    %v1048 = vld [vmem:[%s1030 + $0x118] sm:$0x3]
    %s1049 = sld [smem:[#allocation3 + $0x9]]
    %v1050 = vstv %s1049
    %v1051 = vmul.f32 %v1050, %v1031
    %v1052 = vmul.f32 %v1050, %v1032
    %v1053 = vmul.f32 %v1050, %v1033
    %v1054 = vmul.f32 %v1050, %v1034
    %v1055 = vmul.f32 %v1050, %v1035
    %v1056 = vmul.f32 %v1050, %v1036
    %v1057 = vmul.f32 %v1050, %v1037
    %v1058 = vmul.f32 %v1050, %v1038
    %v1059 = vmul.f32 %v1050, %v1040
    %v1060 = vmul.f32 %v1050, %v1041
    %v1061 = vmul.f32 %v1050, %v1042
    %v1062 = vmul.f32 %v1050, %v1043
    %v1063 = vmul.f32 %v1050, %v1044
    %v1064 = vmul.f32 %v1050, %v1045
    %v1065 = vmul.f32 %v1050, %v1046
    %v1066 = vmul.f32 %v1050, %v1047
    %v1067 = vadd.f32 %v1014, %v1051
    %v1068 = vadd.f32 %v1015, %v1052
    %v1069 = vadd.f32 %v1016, %v1053
    %v1070 = vadd.f32 %v1017, %v1054
    %v1071 = vadd.f32 %v1018, %v1055
    %v1072 = vadd.f32 %v1019, %v1056
    %v1073 = vadd.f32 %v1020, %v1057
    %v1074 = vadd.f32 %v1021, %v1058
    %v1075 = vadd.f32 %v1022, %v1059
    %v1076 = vadd.f32 %v1023, %v1060
    %v1077 = vadd.f32 %v1024, %v1061
    %v1078 = vadd.f32 %v1025, %v1062
    %v1079 = vadd.f32 %v1026, %v1063
    %v1080 = vadd.f32 %v1027, %v1064
    %v1081 = vadd.f32 %v1028, %v1065
    %v1082 = vadd.f32 %v1029, %v1066
    %s1083 = sld [smem:[#allocation3 + $0xa]]
    %v1084 = vstv %s1083
    %v1085 = vmul.f32 %v1084, %v1031
    %v1086 = vmul.f32 %v1084, %v1032
    %v1087 = vmul.f32 %v1084, %v1033
    %v1088 = vmul.f32 %v1084, %v1034
    %v1089 = vmul.f32 %v1084, %v1035
    %v1090 = vmul.f32 %v1084, %v1036
    %v1091 = vmul.f32 %v1084, %v1037
    %v1092 = vmul.f32 %v1084, %v1038
    %v1093 = vmul.f32 %v1084, %v1040
    %v1094 = vmul.f32 %v1084, %v1041
    %v1095 = vmul.f32 %v1084, %v1042
    %v1096 = vmul.f32 %v1084, %v1043
    %v1097 = vmul.f32 %v1084, %v1044
    %v1098 = vmul.f32 %v1084, %v1045
    %v1099 = vmul.f32 %v1084, %v1046
    %v1100 = vmul.f32 %v1084, %v1047
    %1117 = vrot.lane.b32.xlu0 %v1085, 127
    %v1118 = vpop.permute.xlu0 %1117
    %1119 = vrot.lane.b32.xlu0 %v1086, 127
    %v1120 = vpop.permute.xlu0 %1119
    %1121 = vrot.lane.b32.xlu0 %v1087, 127
    %v1122 = vpop.permute.xlu0 %1121
    %1123 = vrot.lane.b32.xlu0 %v1088, 127
    %v1124 = vpop.permute.xlu0 %1123
    %1125 = vrot.lane.b32.xlu0 %v1089, 127
    %v1126 = vpop.permute.xlu0 %1125
    %1127 = vrot.lane.b32.xlu0 %v1090, 127
    %v1128 = vpop.permute.xlu0 %1127
    %1129 = vrot.lane.b32.xlu0 %v1091, 127
    %v1130 = vpop.permute.xlu0 %1129
    %1131 = vrot.lane.b32.xlu0 %v1092, 127
    %v1132 = vpop.permute.xlu0 %1131
    %1133 = vrot.lane.b32.xlu0 %v1093, 127
    %v1134 = vpop.permute.xlu0 %1133
    %1135 = vrot.lane.b32.xlu0 %v1094, 127
    %v1136 = vpop.permute.xlu0 %1135
    %1137 = vrot.lane.b32.xlu0 %v1095, 127
    %v1138 = vpop.permute.xlu0 %1137
    %1139 = vrot.lane.b32.xlu0 %v1096, 127
    %v1140 = vpop.permute.xlu0 %1139
    %1141 = vrot.lane.b32.xlu0 %v1097, 127
    %v1142 = vpop.permute.xlu0 %1141
    %1143 = vrot.lane.b32.xlu0 %v1098, 127
    %v1144 = vpop.permute.xlu0 %1143
    %1145 = vrot.lane.b32.xlu0 %v1099, 127
    %v1146 = vpop.permute.xlu0 %1145
    %1147 = vrot.lane.b32.xlu0 %v1100, 127
    %v1148 = vpop.permute.xlu0 %1147
    %v1165 = vadd.f32 %v1067, %v1118
    %v1166 = vadd.f32 %v1068, %v1120
    %v1167 = vadd.f32 %v1069, %v1122
    %v1168 = vadd.f32 %v1070, %v1124
    %v1169 = vadd.f32 %v1071, %v1126
    %v1170 = vadd.f32 %v1072, %v1128
    %v1171 = vadd.f32 %v1073, %v1130
    %v1172 = vadd.f32 %v1074, %v1132
    %v1173 = vadd.f32 %v1075, %v1134
    %v1174 = vadd.f32 %v1076, %v1136
    %v1175 = vadd.f32 %v1077, %v1138
    %v1176 = vadd.f32 %v1078, %v1140
    %v1177 = vadd.f32 %v1079, %v1142
    %v1178 = vadd.f32 %v1080, %v1144
    %v1179 = vadd.f32 %v1081, %v1146
    %v1180 = vadd.f32 %v1082, %v1148
    %s1181 = sld [smem:[#allocation3 + $0xb]]
    %v1182 = vstv %s1181
    %v1183 = vmul.f32 %v1182, %v1031
    %v1184 = vmul.f32 %v1182, %v1032
    %v1185 = vmul.f32 %v1182, %v1033
    %v1186 = vmul.f32 %v1182, %v1034
    %v1187 = vmul.f32 %v1182, %v1035
    %v1188 = vmul.f32 %v1182, %v1036
    %v1189 = vmul.f32 %v1182, %v1037
    %v1190 = vmul.f32 %v1182, %v1038
    %v1191 = vmul.f32 %v1182, %v1040
    %v1192 = vmul.f32 %v1182, %v1041
    %v1193 = vmul.f32 %v1182, %v1042
    %v1194 = vmul.f32 %v1182, %v1043
    %v1195 = vmul.f32 %v1182, %v1044
    %v1196 = vmul.f32 %v1182, %v1045
    %v1197 = vmul.f32 %v1182, %v1046
    %v1198 = vmul.f32 %v1182, %v1047
    %1215 = vrot.lane.b32.xlu0 %v1183, 126
    %v1216 = vpop.permute.xlu0 %1215
    %1217 = vrot.lane.b32.xlu0 %v1184, 126
    %v1218 = vpop.permute.xlu0 %1217
    %1219 = vrot.lane.b32.xlu0 %v1185, 126
    %v1220 = vpop.permute.xlu0 %1219
    %1221 = vrot.lane.b32.xlu0 %v1186, 126
    %v1222 = vpop.permute.xlu0 %1221
    %1223 = vrot.lane.b32.xlu0 %v1187, 126
    %v1224 = vpop.permute.xlu0 %1223
    %1225 = vrot.lane.b32.xlu0 %v1188, 126
    %v1226 = vpop.permute.xlu0 %1225
    %1227 = vrot.lane.b32.xlu0 %v1189, 126
    %v1228 = vpop.permute.xlu0 %1227
    %1229 = vrot.lane.b32.xlu0 %v1190, 126
    %v1230 = vpop.permute.xlu0 %1229
    %1231 = vrot.lane.b32.xlu0 %v1191, 126
    %v1232 = vpop.permute.xlu0 %1231
    %1233 = vrot.lane.b32.xlu0 %v1192, 126
    %v1234 = vpop.permute.xlu0 %1233
    %1235 = vrot.lane.b32.xlu0 %v1193, 126
    %v1236 = vpop.permute.xlu0 %1235
    %1237 = vrot.lane.b32.xlu0 %v1194, 126
    %v1238 = vpop.permute.xlu0 %1237
    %1239 = vrot.lane.b32.xlu0 %v1195, 126
    %v1240 = vpop.permute.xlu0 %1239
    %1241 = vrot.lane.b32.xlu0 %v1196, 126
    %v1242 = vpop.permute.xlu0 %1241
    %1243 = vrot.lane.b32.xlu0 %v1197, 126
    %v1244 = vpop.permute.xlu0 %1243
    %1245 = vrot.lane.b32.xlu0 %v1198, 126
    %v1246 = vpop.permute.xlu0 %1245
    %v1263 = vadd.f32 %v1165, %v1216
    %v1264 = vadd.f32 %v1166, %v1218
    %v1265 = vadd.f32 %v1167, %v1220
    %v1266 = vadd.f32 %v1168, %v1222
    %v1267 = vadd.f32 %v1169, %v1224
    %v1268 = vadd.f32 %v1170, %v1226
    %v1269 = vadd.f32 %v1171, %v1228
    %v1270 = vadd.f32 %v1172, %v1230
    %v1271 = vadd.f32 %v1173, %v1232
    %v1272 = vadd.f32 %v1174, %v1234
    %v1273 = vadd.f32 %v1175, %v1236
    %v1274 = vadd.f32 %v1176, %v1238
    %v1275 = vadd.f32 %v1177, %v1240
    %v1276 = vadd.f32 %v1178, %v1242
    %v1277 = vadd.f32 %v1179, %v1244
    %v1278 = vadd.f32 %v1180, %v1246
    %s1279 = sld [smem:[#allocation3 + $0xc]]
    %v1280 = vstv %s1279
    %v1281 = vmul.f32 %v1280, %v1031
    %v1282 = vmul.f32 %v1280, %v1032
    %v1283 = vmul.f32 %v1280, %v1033
    %v1284 = vmul.f32 %v1280, %v1034
    %v1285 = vmul.f32 %v1280, %v1035
    %v1286 = vmul.f32 %v1280, %v1036
    %v1287 = vmul.f32 %v1280, %v1037
    %v1288 = vmul.f32 %v1280, %v1038
    %v1289 = vmul.f32 %v1280, %v1039
    %v1290 = vmul.f32 %v1280, %v1040
    %v1291 = vmul.f32 %v1280, %v1041
    %v1292 = vmul.f32 %v1280, %v1042
    %v1293 = vmul.f32 %v1280, %v1043
    %v1294 = vmul.f32 %v1280, %v1044
    %v1295 = vmul.f32 %v1280, %v1045
    %v1296 = vmul.f32 %v1280, %v1046
    %v1297 = vmul.f32 %v1280, %v1047
    %v1298 = vmul.f32 %v1280, %v1048
    %v1317 = vrot.slane %v1281, 1
    %v1318 = vrot.slane %v1282, 1
    %v1319 = vsel %vm314, %v1317, %v1318
    %v1320 = vrot.slane %v1283, 1
    %v1321 = vsel %vm314, %v1318, %v1320
    %v1322 = vrot.slane %v1284, 1
    %v1323 = vsel %vm314, %v1320, %v1322
    %v1324 = vrot.slane %v1285, 1
    %v1325 = vsel %vm314, %v1322, %v1324
    %v1326 = vrot.slane %v1286, 1
    %v1327 = vsel %vm314, %v1324, %v1326
    %v1328 = vrot.slane %v1287, 1
    %v1329 = vsel %vm314, %v1326, %v1328
    %v1330 = vrot.slane %v1288, 1
    %v1331 = vsel %vm314, %v1328, %v1330
    %v1332 = vrot.slane %v1289, 1
    %v1333 = vsel %vm314, %v1330, %v1332
    %v1334 = vrot.slane %v1290, 1
    %v1335 = vrot.slane %v1291, 1
    %v1336 = vsel %vm314, %v1334, %v1335
    %v1337 = vrot.slane %v1292, 1
    %v1338 = vsel %vm314, %v1335, %v1337
    %v1339 = vrot.slane %v1293, 1
    %v1340 = vsel %vm314, %v1337, %v1339
    %v1341 = vrot.slane %v1294, 1
    %v1342 = vsel %vm314, %v1339, %v1341
    %v1343 = vrot.slane %v1295, 1
    %v1344 = vsel %vm314, %v1341, %v1343
    %v1345 = vrot.slane %v1296, 1
    %v1346 = vsel %vm314, %v1343, %v1345
    %v1347 = vrot.slane %v1297, 1
    %v1348 = vsel %vm314, %v1345, %v1347
    %v1349 = vrot.slane %v1298, 1
    %v1350 = vsel %vm314, %v1347, %v1349
    %v1367 = vadd.f32 %v1263, %v1319
    %v1368 = vadd.f32 %v1264, %v1321
    %v1369 = vadd.f32 %v1265, %v1323
    %v1370 = vadd.f32 %v1266, %v1325
    %v1371 = vadd.f32 %v1267, %v1327
    %v1372 = vadd.f32 %v1268, %v1329
    %v1373 = vadd.f32 %v1269, %v1331
    %v1374 = vadd.f32 %v1270, %v1333
    %v1375 = vadd.f32 %v1271, %v1336
    %v1376 = vadd.f32 %v1272, %v1338
    %v1377 = vadd.f32 %v1273, %v1340
    %v1378 = vadd.f32 %v1274, %v1342
    %v1379 = vadd.f32 %v1275, %v1344
    %v1380 = vadd.f32 %v1276, %v1346
    %v1381 = vadd.f32 %v1277, %v1348
    %v1382 = vadd.f32 %v1278, %v1350
    %s1383 = sld [smem:[#allocation3 + $0xd]]
    %v1384 = vstv %s1383
    %v1385 = vmul.f32 %v1384, %v1031
    %v1386 = vmul.f32 %v1384, %v1032
    %v1387 = vmul.f32 %v1384, %v1033
    %v1388 = vmul.f32 %v1384, %v1034
    %v1389 = vmul.f32 %v1384, %v1035
    %v1390 = vmul.f32 %v1384, %v1036
    %v1391 = vmul.f32 %v1384, %v1037
    %v1392 = vmul.f32 %v1384, %v1038
    %v1393 = vmul.f32 %v1384, %v1039
    %v1394 = vmul.f32 %v1384, %v1040
    %v1395 = vmul.f32 %v1384, %v1041
    %v1396 = vmul.f32 %v1384, %v1042
    %v1397 = vmul.f32 %v1384, %v1043
    %v1398 = vmul.f32 %v1384, %v1044
    %v1399 = vmul.f32 %v1384, %v1045
    %v1400 = vmul.f32 %v1384, %v1046
    %v1401 = vmul.f32 %v1384, %v1047
    %v1402 = vmul.f32 %v1384, %v1048
    %v1421 = vrot.slane %v1385, 1
    %v1422 = vrot.slane %v1386, 1
    %v1423 = vsel %vm314, %v1421, %v1422
    %v1424 = vrot.slane %v1387, 1
    %v1425 = vsel %vm314, %v1422, %v1424
    %v1426 = vrot.slane %v1388, 1
    %v1427 = vsel %vm314, %v1424, %v1426
    %v1428 = vrot.slane %v1389, 1
    %v1429 = vsel %vm314, %v1426, %v1428
    %v1430 = vrot.slane %v1390, 1
    %v1431 = vsel %vm314, %v1428, %v1430
    %v1432 = vrot.slane %v1391, 1
    %v1433 = vsel %vm314, %v1430, %v1432
    %v1434 = vrot.slane %v1392, 1
    %v1435 = vsel %vm314, %v1432, %v1434
    %v1436 = vrot.slane %v1393, 1
    %v1437 = vsel %vm314, %v1434, %v1436
    %v1438 = vrot.slane %v1394, 1
    %v1439 = vrot.slane %v1395, 1
    %v1440 = vsel %vm314, %v1438, %v1439
    %v1441 = vrot.slane %v1396, 1
    %v1442 = vsel %vm314, %v1439, %v1441
    %v1443 = vrot.slane %v1397, 1
    %v1444 = vsel %vm314, %v1441, %v1443
    %v1445 = vrot.slane %v1398, 1
    %v1446 = vsel %vm314, %v1443, %v1445
    %v1447 = vrot.slane %v1399, 1
    %v1448 = vsel %vm314, %v1445, %v1447
    %v1449 = vrot.slane %v1400, 1
    %v1450 = vsel %vm314, %v1447, %v1449
    %v1451 = vrot.slane %v1401, 1
    %v1452 = vsel %vm314, %v1449, %v1451
    %v1453 = vrot.slane %v1402, 1
    %v1454 = vsel %vm314, %v1451, %v1453
    %1455 = vrot.lane.b32.xlu0 %v1423, 127
    %v1456 = vpop.permute.xlu0 %1455
    %1457 = vrot.lane.b32.xlu0 %v1425, 127
    %v1458 = vpop.permute.xlu0 %1457
    %1459 = vrot.lane.b32.xlu0 %v1427, 127
    %v1460 = vpop.permute.xlu0 %1459
    %1461 = vrot.lane.b32.xlu0 %v1429, 127
    %v1462 = vpop.permute.xlu0 %1461
    %1463 = vrot.lane.b32.xlu0 %v1431, 127
    %v1464 = vpop.permute.xlu0 %1463
    %1465 = vrot.lane.b32.xlu0 %v1433, 127
    %v1466 = vpop.permute.xlu0 %1465
    %1467 = vrot.lane.b32.xlu0 %v1435, 127
    %v1468 = vpop.permute.xlu0 %1467
    %1469 = vrot.lane.b32.xlu0 %v1437, 127
    %v1470 = vpop.permute.xlu0 %1469
    %1471 = vrot.lane.b32.xlu0 %v1440, 127
    %v1472 = vpop.permute.xlu0 %1471
    %1473 = vrot.lane.b32.xlu0 %v1442, 127
    %v1474 = vpop.permute.xlu0 %1473
    %1475 = vrot.lane.b32.xlu0 %v1444, 127
    %v1476 = vpop.permute.xlu0 %1475
    %1477 = vrot.lane.b32.xlu0 %v1446, 127
    %v1478 = vpop.permute.xlu0 %1477
    %1479 = vrot.lane.b32.xlu0 %v1448, 127
    %v1480 = vpop.permute.xlu0 %1479
    %1481 = vrot.lane.b32.xlu0 %v1450, 127
    %v1482 = vpop.permute.xlu0 %1481
    %1483 = vrot.lane.b32.xlu0 %v1452, 127
    %v1484 = vpop.permute.xlu0 %1483
    %1485 = vrot.lane.b32.xlu0 %v1454, 127
    %v1486 = vpop.permute.xlu0 %1485
    %v1503 = vadd.f32 %v1367, %v1456
    %v1504 = vadd.f32 %v1368, %v1458
    %v1505 = vadd.f32 %v1369, %v1460
    %v1506 = vadd.f32 %v1370, %v1462
    %v1507 = vadd.f32 %v1371, %v1464
    %v1508 = vadd.f32 %v1372, %v1466
    %v1509 = vadd.f32 %v1373, %v1468
    %v1510 = vadd.f32 %v1374, %v1470
    %v1511 = vadd.f32 %v1375, %v1472
    %v1512 = vadd.f32 %v1376, %v1474
    %v1513 = vadd.f32 %v1377, %v1476
    %v1514 = vadd.f32 %v1378, %v1478
    %v1515 = vadd.f32 %v1379, %v1480
    %v1516 = vadd.f32 %v1380, %v1482
    %v1517 = vadd.f32 %v1381, %v1484
    %v1518 = vadd.f32 %v1382, %v1486
    %s1519 = sld [smem:[#allocation3 + $0xe]]
    %v1520 = vstv %s1519
    %v1521 = vmul.f32 %v1520, %v1031
    %v1522 = vmul.f32 %v1520, %v1032
    %v1523 = vmul.f32 %v1520, %v1033
    %v1524 = vmul.f32 %v1520, %v1034
    %v1525 = vmul.f32 %v1520, %v1035
    %v1526 = vmul.f32 %v1520, %v1036
    %v1527 = vmul.f32 %v1520, %v1037
    %v1528 = vmul.f32 %v1520, %v1038
    %v1529 = vmul.f32 %v1520, %v1039
    %v1530 = vmul.f32 %v1520, %v1040
    %v1531 = vmul.f32 %v1520, %v1041
    %v1532 = vmul.f32 %v1520, %v1042
    %v1533 = vmul.f32 %v1520, %v1043
    %v1534 = vmul.f32 %v1520, %v1044
    %v1535 = vmul.f32 %v1520, %v1045
    %v1536 = vmul.f32 %v1520, %v1046
    %v1537 = vmul.f32 %v1520, %v1047
    %v1538 = vmul.f32 %v1520, %v1048
    %v1557 = vrot.slane %v1521, 1
    %v1558 = vrot.slane %v1522, 1
    %v1559 = vsel %vm314, %v1557, %v1558
    %v1560 = vrot.slane %v1523, 1
    %v1561 = vsel %vm314, %v1558, %v1560
    %v1562 = vrot.slane %v1524, 1
    %v1563 = vsel %vm314, %v1560, %v1562
    %v1564 = vrot.slane %v1525, 1
    %v1565 = vsel %vm314, %v1562, %v1564
    %v1566 = vrot.slane %v1526, 1
    %v1567 = vsel %vm314, %v1564, %v1566
    %v1568 = vrot.slane %v1527, 1
    %v1569 = vsel %vm314, %v1566, %v1568
    %v1570 = vrot.slane %v1528, 1
    %v1571 = vsel %vm314, %v1568, %v1570
    %v1572 = vrot.slane %v1529, 1
    %v1573 = vsel %vm314, %v1570, %v1572
    %v1574 = vrot.slane %v1530, 1
    %v1575 = vrot.slane %v1531, 1
    %v1576 = vsel %vm314, %v1574, %v1575
    %v1577 = vrot.slane %v1532, 1
    %v1578 = vsel %vm314, %v1575, %v1577
    %v1579 = vrot.slane %v1533, 1
    %v1580 = vsel %vm314, %v1577, %v1579
    %v1581 = vrot.slane %v1534, 1
    %v1582 = vsel %vm314, %v1579, %v1581
    %v1583 = vrot.slane %v1535, 1
    %v1584 = vsel %vm314, %v1581, %v1583
    %v1585 = vrot.slane %v1536, 1
    %v1586 = vsel %vm314, %v1583, %v1585
    %v1587 = vrot.slane %v1537, 1
    %v1588 = vsel %vm314, %v1585, %v1587
    %v1589 = vrot.slane %v1538, 1
    %v1590 = vsel %vm314, %v1587, %v1589
    %1591 = vrot.lane.b32.xlu0 %v1559, 126
    %v1592 = vpop.permute.xlu0 %1591
    %1593 = vrot.lane.b32.xlu0 %v1561, 126
    %v1594 = vpop.permute.xlu0 %1593
    %1595 = vrot.lane.b32.xlu0 %v1563, 126
    %v1596 = vpop.permute.xlu0 %1595
    %1597 = vrot.lane.b32.xlu0 %v1565, 126
    %v1598 = vpop.permute.xlu0 %1597
    %1599 = vrot.lane.b32.xlu0 %v1567, 126
    %v1600 = vpop.permute.xlu0 %1599
    %1601 = vrot.lane.b32.xlu0 %v1569, 126
    %v1602 = vpop.permute.xlu0 %1601
    %1603 = vrot.lane.b32.xlu0 %v1571, 126
    %v1604 = vpop.permute.xlu0 %1603
    %1605 = vrot.lane.b32.xlu0 %v1573, 126
    %v1606 = vpop.permute.xlu0 %1605
    %1607 = vrot.lane.b32.xlu0 %v1576, 126
    %v1608 = vpop.permute.xlu0 %1607
    %1609 = vrot.lane.b32.xlu0 %v1578, 126
    %v1610 = vpop.permute.xlu0 %1609
    %1611 = vrot.lane.b32.xlu0 %v1580, 126
    %v1612 = vpop.permute.xlu0 %1611
    %1613 = vrot.lane.b32.xlu0 %v1582, 126
    %v1614 = vpop.permute.xlu0 %1613
    %1615 = vrot.lane.b32.xlu0 %v1584, 126
    %v1616 = vpop.permute.xlu0 %1615
    %1617 = vrot.lane.b32.xlu0 %v1586, 126
    %v1618 = vpop.permute.xlu0 %1617
    %1619 = vrot.lane.b32.xlu0 %v1588, 126
    %v1620 = vpop.permute.xlu0 %1619
    %1621 = vrot.lane.b32.xlu0 %v1590, 126
    %v1622 = vpop.permute.xlu0 %1621
    %v1639 = vadd.f32 %v1503, %v1592
    %v1640 = vadd.f32 %v1504, %v1594
    %v1641 = vadd.f32 %v1505, %v1596
    %v1642 = vadd.f32 %v1506, %v1598
    %v1643 = vadd.f32 %v1507, %v1600
    %v1644 = vadd.f32 %v1508, %v1602
    %v1645 = vadd.f32 %v1509, %v1604
    %v1646 = vadd.f32 %v1510, %v1606
    %v1647 = vadd.f32 %v1511, %v1608
    %v1648 = vadd.f32 %v1512, %v1610
    %v1649 = vadd.f32 %v1513, %v1612
    %v1650 = vadd.f32 %v1514, %v1614
    %v1651 = vadd.f32 %v1515, %v1616
    %v1652 = vadd.f32 %v1516, %v1618
    %v1653 = vadd.f32 %v1517, %v1620
    %v1654 = vadd.f32 %v1518, %v1622
    %s1655 = sld [smem:[#allocation3 + $0xf]]
    %v1656 = vstv %s1655
    %v1657 = vmul.f32 %v1656, %v1031
    %v1658 = vmul.f32 %v1656, %v1032
    %v1659 = vmul.f32 %v1656, %v1033
    %v1660 = vmul.f32 %v1656, %v1034
    %v1661 = vmul.f32 %v1656, %v1035
    %v1662 = vmul.f32 %v1656, %v1036
    %v1663 = vmul.f32 %v1656, %v1037
    %v1664 = vmul.f32 %v1656, %v1038
    %v1665 = vmul.f32 %v1656, %v1039
    %v1666 = vmul.f32 %v1656, %v1040
    %v1667 = vmul.f32 %v1656, %v1041
    %v1668 = vmul.f32 %v1656, %v1042
    %v1669 = vmul.f32 %v1656, %v1043
    %v1670 = vmul.f32 %v1656, %v1044
    %v1671 = vmul.f32 %v1656, %v1045
    %v1672 = vmul.f32 %v1656, %v1046
    %v1673 = vmul.f32 %v1656, %v1047
    %v1674 = vmul.f32 %v1656, %v1048
    %v1693 = vrot.slane %v1657, 2
    %v1694 = vrot.slane %v1658, 2
    %v1695 = vsel %vm691, %v1693, %v1694
    %v1696 = vrot.slane %v1659, 2
    %v1697 = vsel %vm691, %v1694, %v1696
    %v1698 = vrot.slane %v1660, 2
    %v1699 = vsel %vm691, %v1696, %v1698
    %v1700 = vrot.slane %v1661, 2
    %v1701 = vsel %vm691, %v1698, %v1700
    %v1702 = vrot.slane %v1662, 2
    %v1703 = vsel %vm691, %v1700, %v1702
    %v1704 = vrot.slane %v1663, 2
    %v1705 = vsel %vm691, %v1702, %v1704
    %v1706 = vrot.slane %v1664, 2
    %v1707 = vsel %vm691, %v1704, %v1706
    %v1708 = vrot.slane %v1665, 2
    %v1709 = vsel %vm691, %v1706, %v1708
    %v1710 = vrot.slane %v1666, 2
    %v1711 = vrot.slane %v1667, 2
    %v1712 = vsel %vm691, %v1710, %v1711
    %v1713 = vrot.slane %v1668, 2
    %v1714 = vsel %vm691, %v1711, %v1713
    %v1715 = vrot.slane %v1669, 2
    %v1716 = vsel %vm691, %v1713, %v1715
    %v1717 = vrot.slane %v1670, 2
    %v1718 = vsel %vm691, %v1715, %v1717
    %v1719 = vrot.slane %v1671, 2
    %v1720 = vsel %vm691, %v1717, %v1719
    %v1721 = vrot.slane %v1672, 2
    %v1722 = vsel %vm691, %v1719, %v1721
    %v1723 = vrot.slane %v1673, 2
    %v1724 = vsel %vm691, %v1721, %v1723
    %v1725 = vrot.slane %v1674, 2
    %v1726 = vsel %vm691, %v1723, %v1725
    %v1743 = vadd.f32 %v1639, %v1695
    %v1744 = vadd.f32 %v1640, %v1697
    %v1745 = vadd.f32 %v1641, %v1699
    %v1746 = vadd.f32 %v1642, %v1701
    %v1747 = vadd.f32 %v1643, %v1703
    %v1748 = vadd.f32 %v1644, %v1705
    %v1749 = vadd.f32 %v1645, %v1707
    %v1750 = vadd.f32 %v1646, %v1709
    %v1751 = vadd.f32 %v1647, %v1712
    %v1752 = vadd.f32 %v1648, %v1714
    %v1753 = vadd.f32 %v1649, %v1716
    %v1754 = vadd.f32 %v1650, %v1718
    %v1755 = vadd.f32 %v1651, %v1720
    %v1756 = vadd.f32 %v1652, %v1722
    %v1757 = vadd.f32 %v1653, %v1724
    %v1758 = vadd.f32 %v1654, %v1726
    %s1759 = sld [smem:[#allocation3 + $0x10]]
    %v1760 = vstv %s1759
    %v1761 = vmul.f32 %v1760, %v1031
    %v1762 = vmul.f32 %v1760, %v1032
    %v1763 = vmul.f32 %v1760, %v1033
    %v1764 = vmul.f32 %v1760, %v1034
    %v1765 = vmul.f32 %v1760, %v1035
    %v1766 = vmul.f32 %v1760, %v1036
    %v1767 = vmul.f32 %v1760, %v1037
    %v1768 = vmul.f32 %v1760, %v1038
    %v1769 = vmul.f32 %v1760, %v1039
    %v1770 = vmul.f32 %v1760, %v1040
    %v1771 = vmul.f32 %v1760, %v1041
    %v1772 = vmul.f32 %v1760, %v1042
    %v1773 = vmul.f32 %v1760, %v1043
    %v1774 = vmul.f32 %v1760, %v1044
    %v1775 = vmul.f32 %v1760, %v1045
    %v1776 = vmul.f32 %v1760, %v1046
    %v1777 = vmul.f32 %v1760, %v1047
    %v1778 = vmul.f32 %v1760, %v1048
    %v1797 = vrot.slane %v1761, 2
    %v1798 = vrot.slane %v1762, 2
    %v1799 = vsel %vm691, %v1797, %v1798
    %v1800 = vrot.slane %v1763, 2
    %v1801 = vsel %vm691, %v1798, %v1800
    %v1802 = vrot.slane %v1764, 2
    %v1803 = vsel %vm691, %v1800, %v1802
    %v1804 = vrot.slane %v1765, 2
    %v1805 = vsel %vm691, %v1802, %v1804
    %v1806 = vrot.slane %v1766, 2
    %v1807 = vsel %vm691, %v1804, %v1806
    %v1808 = vrot.slane %v1767, 2
    %v1809 = vsel %vm691, %v1806, %v1808
    %v1810 = vrot.slane %v1768, 2
    %v1811 = vsel %vm691, %v1808, %v1810
    %v1812 = vrot.slane %v1769, 2
    %v1813 = vsel %vm691, %v1810, %v1812
    %v1814 = vrot.slane %v1770, 2
    %v1815 = vrot.slane %v1771, 2
    %v1816 = vsel %vm691, %v1814, %v1815
    %v1817 = vrot.slane %v1772, 2
    %v1818 = vsel %vm691, %v1815, %v1817
    %v1819 = vrot.slane %v1773, 2
    %v1820 = vsel %vm691, %v1817, %v1819
    %v1821 = vrot.slane %v1774, 2
    %v1822 = vsel %vm691, %v1819, %v1821
    %v1823 = vrot.slane %v1775, 2
    %v1824 = vsel %vm691, %v1821, %v1823
    %v1825 = vrot.slane %v1776, 2
    %v1826 = vsel %vm691, %v1823, %v1825
    %v1827 = vrot.slane %v1777, 2
    %v1828 = vsel %vm691, %v1825, %v1827
    %v1829 = vrot.slane %v1778, 2
    %v1830 = vsel %vm691, %v1827, %v1829
    %1831 = vrot.lane.b32.xlu0 %v1799, 127
    %v1832 = vpop.permute.xlu0 %1831
    %1833 = vrot.lane.b32.xlu0 %v1801, 127
    %v1834 = vpop.permute.xlu0 %1833
    %1835 = vrot.lane.b32.xlu0 %v1803, 127
    %v1836 = vpop.permute.xlu0 %1835
    %1837 = vrot.lane.b32.xlu0 %v1805, 127
    %v1838 = vpop.permute.xlu0 %1837
    %1839 = vrot.lane.b32.xlu0 %v1807, 127
    %v1840 = vpop.permute.xlu0 %1839
    %1841 = vrot.lane.b32.xlu0 %v1809, 127
    %v1842 = vpop.permute.xlu0 %1841
    %1843 = vrot.lane.b32.xlu0 %v1811, 127
    %v1844 = vpop.permute.xlu0 %1843
    %1845 = vrot.lane.b32.xlu0 %v1813, 127
    %v1846 = vpop.permute.xlu0 %1845
    %1847 = vrot.lane.b32.xlu0 %v1816, 127
    %v1848 = vpop.permute.xlu0 %1847
    %1849 = vrot.lane.b32.xlu0 %v1818, 127
    %v1850 = vpop.permute.xlu0 %1849
    %1851 = vrot.lane.b32.xlu0 %v1820, 127
    %v1852 = vpop.permute.xlu0 %1851
    %1853 = vrot.lane.b32.xlu0 %v1822, 127
    %v1854 = vpop.permute.xlu0 %1853
    %1855 = vrot.lane.b32.xlu0 %v1824, 127
    %v1856 = vpop.permute.xlu0 %1855
    %1857 = vrot.lane.b32.xlu0 %v1826, 127
    %v1858 = vpop.permute.xlu0 %1857
    %1859 = vrot.lane.b32.xlu0 %v1828, 127
    %v1860 = vpop.permute.xlu0 %1859
    %1861 = vrot.lane.b32.xlu0 %v1830, 127
    %v1862 = vpop.permute.xlu0 %1861
    %v1879 = vadd.f32 %v1743, %v1832
    %v1880 = vadd.f32 %v1744, %v1834
    %v1881 = vadd.f32 %v1745, %v1836
    %v1882 = vadd.f32 %v1746, %v1838
    %v1883 = vadd.f32 %v1747, %v1840
    %v1884 = vadd.f32 %v1748, %v1842
    %v1885 = vadd.f32 %v1749, %v1844
    %v1886 = vadd.f32 %v1750, %v1846
    %v1887 = vadd.f32 %v1751, %v1848
    %v1888 = vadd.f32 %v1752, %v1850
    %v1889 = vadd.f32 %v1753, %v1852
    %v1890 = vadd.f32 %v1754, %v1854
    %v1891 = vadd.f32 %v1755, %v1856
    %v1892 = vadd.f32 %v1756, %v1858
    %v1893 = vadd.f32 %v1757, %v1860
    %v1894 = vadd.f32 %v1758, %v1862
    %s1895 = sld [smem:[#allocation3 + $0x11]]
    %v1896 = vstv %s1895
    %v1897 = vmul.f32 %v1896, %v1031
    %v1898 = vmul.f32 %v1896, %v1032
    %v1899 = vmul.f32 %v1896, %v1033
    %v1900 = vmul.f32 %v1896, %v1034
    %v1901 = vmul.f32 %v1896, %v1035
    %v1902 = vmul.f32 %v1896, %v1036
    %v1903 = vmul.f32 %v1896, %v1037
    %v1904 = vmul.f32 %v1896, %v1038
    %v1905 = vmul.f32 %v1896, %v1039
    %v1906 = vmul.f32 %v1896, %v1040
    %v1907 = vmul.f32 %v1896, %v1041
    %v1908 = vmul.f32 %v1896, %v1042
    %v1909 = vmul.f32 %v1896, %v1043
    %v1910 = vmul.f32 %v1896, %v1044
    %v1911 = vmul.f32 %v1896, %v1045
    %v1912 = vmul.f32 %v1896, %v1046
    %v1913 = vmul.f32 %v1896, %v1047
    %v1914 = vmul.f32 %v1896, %v1048
    %v1933 = vrot.slane %v1897, 2
    %v1934 = vrot.slane %v1898, 2
    %v1935 = vsel %vm691, %v1933, %v1934
    %v1936 = vrot.slane %v1899, 2
    %v1937 = vsel %vm691, %v1934, %v1936
    %v1938 = vrot.slane %v1900, 2
    %v1939 = vsel %vm691, %v1936, %v1938
    %v1940 = vrot.slane %v1901, 2
    %v1941 = vsel %vm691, %v1938, %v1940
    %v1942 = vrot.slane %v1902, 2
    %v1943 = vsel %vm691, %v1940, %v1942
    %v1944 = vrot.slane %v1903, 2
    %v1945 = vsel %vm691, %v1942, %v1944
    %v1946 = vrot.slane %v1904, 2
    %v1947 = vsel %vm691, %v1944, %v1946
    %v1948 = vrot.slane %v1905, 2
    %v1949 = vsel %vm691, %v1946, %v1948
    %v1950 = vrot.slane %v1906, 2
    %v1951 = vrot.slane %v1907, 2
    %v1952 = vsel %vm691, %v1950, %v1951
    %v1953 = vrot.slane %v1908, 2
    %v1954 = vsel %vm691, %v1951, %v1953
    %v1955 = vrot.slane %v1909, 2
    %v1956 = vsel %vm691, %v1953, %v1955
    %v1957 = vrot.slane %v1910, 2
    %v1958 = vsel %vm691, %v1955, %v1957
    %v1959 = vrot.slane %v1911, 2
    %v1960 = vsel %vm691, %v1957, %v1959
    %v1961 = vrot.slane %v1912, 2
    %v1962 = vsel %vm691, %v1959, %v1961
    %v1963 = vrot.slane %v1913, 2
    %v1964 = vsel %vm691, %v1961, %v1963
    %v1965 = vrot.slane %v1914, 2
    %v1966 = vsel %vm691, %v1963, %v1965
    %1967 = vrot.lane.b32.xlu0 %v1935, 126
    %v1968 = vpop.permute.xlu0 %1967
    %1969 = vrot.lane.b32.xlu0 %v1937, 126
    %v1970 = vpop.permute.xlu0 %1969
    %1971 = vrot.lane.b32.xlu0 %v1939, 126
    %v1972 = vpop.permute.xlu0 %1971
    %1973 = vrot.lane.b32.xlu0 %v1941, 126
    %v1974 = vpop.permute.xlu0 %1973
    %1975 = vrot.lane.b32.xlu0 %v1943, 126
    %v1976 = vpop.permute.xlu0 %1975
    %1977 = vrot.lane.b32.xlu0 %v1945, 126
    %v1978 = vpop.permute.xlu0 %1977
    %1979 = vrot.lane.b32.xlu0 %v1947, 126
    %v1980 = vpop.permute.xlu0 %1979
    %1981 = vrot.lane.b32.xlu0 %v1949, 126
    %v1982 = vpop.permute.xlu0 %1981
    %1983 = vrot.lane.b32.xlu0 %v1952, 126
    %v1984 = vpop.permute.xlu0 %1983
    %1985 = vrot.lane.b32.xlu0 %v1954, 126
    %v1986 = vpop.permute.xlu0 %1985
    %1987 = vrot.lane.b32.xlu0 %v1956, 126
    %v1988 = vpop.permute.xlu0 %1987
    %1989 = vrot.lane.b32.xlu0 %v1958, 126
    %v1990 = vpop.permute.xlu0 %1989
    %1991 = vrot.lane.b32.xlu0 %v1960, 126
    %v1992 = vpop.permute.xlu0 %1991
    %1993 = vrot.lane.b32.xlu0 %v1962, 126
    %v1994 = vpop.permute.xlu0 %1993
    %1995 = vrot.lane.b32.xlu0 %v1964, 126
    %v1996 = vpop.permute.xlu0 %1995
    %1997 = vrot.lane.b32.xlu0 %v1966, 126
    %v1998 = vpop.permute.xlu0 %1997
    %v2015 = vadd.f32 %v1879, %v1968
    %v2016 = vadd.f32 %v1880, %v1970
    %v2017 = vadd.f32 %v1881, %v1972
    %v2018 = vadd.f32 %v1882, %v1974
    %v2019 = vadd.f32 %v1883, %v1976
    %v2020 = vadd.f32 %v1884, %v1978
    %v2021 = vadd.f32 %v1885, %v1980
    %v2022 = vadd.f32 %v1886, %v1982
    %v2023 = vadd.f32 %v1887, %v1984
    %v2024 = vadd.f32 %v1888, %v1986
    %v2025 = vadd.f32 %v1889, %v1988
    %v2026 = vadd.f32 %v1890, %v1990
    %v2027 = vadd.f32 %v1891, %v1992
    %v2028 = vadd.f32 %v1892, %v1994
    %v2029 = vadd.f32 %v1893, %v1996
    %v2030 = vadd.f32 %v1894, %v1998
    %s2031 = scalar_lea.vmem %s0, 144
    %v2032 = vld [vmem:[%s2031] sm:$0xff]
    %v2033 = vld [vmem:[%s2031 + $0x8] sm:$0xff]
    %v2034 = vld [vmem:[%s2031 + $0x10] sm:$0xff]
    %v2035 = vld [vmem:[%s2031 + $0x18] sm:$0xff]
    %v2036 = vld [vmem:[%s2031 + $0x20] sm:$0xff]
    %v2037 = vld [vmem:[%s2031 + $0x28] sm:$0xff]
    %v2038 = vld [vmem:[%s2031 + $0x30] sm:$0xff]
    %v2039 = vld [vmem:[%s2031 + $0x38] sm:$0xff]
    %v2040 = vld [vmem:[%s2031 + $0x40] sm:$0x3]
    %v2041 = vld [vmem:[%s2031 + $0xd8] sm:$0xff]
    %v2042 = vld [vmem:[%s2031 + $0xe0] sm:$0xff]
    %v2043 = vld [vmem:[%s2031 + $0xe8] sm:$0xff]
    %v2044 = vld [vmem:[%s2031 + $0xf0] sm:$0xff]
    %v2045 = vld [vmem:[%s2031 + $0xf8] sm:$0xff]
    %v2046 = vld [vmem:[%s2031 + $0x100] sm:$0xff]
    %v2047 = vld [vmem:[%s2031 + $0x108] sm:$0xff]
    %v2048 = vld [vmem:[%s2031 + $0x110] sm:$0xff]
    %v2049 = vld [vmem:[%s2031 + $0x118] sm:$0x3]
    %s2050 = sld [smem:[#allocation3 + $0x12]]
    %v2051 = vstv %s2050
    %v2052 = vmul.f32 %v2051, %v2032
    %v2053 = vmul.f32 %v2051, %v2033
    %v2054 = vmul.f32 %v2051, %v2034
    %v2055 = vmul.f32 %v2051, %v2035
    %v2056 = vmul.f32 %v2051, %v2036
    %v2057 = vmul.f32 %v2051, %v2037
    %v2058 = vmul.f32 %v2051, %v2038
    %v2059 = vmul.f32 %v2051, %v2039
    %v2060 = vmul.f32 %v2051, %v2041
    %v2061 = vmul.f32 %v2051, %v2042
    %v2062 = vmul.f32 %v2051, %v2043
    %v2063 = vmul.f32 %v2051, %v2044
    %v2064 = vmul.f32 %v2051, %v2045
    %v2065 = vmul.f32 %v2051, %v2046
    %v2066 = vmul.f32 %v2051, %v2047
    %v2067 = vmul.f32 %v2051, %v2048
    %v2068 = vadd.f32 %v2015, %v2052
    %v2069 = vadd.f32 %v2016, %v2053
    %v2070 = vadd.f32 %v2017, %v2054
    %v2071 = vadd.f32 %v2018, %v2055
    %v2072 = vadd.f32 %v2019, %v2056
    %v2073 = vadd.f32 %v2020, %v2057
    %v2074 = vadd.f32 %v2021, %v2058
    %v2075 = vadd.f32 %v2022, %v2059
    %v2076 = vadd.f32 %v2023, %v2060
    %v2077 = vadd.f32 %v2024, %v2061
    %v2078 = vadd.f32 %v2025, %v2062
    %v2079 = vadd.f32 %v2026, %v2063
    %v2080 = vadd.f32 %v2027, %v2064
    %v2081 = vadd.f32 %v2028, %v2065
    %v2082 = vadd.f32 %v2029, %v2066
    %v2083 = vadd.f32 %v2030, %v2067
    %s2084 = sld [smem:[#allocation3 + $0x13]]
    %v2085 = vstv %s2084
    %v2086 = vmul.f32 %v2085, %v2032
    %v2087 = vmul.f32 %v2085, %v2033
    %v2088 = vmul.f32 %v2085, %v2034
    %v2089 = vmul.f32 %v2085, %v2035
    %v2090 = vmul.f32 %v2085, %v2036
    %v2091 = vmul.f32 %v2085, %v2037
    %v2092 = vmul.f32 %v2085, %v2038
    %v2093 = vmul.f32 %v2085, %v2039
    %v2094 = vmul.f32 %v2085, %v2041
    %v2095 = vmul.f32 %v2085, %v2042
    %v2096 = vmul.f32 %v2085, %v2043
    %v2097 = vmul.f32 %v2085, %v2044
    %v2098 = vmul.f32 %v2085, %v2045
    %v2099 = vmul.f32 %v2085, %v2046
    %v2100 = vmul.f32 %v2085, %v2047
    %v2101 = vmul.f32 %v2085, %v2048
    %2118 = vrot.lane.b32.xlu0 %v2086, 127
    %v2119 = vpop.permute.xlu0 %2118
    %2120 = vrot.lane.b32.xlu0 %v2087, 127
    %v2121 = vpop.permute.xlu0 %2120
    %2122 = vrot.lane.b32.xlu0 %v2088, 127
    %v2123 = vpop.permute.xlu0 %2122
    %2124 = vrot.lane.b32.xlu0 %v2089, 127
    %v2125 = vpop.permute.xlu0 %2124
    %2126 = vrot.lane.b32.xlu0 %v2090, 127
    %v2127 = vpop.permute.xlu0 %2126
    %2128 = vrot.lane.b32.xlu0 %v2091, 127
    %v2129 = vpop.permute.xlu0 %2128
    %2130 = vrot.lane.b32.xlu0 %v2092, 127
    %v2131 = vpop.permute.xlu0 %2130
    %2132 = vrot.lane.b32.xlu0 %v2093, 127
    %v2133 = vpop.permute.xlu0 %2132
    %2134 = vrot.lane.b32.xlu0 %v2094, 127
    %v2135 = vpop.permute.xlu0 %2134
    %2136 = vrot.lane.b32.xlu0 %v2095, 127
    %v2137 = vpop.permute.xlu0 %2136
    %2138 = vrot.lane.b32.xlu0 %v2096, 127
    %v2139 = vpop.permute.xlu0 %2138
    %2140 = vrot.lane.b32.xlu0 %v2097, 127
    %v2141 = vpop.permute.xlu0 %2140
    %2142 = vrot.lane.b32.xlu0 %v2098, 127
    %v2143 = vpop.permute.xlu0 %2142
    %2144 = vrot.lane.b32.xlu0 %v2099, 127
    %v2145 = vpop.permute.xlu0 %2144
    %2146 = vrot.lane.b32.xlu0 %v2100, 127
    %v2147 = vpop.permute.xlu0 %2146
    %2148 = vrot.lane.b32.xlu0 %v2101, 127
    %v2149 = vpop.permute.xlu0 %2148
    %v2166 = vadd.f32 %v2068, %v2119
    %v2167 = vadd.f32 %v2069, %v2121
    %v2168 = vadd.f32 %v2070, %v2123
    %v2169 = vadd.f32 %v2071, %v2125
    %v2170 = vadd.f32 %v2072, %v2127
    %v2171 = vadd.f32 %v2073, %v2129
    %v2172 = vadd.f32 %v2074, %v2131
    %v2173 = vadd.f32 %v2075, %v2133
    %v2174 = vadd.f32 %v2076, %v2135
    %v2175 = vadd.f32 %v2077, %v2137
    %v2176 = vadd.f32 %v2078, %v2139
    %v2177 = vadd.f32 %v2079, %v2141
    %v2178 = vadd.f32 %v2080, %v2143
    %v2179 = vadd.f32 %v2081, %v2145
    %v2180 = vadd.f32 %v2082, %v2147
    %v2181 = vadd.f32 %v2083, %v2149
    %s2182 = sld [smem:[#allocation3 + $0x14]]
    %v2183 = vstv %s2182
    %v2184 = vmul.f32 %v2183, %v2032
    %v2185 = vmul.f32 %v2183, %v2033
    %v2186 = vmul.f32 %v2183, %v2034
    %v2187 = vmul.f32 %v2183, %v2035
    %v2188 = vmul.f32 %v2183, %v2036
    %v2189 = vmul.f32 %v2183, %v2037
    %v2190 = vmul.f32 %v2183, %v2038
    %v2191 = vmul.f32 %v2183, %v2039
    %v2192 = vmul.f32 %v2183, %v2041
    %v2193 = vmul.f32 %v2183, %v2042
    %v2194 = vmul.f32 %v2183, %v2043
    %v2195 = vmul.f32 %v2183, %v2044
    %v2196 = vmul.f32 %v2183, %v2045
    %v2197 = vmul.f32 %v2183, %v2046
    %v2198 = vmul.f32 %v2183, %v2047
    %v2199 = vmul.f32 %v2183, %v2048
    %2216 = vrot.lane.b32.xlu0 %v2184, 126
    %v2217 = vpop.permute.xlu0 %2216
    %2218 = vrot.lane.b32.xlu0 %v2185, 126
    %v2219 = vpop.permute.xlu0 %2218
    %2220 = vrot.lane.b32.xlu0 %v2186, 126
    %v2221 = vpop.permute.xlu0 %2220
    %2222 = vrot.lane.b32.xlu0 %v2187, 126
    %v2223 = vpop.permute.xlu0 %2222
    %2224 = vrot.lane.b32.xlu0 %v2188, 126
    %v2225 = vpop.permute.xlu0 %2224
    %2226 = vrot.lane.b32.xlu0 %v2189, 126
    %v2227 = vpop.permute.xlu0 %2226
    %2228 = vrot.lane.b32.xlu0 %v2190, 126
    %v2229 = vpop.permute.xlu0 %2228
    %2230 = vrot.lane.b32.xlu0 %v2191, 126
    %v2231 = vpop.permute.xlu0 %2230
    %2232 = vrot.lane.b32.xlu0 %v2192, 126
    %v2233 = vpop.permute.xlu0 %2232
    %2234 = vrot.lane.b32.xlu0 %v2193, 126
    %v2235 = vpop.permute.xlu0 %2234
    %2236 = vrot.lane.b32.xlu0 %v2194, 126
    %v2237 = vpop.permute.xlu0 %2236
    %2238 = vrot.lane.b32.xlu0 %v2195, 126
    %v2239 = vpop.permute.xlu0 %2238
    %2240 = vrot.lane.b32.xlu0 %v2196, 126
    %v2241 = vpop.permute.xlu0 %2240
    %2242 = vrot.lane.b32.xlu0 %v2197, 126
    %v2243 = vpop.permute.xlu0 %2242
    %2244 = vrot.lane.b32.xlu0 %v2198, 126
    %v2245 = vpop.permute.xlu0 %2244
    %2246 = vrot.lane.b32.xlu0 %v2199, 126
    %v2247 = vpop.permute.xlu0 %2246
    %v2264 = vadd.f32 %v2166, %v2217
    %v2265 = vadd.f32 %v2167, %v2219
    %v2266 = vadd.f32 %v2168, %v2221
    %v2267 = vadd.f32 %v2169, %v2223
    %v2268 = vadd.f32 %v2170, %v2225
    %v2269 = vadd.f32 %v2171, %v2227
    %v2270 = vadd.f32 %v2172, %v2229
    %v2271 = vadd.f32 %v2173, %v2231
    %v2272 = vadd.f32 %v2174, %v2233
    %v2273 = vadd.f32 %v2175, %v2235
    %v2274 = vadd.f32 %v2176, %v2237
    %v2275 = vadd.f32 %v2177, %v2239
    %v2276 = vadd.f32 %v2178, %v2241
    %v2277 = vadd.f32 %v2179, %v2243
    %v2278 = vadd.f32 %v2180, %v2245
    %v2279 = vadd.f32 %v2181, %v2247
    %s2280 = sld [smem:[#allocation3 + $0x15]]
    %v2281 = vstv %s2280
    %v2282 = vmul.f32 %v2281, %v2032
    %v2283 = vmul.f32 %v2281, %v2033
    %v2284 = vmul.f32 %v2281, %v2034
    %v2285 = vmul.f32 %v2281, %v2035
    %v2286 = vmul.f32 %v2281, %v2036
    %v2287 = vmul.f32 %v2281, %v2037
    %v2288 = vmul.f32 %v2281, %v2038
    %v2289 = vmul.f32 %v2281, %v2039
    %v2290 = vmul.f32 %v2281, %v2040
    %v2291 = vmul.f32 %v2281, %v2041
    %v2292 = vmul.f32 %v2281, %v2042
    %v2293 = vmul.f32 %v2281, %v2043
    %v2294 = vmul.f32 %v2281, %v2044
    %v2295 = vmul.f32 %v2281, %v2045
    %v2296 = vmul.f32 %v2281, %v2046
    %v2297 = vmul.f32 %v2281, %v2047
    %v2298 = vmul.f32 %v2281, %v2048
    %v2299 = vmul.f32 %v2281, %v2049
    %v2318 = vrot.slane %v2282, 1
    %v2319 = vrot.slane %v2283, 1
    %v2320 = vsel %vm314, %v2318, %v2319
    %v2321 = vrot.slane %v2284, 1
    %v2322 = vsel %vm314, %v2319, %v2321
    %v2323 = vrot.slane %v2285, 1
    %v2324 = vsel %vm314, %v2321, %v2323
    %v2325 = vrot.slane %v2286, 1
    %v2326 = vsel %vm314, %v2323, %v2325
    %v2327 = vrot.slane %v2287, 1
    %v2328 = vsel %vm314, %v2325, %v2327
    %v2329 = vrot.slane %v2288, 1
    %v2330 = vsel %vm314, %v2327, %v2329
    %v2331 = vrot.slane %v2289, 1
    %v2332 = vsel %vm314, %v2329, %v2331
    %v2333 = vrot.slane %v2290, 1
    %v2334 = vsel %vm314, %v2331, %v2333
    %v2335 = vrot.slane %v2291, 1
    %v2336 = vrot.slane %v2292, 1
    %v2337 = vsel %vm314, %v2335, %v2336
    %v2338 = vrot.slane %v2293, 1
    %v2339 = vsel %vm314, %v2336, %v2338
    %v2340 = vrot.slane %v2294, 1
    %v2341 = vsel %vm314, %v2338, %v2340
    %v2342 = vrot.slane %v2295, 1
    %v2343 = vsel %vm314, %v2340, %v2342
    %v2344 = vrot.slane %v2296, 1
    %v2345 = vsel %vm314, %v2342, %v2344
    %v2346 = vrot.slane %v2297, 1
    %v2347 = vsel %vm314, %v2344, %v2346
    %v2348 = vrot.slane %v2298, 1
    %v2349 = vsel %vm314, %v2346, %v2348
    %v2350 = vrot.slane %v2299, 1
    %v2351 = vsel %vm314, %v2348, %v2350
    %v2368 = vadd.f32 %v2264, %v2320
    %v2369 = vadd.f32 %v2265, %v2322
    %v2370 = vadd.f32 %v2266, %v2324
    %v2371 = vadd.f32 %v2267, %v2326
    %v2372 = vadd.f32 %v2268, %v2328
    %v2373 = vadd.f32 %v2269, %v2330
    %v2374 = vadd.f32 %v2270, %v2332
    %v2375 = vadd.f32 %v2271, %v2334
    %v2376 = vadd.f32 %v2272, %v2337
    %v2377 = vadd.f32 %v2273, %v2339
    %v2378 = vadd.f32 %v2274, %v2341
    %v2379 = vadd.f32 %v2275, %v2343
    %v2380 = vadd.f32 %v2276, %v2345
    %v2381 = vadd.f32 %v2277, %v2347
    %v2382 = vadd.f32 %v2278, %v2349
    %v2383 = vadd.f32 %v2279, %v2351
    %s2384 = sld [smem:[#allocation3 + $0x16]]
    %v2385 = vstv %s2384
    %v2386 = vmul.f32 %v2385, %v2032
    %v2387 = vmul.f32 %v2385, %v2033
    %v2388 = vmul.f32 %v2385, %v2034
    %v2389 = vmul.f32 %v2385, %v2035
    %v2390 = vmul.f32 %v2385, %v2036
    %v2391 = vmul.f32 %v2385, %v2037
    %v2392 = vmul.f32 %v2385, %v2038
    %v2393 = vmul.f32 %v2385, %v2039
    %v2394 = vmul.f32 %v2385, %v2040
    %v2395 = vmul.f32 %v2385, %v2041
    %v2396 = vmul.f32 %v2385, %v2042
    %v2397 = vmul.f32 %v2385, %v2043
    %v2398 = vmul.f32 %v2385, %v2044
    %v2399 = vmul.f32 %v2385, %v2045
    %v2400 = vmul.f32 %v2385, %v2046
    %v2401 = vmul.f32 %v2385, %v2047
    %v2402 = vmul.f32 %v2385, %v2048
    %v2403 = vmul.f32 %v2385, %v2049
    %v2422 = vrot.slane %v2386, 1
    %v2423 = vrot.slane %v2387, 1
    %v2424 = vsel %vm314, %v2422, %v2423
    %v2425 = vrot.slane %v2388, 1
    %v2426 = vsel %vm314, %v2423, %v2425
    %v2427 = vrot.slane %v2389, 1
    %v2428 = vsel %vm314, %v2425, %v2427
    %v2429 = vrot.slane %v2390, 1
    %v2430 = vsel %vm314, %v2427, %v2429
    %v2431 = vrot.slane %v2391, 1
    %v2432 = vsel %vm314, %v2429, %v2431
    %v2433 = vrot.slane %v2392, 1
    %v2434 = vsel %vm314, %v2431, %v2433
    %v2435 = vrot.slane %v2393, 1
    %v2436 = vsel %vm314, %v2433, %v2435
    %v2437 = vrot.slane %v2394, 1
    %v2438 = vsel %vm314, %v2435, %v2437
    %v2439 = vrot.slane %v2395, 1
    %v2440 = vrot.slane %v2396, 1
    %v2441 = vsel %vm314, %v2439, %v2440
    %v2442 = vrot.slane %v2397, 1
    %v2443 = vsel %vm314, %v2440, %v2442
    %v2444 = vrot.slane %v2398, 1
    %v2445 = vsel %vm314, %v2442, %v2444
    %v2446 = vrot.slane %v2399, 1
    %v2447 = vsel %vm314, %v2444, %v2446
    %v2448 = vrot.slane %v2400, 1
    %v2449 = vsel %vm314, %v2446, %v2448
    %v2450 = vrot.slane %v2401, 1
    %v2451 = vsel %vm314, %v2448, %v2450
    %v2452 = vrot.slane %v2402, 1
    %v2453 = vsel %vm314, %v2450, %v2452
    %v2454 = vrot.slane %v2403, 1
    %v2455 = vsel %vm314, %v2452, %v2454
    %2456 = vrot.lane.b32.xlu0 %v2424, 127
    %v2457 = vpop.permute.xlu0 %2456
    %2458 = vrot.lane.b32.xlu0 %v2426, 127
    %v2459 = vpop.permute.xlu0 %2458
    %2460 = vrot.lane.b32.xlu0 %v2428, 127
    %v2461 = vpop.permute.xlu0 %2460
    %2462 = vrot.lane.b32.xlu0 %v2430, 127
    %v2463 = vpop.permute.xlu0 %2462
    %2464 = vrot.lane.b32.xlu0 %v2432, 127
    %v2465 = vpop.permute.xlu0 %2464
    %2466 = vrot.lane.b32.xlu0 %v2434, 127
    %v2467 = vpop.permute.xlu0 %2466
    %2468 = vrot.lane.b32.xlu0 %v2436, 127
    %v2469 = vpop.permute.xlu0 %2468
    %2470 = vrot.lane.b32.xlu0 %v2438, 127
    %v2471 = vpop.permute.xlu0 %2470
    %2472 = vrot.lane.b32.xlu0 %v2441, 127
    %v2473 = vpop.permute.xlu0 %2472
    %2474 = vrot.lane.b32.xlu0 %v2443, 127
    %v2475 = vpop.permute.xlu0 %2474
    %2476 = vrot.lane.b32.xlu0 %v2445, 127
    %v2477 = vpop.permute.xlu0 %2476
    %2478 = vrot.lane.b32.xlu0 %v2447, 127
    %v2479 = vpop.permute.xlu0 %2478
    %2480 = vrot.lane.b32.xlu0 %v2449, 127
    %v2481 = vpop.permute.xlu0 %2480
    %2482 = vrot.lane.b32.xlu0 %v2451, 127
    %v2483 = vpop.permute.xlu0 %2482
    %2484 = vrot.lane.b32.xlu0 %v2453, 127
    %v2485 = vpop.permute.xlu0 %2484
    %2486 = vrot.lane.b32.xlu0 %v2455, 127
    %v2487 = vpop.permute.xlu0 %2486
    %v2504 = vadd.f32 %v2368, %v2457
    %v2505 = vadd.f32 %v2369, %v2459
    %v2506 = vadd.f32 %v2370, %v2461
    %v2507 = vadd.f32 %v2371, %v2463
    %v2508 = vadd.f32 %v2372, %v2465
    %v2509 = vadd.f32 %v2373, %v2467
    %v2510 = vadd.f32 %v2374, %v2469
    %v2511 = vadd.f32 %v2375, %v2471
    %v2512 = vadd.f32 %v2376, %v2473
    %v2513 = vadd.f32 %v2377, %v2475
    %v2514 = vadd.f32 %v2378, %v2477
    %v2515 = vadd.f32 %v2379, %v2479
    %v2516 = vadd.f32 %v2380, %v2481
    %v2517 = vadd.f32 %v2381, %v2483
    %v2518 = vadd.f32 %v2382, %v2485
    %v2519 = vadd.f32 %v2383, %v2487
    %s2520 = sld [smem:[#allocation3 + $0x17]]
    %v2521 = vstv %s2520
    %v2522 = vmul.f32 %v2521, %v2032
    %v2523 = vmul.f32 %v2521, %v2033
    %v2524 = vmul.f32 %v2521, %v2034
    %v2525 = vmul.f32 %v2521, %v2035
    %v2526 = vmul.f32 %v2521, %v2036
    %v2527 = vmul.f32 %v2521, %v2037
    %v2528 = vmul.f32 %v2521, %v2038
    %v2529 = vmul.f32 %v2521, %v2039
    %v2530 = vmul.f32 %v2521, %v2040
    %v2531 = vmul.f32 %v2521, %v2041
    %v2532 = vmul.f32 %v2521, %v2042
    %v2533 = vmul.f32 %v2521, %v2043
    %v2534 = vmul.f32 %v2521, %v2044
    %v2535 = vmul.f32 %v2521, %v2045
    %v2536 = vmul.f32 %v2521, %v2046
    %v2537 = vmul.f32 %v2521, %v2047
    %v2538 = vmul.f32 %v2521, %v2048
    %v2539 = vmul.f32 %v2521, %v2049
    %v2558 = vrot.slane %v2522, 1
    %v2559 = vrot.slane %v2523, 1
    %v2560 = vsel %vm314, %v2558, %v2559
    %v2561 = vrot.slane %v2524, 1
    %v2562 = vsel %vm314, %v2559, %v2561
    %v2563 = vrot.slane %v2525, 1
    %v2564 = vsel %vm314, %v2561, %v2563
    %v2565 = vrot.slane %v2526, 1
    %v2566 = vsel %vm314, %v2563, %v2565
    %v2567 = vrot.slane %v2527, 1
    %v2568 = vsel %vm314, %v2565, %v2567
    %v2569 = vrot.slane %v2528, 1
    %v2570 = vsel %vm314, %v2567, %v2569
    %v2571 = vrot.slane %v2529, 1
    %v2572 = vsel %vm314, %v2569, %v2571
    %v2573 = vrot.slane %v2530, 1
    %v2574 = vsel %vm314, %v2571, %v2573
    %v2575 = vrot.slane %v2531, 1
    %v2576 = vrot.slane %v2532, 1
    %v2577 = vsel %vm314, %v2575, %v2576
    %v2578 = vrot.slane %v2533, 1
    %v2579 = vsel %vm314, %v2576, %v2578
    %v2580 = vrot.slane %v2534, 1
    %v2581 = vsel %vm314, %v2578, %v2580
    %v2582 = vrot.slane %v2535, 1
    %v2583 = vsel %vm314, %v2580, %v2582
    %v2584 = vrot.slane %v2536, 1
    %v2585 = vsel %vm314, %v2582, %v2584
    %v2586 = vrot.slane %v2537, 1
    %v2587 = vsel %vm314, %v2584, %v2586
    %v2588 = vrot.slane %v2538, 1
    %v2589 = vsel %vm314, %v2586, %v2588
    %v2590 = vrot.slane %v2539, 1
    %v2591 = vsel %vm314, %v2588, %v2590
    %2592 = vrot.lane.b32.xlu0 %v2560, 126
    %v2593 = vpop.permute.xlu0 %2592
    %2594 = vrot.lane.b32.xlu0 %v2562, 126
    %v2595 = vpop.permute.xlu0 %2594
    %2596 = vrot.lane.b32.xlu0 %v2564, 126
    %v2597 = vpop.permute.xlu0 %2596
    %2598 = vrot.lane.b32.xlu0 %v2566, 126
    %v2599 = vpop.permute.xlu0 %2598
    %2600 = vrot.lane.b32.xlu0 %v2568, 126
    %v2601 = vpop.permute.xlu0 %2600
    %2602 = vrot.lane.b32.xlu0 %v2570, 126
    %v2603 = vpop.permute.xlu0 %2602
    %2604 = vrot.lane.b32.xlu0 %v2572, 126
    %v2605 = vpop.permute.xlu0 %2604
    %2606 = vrot.lane.b32.xlu0 %v2574, 126
    %v2607 = vpop.permute.xlu0 %2606
    %2608 = vrot.lane.b32.xlu0 %v2577, 126
    %v2609 = vpop.permute.xlu0 %2608
    %2610 = vrot.lane.b32.xlu0 %v2579, 126
    %v2611 = vpop.permute.xlu0 %2610
    %2612 = vrot.lane.b32.xlu0 %v2581, 126
    %v2613 = vpop.permute.xlu0 %2612
    %2614 = vrot.lane.b32.xlu0 %v2583, 126
    %v2615 = vpop.permute.xlu0 %2614
    %2616 = vrot.lane.b32.xlu0 %v2585, 126
    %v2617 = vpop.permute.xlu0 %2616
    %2618 = vrot.lane.b32.xlu0 %v2587, 126
    %v2619 = vpop.permute.xlu0 %2618
    %2620 = vrot.lane.b32.xlu0 %v2589, 126
    %v2621 = vpop.permute.xlu0 %2620
    %2622 = vrot.lane.b32.xlu0 %v2591, 126
    %v2623 = vpop.permute.xlu0 %2622
    %v2640 = vadd.f32 %v2504, %v2593
    %v2641 = vadd.f32 %v2505, %v2595
    %v2642 = vadd.f32 %v2506, %v2597
    %v2643 = vadd.f32 %v2507, %v2599
    %v2644 = vadd.f32 %v2508, %v2601
    %v2645 = vadd.f32 %v2509, %v2603
    %v2646 = vadd.f32 %v2510, %v2605
    %v2647 = vadd.f32 %v2511, %v2607
    %v2648 = vadd.f32 %v2512, %v2609
    %v2649 = vadd.f32 %v2513, %v2611
    %v2650 = vadd.f32 %v2514, %v2613
    %v2651 = vadd.f32 %v2515, %v2615
    %v2652 = vadd.f32 %v2516, %v2617
    %v2653 = vadd.f32 %v2517, %v2619
    %v2654 = vadd.f32 %v2518, %v2621
    %v2655 = vadd.f32 %v2519, %v2623
    %s2656 = sld [smem:[#allocation3 + $0x18]]
    %v2657 = vstv %s2656
    %v2658 = vmul.f32 %v2657, %v2032
    %v2659 = vmul.f32 %v2657, %v2033
    %v2660 = vmul.f32 %v2657, %v2034
    %v2661 = vmul.f32 %v2657, %v2035
    %v2662 = vmul.f32 %v2657, %v2036
    %v2663 = vmul.f32 %v2657, %v2037
    %v2664 = vmul.f32 %v2657, %v2038
    %v2665 = vmul.f32 %v2657, %v2039
    %v2666 = vmul.f32 %v2657, %v2040
    %v2667 = vmul.f32 %v2657, %v2041
    %v2668 = vmul.f32 %v2657, %v2042
    %v2669 = vmul.f32 %v2657, %v2043
    %v2670 = vmul.f32 %v2657, %v2044
    %v2671 = vmul.f32 %v2657, %v2045
    %v2672 = vmul.f32 %v2657, %v2046
    %v2673 = vmul.f32 %v2657, %v2047
    %v2674 = vmul.f32 %v2657, %v2048
    %v2675 = vmul.f32 %v2657, %v2049
    %v2694 = vrot.slane %v2658, 2
    %v2695 = vrot.slane %v2659, 2
    %v2696 = vsel %vm691, %v2694, %v2695
    %v2697 = vrot.slane %v2660, 2
    %v2698 = vsel %vm691, %v2695, %v2697
    %v2699 = vrot.slane %v2661, 2
    %v2700 = vsel %vm691, %v2697, %v2699
    %v2701 = vrot.slane %v2662, 2
    %v2702 = vsel %vm691, %v2699, %v2701
    %v2703 = vrot.slane %v2663, 2
    %v2704 = vsel %vm691, %v2701, %v2703
    %v2705 = vrot.slane %v2664, 2
    %v2706 = vsel %vm691, %v2703, %v2705
    %v2707 = vrot.slane %v2665, 2
    %v2708 = vsel %vm691, %v2705, %v2707
    %v2709 = vrot.slane %v2666, 2
    %v2710 = vsel %vm691, %v2707, %v2709
    %v2711 = vrot.slane %v2667, 2
    %v2712 = vrot.slane %v2668, 2
    %v2713 = vsel %vm691, %v2711, %v2712
    %v2714 = vrot.slane %v2669, 2
    %v2715 = vsel %vm691, %v2712, %v2714
    %v2716 = vrot.slane %v2670, 2
    %v2717 = vsel %vm691, %v2714, %v2716
    %v2718 = vrot.slane %v2671, 2
    %v2719 = vsel %vm691, %v2716, %v2718
    %v2720 = vrot.slane %v2672, 2
    %v2721 = vsel %vm691, %v2718, %v2720
    %v2722 = vrot.slane %v2673, 2
    %v2723 = vsel %vm691, %v2720, %v2722
    %v2724 = vrot.slane %v2674, 2
    %v2725 = vsel %vm691, %v2722, %v2724
    %v2726 = vrot.slane %v2675, 2
    %v2727 = vsel %vm691, %v2724, %v2726
    %v2744 = vadd.f32 %v2640, %v2696
    %v2745 = vadd.f32 %v2641, %v2698
    %v2746 = vadd.f32 %v2642, %v2700
    %v2747 = vadd.f32 %v2643, %v2702
    %v2748 = vadd.f32 %v2644, %v2704
    %v2749 = vadd.f32 %v2645, %v2706
    %v2750 = vadd.f32 %v2646, %v2708
    %v2751 = vadd.f32 %v2647, %v2710
    %v2752 = vadd.f32 %v2648, %v2713
    %v2753 = vadd.f32 %v2649, %v2715
    %v2754 = vadd.f32 %v2650, %v2717
    %v2755 = vadd.f32 %v2651, %v2719
    %v2756 = vadd.f32 %v2652, %v2721
    %v2757 = vadd.f32 %v2653, %v2723
    %v2758 = vadd.f32 %v2654, %v2725
    %v2759 = vadd.f32 %v2655, %v2727
    %s2760 = sld [smem:[#allocation3 + $0x19]]
    %v2761 = vstv %s2760
    %v2762 = vmul.f32 %v2761, %v2032
    %v2763 = vmul.f32 %v2761, %v2033
    %v2764 = vmul.f32 %v2761, %v2034
    %v2765 = vmul.f32 %v2761, %v2035
    %v2766 = vmul.f32 %v2761, %v2036
    %v2767 = vmul.f32 %v2761, %v2037
    %v2768 = vmul.f32 %v2761, %v2038
    %v2769 = vmul.f32 %v2761, %v2039
    %v2770 = vmul.f32 %v2761, %v2040
    %v2771 = vmul.f32 %v2761, %v2041
    %v2772 = vmul.f32 %v2761, %v2042
    %v2773 = vmul.f32 %v2761, %v2043
    %v2774 = vmul.f32 %v2761, %v2044
    %v2775 = vmul.f32 %v2761, %v2045
    %v2776 = vmul.f32 %v2761, %v2046
    %v2777 = vmul.f32 %v2761, %v2047
    %v2778 = vmul.f32 %v2761, %v2048
    %v2779 = vmul.f32 %v2761, %v2049
    %v2798 = vrot.slane %v2762, 2
    %v2799 = vrot.slane %v2763, 2
    %v2800 = vsel %vm691, %v2798, %v2799
    %v2801 = vrot.slane %v2764, 2
    %v2802 = vsel %vm691, %v2799, %v2801
    %v2803 = vrot.slane %v2765, 2
    %v2804 = vsel %vm691, %v2801, %v2803
    %v2805 = vrot.slane %v2766, 2
    %v2806 = vsel %vm691, %v2803, %v2805
    %v2807 = vrot.slane %v2767, 2
    %v2808 = vsel %vm691, %v2805, %v2807
    %v2809 = vrot.slane %v2768, 2
    %v2810 = vsel %vm691, %v2807, %v2809
    %v2811 = vrot.slane %v2769, 2
    %v2812 = vsel %vm691, %v2809, %v2811
    %v2813 = vrot.slane %v2770, 2
    %v2814 = vsel %vm691, %v2811, %v2813
    %v2815 = vrot.slane %v2771, 2
    %v2816 = vrot.slane %v2772, 2
    %v2817 = vsel %vm691, %v2815, %v2816
    %v2818 = vrot.slane %v2773, 2
    %v2819 = vsel %vm691, %v2816, %v2818
    %v2820 = vrot.slane %v2774, 2
    %v2821 = vsel %vm691, %v2818, %v2820
    %v2822 = vrot.slane %v2775, 2
    %v2823 = vsel %vm691, %v2820, %v2822
    %v2824 = vrot.slane %v2776, 2
    %v2825 = vsel %vm691, %v2822, %v2824
    %v2826 = vrot.slane %v2777, 2
    %v2827 = vsel %vm691, %v2824, %v2826
    %v2828 = vrot.slane %v2778, 2
    %v2829 = vsel %vm691, %v2826, %v2828
    %v2830 = vrot.slane %v2779, 2
    %v2831 = vsel %vm691, %v2828, %v2830
    %2832 = vrot.lane.b32.xlu0 %v2800, 127
    %v2833 = vpop.permute.xlu0 %2832
    %2834 = vrot.lane.b32.xlu0 %v2802, 127
    %v2835 = vpop.permute.xlu0 %2834
    %2836 = vrot.lane.b32.xlu0 %v2804, 127
    %v2837 = vpop.permute.xlu0 %2836
    %2838 = vrot.lane.b32.xlu0 %v2806, 127
    %v2839 = vpop.permute.xlu0 %2838
    %2840 = vrot.lane.b32.xlu0 %v2808, 127
    %v2841 = vpop.permute.xlu0 %2840
    %2842 = vrot.lane.b32.xlu0 %v2810, 127
    %v2843 = vpop.permute.xlu0 %2842
    %2844 = vrot.lane.b32.xlu0 %v2812, 127
    %v2845 = vpop.permute.xlu0 %2844
    %2846 = vrot.lane.b32.xlu0 %v2814, 127
    %v2847 = vpop.permute.xlu0 %2846
    %2848 = vrot.lane.b32.xlu0 %v2817, 127
    %v2849 = vpop.permute.xlu0 %2848
    %2850 = vrot.lane.b32.xlu0 %v2819, 127
    %v2851 = vpop.permute.xlu0 %2850
    %2852 = vrot.lane.b32.xlu0 %v2821, 127
    %v2853 = vpop.permute.xlu0 %2852
    %2854 = vrot.lane.b32.xlu0 %v2823, 127
    %v2855 = vpop.permute.xlu0 %2854
    %2856 = vrot.lane.b32.xlu0 %v2825, 127
    %v2857 = vpop.permute.xlu0 %2856
    %2858 = vrot.lane.b32.xlu0 %v2827, 127
    %v2859 = vpop.permute.xlu0 %2858
    %2860 = vrot.lane.b32.xlu0 %v2829, 127
    %v2861 = vpop.permute.xlu0 %2860
    %2862 = vrot.lane.b32.xlu0 %v2831, 127
    %v2863 = vpop.permute.xlu0 %2862
    %v2880 = vadd.f32 %v2744, %v2833
    %v2881 = vadd.f32 %v2745, %v2835
    %v2882 = vadd.f32 %v2746, %v2837
    %v2883 = vadd.f32 %v2747, %v2839
    %v2884 = vadd.f32 %v2748, %v2841
    %v2885 = vadd.f32 %v2749, %v2843
    %v2886 = vadd.f32 %v2750, %v2845
    %v2887 = vadd.f32 %v2751, %v2847
    %v2888 = vadd.f32 %v2752, %v2849
    %v2889 = vadd.f32 %v2753, %v2851
    %v2890 = vadd.f32 %v2754, %v2853
    %v2891 = vadd.f32 %v2755, %v2855
    %v2892 = vadd.f32 %v2756, %v2857
    %v2893 = vadd.f32 %v2757, %v2859
    %v2894 = vadd.f32 %v2758, %v2861
    %v2895 = vadd.f32 %v2759, %v2863
    %s2896 = sld [smem:[#allocation3 + $0x1a]]
    %v2897 = vstv %s2896
    %v2898 = vmul.f32 %v2897, %v2032
    %v2899 = vmul.f32 %v2897, %v2033
    %v2900 = vmul.f32 %v2897, %v2034
    %v2901 = vmul.f32 %v2897, %v2035
    %v2902 = vmul.f32 %v2897, %v2036
    %v2903 = vmul.f32 %v2897, %v2037
    %v2904 = vmul.f32 %v2897, %v2038
    %v2905 = vmul.f32 %v2897, %v2039
    %v2906 = vmul.f32 %v2897, %v2040
    %v2907 = vmul.f32 %v2897, %v2041
    %v2908 = vmul.f32 %v2897, %v2042
    %v2909 = vmul.f32 %v2897, %v2043
    %v2910 = vmul.f32 %v2897, %v2044
    %v2911 = vmul.f32 %v2897, %v2045
    %v2912 = vmul.f32 %v2897, %v2046
    %v2913 = vmul.f32 %v2897, %v2047
    %v2914 = vmul.f32 %v2897, %v2048
    %v2915 = vmul.f32 %v2897, %v2049
    %v2934 = vrot.slane %v2898, 2
    %v2935 = vrot.slane %v2899, 2
    %v2936 = vsel %vm691, %v2934, %v2935
    %v2937 = vrot.slane %v2900, 2
    %v2938 = vsel %vm691, %v2935, %v2937
    %v2939 = vrot.slane %v2901, 2
    %v2940 = vsel %vm691, %v2937, %v2939
    %v2941 = vrot.slane %v2902, 2
    %v2942 = vsel %vm691, %v2939, %v2941
    %v2943 = vrot.slane %v2903, 2
    %v2944 = vsel %vm691, %v2941, %v2943
    %v2945 = vrot.slane %v2904, 2
    %v2946 = vsel %vm691, %v2943, %v2945
    %v2947 = vrot.slane %v2905, 2
    %v2948 = vsel %vm691, %v2945, %v2947
    %v2949 = vrot.slane %v2906, 2
    %v2950 = vsel %vm691, %v2947, %v2949
    %v2951 = vrot.slane %v2907, 2
    %v2952 = vrot.slane %v2908, 2
    %v2953 = vsel %vm691, %v2951, %v2952
    %v2954 = vrot.slane %v2909, 2
    %v2955 = vsel %vm691, %v2952, %v2954
    %v2956 = vrot.slane %v2910, 2
    %v2957 = vsel %vm691, %v2954, %v2956
    %v2958 = vrot.slane %v2911, 2
    %v2959 = vsel %vm691, %v2956, %v2958
    %v2960 = vrot.slane %v2912, 2
    %v2961 = vsel %vm691, %v2958, %v2960
    %v2962 = vrot.slane %v2913, 2
    %v2963 = vsel %vm691, %v2960, %v2962
    %v2964 = vrot.slane %v2914, 2
    %v2965 = vsel %vm691, %v2962, %v2964
    %v2966 = vrot.slane %v2915, 2
    %v2967 = vsel %vm691, %v2964, %v2966
    %2968 = vrot.lane.b32.xlu0 %v2936, 126
    %v2969 = vpop.permute.xlu0 %2968
    %2970 = vrot.lane.b32.xlu0 %v2938, 126
    %v2971 = vpop.permute.xlu0 %2970
    %2972 = vrot.lane.b32.xlu0 %v2940, 126
    %v2973 = vpop.permute.xlu0 %2972
    %2974 = vrot.lane.b32.xlu0 %v2942, 126
    %v2975 = vpop.permute.xlu0 %2974
    %2976 = vrot.lane.b32.xlu0 %v2944, 126
    %v2977 = vpop.permute.xlu0 %2976
    %2978 = vrot.lane.b32.xlu0 %v2946, 126
    %v2979 = vpop.permute.xlu0 %2978
    %2980 = vrot.lane.b32.xlu0 %v2948, 126
    %v2981 = vpop.permute.xlu0 %2980
    %2982 = vrot.lane.b32.xlu0 %v2950, 126
    %v2983 = vpop.permute.xlu0 %2982
    %2984 = vrot.lane.b32.xlu0 %v2953, 126
    %v2985 = vpop.permute.xlu0 %2984
    %2986 = vrot.lane.b32.xlu0 %v2955, 126
    %v2987 = vpop.permute.xlu0 %2986
    %2988 = vrot.lane.b32.xlu0 %v2957, 126
    %v2989 = vpop.permute.xlu0 %2988
    %2990 = vrot.lane.b32.xlu0 %v2959, 126
    %v2991 = vpop.permute.xlu0 %2990
    %2992 = vrot.lane.b32.xlu0 %v2961, 126
    %v2993 = vpop.permute.xlu0 %2992
    %2994 = vrot.lane.b32.xlu0 %v2963, 126
    %v2995 = vpop.permute.xlu0 %2994
    %2996 = vrot.lane.b32.xlu0 %v2965, 126
    %v2997 = vpop.permute.xlu0 %2996
    %2998 = vrot.lane.b32.xlu0 %v2967, 126
    %v2999 = vpop.permute.xlu0 %2998
    %v3016 = vadd.f32 %v2880, %v2969
    %v3017 = vadd.f32 %v2881, %v2971
    %v3018 = vadd.f32 %v2882, %v2973
    %v3019 = vadd.f32 %v2883, %v2975
    %v3020 = vadd.f32 %v2884, %v2977
    %v3021 = vadd.f32 %v2885, %v2979
    %v3022 = vadd.f32 %v2886, %v2981
    %v3023 = vadd.f32 %v2887, %v2983
    %v3024 = vadd.f32 %v2888, %v2985
    %v3025 = vadd.f32 %v2889, %v2987
    %v3026 = vadd.f32 %v2890, %v2989
    %v3027 = vadd.f32 %v2891, %v2991
    %v3028 = vadd.f32 %v2892, %v2993
    %v3029 = vadd.f32 %v2893, %v2995
    %v3030 = vadd.f32 %v2894, %v2997
    %v3031 = vadd.f32 %v2895, %v2999
    %s3032 = sld [smem:[#allocation2]]
    %v3033 = vstv %s3032
    %v3034 = vadd.f32 %v3016, %v3033
    %v3035 = vadd.f32 %v3017, %v3033
    %v3036 = vadd.f32 %v3018, %v3033
    %v3037 = vadd.f32 %v3019, %v3033
    %v3038 = vadd.f32 %v3020, %v3033
    %v3039 = vadd.f32 %v3021, %v3033
    %v3040 = vadd.f32 %v3022, %v3033
    %v3041 = vadd.f32 %v3023, %v3033
    %v3042 = vadd.f32 %v3024, %v3033
    %v3043 = vadd.f32 %v3025, %v3033
    %v3044 = vadd.f32 %v3026, %v3033
    %v3045 = vadd.f32 %v3027, %v3033
    %v3046 = vadd.f32 %v3028, %v3033
    %v3047 = vadd.f32 %v3029, %v3033
    %v3048 = vadd.f32 %v3030, %v3033
    %v3049 = vadd.f32 %v3031, %v3033
    %v3050 = vmul.f32 %v3034, 0.01
    %v3051 = vmul.f32 %v3035, 0.01
    %v3052 = vmul.f32 %v3036, 0.01
    %v3053 = vmul.f32 %v3037, 0.01
    %v3054 = vmul.f32 %v3038, 0.01
    %v3055 = vmul.f32 %v3039, 0.01
    %v3056 = vmul.f32 %v3040, 0.01
    %v3057 = vmul.f32 %v3041, 0.01
    %v3058 = vmul.f32 %v3042, 0.01
    %v3059 = vmul.f32 %v3043, 0.01
    %v3060 = vmul.f32 %v3044, 0.01
    %v3061 = vmul.f32 %v3045, 0.01
    %v3062 = vmul.f32 %v3046, 0.01
    %v3063 = vmul.f32 %v3047, 0.01
    %v3064 = vmul.f32 %v3048, 0.01
    %v3065 = vmul.f32 %v3049, 0.01
    %v3066 = vmax.f32 %v3034, %v3050
    %v3067 = vmax.f32 %v3035, %v3051
    %v3068 = vmax.f32 %v3036, %v3052
    %v3069 = vmax.f32 %v3037, %v3053
    %v3070 = vmax.f32 %v3038, %v3054
    %v3071 = vmax.f32 %v3039, %v3055
    %v3072 = vmax.f32 %v3040, %v3056
    %v3073 = vmax.f32 %v3041, %v3057
    %v3074 = vmax.f32 %v3042, %v3058
    %v3075 = vmax.f32 %v3043, %v3059
    %v3076 = vmax.f32 %v3044, %v3060
    %v3077 = vmax.f32 %v3045, %v3061
    %v3078 = vmax.f32 %v3046, %v3062
    %v3079 = vmax.f32 %v3047, %v3063
    %v3080 = vmax.f32 %v3048, %v3064
    %v3081 = vmax.f32 %v3049, %v3065
    %vm3082 = vcmask 523264
    %3083 = vst.msk [vmem:[%s3] sm:$0xff] %vm3082, %v3066
    %3084 = vst.msk [vmem:[%s3 + $0x8] sm:$0xff] %vm3082, %v3067
    %3085 = vst.msk [vmem:[%s3 + $0x10] sm:$0xff] %vm3082, %v3068
    %3086 = vst.msk [vmem:[%s3 + $0x18] sm:$0xff] %vm3082, %v3069
    %3087 = vst.msk [vmem:[%s3 + $0x20] sm:$0xff] %vm3082, %v3070
    %3088 = vst.msk [vmem:[%s3 + $0x28] sm:$0xff] %vm3082, %v3071
    %3089 = vst.msk [vmem:[%s3 + $0x30] sm:$0xff] %vm3082, %v3072
    %3090 = vst.msk [vmem:[%s3 + $0x38] sm:$0xff] %vm3082, %v3073
    %3091 = vst.msk [vmem:[%s3 + $0x40] sm:$0xff] %vm3082, %v3074
    %3092 = vst.msk [vmem:[%s3 + $0x48] sm:$0xff] %vm3082, %v3075
    %3093 = vst.msk [vmem:[%s3 + $0x50] sm:$0xff] %vm3082, %v3076
    %3094 = vst.msk [vmem:[%s3 + $0x58] sm:$0xff] %vm3082, %v3077
    %3095 = vst.msk [vmem:[%s3 + $0x60] sm:$0xff] %vm3082, %v3078
    %3096 = vst.msk [vmem:[%s3 + $0x68] sm:$0xff] %vm3082, %v3079
    %3097 = vst.msk [vmem:[%s3 + $0x70] sm:$0xff] %vm3082, %v3080
    %3098 = vst.msk [vmem:[%s3 + $0x78] sm:$0xff] %vm3082, %v3081
    // Predicated region
    $region18: #{policy_forward.3} parent=1 // pred_check
      _
    $region19: #{policy_forward.3} parent=1 // pred_check_branch
      %3100 = sbr.rel (0) target = $region21
    $region20: #{policy_forward.3} parent=1 // pred_region
      _
    $region21: #{policy_forward.3} parent=1 // pred_fallthru
      _
    // Predicated region
    $region22: #{policy_forward.3} parent=1 // pred_check
      _
    $region23: #{policy_forward.3} parent=1 // pred_check_branch
      %3102 = sbr.rel (0) target = $region25
    $region24: #{policy_forward.3} parent=1 // pred_region
      _
    $region25: #{policy_forward.3} parent=1 // pred_fallthru
      _
    %3103 = vsyncpa [#allocation4], 1

// kernel: policy_forward.4
$region0: #{policy_forward.4}
  #allocation0 [shape = 'u32[]', space=smem, size = 0x4, offset = 0x4, fixed_abs, tag = 'smem constant byte address 0x4 - core index']
  #allocation1 [shape = 'u32[144,128]{1,0:T(1,128)}', space=vmem, size = 0x12000, scoped, tag = 'internal scratch']
  %s0 = inlined_call_operand.vmem [shape: f32[2,16,17,16], index: 0, kind: input, shape index: {}]
  %s1 = inlined_call_operand.vmem [shape: bf16[4,16,32], index: 1, kind: input, shape index: {}]
  %s2 = inlined_call_operand.vmem [shape: f32[1,32], index: 2, kind: input, shape index: {}]
  %s3 = inlined_call_operand.vmem [shape: f32[480,32], index: 3, kind: output, shape index: {}]
  %s4 = sld [smem:[#allocation0]]
  $region22: #{policy_forward.4} parent=0
    _
  %s6 = ssub.s32 1, %s4
  %s7 = scalar_select 0, %s6, %s4
  // Predicated region
  $region2: #{policy_forward.4} parent=0 // pred_check
    _
  $region3: #{policy_forward.4} parent=0 // pred_check_branch
    %9 = sbr.rel (0) target = $region5
  $region4: #{policy_forward.4} parent=0 // pred_region
    _
  $region5: #{policy_forward.4} parent=0 // pred_fallthru
    _
  // Predicated region
  $region6: #{policy_forward.4} parent=0 // pred_check
    _
  $region7: #{policy_forward.4} parent=0 // pred_check_branch
    %11 = sbr.rel (0) target = $region9
  $region8: #{policy_forward.4} parent=0 // pred_region
    _
  $region9: #{policy_forward.4} parent=0 // pred_fallthru
    _
  // Predicated region
  $region10: #{policy_forward.4} parent=0 // pred_check
    _
  $region11: #{policy_forward.4} parent=0 // pred_check_branch
    %13 = sbr.rel (0) target = $region13
  $region12: #{policy_forward.4} parent=0 // pred_region
    _
  $region13: #{policy_forward.4} parent=0 // pred_fallthru
    _
  %v15 = vld [vmem:[%s0] sm:$0xff]
  %v16 = vld [vmem:[%s0 + $0x8] sm:$0xff]
  %v17 = vld [vmem:[%s0 + $0x18] sm:$0xff]
  %v18 = vld [vmem:[%s0 + $0x20] sm:$0xff]
  %v19 = vld [vmem:[%s0 + $0x30] sm:$0xff]
  %v20 = vld [vmem:[%s0 + $0x38] sm:$0xff]
  %v21 = vld [vmem:[%s0 + $0x48] sm:$0xff]
  %v22 = vld [vmem:[%s0 + $0x50] sm:$0xff]
  %v23 = vld [vmem:[%s0 + $0x60] sm:$0xff]
  %v24 = vld [vmem:[%s0 + $0x68] sm:$0xff]
  %v25 = vld [vmem:[%s0 + $0x78] sm:$0xff]
  %v26 = vld [vmem:[%s0 + $0x80] sm:$0xff]
  %v27 = vld [vmem:[%s0 + $0x90] sm:$0xff]
  %v28 = vld [vmem:[%s0 + $0x98] sm:$0xff]
  %v29 = vld [vmem:[%s0 + $0xa8] sm:$0xff]
  %v30 = vld [vmem:[%s0 + $0xb0] sm:$0xff]
  %v31 = vld [vmem:[%s0 + $0xc0] sm:$0xff]
  %v32 = vld [vmem:[%s0 + $0xc8] sm:$0xff]
  %v33 = vld [vmem:[%s0 + $0xd8] sm:$0xff]
  %v34 = vld [vmem:[%s0 + $0xe0] sm:$0xff]
  %v35 = vld [vmem:[%s0 + $0xf0] sm:$0xff]
  %v36 = vld [vmem:[%s0 + $0xf8] sm:$0xff]
  %v37 = vld [vmem:[%s0 + $0x108] sm:$0xff]
  %v38 = vld [vmem:[%s0 + $0x110] sm:$0xff]
  %v39 = vld [vmem:[%s0 + $0x120] sm:$0xff]
  %v40 = vld [vmem:[%s0 + $0x128] sm:$0xff]
  %v41 = vld [vmem:[%s0 + $0x138] sm:$0xff]
  %v42 = vld [vmem:[%s0 + $0x140] sm:$0xff]
  %v43 = vld [vmem:[%s0 + $0x150] sm:$0xff]
  %v44 = vld [vmem:[%s0 + $0x158] sm:$0xff]
  %v45 = vld [vmem:[%s0 + $0x180] sm:$0xff]
  %v46 = vld [vmem:[%s0 + $0x188] sm:$0xff]
  %v47 = vld [vmem:[%s0 + $0x198] sm:$0xff]
  %v48 = vld [vmem:[%s0 + $0x1a0] sm:$0xff]
  %v49 = vld [vmem:[%s0 + $0x1b0] sm:$0xff]
  %v50 = vld [vmem:[%s0 + $0x1b8] sm:$0xff]
  %v51 = vld [vmem:[%s0 + $0x1c8] sm:$0xff]
  %v52 = vld [vmem:[%s0 + $0x1d0] sm:$0xff]
  %v53 = vld [vmem:[%s0 + $0x1e0] sm:$0xff]
  %v54 = vld [vmem:[%s0 + $0x1e8] sm:$0xff]
  %v55 = vld [vmem:[%s0 + $0x1f8] sm:$0xff]
  %v56 = vld [vmem:[%s0 + $0x200] sm:$0xff]
  %v57 = vld [vmem:[%s0 + $0x210] sm:$0xff]
  %v58 = vld [vmem:[%s0 + $0x218] sm:$0xff]
  %v59 = vld [vmem:[%s0 + $0x228] sm:$0xff]
  %v60 = vld [vmem:[%s0 + $0x230] sm:$0xff]
  %v61 = vld [vmem:[%s0 + $0x240] sm:$0xff]
  %v62 = vld [vmem:[%s0 + $0x248] sm:$0xff]
  %v63 = vld [vmem:[%s0 + $0x258] sm:$0xff]
  %v64 = vld [vmem:[%s0 + $0x260] sm:$0xff]
  %v65 = vld [vmem:[%s0 + $0x270] sm:$0xff]
  %v66 = vld [vmem:[%s0 + $0x278] sm:$0xff]
  %v67 = vld [vmem:[%s0 + $0x288] sm:$0xff]
  %v68 = vld [vmem:[%s0 + $0x290] sm:$0xff]
  %v69 = vld [vmem:[%s0 + $0x2a0] sm:$0xff]
  %v70 = vld [vmem:[%s0 + $0x2a8] sm:$0xff]
  %v71 = vld [vmem:[%s0 + $0x2b8] sm:$0xff]
  %v72 = vld [vmem:[%s0 + $0x2c0] sm:$0xff]
  %v73 = vld [vmem:[%s0 + $0x2d0] sm:$0xff]
  %v74 = vld [vmem:[%s0 + $0x2d8] sm:$0xff]
  %v75 = vpack.c.bf16 %v16, %v15
  %v76 = vpack.c.bf16 %v18, %v17
  %v77 = vpack.c.bf16 %v20, %v19
  %v78 = vpack.c.bf16 %v22, %v21
  %v79 = vpack.c.bf16 %v24, %v23
  %v80 = vpack.c.bf16 %v26, %v25
  %v81 = vpack.c.bf16 %v28, %v27
  %v82 = vpack.c.bf16 %v30, %v29
  %v83 = vpack.c.bf16 %v32, %v31
  %v84 = vpack.c.bf16 %v34, %v33
  %v85 = vpack.c.bf16 %v36, %v35
  %v86 = vpack.c.bf16 %v38, %v37
  %v87 = vpack.c.bf16 %v40, %v39
  %v88 = vpack.c.bf16 %v42, %v41
  %v89 = vpack.c.bf16 %v44, %v43
  %v90 = vpack.c.bf16 %v46, %v45
  %v91 = vpack.c.bf16 %v48, %v47
  %v92 = vpack.c.bf16 %v50, %v49
  %v93 = vpack.c.bf16 %v52, %v51
  %v94 = vpack.c.bf16 %v54, %v53
  %v95 = vpack.c.bf16 %v56, %v55
  %v96 = vpack.c.bf16 %v58, %v57
  %v97 = vpack.c.bf16 %v60, %v59
  %v98 = vpack.c.bf16 %v62, %v61
  %v99 = vpack.c.bf16 %v64, %v63
  %v100 = vpack.c.bf16 %v66, %v65
  %v101 = vpack.c.bf16 %v68, %v67
  %v102 = vpack.c.bf16 %v70, %v69
  %v103 = vpack.c.bf16 %v72, %v71
  %v104 = vpack.c.bf16 %v74, %v73
  %v105 = vld [vmem:[%s1] sm:$0xf]
  %v106 = vld [vmem:[%s1 + $0x4] sm:$0xf]
  %v107 = vld [vmem:[%s0 + $0x1] sm:$0xff]
  %v108 = vld [vmem:[%s0 + $0x9] sm:$0xff]
  %v109 = vld [vmem:[%s0 + $0x19] sm:$0xff]
  %v110 = vld [vmem:[%s0 + $0x21] sm:$0xff]
  %v111 = vld [vmem:[%s0 + $0x31] sm:$0xff]
  %v112 = vld [vmem:[%s0 + $0x39] sm:$0xff]
  %v113 = vld [vmem:[%s0 + $0x49] sm:$0xff]
  %v114 = vld [vmem:[%s0 + $0x51] sm:$0xff]
  %v115 = vld [vmem:[%s0 + $0x61] sm:$0xff]
  %v116 = vld [vmem:[%s0 + $0x69] sm:$0xff]
  %v117 = vld [vmem:[%s0 + $0x79] sm:$0xff]
  %v118 = vld [vmem:[%s0 + $0x81] sm:$0xff]
  %v119 = vld [vmem:[%s0 + $0x91] sm:$0xff]
  %v120 = vld [vmem:[%s0 + $0x99] sm:$0xff]
  %v121 = vld [vmem:[%s0 + $0xa9] sm:$0xff]
  %v122 = vld [vmem:[%s0 + $0xb1] sm:$0xff]
  %v123 = vld [vmem:[%s0 + $0xc1] sm:$0xff]
  %v124 = vld [vmem:[%s0 + $0xc9] sm:$0xff]
  %v125 = vld [vmem:[%s0 + $0xd9] sm:$0xff]
  %v126 = vld [vmem:[%s0 + $0xe1] sm:$0xff]
  %v127 = vld [vmem:[%s0 + $0xf1] sm:$0xff]
  %v128 = vld [vmem:[%s0 + $0xf9] sm:$0xff]
  %v129 = vld [vmem:[%s0 + $0x109] sm:$0xff]
  %v130 = vld [vmem:[%s0 + $0x111] sm:$0xff]
  %v131 = vld [vmem:[%s0 + $0x121] sm:$0xff]
  %v132 = vld [vmem:[%s0 + $0x129] sm:$0xff]
  %v133 = vld [vmem:[%s0 + $0x139] sm:$0xff]
  %v134 = vld [vmem:[%s0 + $0x141] sm:$0xff]
  %v135 = vld [vmem:[%s0 + $0x151] sm:$0xff]
  %v136 = vld [vmem:[%s0 + $0x159] sm:$0xff]
  %v137 = vld [vmem:[%s0 + $0x181] sm:$0xff]
  %v138 = vld [vmem:[%s0 + $0x189] sm:$0xff]
  %v139 = vld [vmem:[%s0 + $0x199] sm:$0xff]
  %v140 = vld [vmem:[%s0 + $0x1a1] sm:$0xff]
  %v141 = vld [vmem:[%s0 + $0x1b1] sm:$0xff]
  %v142 = vld [vmem:[%s0 + $0x1b9] sm:$0xff]
  %v143 = vld [vmem:[%s0 + $0x1c9] sm:$0xff]
  %v144 = vld [vmem:[%s0 + $0x1d1] sm:$0xff]
  %v145 = vld [vmem:[%s0 + $0x1e1] sm:$0xff]
  %v146 = vld [vmem:[%s0 + $0x1e9] sm:$0xff]
  %v147 = vld [vmem:[%s0 + $0x1f9] sm:$0xff]
  %v148 = vld [vmem:[%s0 + $0x201] sm:$0xff]
  %v149 = vld [vmem:[%s0 + $0x211] sm:$0xff]
  %v150 = vld [vmem:[%s0 + $0x219] sm:$0xff]
  %v151 = vld [vmem:[%s0 + $0x229] sm:$0xff]
  %v152 = vld [vmem:[%s0 + $0x231] sm:$0xff]
  %v153 = vld [vmem:[%s0 + $0x241] sm:$0xff]
  %v154 = vld [vmem:[%s0 + $0x249] sm:$0xff]
  %v155 = vld [vmem:[%s0 + $0x259] sm:$0xff]
  %v156 = vld [vmem:[%s0 + $0x261] sm:$0xff]
  %v157 = vld [vmem:[%s0 + $0x271] sm:$0xff]
  %v158 = vld [vmem:[%s0 + $0x279] sm:$0xff]
  %v159 = vld [vmem:[%s0 + $0x289] sm:$0xff]
  %v160 = vld [vmem:[%s0 + $0x291] sm:$0xff]
  %v161 = vld [vmem:[%s0 + $0x2a1] sm:$0xff]
  %v162 = vld [vmem:[%s0 + $0x2a9] sm:$0xff]
  %v163 = vld [vmem:[%s0 + $0x2b9] sm:$0xff]
  %v164 = vld [vmem:[%s0 + $0x2c1] sm:$0xff]
  %v165 = vld [vmem:[%s0 + $0x2d1] sm:$0xff]
  %v166 = vld [vmem:[%s0 + $0x2d9] sm:$0xff]
  %v167 = vpack.c.bf16 %v108, %v107
  %v168 = vpack.c.bf16 %v110, %v109
  %v169 = vpack.c.bf16 %v112, %v111
  %v170 = vpack.c.bf16 %v114, %v113
  %v171 = vpack.c.bf16 %v116, %v115
  %v172 = vpack.c.bf16 %v118, %v117
  %v173 = vpack.c.bf16 %v120, %v119
  %v174 = vpack.c.bf16 %v122, %v121
  %v175 = vpack.c.bf16 %v124, %v123
  %v176 = vpack.c.bf16 %v126, %v125
  %v177 = vpack.c.bf16 %v128, %v127
  %v178 = vpack.c.bf16 %v130, %v129
  %v179 = vpack.c.bf16 %v132, %v131
  %v180 = vpack.c.bf16 %v134, %v133
  %v181 = vpack.c.bf16 %v136, %v135
  %v182 = vpack.c.bf16 %v138, %v137
  %v183 = vpack.c.bf16 %v140, %v139
  %v184 = vpack.c.bf16 %v142, %v141
  %v185 = vpack.c.bf16 %v144, %v143
  %v186 = vpack.c.bf16 %v146, %v145
  %v187 = vpack.c.bf16 %v148, %v147
  %v188 = vpack.c.bf16 %v150, %v149
  %v189 = vpack.c.bf16 %v152, %v151
  %v190 = vpack.c.bf16 %v154, %v153
  %v191 = vpack.c.bf16 %v156, %v155
  %v192 = vpack.c.bf16 %v158, %v157
  %v193 = vpack.c.bf16 %v160, %v159
  %v194 = vpack.c.bf16 %v162, %v161
  %v195 = vpack.c.bf16 %v164, %v163
  %v196 = vpack.c.bf16 %v166, %v165
  %s197 = scalar_lea.vmem %s1, 8
  %v198 = vld [vmem:[%s197] sm:$0xf]
  %v199 = vld [vmem:[%s197 + $0x4] sm:$0xf]
  %v202 = vunpack.c.l.b16 %v198
  %v203 = vunpack.c.l.b16 %v199
  %v204 = vpack.c.b16 %v203, %v202
  %vm206 = vcmask 130048
  %v208 = vsel %vm206, %v167, 0
  %v211 = vsel %vm206, %v168, 0
  %v214 = vsel %vm206, %v169, 0
  %v217 = vsel %vm206, %v170, 0
  %v220 = vsel %vm206, %v171, 0
  %v223 = vsel %vm206, %v172, 0
  %v226 = vsel %vm206, %v173, 0
  %v229 = vsel %vm206, %v174, 0
  %v232 = vsel %vm206, %v175, 0
  %v235 = vsel %vm206, %v176, 0
  %v238 = vsel %vm206, %v177, 0
  %v241 = vsel %vm206, %v178, 0
  %v244 = vsel %vm206, %v179, 0
  %v247 = vsel %vm206, %v180, 0
  %v250 = vsel %vm206, %v181, 0
  %v253 = vsel %vm206, %v182, 0
  %v256 = vsel %vm206, %v183, 0
  %v259 = vsel %vm206, %v184, 0
  %v262 = vsel %vm206, %v185, 0
  %v265 = vsel %vm206, %v186, 0
  %v268 = vsel %vm206, %v187, 0
  %v271 = vsel %vm206, %v188, 0
  %v274 = vsel %vm206, %v189, 0
  %v277 = vsel %vm206, %v190, 0
  %v280 = vsel %vm206, %v191, 0
  %v283 = vsel %vm206, %v192, 0
  %v286 = vsel %vm206, %v193, 0
  %v289 = vsel %vm206, %v194, 0
  %v292 = vsel %vm206, %v195, 0
  %v295 = vsel %vm206, %v196, 0
  %297 = vmatprep.subr.bf16.mxu0 0
  %298 = vmatpush1.bf16.msra.mxu0 %v204
  %299 = vmatprep.subr.bf16.mxu0 0
  %300 = vmatpush1.bf16.msra.mxu0 0
  %301 = vmatprep.subr.bf16.mxu0 0
  %302 = vmatpush1.bf16.msra.mxu0 0
  %303 = vmatprep.subr.bf16.mxu0 0
  %304 = vmatpush1.bf16.msra.mxu0 0
  %305 = vmatprep.subr.bf16.mxu0 0
  %306 = vmatpush1.bf16.msra.mxu0 0
  %307 = vmatprep.subr.bf16.mxu0 0
  %308 = vmatpush1.bf16.msra.mxu0 0
  %309 = vmatprep.subr.bf16.mxu0 0
  %310 = vmatpush1.bf16.msra.mxu0 0
  %311 = vmatprep.subr.bf16.mxu0 0
  %312 = vmatpush1.bf16.msra.mxu0 0
  %313 = vmatprep.subr.bf16.mxu0 0
  %314 = vmatpush1.bf16.msra.mxu0 0
  %315 = vmatprep.subr.bf16.mxu0 0
  %316 = vmatpush1.bf16.msra.mxu0 0
  %317 = vmatprep.subr.bf16.mxu0 0
  %318 = vmatpush1.bf16.msra.mxu0 0
  %319 = vmatprep.subr.bf16.mxu0 0
  %320 = vmatpush1.bf16.msra.mxu0 0
  %321 = vmatprep.subr.bf16.mxu0 0
  %322 = vmatpush1.bf16.msra.mxu0 0
  %323 = vmatprep.subr.bf16.mxu0 0
  %324 = vmatpush1.bf16.msra.mxu0 0
  %325 = vmatprep.subr.bf16.mxu0 0
  %326 = vmatpush1.bf16.msra.mxu0 0
  %327 = vmatprep.subr.bf16.mxu0 0
  %328 = vmatpush1.bf16.msra.mxu0 0
  %329 = vmatprep.mubr.bf16.mxu0 0
  %330 = vmatmul.mubr.bf16.gmra.mrb[0].mxu0 %v208
  %v331 = vpop.f32.mrb[0].mxu0
  %v332 = vadd.f32 0.0, %v331
  %v333 = vpop.f32.mrb[0].mxu0
  %v334 = vpop.f32.mrb[0].mxu0
  %v335 = vadd.f32 0.0, %v334
  %v336 = vpop.f32.mrb[0].mxu0
  %337 = vmatprep.mubr.bf16.mxu0 0
  %338 = vmatmul.mubr.bf16.gmra.mrb[0].mxu0 %v211
  %v339 = vpop.f32.mrb[0].mxu0
  %v340 = vadd.f32 0.0, %v339
  %v341 = vpop.f32.mrb[0].mxu0
  %v342 = vpop.f32.mrb[0].mxu0
  %v343 = vadd.f32 0.0, %v342
  %v344 = vpop.f32.mrb[0].mxu0
  %345 = vmatprep.mubr.bf16.mxu0 0
  %346 = vmatmul.mubr.bf16.gmra.mrb[0].mxu0 %v214
  %v347 = vpop.f32.mrb[0].mxu0
  %v348 = vadd.f32 0.0, %v347
  %v349 = vpop.f32.mrb[0].mxu0
  %v350 = vpop.f32.mrb[0].mxu0
  %v351 = vadd.f32 0.0, %v350
  %v352 = vpop.f32.mrb[0].mxu0
  %353 = vmatprep.mubr.bf16.mxu0 0
  %354 = vmatmul.mubr.bf16.gmra.mrb[0].mxu0 %v217
  %v355 = vpop.f32.mrb[0].mxu0
  %v356 = vadd.f32 0.0, %v355
  %v357 = vpop.f32.mrb[0].mxu0
  %v358 = vpop.f32.mrb[0].mxu0
  %v359 = vadd.f32 0.0, %v358
  %v360 = vpop.f32.mrb[0].mxu0
  %361 = vmatprep.mubr.bf16.mxu0 0
  %362 = vmatmul.mubr.bf16.gmra.mrb[0].mxu0 %v220
  %v363 = vpop.f32.mrb[0].mxu0
  %v364 = vadd.f32 0.0, %v363
  %v365 = vpop.f32.mrb[0].mxu0
  %v366 = vpop.f32.mrb[0].mxu0
  %v367 = vadd.f32 0.0, %v366
  %v368 = vpop.f32.mrb[0].mxu0
  %369 = vmatprep.mubr.bf16.mxu0 0
  %370 = vmatmul.mubr.bf16.gmra.mrb[0].mxu0 %v223
  %v371 = vpop.f32.mrb[0].mxu0
  %v372 = vadd.f32 0.0, %v371
  %v373 = vpop.f32.mrb[0].mxu0
  %v374 = vpop.f32.mrb[0].mxu0
  %v375 = vadd.f32 0.0, %v374
  %v376 = vpop.f32.mrb[0].mxu0
  %377 = vmatprep.mubr.bf16.mxu0 0
  %378 = vmatmul.mubr.bf16.gmra.mrb[0].mxu0 %v226
  %v379 = vpop.f32.mrb[0].mxu0
  %v380 = vadd.f32 0.0, %v379
  %v381 = vpop.f32.mrb[0].mxu0
  %v382 = vpop.f32.mrb[0].mxu0
  %v383 = vadd.f32 0.0, %v382
  %v384 = vpop.f32.mrb[0].mxu0
  %385 = vmatprep.mubr.bf16.mxu0 0
  %386 = vmatmul.mubr.bf16.gmra.mrb[0].mxu0 %v229
  %v387 = vpop.f32.mrb[0].mxu0
  %v388 = vadd.f32 0.0, %v387
  %v389 = vpop.f32.mrb[0].mxu0
  %v390 = vpop.f32.mrb[0].mxu0
  %v391 = vadd.f32 0.0, %v390
  %v392 = vpop.f32.mrb[0].mxu0
  %393 = vmatprep.mubr.bf16.mxu0 0
  %394 = vmatmul.mubr.bf16.gmra.mrb[0].mxu0 %v232
  %v395 = vpop.f32.mrb[0].mxu0
  %v396 = vadd.f32 0.0, %v395
  %v397 = vpop.f32.mrb[0].mxu0
  %v398 = vpop.f32.mrb[0].mxu0
  %v399 = vadd.f32 0.0, %v398
  %v400 = vpop.f32.mrb[0].mxu0
  %401 = vmatprep.mubr.bf16.mxu0 0
  %402 = vmatmul.mubr.bf16.gmra.mrb[0].mxu0 %v235
  %v403 = vpop.f32.mrb[0].mxu0
  %v404 = vadd.f32 0.0, %v403
  %v405 = vpop.f32.mrb[0].mxu0
  %v406 = vpop.f32.mrb[0].mxu0
  %v407 = vadd.f32 0.0, %v406
  %v408 = vpop.f32.mrb[0].mxu0
  %409 = vmatprep.mubr.bf16.mxu0 0
  %410 = vmatmul.mubr.bf16.gmra.mrb[0].mxu0 %v238
  %v411 = vpop.f32.mrb[0].mxu0
  %v412 = vadd.f32 0.0, %v411
  %v413 = vpop.f32.mrb[0].mxu0
  %v414 = vpop.f32.mrb[0].mxu0
  %v415 = vadd.f32 0.0, %v414
  %v416 = vpop.f32.mrb[0].mxu0
  %417 = vmatprep.mubr.bf16.mxu0 0
  %418 = vmatmul.mubr.bf16.gmra.mrb[0].mxu0 %v241
  %v419 = vpop.f32.mrb[0].mxu0
  %v420 = vadd.f32 0.0, %v419
  %v421 = vpop.f32.mrb[0].mxu0
  %v422 = vpop.f32.mrb[0].mxu0
  %v423 = vadd.f32 0.0, %v422
  %v424 = vpop.f32.mrb[0].mxu0
  %425 = vmatprep.mubr.bf16.mxu0 0
  %426 = vmatmul.mubr.bf16.gmra.mrb[0].mxu0 %v244
  %v427 = vpop.f32.mrb[0].mxu0
  %v428 = vadd.f32 0.0, %v427
  %v429 = vpop.f32.mrb[0].mxu0
  %v430 = vpop.f32.mrb[0].mxu0
  %v431 = vadd.f32 0.0, %v430
  %v432 = vpop.f32.mrb[0].mxu0
  %433 = vmatprep.mubr.bf16.mxu0 0
  %434 = vmatmul.mubr.bf16.gmra.mrb[0].mxu0 %v247
  %v435 = vpop.f32.mrb[0].mxu0
  %v436 = vadd.f32 0.0, %v435
  %v437 = vpop.f32.mrb[0].mxu0
  %v438 = vpop.f32.mrb[0].mxu0
  %v439 = vadd.f32 0.0, %v438
  %v440 = vpop.f32.mrb[0].mxu0
  %441 = vmatprep.mubr.bf16.mxu0 0
  %442 = vmatmul.mubr.bf16.gmra.mrb[0].mxu0 %v250
  %v443 = vpop.f32.mrb[0].mxu0
  %v444 = vadd.f32 0.0, %v443
  %v445 = vpop.f32.mrb[0].mxu0
  %v446 = vpop.f32.mrb[0].mxu0
  %v447 = vadd.f32 0.0, %v446
  %v448 = vpop.f32.mrb[0].mxu0
  %449 = vmatprep.mubr.bf16.mxu0 0
  %450 = vmatmul.mubr.bf16.gmra.mrb[0].mxu0 %v253
  %v451 = vpop.f32.mrb[0].mxu0
  %v452 = vadd.f32 0.0, %v451
  %v453 = vpop.f32.mrb[0].mxu0
  %v454 = vpop.f32.mrb[0].mxu0
  %v455 = vadd.f32 0.0, %v454
  %v456 = vpop.f32.mrb[0].mxu0
  %457 = vmatprep.mubr.bf16.mxu0 0
  %458 = vmatmul.mubr.bf16.gmra.mrb[0].mxu0 %v256
  %v459 = vpop.f32.mrb[0].mxu0
  %v460 = vadd.f32 0.0, %v459
  %v461 = vpop.f32.mrb[0].mxu0
  %v462 = vpop.f32.mrb[0].mxu0
  %v463 = vadd.f32 0.0, %v462
  %v464 = vpop.f32.mrb[0].mxu0
  %465 = vmatprep.mubr.bf16.mxu0 0
  %466 = vmatmul.mubr.bf16.gmra.mrb[0].mxu0 %v259
  %v467 = vpop.f32.mrb[0].mxu0
  %v468 = vadd.f32 0.0, %v467
  %v469 = vpop.f32.mrb[0].mxu0
  %v470 = vpop.f32.mrb[0].mxu0
  %v471 = vadd.f32 0.0, %v470
  %v472 = vpop.f32.mrb[0].mxu0
  %473 = vmatprep.mubr.bf16.mxu0 0
  %474 = vmatmul.mubr.bf16.gmra.mrb[0].mxu0 %v262
  %v475 = vpop.f32.mrb[0].mxu0
  %v476 = vadd.f32 0.0, %v475
  %v477 = vpop.f32.mrb[0].mxu0
  %v478 = vpop.f32.mrb[0].mxu0
  %v479 = vadd.f32 0.0, %v478
  %v480 = vpop.f32.mrb[0].mxu0
  %481 = vmatprep.mubr.bf16.mxu0 0
  %482 = vmatmul.mubr.bf16.gmra.mrb[0].mxu0 %v265
  %v483 = vpop.f32.mrb[0].mxu0
  %v484 = vadd.f32 0.0, %v483
  %v485 = vpop.f32.mrb[0].mxu0
  %v486 = vpop.f32.mrb[0].mxu0
  %v487 = vadd.f32 0.0, %v486
  %v488 = vpop.f32.mrb[0].mxu0
  %489 = vmatprep.mubr.bf16.mxu0 0
  %490 = vmatmul.mubr.bf16.gmra.mrb[0].mxu0 %v268
  %v491 = vpop.f32.mrb[0].mxu0
  %v492 = vadd.f32 0.0, %v491
  %v493 = vpop.f32.mrb[0].mxu0
  %v494 = vpop.f32.mrb[0].mxu0
  %v495 = vadd.f32 0.0, %v494
  %v496 = vpop.f32.mrb[0].mxu0
  %497 = vmatprep.mubr.bf16.mxu0 0
  %498 = vmatmul.mubr.bf16.gmra.mrb[0].mxu0 %v271
  %v499 = vpop.f32.mrb[0].mxu0
  %v500 = vadd.f32 0.0, %v499
  %v501 = vpop.f32.mrb[0].mxu0
  %v502 = vpop.f32.mrb[0].mxu0
  %v503 = vadd.f32 0.0, %v502
  %v504 = vpop.f32.mrb[0].mxu0
  %505 = vmatprep.mubr.bf16.mxu0 0
  %506 = vmatmul.mubr.bf16.gmra.mrb[0].mxu0 %v274
  %v507 = vpop.f32.mrb[0].mxu0
  %v508 = vadd.f32 0.0, %v507
  %v509 = vpop.f32.mrb[0].mxu0
  %v510 = vpop.f32.mrb[0].mxu0
  %v511 = vadd.f32 0.0, %v510
  %v512 = vpop.f32.mrb[0].mxu0
  %513 = vmatprep.mubr.bf16.mxu0 0
  %514 = vmatmul.mubr.bf16.gmra.mrb[0].mxu0 %v277
  %v515 = vpop.f32.mrb[0].mxu0
  %v516 = vadd.f32 0.0, %v515
  %v517 = vpop.f32.mrb[0].mxu0
  %v518 = vpop.f32.mrb[0].mxu0
  %v519 = vadd.f32 0.0, %v518
  %v520 = vpop.f32.mrb[0].mxu0
  %521 = vmatprep.mubr.bf16.mxu0 0
  %522 = vmatmul.mubr.bf16.gmra.mrb[0].mxu0 %v280
  %v523 = vpop.f32.mrb[0].mxu0
  %v524 = vadd.f32 0.0, %v523
  %v525 = vpop.f32.mrb[0].mxu0
  %v526 = vpop.f32.mrb[0].mxu0
  %v527 = vadd.f32 0.0, %v526
  %v528 = vpop.f32.mrb[0].mxu0
  %529 = vmatprep.mubr.bf16.mxu0 0
  %530 = vmatmul.mubr.bf16.gmra.mrb[0].mxu0 %v283
  %v531 = vpop.f32.mrb[0].mxu0
  %v532 = vadd.f32 0.0, %v531
  %v533 = vpop.f32.mrb[0].mxu0
  %v534 = vpop.f32.mrb[0].mxu0
  %v535 = vadd.f32 0.0, %v534
  %v536 = vpop.f32.mrb[0].mxu0
  %537 = vmatprep.mubr.bf16.mxu0 0
  %538 = vmatmul.mubr.bf16.gmra.mrb[0].mxu0 %v286
  %v539 = vpop.f32.mrb[0].mxu0
  %v540 = vadd.f32 0.0, %v539
  %v541 = vpop.f32.mrb[0].mxu0
  %v542 = vpop.f32.mrb[0].mxu0
  %v543 = vadd.f32 0.0, %v542
  %v544 = vpop.f32.mrb[0].mxu0
  %545 = vmatprep.mubr.bf16.mxu0 0
  %546 = vmatmul.mubr.bf16.gmra.mrb[0].mxu0 %v289
  %v547 = vpop.f32.mrb[0].mxu0
  %v548 = vadd.f32 0.0, %v547
  %v549 = vpop.f32.mrb[0].mxu0
  %v550 = vpop.f32.mrb[0].mxu0
  %v551 = vadd.f32 0.0, %v550
  %v552 = vpop.f32.mrb[0].mxu0
  %553 = vmatprep.mubr.bf16.mxu0 0
  %554 = vmatmul.mubr.bf16.gmra.mrb[0].mxu0 %v292
  %v555 = vpop.f32.mrb[0].mxu0
  %v556 = vadd.f32 0.0, %v555
  %v557 = vpop.f32.mrb[0].mxu0
  %v558 = vpop.f32.mrb[0].mxu0
  %v559 = vadd.f32 0.0, %v558
  %v560 = vpop.f32.mrb[0].mxu0
  %561 = vmatprep.mubr.bf16.mxu0 0
  %562 = vmatmul.mubr.bf16.gmra.mrb[0].mxu0 %v295
  %v563 = vpop.f32.mrb[0].mxu0
  %v564 = vadd.f32 0.0, %v563
  %v565 = vpop.f32.mrb[0].mxu0
  %v566 = vpop.f32.mrb[0].mxu0
  %v567 = vadd.f32 0.0, %v566
  %v568 = vpop.f32.mrb[0].mxu0
  %569 = vdwg.mxu0
  %v572 = vunpack.c.l.b16 %v105
  %v573 = vunpack.c.l.b16 %v106
  %v574 = vpack.c.b16 %v573, %v572
  %v577 = vsel %vm206, %v75, 0
  %v580 = vsel %vm206, %v76, 0
  %v583 = vsel %vm206, %v77, 0
  %v586 = vsel %vm206, %v78, 0
  %v589 = vsel %vm206, %v79, 0
  %v592 = vsel %vm206, %v80, 0
  %v595 = vsel %vm206, %v81, 0
  %v598 = vsel %vm206, %v82, 0
  %v601 = vsel %vm206, %v83, 0
  %v604 = vsel %vm206, %v84, 0
  %v607 = vsel %vm206, %v85, 0
  %v610 = vsel %vm206, %v86, 0
  %v613 = vsel %vm206, %v87, 0
  %v616 = vsel %vm206, %v88, 0
  %v619 = vsel %vm206, %v89, 0
  %v622 = vsel %vm206, %v90, 0
  %v625 = vsel %vm206, %v91, 0
  %v628 = vsel %vm206, %v92, 0
  %v631 = vsel %vm206, %v93, 0
  %v634 = vsel %vm206, %v94, 0
  %v637 = vsel %vm206, %v95, 0
  %v640 = vsel %vm206, %v96, 0
  %v643 = vsel %vm206, %v97, 0
  %v646 = vsel %vm206, %v98, 0
  %v649 = vsel %vm206, %v99, 0
  %v652 = vsel %vm206, %v100, 0
  %v655 = vsel %vm206, %v101, 0
  %v658 = vsel %vm206, %v102, 0
  %v661 = vsel %vm206, %v103, 0
  %v664 = vsel %vm206, %v104, 0
  %666 = vmatprep.subr.bf16.mxu0 0
  %667 = vmatpush1.bf16.msra.mxu0 %v574
  %668 = vmatprep.subr.bf16.mxu0 0
  %669 = vmatpush1.bf16.msra.mxu0 0
  %670 = vmatprep.subr.bf16.mxu0 0
  %671 = vmatpush1.bf16.msra.mxu0 0
  %672 = vmatprep.subr.bf16.mxu0 0
  %673 = vmatpush1.bf16.msra.mxu0 0
  %674 = vmatprep.subr.bf16.mxu0 0
  %675 = vmatpush1.bf16.msra.mxu0 0
  %676 = vmatprep.subr.bf16.mxu0 0
  %677 = vmatpush1.bf16.msra.mxu0 0
  %678 = vmatprep.subr.bf16.mxu0 0
  %679 = vmatpush1.bf16.msra.mxu0 0
  %680 = vmatprep.subr.bf16.mxu0 0
  %681 = vmatpush1.bf16.msra.mxu0 0
  %682 = vmatprep.subr.bf16.mxu0 0
  %683 = vmatpush1.bf16.msra.mxu0 0
  %684 = vmatprep.subr.bf16.mxu0 0
  %685 = vmatpush1.bf16.msra.mxu0 0
  %686 = vmatprep.subr.bf16.mxu0 0
  %687 = vmatpush1.bf16.msra.mxu0 0
  %688 = vmatprep.subr.bf16.mxu0 0
  %689 = vmatpush1.bf16.msra.mxu0 0
  %690 = vmatprep.subr.bf16.mxu0 0
  %691 = vmatpush1.bf16.msra.mxu0 0
  %692 = vmatprep.subr.bf16.mxu0 0
  %693 = vmatpush1.bf16.msra.mxu0 0
  %694 = vmatprep.subr.bf16.mxu0 0
  %695 = vmatpush1.bf16.msra.mxu0 0
  %696 = vmatprep.subr.bf16.mxu0 0
  %697 = vmatpush1.bf16.msra.mxu0 0
  %698 = vmatprep.mubr.bf16.mxu0 0
  %699 = vmatmul.mubr.bf16.gmra.mrb[0].mxu0 %v577
  %v700 = vpop.f32.mrb[0].mxu0
  %v701 = vadd.f32 %v332, %v700
  %v702 = vpop.f32.mrb[0].mxu0
  %v703 = vpop.f32.mrb[0].mxu0
  %v704 = vadd.f32 %v335, %v703
  %v705 = vpop.f32.mrb[0].mxu0
  %706 = vmatprep.mubr.bf16.mxu0 0
  %707 = vmatmul.mubr.bf16.gmra.mrb[0].mxu0 %v580
  %v708 = vpop.f32.mrb[0].mxu0
  %v709 = vadd.f32 %v340, %v708
  %v710 = vpop.f32.mrb[0].mxu0
  %v711 = vpop.f32.mrb[0].mxu0
  %v712 = vadd.f32 %v343, %v711
  %v713 = vpop.f32.mrb[0].mxu0
  %714 = vmatprep.mubr.bf16.mxu0 0
  %715 = vmatmul.mubr.bf16.gmra.mrb[0].mxu0 %v583
  %v716 = vpop.f32.mrb[0].mxu0
  %v717 = vadd.f32 %v348, %v716
  %v718 = vpop.f32.mrb[0].mxu0
  %v719 = vpop.f32.mrb[0].mxu0
  %v720 = vadd.f32 %v351, %v719
  %v721 = vpop.f32.mrb[0].mxu0
  %722 = vmatprep.mubr.bf16.mxu0 0
  %723 = vmatmul.mubr.bf16.gmra.mrb[0].mxu0 %v586
  %v724 = vpop.f32.mrb[0].mxu0
  %v725 = vadd.f32 %v356, %v724
  %v726 = vpop.f32.mrb[0].mxu0
  %v727 = vpop.f32.mrb[0].mxu0
  %v728 = vadd.f32 %v359, %v727
  %v729 = vpop.f32.mrb[0].mxu0
  %730 = vmatprep.mubr.bf16.mxu0 0
  %731 = vmatmul.mubr.bf16.gmra.mrb[0].mxu0 %v589
  %v732 = vpop.f32.mrb[0].mxu0
  %v733 = vadd.f32 %v364, %v732
  %v734 = vpop.f32.mrb[0].mxu0
  %v735 = vpop.f32.mrb[0].mxu0
  %v736 = vadd.f32 %v367, %v735
  %v737 = vpop.f32.mrb[0].mxu0
  %738 = vmatprep.mubr.bf16.mxu0 0
  %739 = vmatmul.mubr.bf16.gmra.mrb[0].mxu0 %v592
  %v740 = vpop.f32.mrb[0].mxu0
  %v741 = vadd.f32 %v372, %v740
  %v742 = vpop.f32.mrb[0].mxu0
  %v743 = vpop.f32.mrb[0].mxu0
  %v744 = vadd.f32 %v375, %v743
  %v745 = vpop.f32.mrb[0].mxu0
  %746 = vmatprep.mubr.bf16.mxu0 0
  %747 = vmatmul.mubr.bf16.gmra.mrb[0].mxu0 %v595
  %v748 = vpop.f32.mrb[0].mxu0
  %v749 = vadd.f32 %v380, %v748
  %v750 = vpop.f32.mrb[0].mxu0
  %v751 = vpop.f32.mrb[0].mxu0
  %v752 = vadd.f32 %v383, %v751
  %v753 = vpop.f32.mrb[0].mxu0
  %754 = vmatprep.mubr.bf16.mxu0 0
  %755 = vmatmul.mubr.bf16.gmra.mrb[0].mxu0 %v598
  %v756 = vpop.f32.mrb[0].mxu0
  %v757 = vadd.f32 %v388, %v756
  %v758 = vpop.f32.mrb[0].mxu0
  %v759 = vpop.f32.mrb[0].mxu0
  %v760 = vadd.f32 %v391, %v759
  %v761 = vpop.f32.mrb[0].mxu0
  %762 = vmatprep.mubr.bf16.mxu0 0
  %763 = vmatmul.mubr.bf16.gmra.mrb[0].mxu0 %v601
  %v764 = vpop.f32.mrb[0].mxu0
  %v765 = vadd.f32 %v396, %v764
  %v766 = vpop.f32.mrb[0].mxu0
  %v767 = vpop.f32.mrb[0].mxu0
  %v768 = vadd.f32 %v399, %v767
  %v769 = vpop.f32.mrb[0].mxu0
  %770 = vmatprep.mubr.bf16.mxu0 0
  %771 = vmatmul.mubr.bf16.gmra.mrb[0].mxu0 %v604
  %v772 = vpop.f32.mrb[0].mxu0
  %v773 = vadd.f32 %v404, %v772
  %v774 = vpop.f32.mrb[0].mxu0
  %v775 = vpop.f32.mrb[0].mxu0
  %v776 = vadd.f32 %v407, %v775
  %v777 = vpop.f32.mrb[0].mxu0
  %778 = vmatprep.mubr.bf16.mxu0 0
  %779 = vmatmul.mubr.bf16.gmra.mrb[0].mxu0 %v607
  %v780 = vpop.f32.mrb[0].mxu0
  %v781 = vadd.f32 %v412, %v780
  %v782 = vpop.f32.mrb[0].mxu0
  %v783 = vpop.f32.mrb[0].mxu0
  %v784 = vadd.f32 %v415, %v783
  %v785 = vpop.f32.mrb[0].mxu0
  %786 = vmatprep.mubr.bf16.mxu0 0
  %787 = vmatmul.mubr.bf16.gmra.mrb[0].mxu0 %v610
  %v788 = vpop.f32.mrb[0].mxu0
  %v789 = vadd.f32 %v420, %v788
  %v790 = vpop.f32.mrb[0].mxu0
  %v791 = vpop.f32.mrb[0].mxu0
  %v792 = vadd.f32 %v423, %v791
  %v793 = vpop.f32.mrb[0].mxu0
  %794 = vmatprep.mubr.bf16.mxu0 0
  %795 = vmatmul.mubr.bf16.gmra.mrb[0].mxu0 %v613
  %v796 = vpop.f32.mrb[0].mxu0
  %v797 = vadd.f32 %v428, %v796
  %v798 = vpop.f32.mrb[0].mxu0
  %v799 = vpop.f32.mrb[0].mxu0
  %v800 = vadd.f32 %v431, %v799
  %v801 = vpop.f32.mrb[0].mxu0
  %802 = vmatprep.mubr.bf16.mxu0 0
  %803 = vmatmul.mubr.bf16.gmra.mrb[0].mxu0 %v616
  %v804 = vpop.f32.mrb[0].mxu0
  %v805 = vadd.f32 %v436, %v804
  %v806 = vpop.f32.mrb[0].mxu0
  %v807 = vpop.f32.mrb[0].mxu0
  %v808 = vadd.f32 %v439, %v807
  %v809 = vpop.f32.mrb[0].mxu0
  %810 = vmatprep.mubr.bf16.mxu0 0
  %811 = vmatmul.mubr.bf16.gmra.mrb[0].mxu0 %v619
  %v812 = vpop.f32.mrb[0].mxu0
  %v813 = vadd.f32 %v444, %v812
  %v814 = vpop.f32.mrb[0].mxu0
  %v815 = vpop.f32.mrb[0].mxu0
  %v816 = vadd.f32 %v447, %v815
  %v817 = vpop.f32.mrb[0].mxu0
  %818 = vmatprep.mubr.bf16.mxu0 0
  %819 = vmatmul.mubr.bf16.gmra.mrb[0].mxu0 %v622
  %v820 = vpop.f32.mrb[0].mxu0
  %v821 = vadd.f32 %v452, %v820
  %v822 = vpop.f32.mrb[0].mxu0
  %v823 = vpop.f32.mrb[0].mxu0
  %v824 = vadd.f32 %v455, %v823
  %v825 = vpop.f32.mrb[0].mxu0
  %826 = vmatprep.mubr.bf16.mxu0 0
  %827 = vmatmul.mubr.bf16.gmra.mrb[0].mxu0 %v625
  %v828 = vpop.f32.mrb[0].mxu0
  %v829 = vadd.f32 %v460, %v828
  %v830 = vpop.f32.mrb[0].mxu0
  %v831 = vpop.f32.mrb[0].mxu0
  %v832 = vadd.f32 %v463, %v831
  %v833 = vpop.f32.mrb[0].mxu0
  %834 = vmatprep.mubr.bf16.mxu0 0
  %835 = vmatmul.mubr.bf16.gmra.mrb[0].mxu0 %v628
  %v836 = vpop.f32.mrb[0].mxu0
  %v837 = vadd.f32 %v468, %v836
  %v838 = vpop.f32.mrb[0].mxu0
  %v839 = vpop.f32.mrb[0].mxu0
  %v840 = vadd.f32 %v471, %v839
  %v841 = vpop.f32.mrb[0].mxu0
  %842 = vmatprep.mubr.bf16.mxu0 0
  %843 = vmatmul.mubr.bf16.gmra.mrb[0].mxu0 %v631
  %v844 = vpop.f32.mrb[0].mxu0
  %v845 = vadd.f32 %v476, %v844
  %v846 = vpop.f32.mrb[0].mxu0
  %v847 = vpop.f32.mrb[0].mxu0
  %v848 = vadd.f32 %v479, %v847
  %v849 = vpop.f32.mrb[0].mxu0
  %850 = vmatprep.mubr.bf16.mxu0 0
  %851 = vmatmul.mubr.bf16.gmra.mrb[0].mxu0 %v634
  %v852 = vpop.f32.mrb[0].mxu0
  %v853 = vadd.f32 %v484, %v852
  %v854 = vpop.f32.mrb[0].mxu0
  %v855 = vpop.f32.mrb[0].mxu0
  %v856 = vadd.f32 %v487, %v855
  %v857 = vpop.f32.mrb[0].mxu0
  %858 = vmatprep.mubr.bf16.mxu0 0
  %859 = vmatmul.mubr.bf16.gmra.mrb[0].mxu0 %v637
  %v860 = vpop.f32.mrb[0].mxu0
  %v861 = vadd.f32 %v492, %v860
  %v862 = vpop.f32.mrb[0].mxu0
  %v863 = vpop.f32.mrb[0].mxu0
  %v864 = vadd.f32 %v495, %v863
  %v865 = vpop.f32.mrb[0].mxu0
  %866 = vmatprep.mubr.bf16.mxu0 0
  %867 = vmatmul.mubr.bf16.gmra.mrb[0].mxu0 %v640
  %v868 = vpop.f32.mrb[0].mxu0
  %v869 = vadd.f32 %v500, %v868
  %v870 = vpop.f32.mrb[0].mxu0
  %v871 = vpop.f32.mrb[0].mxu0
  %v872 = vadd.f32 %v503, %v871
  %v873 = vpop.f32.mrb[0].mxu0
  %874 = vmatprep.mubr.bf16.mxu0 0
  %875 = vmatmul.mubr.bf16.gmra.mrb[0].mxu0 %v643
  %v876 = vpop.f32.mrb[0].mxu0
  %v877 = vadd.f32 %v508, %v876
  %v878 = vpop.f32.mrb[0].mxu0
  %v879 = vpop.f32.mrb[0].mxu0
  %v880 = vadd.f32 %v511, %v879
  %v881 = vpop.f32.mrb[0].mxu0
  %882 = vmatprep.mubr.bf16.mxu0 0
  %883 = vmatmul.mubr.bf16.gmra.mrb[0].mxu0 %v646
  %v884 = vpop.f32.mrb[0].mxu0
  %v885 = vadd.f32 %v516, %v884
  %v886 = vpop.f32.mrb[0].mxu0
  %v887 = vpop.f32.mrb[0].mxu0
  %v888 = vadd.f32 %v519, %v887
  %v889 = vpop.f32.mrb[0].mxu0
  %890 = vmatprep.mubr.bf16.mxu0 0
  %891 = vmatmul.mubr.bf16.gmra.mrb[0].mxu0 %v649
  %v892 = vpop.f32.mrb[0].mxu0
  %v893 = vadd.f32 %v524, %v892
  %v894 = vpop.f32.mrb[0].mxu0
  %v895 = vpop.f32.mrb[0].mxu0
  %v896 = vadd.f32 %v527, %v895
  %v897 = vpop.f32.mrb[0].mxu0
  %898 = vmatprep.mubr.bf16.mxu0 0
  %899 = vmatmul.mubr.bf16.gmra.mrb[0].mxu0 %v652
  %v900 = vpop.f32.mrb[0].mxu0
  %v901 = vadd.f32 %v532, %v900
  %v902 = vpop.f32.mrb[0].mxu0
  %v903 = vpop.f32.mrb[0].mxu0
  %v904 = vadd.f32 %v535, %v903
  %v905 = vpop.f32.mrb[0].mxu0
  %906 = vmatprep.mubr.bf16.mxu0 0
  %907 = vmatmul.mubr.bf16.gmra.mrb[0].mxu0 %v655
  %v908 = vpop.f32.mrb[0].mxu0
  %v909 = vadd.f32 %v540, %v908
  %v910 = vpop.f32.mrb[0].mxu0
  %v911 = vpop.f32.mrb[0].mxu0
  %v912 = vadd.f32 %v543, %v911
  %v913 = vpop.f32.mrb[0].mxu0
  %914 = vmatprep.mubr.bf16.mxu0 0
  %915 = vmatmul.mubr.bf16.gmra.mrb[0].mxu0 %v658
  %v916 = vpop.f32.mrb[0].mxu0
  %v917 = vadd.f32 %v548, %v916
  %v918 = vpop.f32.mrb[0].mxu0
  %v919 = vpop.f32.mrb[0].mxu0
  %v920 = vadd.f32 %v551, %v919
  %v921 = vpop.f32.mrb[0].mxu0
  %922 = vmatprep.mubr.bf16.mxu0 0
  %923 = vmatmul.mubr.bf16.gmra.mrb[0].mxu0 %v661
  %v924 = vpop.f32.mrb[0].mxu0
  %v925 = vadd.f32 %v556, %v924
  %v926 = vpop.f32.mrb[0].mxu0
  %v927 = vpop.f32.mrb[0].mxu0
  %v928 = vadd.f32 %v559, %v927
  %v929 = vpop.f32.mrb[0].mxu0
  %930 = vmatprep.mubr.bf16.mxu0 0
  %931 = vmatmul.mubr.bf16.gmra.mrb[0].mxu0 %v664
  %v932 = vpop.f32.mrb[0].mxu0
  %v933 = vadd.f32 %v564, %v932
  %v934 = vpop.f32.mrb[0].mxu0
  %v935 = vpop.f32.mrb[0].mxu0
  %v936 = vadd.f32 %v567, %v935
  %v937 = vpop.f32.mrb[0].mxu0
  %938 = vdwg.mxu0
  %s939 = scalar_lea.vmem %s0, 24
  %v940 = vld [vmem:[%s939] sm:$0xff]
  %v941 = vld [vmem:[%s939 + $0x8] sm:$0xff]
  %v942 = vld [vmem:[%s939 + $0x18] sm:$0xff]
  %v943 = vld [vmem:[%s939 + $0x20] sm:$0xff]
  %v944 = vld [vmem:[%s939 + $0x30] sm:$0xff]
  %v945 = vld [vmem:[%s939 + $0x38] sm:$0xff]
  %v946 = vld [vmem:[%s939 + $0x48] sm:$0xff]
  %v947 = vld [vmem:[%s939 + $0x50] sm:$0xff]
  %v948 = vld [vmem:[%s939 + $0x60] sm:$0xff]
  %v949 = vld [vmem:[%s939 + $0x68] sm:$0xff]
  %v950 = vld [vmem:[%s939 + $0x78] sm:$0xff]
  %v951 = vld [vmem:[%s939 + $0x80] sm:$0xff]
  %v952 = vld [vmem:[%s939 + $0x90] sm:$0xff]
  %v953 = vld [vmem:[%s939 + $0x98] sm:$0xff]
  %v954 = vld [vmem:[%s939 + $0xa8] sm:$0xff]
  %v955 = vld [vmem:[%s939 + $0xb0] sm:$0xff]
  %v956 = vld [vmem:[%s939 + $0xc0] sm:$0xff]
  %v957 = vld [vmem:[%s939 + $0xc8] sm:$0xff]
  %v958 = vld [vmem:[%s939 + $0xd8] sm:$0xff]
  %v959 = vld [vmem:[%s939 + $0xe0] sm:$0xff]
  %v960 = vld [vmem:[%s939 + $0xf0] sm:$0xff]
  %v961 = vld [vmem:[%s939 + $0xf8] sm:$0xff]
  %v962 = vld [vmem:[%s939 + $0x108] sm:$0xff]
  %v963 = vld [vmem:[%s939 + $0x110] sm:$0xff]
  %v964 = vld [vmem:[%s939 + $0x120] sm:$0xff]
  %v965 = vld [vmem:[%s939 + $0x128] sm:$0xff]
  %v966 = vld [vmem:[%s939 + $0x138] sm:$0xff]
  %v967 = vld [vmem:[%s939 + $0x140] sm:$0xff]
  %v968 = vld [vmem:[%s939 + $0x150] sm:$0xff]
  %v969 = vld [vmem:[%s939 + $0x158] sm:$0xff]
  %v970 = vld [vmem:[%s939 + $0x180] sm:$0xff]
  %v971 = vld [vmem:[%s939 + $0x188] sm:$0xff]
  %v972 = vld [vmem:[%s939 + $0x198] sm:$0xff]
  %v973 = vld [vmem:[%s939 + $0x1a0] sm:$0xff]
  %v974 = vld [vmem:[%s939 + $0x1b0] sm:$0xff]
  %v975 = vld [vmem:[%s939 + $0x1b8] sm:$0xff]
  %v976 = vld [vmem:[%s939 + $0x1c8] sm:$0xff]
  %v977 = vld [vmem:[%s939 + $0x1d0] sm:$0xff]
  %v978 = vld [vmem:[%s939 + $0x1e0] sm:$0xff]
  %v979 = vld [vmem:[%s939 + $0x1e8] sm:$0xff]
  %v980 = vld [vmem:[%s939 + $0x1f8] sm:$0xff]
  %v981 = vld [vmem:[%s939 + $0x200] sm:$0xff]
  %v982 = vld [vmem:[%s939 + $0x210] sm:$0xff]
  %v983 = vld [vmem:[%s939 + $0x218] sm:$0xff]
  %v984 = vld [vmem:[%s939 + $0x228] sm:$0xff]
  %v985 = vld [vmem:[%s939 + $0x230] sm:$0xff]
  %v986 = vld [vmem:[%s939 + $0x240] sm:$0xff]
  %v987 = vld [vmem:[%s939 + $0x248] sm:$0xff]
  %v988 = vld [vmem:[%s939 + $0x258] sm:$0xff]
  %v989 = vld [vmem:[%s939 + $0x260] sm:$0xff]
  %v990 = vld [vmem:[%s939 + $0x270] sm:$0xff]
  %v991 = vld [vmem:[%s939 + $0x278] sm:$0xff]
  %v992 = vld [vmem:[%s939 + $0x288] sm:$0xff]
  %v993 = vld [vmem:[%s939 + $0x290] sm:$0xff]
  %v994 = vld [vmem:[%s939 + $0x2a0] sm:$0xff]
  %v995 = vld [vmem:[%s939 + $0x2a8] sm:$0xff]
  %v996 = vld [vmem:[%s939 + $0x2b8] sm:$0xff]
  %v997 = vld [vmem:[%s939 + $0x2c0] sm:$0xff]
  %v998 = vld [vmem:[%s939 + $0x2d0] sm:$0xff]
  %v999 = vld [vmem:[%s939 + $0x2d8] sm:$0xff]
  %v1000 = vpack.c.bf16 %v941, %v940
  %v1001 = vpack.c.bf16 %v943, %v942
  %v1002 = vpack.c.bf16 %v945, %v944
  %v1003 = vpack.c.bf16 %v947, %v946
  %v1004 = vpack.c.bf16 %v949, %v948
  %v1005 = vpack.c.bf16 %v951, %v950
  %v1006 = vpack.c.bf16 %v953, %v952
  %v1007 = vpack.c.bf16 %v955, %v954
  %v1008 = vpack.c.bf16 %v957, %v956
  %v1009 = vpack.c.bf16 %v959, %v958
  %v1010 = vpack.c.bf16 %v961, %v960
  %v1011 = vpack.c.bf16 %v963, %v962
  %v1012 = vpack.c.bf16 %v965, %v964
  %v1013 = vpack.c.bf16 %v967, %v966
  %v1014 = vpack.c.bf16 %v969, %v968
  %v1015 = vpack.c.bf16 %v971, %v970
  %v1016 = vpack.c.bf16 %v973, %v972
  %v1017 = vpack.c.bf16 %v975, %v974
  %v1018 = vpack.c.bf16 %v977, %v976
  %v1019 = vpack.c.bf16 %v979, %v978
  %v1020 = vpack.c.bf16 %v981, %v980
  %v1021 = vpack.c.bf16 %v983, %v982
  %v1022 = vpack.c.bf16 %v985, %v984
  %v1023 = vpack.c.bf16 %v987, %v986
  %v1024 = vpack.c.bf16 %v989, %v988
  %v1025 = vpack.c.bf16 %v991, %v990
  %v1026 = vpack.c.bf16 %v993, %v992
  %v1027 = vpack.c.bf16 %v995, %v994
  %v1028 = vpack.c.bf16 %v997, %v996
  %v1029 = vpack.c.bf16 %v999, %v998
  %s1030 = scalar_lea.vmem %s1, 16
  %v1031 = vld [vmem:[%s1030] sm:$0xf]
  %v1032 = vld [vmem:[%s1030 + $0x4] sm:$0xf]
  %v1035 = vunpack.c.l.b16 %v1031
  %v1036 = vunpack.c.l.b16 %v1032
  %v1037 = vpack.c.b16 %v1036, %v1035
  %v1040 = vsel %vm206, %v1000, 0
  %v1043 = vsel %vm206, %v1001, 0
  %v1046 = vsel %vm206, %v1002, 0
  %v1049 = vsel %vm206, %v1003, 0
  %v1052 = vsel %vm206, %v1004, 0
  %v1055 = vsel %vm206, %v1005, 0
  %v1058 = vsel %vm206, %v1006, 0
  %v1061 = vsel %vm206, %v1007, 0
  %v1064 = vsel %vm206, %v1008, 0
  %v1067 = vsel %vm206, %v1009, 0
  %v1070 = vsel %vm206, %v1010, 0
  %v1073 = vsel %vm206, %v1011, 0
  %v1076 = vsel %vm206, %v1012, 0
  %v1079 = vsel %vm206, %v1013, 0
  %v1082 = vsel %vm206, %v1014, 0
  %v1085 = vsel %vm206, %v1015, 0
  %v1088 = vsel %vm206, %v1016, 0
  %v1091 = vsel %vm206, %v1017, 0
  %v1094 = vsel %vm206, %v1018, 0
  %v1097 = vsel %vm206, %v1019, 0
  %v1100 = vsel %vm206, %v1020, 0
  %v1103 = vsel %vm206, %v1021, 0
  %v1106 = vsel %vm206, %v1022, 0
  %v1109 = vsel %vm206, %v1023, 0
  %v1112 = vsel %vm206, %v1024, 0
  %v1115 = vsel %vm206, %v1025, 0
  %v1118 = vsel %vm206, %v1026, 0
  %v1121 = vsel %vm206, %v1027, 0
  %v1124 = vsel %vm206, %v1028, 0
  %v1127 = vsel %vm206, %v1029, 0
  %1129 = vmatprep.subr.bf16.mxu0 0
  %1130 = vmatpush1.bf16.msra.mxu0 %v1037
  %1131 = vmatprep.subr.bf16.mxu0 0
  %1132 = vmatpush1.bf16.msra.mxu0 0
  %1133 = vmatprep.subr.bf16.mxu0 0
  %1134 = vmatpush1.bf16.msra.mxu0 0
  %1135 = vmatprep.subr.bf16.mxu0 0
  %1136 = vmatpush1.bf16.msra.mxu0 0
  %1137 = vmatprep.subr.bf16.mxu0 0
  %1138 = vmatpush1.bf16.msra.mxu0 0
  %1139 = vmatprep.subr.bf16.mxu0 0
  %1140 = vmatpush1.bf16.msra.mxu0 0
  %1141 = vmatprep.subr.bf16.mxu0 0
  %1142 = vmatpush1.bf16.msra.mxu0 0
  %1143 = vmatprep.subr.bf16.mxu0 0
  %1144 = vmatpush1.bf16.msra.mxu0 0
  %1145 = vmatprep.subr.bf16.mxu0 0
  %1146 = vmatpush1.bf16.msra.mxu0 0
  %1147 = vmatprep.subr.bf16.mxu0 0
  %1148 = vmatpush1.bf16.msra.mxu0 0
  %1149 = vmatprep.subr.bf16.mxu0 0
  %1150 = vmatpush1.bf16.msra.mxu0 0
  %1151 = vmatprep.subr.bf16.mxu0 0
  %1152 = vmatpush1.bf16.msra.mxu0 0
  %1153 = vmatprep.subr.bf16.mxu0 0
  %1154 = vmatpush1.bf16.msra.mxu0 0
  %1155 = vmatprep.subr.bf16.mxu0 0
  %1156 = vmatpush1.bf16.msra.mxu0 0
  %1157 = vmatprep.subr.bf16.mxu0 0
  %1158 = vmatpush1.bf16.msra.mxu0 0
  %1159 = vmatprep.subr.bf16.mxu0 0
  %1160 = vmatpush1.bf16.msra.mxu0 0
  %1161 = vmatprep.mubr.bf16.mxu0 0
  %1162 = vmatmul.mubr.bf16.gmra.mrb[0].mxu0 %v1040
  %v1163 = vpop.f32.mrb[0].mxu0
  %v1164 = vadd.f32 0.0, %v1163
  %v1165 = vpop.f32.mrb[0].mxu0
  %v1166 = vpop.f32.mrb[0].mxu0
  %v1167 = vadd.f32 0.0, %v1166
  %v1168 = vpop.f32.mrb[0].mxu0
  %1169 = vmatprep.mubr.bf16.mxu0 0
  %1170 = vmatmul.mubr.bf16.gmra.mrb[0].mxu0 %v1043
  %v1171 = vpop.f32.mrb[0].mxu0
  %v1172 = vadd.f32 0.0, %v1171
  %v1173 = vpop.f32.mrb[0].mxu0
  %v1174 = vpop.f32.mrb[0].mxu0
  %v1175 = vadd.f32 0.0, %v1174
  %v1176 = vpop.f32.mrb[0].mxu0
  %1177 = vmatprep.mubr.bf16.mxu0 0
  %1178 = vmatmul.mubr.bf16.gmra.mrb[0].mxu0 %v1046
  %v1179 = vpop.f32.mrb[0].mxu0
  %v1180 = vadd.f32 0.0, %v1179
  %v1181 = vpop.f32.mrb[0].mxu0
  %v1182 = vpop.f32.mrb[0].mxu0
  %v1183 = vadd.f32 0.0, %v1182
  %v1184 = vpop.f32.mrb[0].mxu0
  %1185 = vmatprep.mubr.bf16.mxu0 0
  %1186 = vmatmul.mubr.bf16.gmra.mrb[0].mxu0 %v1049
  %v1187 = vpop.f32.mrb[0].mxu0
  %v1188 = vadd.f32 0.0, %v1187
  %v1189 = vpop.f32.mrb[0].mxu0
  %v1190 = vpop.f32.mrb[0].mxu0
  %v1191 = vadd.f32 0.0, %v1190
  %v1192 = vpop.f32.mrb[0].mxu0
  %1193 = vmatprep.mubr.bf16.mxu0 0
  %1194 = vmatmul.mubr.bf16.gmra.mrb[0].mxu0 %v1052
  %v1195 = vpop.f32.mrb[0].mxu0
  %v1196 = vadd.f32 0.0, %v1195
  %v1197 = vpop.f32.mrb[0].mxu0
  %v1198 = vpop.f32.mrb[0].mxu0
  %v1199 = vadd.f32 0.0, %v1198
  %v1200 = vpop.f32.mrb[0].mxu0
  %1201 = vmatprep.mubr.bf16.mxu0 0
  %1202 = vmatmul.mubr.bf16.gmra.mrb[0].mxu0 %v1055
  %v1203 = vpop.f32.mrb[0].mxu0
  %v1204 = vadd.f32 0.0, %v1203
  %v1205 = vpop.f32.mrb[0].mxu0
  %v1206 = vpop.f32.mrb[0].mxu0
  %v1207 = vadd.f32 0.0, %v1206
  %v1208 = vpop.f32.mrb[0].mxu0
  %1209 = vmatprep.mubr.bf16.mxu0 0
  %1210 = vmatmul.mubr.bf16.gmra.mrb[0].mxu0 %v1058
  %v1211 = vpop.f32.mrb[0].mxu0
  %v1212 = vadd.f32 0.0, %v1211
  %v1213 = vpop.f32.mrb[0].mxu0
  %v1214 = vpop.f32.mrb[0].mxu0
  %v1215 = vadd.f32 0.0, %v1214
  %v1216 = vpop.f32.mrb[0].mxu0
  %1217 = vmatprep.mubr.bf16.mxu0 0
  %1218 = vmatmul.mubr.bf16.gmra.mrb[0].mxu0 %v1061
  %v1219 = vpop.f32.mrb[0].mxu0
  %v1220 = vadd.f32 0.0, %v1219
  %v1221 = vpop.f32.mrb[0].mxu0
  %v1222 = vpop.f32.mrb[0].mxu0
  %v1223 = vadd.f32 0.0, %v1222
  %v1224 = vpop.f32.mrb[0].mxu0
  %1225 = vmatprep.mubr.bf16.mxu0 0
  %1226 = vmatmul.mubr.bf16.gmra.mrb[0].mxu0 %v1064
  %v1227 = vpop.f32.mrb[0].mxu0
  %v1228 = vadd.f32 0.0, %v1227
  %v1229 = vpop.f32.mrb[0].mxu0
  %v1230 = vpop.f32.mrb[0].mxu0
  %v1231 = vadd.f32 0.0, %v1230
  %v1232 = vpop.f32.mrb[0].mxu0
  %1233 = vmatprep.mubr.bf16.mxu0 0
  %1234 = vmatmul.mubr.bf16.gmra.mrb[0].mxu0 %v1067
  %v1235 = vpop.f32.mrb[0].mxu0
  %v1236 = vadd.f32 0.0, %v1235
  %v1237 = vpop.f32.mrb[0].mxu0
  %v1238 = vpop.f32.mrb[0].mxu0
  %v1239 = vadd.f32 0.0, %v1238
  %v1240 = vpop.f32.mrb[0].mxu0
  %1241 = vmatprep.mubr.bf16.mxu0 0
  %1242 = vmatmul.mubr.bf16.gmra.mrb[0].mxu0 %v1070
  %v1243 = vpop.f32.mrb[0].mxu0
  %v1244 = vadd.f32 0.0, %v1243
  %v1245 = vpop.f32.mrb[0].mxu0
  %v1246 = vpop.f32.mrb[0].mxu0
  %v1247 = vadd.f32 0.0, %v1246
  %v1248 = vpop.f32.mrb[0].mxu0
  %1249 = vmatprep.mubr.bf16.mxu0 0
  %1250 = vmatmul.mubr.bf16.gmra.mrb[0].mxu0 %v1073
  %v1251 = vpop.f32.mrb[0].mxu0
  %v1252 = vadd.f32 0.0, %v1251
  %v1253 = vpop.f32.mrb[0].mxu0
  %v1254 = vpop.f32.mrb[0].mxu0
  %v1255 = vadd.f32 0.0, %v1254
  %v1256 = vpop.f32.mrb[0].mxu0
  %1257 = vmatprep.mubr.bf16.mxu0 0
  %1258 = vmatmul.mubr.bf16.gmra.mrb[0].mxu0 %v1076
  %v1259 = vpop.f32.mrb[0].mxu0
  %v1260 = vadd.f32 0.0, %v1259
  %v1261 = vpop.f32.mrb[0].mxu0
  %v1262 = vpop.f32.mrb[0].mxu0
  %v1263 = vadd.f32 0.0, %v1262
  %v1264 = vpop.f32.mrb[0].mxu0
  %1265 = vmatprep.mubr.bf16.mxu0 0
  %1266 = vmatmul.mubr.bf16.gmra.mrb[0].mxu0 %v1079
  %v1267 = vpop.f32.mrb[0].mxu0
  %v1268 = vadd.f32 0.0, %v1267
  %v1269 = vpop.f32.mrb[0].mxu0
  %v1270 = vpop.f32.mrb[0].mxu0
  %v1271 = vadd.f32 0.0, %v1270
  %v1272 = vpop.f32.mrb[0].mxu0
  %1273 = vmatprep.mubr.bf16.mxu0 0
  %1274 = vmatmul.mubr.bf16.gmra.mrb[0].mxu0 %v1082
  %v1275 = vpop.f32.mrb[0].mxu0
  %v1276 = vadd.f32 0.0, %v1275
  %v1277 = vpop.f32.mrb[0].mxu0
  %v1278 = vpop.f32.mrb[0].mxu0
  %v1279 = vadd.f32 0.0, %v1278
  %v1280 = vpop.f32.mrb[0].mxu0
  %1281 = vmatprep.mubr.bf16.mxu0 0
  %1282 = vmatmul.mubr.bf16.gmra.mrb[0].mxu0 %v1085
  %v1283 = vpop.f32.mrb[0].mxu0
  %v1284 = vadd.f32 0.0, %v1283
  %v1285 = vpop.f32.mrb[0].mxu0
  %v1286 = vpop.f32.mrb[0].mxu0
  %v1287 = vadd.f32 0.0, %v1286
  %v1288 = vpop.f32.mrb[0].mxu0
  %1289 = vmatprep.mubr.bf16.mxu0 0
  %1290 = vmatmul.mubr.bf16.gmra.mrb[0].mxu0 %v1088
  %v1291 = vpop.f32.mrb[0].mxu0
  %v1292 = vadd.f32 0.0, %v1291
  %v1293 = vpop.f32.mrb[0].mxu0
  %v1294 = vpop.f32.mrb[0].mxu0
  %v1295 = vadd.f32 0.0, %v1294
  %v1296 = vpop.f32.mrb[0].mxu0
  %1297 = vmatprep.mubr.bf16.mxu0 0
  %1298 = vmatmul.mubr.bf16.gmra.mrb[0].mxu0 %v1091
  %v1299 = vpop.f32.mrb[0].mxu0
  %v1300 = vadd.f32 0.0, %v1299
  %v1301 = vpop.f32.mrb[0].mxu0
  %v1302 = vpop.f32.mrb[0].mxu0
  %v1303 = vadd.f32 0.0, %v1302
  %v1304 = vpop.f32.mrb[0].mxu0
  %1305 = vmatprep.mubr.bf16.mxu0 0
  %1306 = vmatmul.mubr.bf16.gmra.mrb[0].mxu0 %v1094
  %v1307 = vpop.f32.mrb[0].mxu0
  %v1308 = vadd.f32 0.0, %v1307
  %v1309 = vpop.f32.mrb[0].mxu0
  %v1310 = vpop.f32.mrb[0].mxu0
  %v1311 = vadd.f32 0.0, %v1310
  %v1312 = vpop.f32.mrb[0].mxu0
  %1313 = vmatprep.mubr.bf16.mxu0 0
  %1314 = vmatmul.mubr.bf16.gmra.mrb[0].mxu0 %v1097
  %v1315 = vpop.f32.mrb[0].mxu0
  %v1316 = vadd.f32 0.0, %v1315
  %v1317 = vpop.f32.mrb[0].mxu0
  %v1318 = vpop.f32.mrb[0].mxu0
  %v1319 = vadd.f32 0.0, %v1318
  %v1320 = vpop.f32.mrb[0].mxu0
  %1321 = vmatprep.mubr.bf16.mxu0 0
  %1322 = vmatmul.mubr.bf16.gmra.mrb[0].mxu0 %v1100
  %v1323 = vpop.f32.mrb[0].mxu0
  %v1324 = vadd.f32 0.0, %v1323
  %v1325 = vpop.f32.mrb[0].mxu0
  %v1326 = vpop.f32.mrb[0].mxu0
  %v1327 = vadd.f32 0.0, %v1326
  %v1328 = vpop.f32.mrb[0].mxu0
  %1329 = vmatprep.mubr.bf16.mxu0 0
  %1330 = vmatmul.mubr.bf16.gmra.mrb[0].mxu0 %v1103
  %v1331 = vpop.f32.mrb[0].mxu0
  %v1332 = vadd.f32 0.0, %v1331
  %v1333 = vpop.f32.mrb[0].mxu0
  %v1334 = vpop.f32.mrb[0].mxu0
  %v1335 = vadd.f32 0.0, %v1334
  %v1336 = vpop.f32.mrb[0].mxu0
  %1337 = vmatprep.mubr.bf16.mxu0 0
  %1338 = vmatmul.mubr.bf16.gmra.mrb[0].mxu0 %v1106
  %v1339 = vpop.f32.mrb[0].mxu0
  %v1340 = vadd.f32 0.0, %v1339
  %v1341 = vpop.f32.mrb[0].mxu0
  %v1342 = vpop.f32.mrb[0].mxu0
  %v1343 = vadd.f32 0.0, %v1342
  %v1344 = vpop.f32.mrb[0].mxu0
  %1345 = vmatprep.mubr.bf16.mxu0 0
  %1346 = vmatmul.mubr.bf16.gmra.mrb[0].mxu0 %v1109
  %v1347 = vpop.f32.mrb[0].mxu0
  %v1348 = vadd.f32 0.0, %v1347
  %v1349 = vpop.f32.mrb[0].mxu0
  %v1350 = vpop.f32.mrb[0].mxu0
  %v1351 = vadd.f32 0.0, %v1350
  %v1352 = vpop.f32.mrb[0].mxu0
  %1353 = vmatprep.mubr.bf16.mxu0 0
  %1354 = vmatmul.mubr.bf16.gmra.mrb[0].mxu0 %v1112
  %v1355 = vpop.f32.mrb[0].mxu0
  %v1356 = vadd.f32 0.0, %v1355
  %v1357 = vpop.f32.mrb[0].mxu0
  %v1358 = vpop.f32.mrb[0].mxu0
  %v1359 = vadd.f32 0.0, %v1358
  %v1360 = vpop.f32.mrb[0].mxu0
  %1361 = vmatprep.mubr.bf16.mxu0 0
  %1362 = vmatmul.mubr.bf16.gmra.mrb[0].mxu0 %v1115
  %v1363 = vpop.f32.mrb[0].mxu0
  %v1364 = vadd.f32 0.0, %v1363
  %v1365 = vpop.f32.mrb[0].mxu0
  %v1366 = vpop.f32.mrb[0].mxu0
  %v1367 = vadd.f32 0.0, %v1366
  %v1368 = vpop.f32.mrb[0].mxu0
  %1369 = vmatprep.mubr.bf16.mxu0 0
  %1370 = vmatmul.mubr.bf16.gmra.mrb[0].mxu0 %v1118
  %v1371 = vpop.f32.mrb[0].mxu0
  %v1372 = vadd.f32 0.0, %v1371
  %v1373 = vpop.f32.mrb[0].mxu0
  %v1374 = vpop.f32.mrb[0].mxu0
  %v1375 = vadd.f32 0.0, %v1374
  %v1376 = vpop.f32.mrb[0].mxu0
  %1377 = vmatprep.mubr.bf16.mxu0 0
  %1378 = vmatmul.mubr.bf16.gmra.mrb[0].mxu0 %v1121
  %v1379 = vpop.f32.mrb[0].mxu0
  %v1380 = vadd.f32 0.0, %v1379
  %v1381 = vpop.f32.mrb[0].mxu0
  %v1382 = vpop.f32.mrb[0].mxu0
  %v1383 = vadd.f32 0.0, %v1382
  %v1384 = vpop.f32.mrb[0].mxu0
  %1385 = vmatprep.mubr.bf16.mxu0 0
  %1386 = vmatmul.mubr.bf16.gmra.mrb[0].mxu0 %v1124
  %v1387 = vpop.f32.mrb[0].mxu0
  %v1388 = vadd.f32 0.0, %v1387
  %v1389 = vpop.f32.mrb[0].mxu0
  %v1390 = vpop.f32.mrb[0].mxu0
  %v1391 = vadd.f32 0.0, %v1390
  %v1392 = vpop.f32.mrb[0].mxu0
  %1393 = vmatprep.mubr.bf16.mxu0 0
  %1394 = vmatmul.mubr.bf16.gmra.mrb[0].mxu0 %v1127
  %v1395 = vpop.f32.mrb[0].mxu0
  %v1396 = vadd.f32 0.0, %v1395
  %v1397 = vpop.f32.mrb[0].mxu0
  %v1398 = vpop.f32.mrb[0].mxu0
  %v1399 = vadd.f32 0.0, %v1398
  %v1400 = vpop.f32.mrb[0].mxu0
  %1401 = vdwg.mxu0
  %v1402 = vadd.f32 %v701, %v1164
  %v1403 = vadd.f32 %v704, %v1167
  %v1404 = vadd.f32 %v709, %v1172
  %v1405 = vadd.f32 %v712, %v1175
  %v1406 = vadd.f32 %v717, %v1180
  %v1407 = vadd.f32 %v720, %v1183
  %v1408 = vadd.f32 %v725, %v1188
  %v1409 = vadd.f32 %v728, %v1191
  %v1410 = vadd.f32 %v733, %v1196
  %v1411 = vadd.f32 %v736, %v1199
  %v1412 = vadd.f32 %v741, %v1204
  %v1413 = vadd.f32 %v744, %v1207
  %v1414 = vadd.f32 %v749, %v1212
  %v1415 = vadd.f32 %v752, %v1215
  %v1416 = vadd.f32 %v757, %v1220
  %v1417 = vadd.f32 %v760, %v1223
  %v1418 = vadd.f32 %v765, %v1228
  %v1419 = vadd.f32 %v768, %v1231
  %v1420 = vadd.f32 %v773, %v1236
  %v1421 = vadd.f32 %v776, %v1239
  %v1422 = vadd.f32 %v781, %v1244
  %v1423 = vadd.f32 %v784, %v1247
  %v1424 = vadd.f32 %v789, %v1252
  %v1425 = vadd.f32 %v792, %v1255
  %v1426 = vadd.f32 %v797, %v1260
  %v1427 = vadd.f32 %v800, %v1263
  %v1428 = vadd.f32 %v805, %v1268
  %v1429 = vadd.f32 %v808, %v1271
  %v1430 = vadd.f32 %v813, %v1276
  %v1431 = vadd.f32 %v816, %v1279
  %v1432 = vadd.f32 %v821, %v1284
  %v1433 = vadd.f32 %v824, %v1287
  %v1434 = vadd.f32 %v829, %v1292
  %v1435 = vadd.f32 %v832, %v1295
  %v1436 = vadd.f32 %v837, %v1300
  %v1437 = vadd.f32 %v840, %v1303
  %v1438 = vadd.f32 %v845, %v1308
  %v1439 = vadd.f32 %v848, %v1311
  %v1440 = vadd.f32 %v853, %v1316
  %v1441 = vadd.f32 %v856, %v1319
  %v1442 = vadd.f32 %v861, %v1324
  %v1443 = vadd.f32 %v864, %v1327
  %v1444 = vadd.f32 %v869, %v1332
  %v1445 = vadd.f32 %v872, %v1335
  %v1446 = vadd.f32 %v877, %v1340
  %v1447 = vadd.f32 %v880, %v1343
  %v1448 = vadd.f32 %v885, %v1348
  %v1449 = vadd.f32 %v888, %v1351
  %v1450 = vadd.f32 %v893, %v1356
  %v1451 = vadd.f32 %v896, %v1359
  %v1452 = vadd.f32 %v901, %v1364
  %v1453 = vadd.f32 %v904, %v1367
  %v1454 = vadd.f32 %v909, %v1372
  %v1455 = vadd.f32 %v912, %v1375
  %v1456 = vadd.f32 %v917, %v1380
  %v1457 = vadd.f32 %v920, %v1383
  %v1458 = vadd.f32 %v925, %v1388
  %v1459 = vadd.f32 %v928, %v1391
  %v1460 = vadd.f32 %v933, %v1396
  %v1461 = vadd.f32 %v936, %v1399
  %v1462 = vld [vmem:[%s939 + $0x1] sm:$0xff]
  %v1463 = vld [vmem:[%s939 + $0x9] sm:$0xff]
  %v1464 = vld [vmem:[%s939 + $0x19] sm:$0xff]
  %v1465 = vld [vmem:[%s939 + $0x21] sm:$0xff]
  %v1466 = vld [vmem:[%s939 + $0x31] sm:$0xff]
  %v1467 = vld [vmem:[%s939 + $0x39] sm:$0xff]
  %v1468 = vld [vmem:[%s939 + $0x49] sm:$0xff]
  %v1469 = vld [vmem:[%s939 + $0x51] sm:$0xff]
  %v1470 = vld [vmem:[%s939 + $0x61] sm:$0xff]
  %v1471 = vld [vmem:[%s939 + $0x69] sm:$0xff]
  %v1472 = vld [vmem:[%s939 + $0x79] sm:$0xff]
  %v1473 = vld [vmem:[%s939 + $0x81] sm:$0xff]
  %v1474 = vld [vmem:[%s939 + $0x91] sm:$0xff]
  %v1475 = vld [vmem:[%s939 + $0x99] sm:$0xff]
  %v1476 = vld [vmem:[%s939 + $0xa9] sm:$0xff]
  %v1477 = vld [vmem:[%s939 + $0xb1] sm:$0xff]
  %v1478 = vld [vmem:[%s939 + $0xc1] sm:$0xff]
  %v1479 = vld [vmem:[%s939 + $0xc9] sm:$0xff]
  %v1480 = vld [vmem:[%s939 + $0xd9] sm:$0xff]
  %v1481 = vld [vmem:[%s939 + $0xe1] sm:$0xff]
  %v1482 = vld [vmem:[%s939 + $0xf1] sm:$0xff]
  %v1483 = vld [vmem:[%s939 + $0xf9] sm:$0xff]
  %v1484 = vld [vmem:[%s939 + $0x109] sm:$0xff]
  %v1485 = vld [vmem:[%s939 + $0x111] sm:$0xff]
  %v1486 = vld [vmem:[%s939 + $0x121] sm:$0xff]
  %v1487 = vld [vmem:[%s939 + $0x129] sm:$0xff]
  %v1488 = vld [vmem:[%s939 + $0x139] sm:$0xff]
  %v1489 = vld [vmem:[%s939 + $0x141] sm:$0xff]
  %v1490 = vld [vmem:[%s939 + $0x151] sm:$0xff]
  %v1491 = vld [vmem:[%s939 + $0x159] sm:$0xff]
  %v1492 = vld [vmem:[%s939 + $0x181] sm:$0xff]
  %v1493 = vld [vmem:[%s939 + $0x189] sm:$0xff]
  %v1494 = vld [vmem:[%s939 + $0x199] sm:$0xff]
  %v1495 = vld [vmem:[%s939 + $0x1a1] sm:$0xff]
  %v1496 = vld [vmem:[%s939 + $0x1b1] sm:$0xff]
  %v1497 = vld [vmem:[%s939 + $0x1b9] sm:$0xff]
  %v1498 = vld [vmem:[%s939 + $0x1c9] sm:$0xff]
  %v1499 = vld [vmem:[%s939 + $0x1d1] sm:$0xff]
  %v1500 = vld [vmem:[%s939 + $0x1e1] sm:$0xff]
  %v1501 = vld [vmem:[%s939 + $0x1e9] sm:$0xff]
  %v1502 = vld [vmem:[%s939 + $0x1f9] sm:$0xff]
  %v1503 = vld [vmem:[%s939 + $0x201] sm:$0xff]
  %v1504 = vld [vmem:[%s939 + $0x211] sm:$0xff]
  %v1505 = vld [vmem:[%s939 + $0x219] sm:$0xff]
  %v1506 = vld [vmem:[%s939 + $0x229] sm:$0xff]
  %v1507 = vld [vmem:[%s939 + $0x231] sm:$0xff]
  %v1508 = vld [vmem:[%s939 + $0x241] sm:$0xff]
  %v1509 = vld [vmem:[%s939 + $0x249] sm:$0xff]
  %v1510 = vld [vmem:[%s939 + $0x259] sm:$0xff]
  %v1511 = vld [vmem:[%s939 + $0x261] sm:$0xff]
  %v1512 = vld [vmem:[%s939 + $0x271] sm:$0xff]
  %v1513 = vld [vmem:[%s939 + $0x279] sm:$0xff]
  %v1514 = vld [vmem:[%s939 + $0x289] sm:$0xff]
  %v1515 = vld [vmem:[%s939 + $0x291] sm:$0xff]
  %v1516 = vld [vmem:[%s939 + $0x2a1] sm:$0xff]
  %v1517 = vld [vmem:[%s939 + $0x2a9] sm:$0xff]
  %v1518 = vld [vmem:[%s939 + $0x2b9] sm:$0xff]
  %v1519 = vld [vmem:[%s939 + $0x2c1] sm:$0xff]
  %v1520 = vld [vmem:[%s939 + $0x2d1] sm:$0xff]
  %v1521 = vld [vmem:[%s939 + $0x2d9] sm:$0xff]
  %v1522 = vpack.c.bf16 %v1463, %v1462
  %v1523 = vpack.c.bf16 %v1465, %v1464
  %v1524 = vpack.c.bf16 %v1467, %v1466
  %v1525 = vpack.c.bf16 %v1469, %v1468
  %v1526 = vpack.c.bf16 %v1471, %v1470
  %v1527 = vpack.c.bf16 %v1473, %v1472
  %v1528 = vpack.c.bf16 %v1475, %v1474
  %v1529 = vpack.c.bf16 %v1477, %v1476
  %v1530 = vpack.c.bf16 %v1479, %v1478
  %v1531 = vpack.c.bf16 %v1481, %v1480
  %v1532 = vpack.c.bf16 %v1483, %v1482
  %v1533 = vpack.c.bf16 %v1485, %v1484
  %v1534 = vpack.c.bf16 %v1487, %v1486
  %v1535 = vpack.c.bf16 %v1489, %v1488
  %v1536 = vpack.c.bf16 %v1491, %v1490
  %v1537 = vpack.c.bf16 %v1493, %v1492
  %v1538 = vpack.c.bf16 %v1495, %v1494
  %v1539 = vpack.c.bf16 %v1497, %v1496
  %v1540 = vpack.c.bf16 %v1499, %v1498
  %v1541 = vpack.c.bf16 %v1501, %v1500
  %v1542 = vpack.c.bf16 %v1503, %v1502
  %v1543 = vpack.c.bf16 %v1505, %v1504
  %v1544 = vpack.c.bf16 %v1507, %v1506
  %v1545 = vpack.c.bf16 %v1509, %v1508
  %v1546 = vpack.c.bf16 %v1511, %v1510
  %v1547 = vpack.c.bf16 %v1513, %v1512
  %v1548 = vpack.c.bf16 %v1515, %v1514
  %v1549 = vpack.c.bf16 %v1517, %v1516
  %v1550 = vpack.c.bf16 %v1519, %v1518
  %v1551 = vpack.c.bf16 %v1521, %v1520
  %s1552 = scalar_lea.vmem %s1, 24
  %v1553 = vld [vmem:[%s1552] sm:$0xf]
  %v1554 = vld [vmem:[%s1552 + $0x4] sm:$0xf]
  %v1557 = vunpack.c.l.b16 %v1553
  %v1558 = vunpack.c.l.b16 %v1554
  %v1559 = vpack.c.b16 %v1558, %v1557
  %v1562 = vsel %vm206, %v1522, 0
  %v1565 = vsel %vm206, %v1523, 0
  %v1568 = vsel %vm206, %v1524, 0
  %v1571 = vsel %vm206, %v1525, 0
  %v1574 = vsel %vm206, %v1526, 0
  %v1577 = vsel %vm206, %v1527, 0
  %v1580 = vsel %vm206, %v1528, 0
  %v1583 = vsel %vm206, %v1529, 0
  %v1586 = vsel %vm206, %v1530, 0
  %v1589 = vsel %vm206, %v1531, 0
  %v1592 = vsel %vm206, %v1532, 0
  %v1595 = vsel %vm206, %v1533, 0
  %v1598 = vsel %vm206, %v1534, 0
  %v1601 = vsel %vm206, %v1535, 0
  %v1604 = vsel %vm206, %v1536, 0
  %v1607 = vsel %vm206, %v1537, 0
  %v1610 = vsel %vm206, %v1538, 0
  %v1613 = vsel %vm206, %v1539, 0
  %v1616 = vsel %vm206, %v1540, 0
  %v1619 = vsel %vm206, %v1541, 0
  %v1622 = vsel %vm206, %v1542, 0
  %v1625 = vsel %vm206, %v1543, 0
  %v1628 = vsel %vm206, %v1544, 0
  %v1631 = vsel %vm206, %v1545, 0
  %v1634 = vsel %vm206, %v1546, 0
  %v1637 = vsel %vm206, %v1547, 0
  %v1640 = vsel %vm206, %v1548, 0
  %v1643 = vsel %vm206, %v1549, 0
  %v1646 = vsel %vm206, %v1550, 0
  %v1649 = vsel %vm206, %v1551, 0
  %1651 = vmatprep.subr.bf16.mxu0 0
  %1652 = vmatpush1.bf16.msra.mxu0 %v1559
  %1653 = vmatprep.subr.bf16.mxu0 0
  %1654 = vmatpush1.bf16.msra.mxu0 0
  %1655 = vmatprep.subr.bf16.mxu0 0
  %1656 = vmatpush1.bf16.msra.mxu0 0
  %1657 = vmatprep.subr.bf16.mxu0 0
  %1658 = vmatpush1.bf16.msra.mxu0 0
  %1659 = vmatprep.subr.bf16.mxu0 0
  %1660 = vmatpush1.bf16.msra.mxu0 0
  %1661 = vmatprep.subr.bf16.mxu0 0
  %1662 = vmatpush1.bf16.msra.mxu0 0
  %1663 = vmatprep.subr.bf16.mxu0 0
  %1664 = vmatpush1.bf16.msra.mxu0 0
  %1665 = vmatprep.subr.bf16.mxu0 0
  %1666 = vmatpush1.bf16.msra.mxu0 0
  %1667 = vmatprep.subr.bf16.mxu0 0
  %1668 = vmatpush1.bf16.msra.mxu0 0
  %1669 = vmatprep.subr.bf16.mxu0 0
  %1670 = vmatpush1.bf16.msra.mxu0 0
  %1671 = vmatprep.subr.bf16.mxu0 0
  %1672 = vmatpush1.bf16.msra.mxu0 0
  %1673 = vmatprep.subr.bf16.mxu0 0
  %1674 = vmatpush1.bf16.msra.mxu0 0
  %1675 = vmatprep.subr.bf16.mxu0 0
  %1676 = vmatpush1.bf16.msra.mxu0 0
  %1677 = vmatprep.subr.bf16.mxu0 0
  %1678 = vmatpush1.bf16.msra.mxu0 0
  %1679 = vmatprep.subr.bf16.mxu0 0
  %1680 = vmatpush1.bf16.msra.mxu0 0
  %1681 = vmatprep.subr.bf16.mxu0 0
  %1682 = vmatpush1.bf16.msra.mxu0 0
  %1683 = vmatprep.mubr.bf16.mxu0 0
  %1684 = vmatmul.mubr.bf16.gmra.mrb[0].mxu0 %v1562
  %v1685 = vpop.f32.mrb[0].mxu0
  %v1686 = vadd.f32 0.0, %v1685
  %v1687 = vpop.f32.mrb[0].mxu0
  %v1688 = vpop.f32.mrb[0].mxu0
  %v1689 = vadd.f32 0.0, %v1688
  %v1690 = vpop.f32.mrb[0].mxu0
  %1691 = vmatprep.mubr.bf16.mxu0 0
  %1692 = vmatmul.mubr.bf16.gmra.mrb[0].mxu0 %v1565
  %v1693 = vpop.f32.mrb[0].mxu0
  %v1694 = vadd.f32 0.0, %v1693
  %v1695 = vpop.f32.mrb[0].mxu0
  %v1696 = vpop.f32.mrb[0].mxu0
  %v1697 = vadd.f32 0.0, %v1696
  %v1698 = vpop.f32.mrb[0].mxu0
  %1699 = vmatprep.mubr.bf16.mxu0 0
  %1700 = vmatmul.mubr.bf16.gmra.mrb[0].mxu0 %v1568
  %v1701 = vpop.f32.mrb[0].mxu0
  %v1702 = vadd.f32 0.0, %v1701
  %v1703 = vpop.f32.mrb[0].mxu0
  %v1704 = vpop.f32.mrb[0].mxu0
  %v1705 = vadd.f32 0.0, %v1704
  %v1706 = vpop.f32.mrb[0].mxu0
  %1707 = vmatprep.mubr.bf16.mxu0 0
  %1708 = vmatmul.mubr.bf16.gmra.mrb[0].mxu0 %v1571
  %v1709 = vpop.f32.mrb[0].mxu0
  %v1710 = vadd.f32 0.0, %v1709
  %v1711 = vpop.f32.mrb[0].mxu0
  %v1712 = vpop.f32.mrb[0].mxu0
  %v1713 = vadd.f32 0.0, %v1712
  %v1714 = vpop.f32.mrb[0].mxu0
  %1715 = vmatprep.mubr.bf16.mxu0 0
  %1716 = vmatmul.mubr.bf16.gmra.mrb[0].mxu0 %v1574
  %v1717 = vpop.f32.mrb[0].mxu0
  %v1718 = vadd.f32 0.0, %v1717
  %v1719 = vpop.f32.mrb[0].mxu0
  %v1720 = vpop.f32.mrb[0].mxu0
  %v1721 = vadd.f32 0.0, %v1720
  %v1722 = vpop.f32.mrb[0].mxu0
  %1723 = vmatprep.mubr.bf16.mxu0 0
  %1724 = vmatmul.mubr.bf16.gmra.mrb[0].mxu0 %v1577
  %v1725 = vpop.f32.mrb[0].mxu0
  %v1726 = vadd.f32 0.0, %v1725
  %v1727 = vpop.f32.mrb[0].mxu0
  %v1728 = vpop.f32.mrb[0].mxu0
  %v1729 = vadd.f32 0.0, %v1728
  %v1730 = vpop.f32.mrb[0].mxu0
  %1731 = vmatprep.mubr.bf16.mxu0 0
  %1732 = vmatmul.mubr.bf16.gmra.mrb[0].mxu0 %v1580
  %v1733 = vpop.f32.mrb[0].mxu0
  %v1734 = vadd.f32 0.0, %v1733
  %v1735 = vpop.f32.mrb[0].mxu0
  %v1736 = vpop.f32.mrb[0].mxu0
  %v1737 = vadd.f32 0.0, %v1736
  %v1738 = vpop.f32.mrb[0].mxu0
  %1739 = vmatprep.mubr.bf16.mxu0 0
  %1740 = vmatmul.mubr.bf16.gmra.mrb[0].mxu0 %v1583
  %v1741 = vpop.f32.mrb[0].mxu0
  %v1742 = vadd.f32 0.0, %v1741
  %v1743 = vpop.f32.mrb[0].mxu0
  %v1744 = vpop.f32.mrb[0].mxu0
  %v1745 = vadd.f32 0.0, %v1744
  %v1746 = vpop.f32.mrb[0].mxu0
  %1747 = vmatprep.mubr.bf16.mxu0 0
  %1748 = vmatmul.mubr.bf16.gmra.mrb[0].mxu0 %v1586
  %v1749 = vpop.f32.mrb[0].mxu0
  %v1750 = vadd.f32 0.0, %v1749
  %v1751 = vpop.f32.mrb[0].mxu0
  %v1752 = vpop.f32.mrb[0].mxu0
  %v1753 = vadd.f32 0.0, %v1752
  %v1754 = vpop.f32.mrb[0].mxu0
  %1755 = vmatprep.mubr.bf16.mxu0 0
  %1756 = vmatmul.mubr.bf16.gmra.mrb[0].mxu0 %v1589
  %v1757 = vpop.f32.mrb[0].mxu0
  %v1758 = vadd.f32 0.0, %v1757
  %v1759 = vpop.f32.mrb[0].mxu0
  %v1760 = vpop.f32.mrb[0].mxu0
  %v1761 = vadd.f32 0.0, %v1760
  %v1762 = vpop.f32.mrb[0].mxu0
  %1763 = vmatprep.mubr.bf16.mxu0 0
  %1764 = vmatmul.mubr.bf16.gmra.mrb[0].mxu0 %v1592
  %v1765 = vpop.f32.mrb[0].mxu0
  %v1766 = vadd.f32 0.0, %v1765
  %v1767 = vpop.f32.mrb[0].mxu0
  %v1768 = vpop.f32.mrb[0].mxu0
  %v1769 = vadd.f32 0.0, %v1768
  %v1770 = vpop.f32.mrb[0].mxu0
  %1771 = vmatprep.mubr.bf16.mxu0 0
  %1772 = vmatmul.mubr.bf16.gmra.mrb[0].mxu0 %v1595
  %v1773 = vpop.f32.mrb[0].mxu0
  %v1774 = vadd.f32 0.0, %v1773
  %v1775 = vpop.f32.mrb[0].mxu0
  %v1776 = vpop.f32.mrb[0].mxu0
  %v1777 = vadd.f32 0.0, %v1776
  %v1778 = vpop.f32.mrb[0].mxu0
  %1779 = vmatprep.mubr.bf16.mxu0 0
  %1780 = vmatmul.mubr.bf16.gmra.mrb[0].mxu0 %v1598
  %v1781 = vpop.f32.mrb[0].mxu0
  %v1782 = vadd.f32 0.0, %v1781
  %v1783 = vpop.f32.mrb[0].mxu0
  %v1784 = vpop.f32.mrb[0].mxu0
  %v1785 = vadd.f32 0.0, %v1784
  %v1786 = vpop.f32.mrb[0].mxu0
  %1787 = vmatprep.mubr.bf16.mxu0 0
  %1788 = vmatmul.mubr.bf16.gmra.mrb[0].mxu0 %v1601
  %v1789 = vpop.f32.mrb[0].mxu0
  %v1790 = vadd.f32 0.0, %v1789
  %v1791 = vpop.f32.mrb[0].mxu0
  %v1792 = vpop.f32.mrb[0].mxu0
  %v1793 = vadd.f32 0.0, %v1792
  %v1794 = vpop.f32.mrb[0].mxu0
  %1795 = vmatprep.mubr.bf16.mxu0 0
  %1796 = vmatmul.mubr.bf16.gmra.mrb[0].mxu0 %v1604
  %v1797 = vpop.f32.mrb[0].mxu0
  %v1798 = vadd.f32 0.0, %v1797
  %v1799 = vpop.f32.mrb[0].mxu0
  %v1800 = vpop.f32.mrb[0].mxu0
  %v1801 = vadd.f32 0.0, %v1800
  %v1802 = vpop.f32.mrb[0].mxu0
  %1803 = vmatprep.mubr.bf16.mxu0 0
  %1804 = vmatmul.mubr.bf16.gmra.mrb[0].mxu0 %v1607
  %v1805 = vpop.f32.mrb[0].mxu0
  %v1806 = vadd.f32 0.0, %v1805
  %v1807 = vpop.f32.mrb[0].mxu0
  %v1808 = vpop.f32.mrb[0].mxu0
  %v1809 = vadd.f32 0.0, %v1808
  %v1810 = vpop.f32.mrb[0].mxu0
  %1811 = vmatprep.mubr.bf16.mxu0 0
  %1812 = vmatmul.mubr.bf16.gmra.mrb[0].mxu0 %v1610
  %v1813 = vpop.f32.mrb[0].mxu0
  %v1814 = vadd.f32 0.0, %v1813
  %v1815 = vpop.f32.mrb[0].mxu0
  %v1816 = vpop.f32.mrb[0].mxu0
  %v1817 = vadd.f32 0.0, %v1816
  %v1818 = vpop.f32.mrb[0].mxu0
  %1819 = vmatprep.mubr.bf16.mxu0 0
  %1820 = vmatmul.mubr.bf16.gmra.mrb[0].mxu0 %v1613
  %v1821 = vpop.f32.mrb[0].mxu0
  %v1822 = vadd.f32 0.0, %v1821
  %v1823 = vpop.f32.mrb[0].mxu0
  %v1824 = vpop.f32.mrb[0].mxu0
  %v1825 = vadd.f32 0.0, %v1824
  %v1826 = vpop.f32.mrb[0].mxu0
  %1827 = vmatprep.mubr.bf16.mxu0 0
  %1828 = vmatmul.mubr.bf16.gmra.mrb[0].mxu0 %v1616
  %v1829 = vpop.f32.mrb[0].mxu0
  %v1830 = vadd.f32 0.0, %v1829
  %v1831 = vpop.f32.mrb[0].mxu0
  %v1832 = vpop.f32.mrb[0].mxu0
  %v1833 = vadd.f32 0.0, %v1832
  %v1834 = vpop.f32.mrb[0].mxu0
  %1835 = vmatprep.mubr.bf16.mxu0 0
  %1836 = vmatmul.mubr.bf16.gmra.mrb[0].mxu0 %v1619
  %v1837 = vpop.f32.mrb[0].mxu0
  %v1838 = vadd.f32 0.0, %v1837
  %v1839 = vpop.f32.mrb[0].mxu0
  %v1840 = vpop.f32.mrb[0].mxu0
  %v1841 = vadd.f32 0.0, %v1840
  %v1842 = vpop.f32.mrb[0].mxu0
  %1843 = vmatprep.mubr.bf16.mxu0 0
  %1844 = vmatmul.mubr.bf16.gmra.mrb[0].mxu0 %v1622
  %v1845 = vpop.f32.mrb[0].mxu0
  %v1846 = vadd.f32 0.0, %v1845
  %v1847 = vpop.f32.mrb[0].mxu0
  %v1848 = vpop.f32.mrb[0].mxu0
  %v1849 = vadd.f32 0.0, %v1848
  %v1850 = vpop.f32.mrb[0].mxu0
  %1851 = vmatprep.mubr.bf16.mxu0 0
  %1852 = vmatmul.mubr.bf16.gmra.mrb[0].mxu0 %v1625
  %v1853 = vpop.f32.mrb[0].mxu0
  %v1854 = vadd.f32 0.0, %v1853
  %v1855 = vpop.f32.mrb[0].mxu0
  %v1856 = vpop.f32.mrb[0].mxu0
  %v1857 = vadd.f32 0.0, %v1856
  %v1858 = vpop.f32.mrb[0].mxu0
  %1859 = vmatprep.mubr.bf16.mxu0 0
  %1860 = vmatmul.mubr.bf16.gmra.mrb[0].mxu0 %v1628
  %v1861 = vpop.f32.mrb[0].mxu0
  %v1862 = vadd.f32 0.0, %v1861
  %v1863 = vpop.f32.mrb[0].mxu0
  %v1864 = vpop.f32.mrb[0].mxu0
  %v1865 = vadd.f32 0.0, %v1864
  %v1866 = vpop.f32.mrb[0].mxu0
  %1867 = vmatprep.mubr.bf16.mxu0 0
  %1868 = vmatmul.mubr.bf16.gmra.mrb[0].mxu0 %v1631
  %v1869 = vpop.f32.mrb[0].mxu0
  %v1870 = vadd.f32 0.0, %v1869
  %v1871 = vpop.f32.mrb[0].mxu0
  %v1872 = vpop.f32.mrb[0].mxu0
  %v1873 = vadd.f32 0.0, %v1872
  %v1874 = vpop.f32.mrb[0].mxu0
  %1875 = vmatprep.mubr.bf16.mxu0 0
  %1876 = vmatmul.mubr.bf16.gmra.mrb[0].mxu0 %v1634
  %v1877 = vpop.f32.mrb[0].mxu0
  %v1878 = vadd.f32 0.0, %v1877
  %v1879 = vpop.f32.mrb[0].mxu0
  %v1880 = vpop.f32.mrb[0].mxu0
  %v1881 = vadd.f32 0.0, %v1880
  %v1882 = vpop.f32.mrb[0].mxu0
  %1883 = vmatprep.mubr.bf16.mxu0 0
  %1884 = vmatmul.mubr.bf16.gmra.mrb[0].mxu0 %v1637
  %v1885 = vpop.f32.mrb[0].mxu0
  %v1886 = vadd.f32 0.0, %v1885
  %v1887 = vpop.f32.mrb[0].mxu0
  %v1888 = vpop.f32.mrb[0].mxu0
  %v1889 = vadd.f32 0.0, %v1888
  %v1890 = vpop.f32.mrb[0].mxu0
  %1891 = vmatprep.mubr.bf16.mxu0 0
  %1892 = vmatmul.mubr.bf16.gmra.mrb[0].mxu0 %v1640
  %v1893 = vpop.f32.mrb[0].mxu0
  %v1894 = vadd.f32 0.0, %v1893
  %v1895 = vpop.f32.mrb[0].mxu0
  %v1896 = vpop.f32.mrb[0].mxu0
  %v1897 = vadd.f32 0.0, %v1896
  %v1898 = vpop.f32.mrb[0].mxu0
  %1899 = vmatprep.mubr.bf16.mxu0 0
  %1900 = vmatmul.mubr.bf16.gmra.mrb[0].mxu0 %v1643
  %v1901 = vpop.f32.mrb[0].mxu0
  %v1902 = vadd.f32 0.0, %v1901
  %v1903 = vpop.f32.mrb[0].mxu0
  %v1904 = vpop.f32.mrb[0].mxu0
  %v1905 = vadd.f32 0.0, %v1904
  %v1906 = vpop.f32.mrb[0].mxu0
  %1907 = vmatprep.mubr.bf16.mxu0 0
  %1908 = vmatmul.mubr.bf16.gmra.mrb[0].mxu0 %v1646
  %v1909 = vpop.f32.mrb[0].mxu0
  %v1910 = vadd.f32 0.0, %v1909
  %v1911 = vpop.f32.mrb[0].mxu0
  %v1912 = vpop.f32.mrb[0].mxu0
  %v1913 = vadd.f32 0.0, %v1912
  %v1914 = vpop.f32.mrb[0].mxu0
  %1915 = vmatprep.mubr.bf16.mxu0 0
  %1916 = vmatmul.mubr.bf16.gmra.mrb[0].mxu0 %v1649
  %v1917 = vpop.f32.mrb[0].mxu0
  %v1918 = vadd.f32 0.0, %v1917
  %v1919 = vpop.f32.mrb[0].mxu0
  %v1920 = vpop.f32.mrb[0].mxu0
  %v1921 = vadd.f32 0.0, %v1920
  %v1922 = vpop.f32.mrb[0].mxu0
  %1923 = vdwg.mxu0
  %v1924 = vadd.f32 %v1402, %v1686
  %v1925 = vadd.f32 %v1403, %v1689
  %v1926 = vadd.f32 %v1404, %v1694
  %v1927 = vadd.f32 %v1405, %v1697
  %v1928 = vadd.f32 %v1406, %v1702
  %v1929 = vadd.f32 %v1407, %v1705
  %v1930 = vadd.f32 %v1408, %v1710
  %v1931 = vadd.f32 %v1409, %v1713
  %v1932 = vadd.f32 %v1410, %v1718
  %v1933 = vadd.f32 %v1411, %v1721
  %v1934 = vadd.f32 %v1412, %v1726
  %v1935 = vadd.f32 %v1413, %v1729
  %v1936 = vadd.f32 %v1414, %v1734
  %v1937 = vadd.f32 %v1415, %v1737
  %v1938 = vadd.f32 %v1416, %v1742
  %v1939 = vadd.f32 %v1417, %v1745
  %v1940 = vadd.f32 %v1418, %v1750
  %v1941 = vadd.f32 %v1419, %v1753
  %v1942 = vadd.f32 %v1420, %v1758
  %v1943 = vadd.f32 %v1421, %v1761
  %v1944 = vadd.f32 %v1422, %v1766
  %v1945 = vadd.f32 %v1423, %v1769
  %v1946 = vadd.f32 %v1424, %v1774
  %v1947 = vadd.f32 %v1425, %v1777
  %v1948 = vadd.f32 %v1426, %v1782
  %v1949 = vadd.f32 %v1427, %v1785
  %v1950 = vadd.f32 %v1428, %v1790
  %v1951 = vadd.f32 %v1429, %v1793
  %v1952 = vadd.f32 %v1430, %v1798
  %v1953 = vadd.f32 %v1431, %v1801
  %v1954 = vadd.f32 %v1432, %v1806
  %v1955 = vadd.f32 %v1433, %v1809
  %v1956 = vadd.f32 %v1434, %v1814
  %v1957 = vadd.f32 %v1435, %v1817
  %v1958 = vadd.f32 %v1436, %v1822
  %v1959 = vadd.f32 %v1437, %v1825
  %v1960 = vadd.f32 %v1438, %v1830
  %v1961 = vadd.f32 %v1439, %v1833
  %v1962 = vadd.f32 %v1440, %v1838
  %v1963 = vadd.f32 %v1441, %v1841
  %v1964 = vadd.f32 %v1442, %v1846
  %v1965 = vadd.f32 %v1443, %v1849
  %v1966 = vadd.f32 %v1444, %v1854
  %v1967 = vadd.f32 %v1445, %v1857
  %v1968 = vadd.f32 %v1446, %v1862
  %v1969 = vadd.f32 %v1447, %v1865
  %v1970 = vadd.f32 %v1448, %v1870
  %v1971 = vadd.f32 %v1449, %v1873
  %v1972 = vadd.f32 %v1450, %v1878
  %v1973 = vadd.f32 %v1451, %v1881
  %v1974 = vadd.f32 %v1452, %v1886
  %v1975 = vadd.f32 %v1453, %v1889
  %v1976 = vadd.f32 %v1454, %v1894
  %v1977 = vadd.f32 %v1455, %v1897
  %v1978 = vadd.f32 %v1456, %v1902
  %v1979 = vadd.f32 %v1457, %v1905
  %v1980 = vadd.f32 %v1458, %v1910
  %v1981 = vadd.f32 %v1459, %v1913
  %v1982 = vadd.f32 %v1460, %v1918
  %v1983 = vadd.f32 %v1461, %v1921
  %v1984 = vld [vmem:[%s2] sm:$0x1]
  %v1986 = vlaneseq
  %v1987 = vshrl.u32 %v1986, 7
  %v1988 = vsub.s32 0, %v1987
  %v1989 = vrot.slane %v1984, %v1988
  %v1991 = vadd.f32 %v1924, %v1989
  %v1992 = vadd.f32 %v1925, %v1989
  %v1993 = vadd.f32 %v1926, %v1989
  %v1994 = vadd.f32 %v1927, %v1989
  %v1995 = vadd.f32 %v1928, %v1989
  %v1996 = vadd.f32 %v1929, %v1989
  %v1997 = vadd.f32 %v1930, %v1989
  %v1998 = vadd.f32 %v1931, %v1989
  %v1999 = vadd.f32 %v1932, %v1989
  %v2000 = vadd.f32 %v1933, %v1989
  %v2001 = vadd.f32 %v1934, %v1989
  %v2002 = vadd.f32 %v1935, %v1989
  %v2003 = vadd.f32 %v1936, %v1989
  %v2004 = vadd.f32 %v1937, %v1989
  %v2005 = vadd.f32 %v1938, %v1989
  %v2006 = vadd.f32 %v1939, %v1989
  %v2007 = vadd.f32 %v1940, %v1989
  %v2008 = vadd.f32 %v1941, %v1989
  %v2009 = vadd.f32 %v1942, %v1989
  %v2010 = vadd.f32 %v1943, %v1989
  %v2011 = vadd.f32 %v1944, %v1989
  %v2012 = vadd.f32 %v1945, %v1989
  %v2013 = vadd.f32 %v1946, %v1989
  %v2014 = vadd.f32 %v1947, %v1989
  %v2015 = vadd.f32 %v1948, %v1989
  %v2016 = vadd.f32 %v1949, %v1989
  %v2017 = vadd.f32 %v1950, %v1989
  %v2018 = vadd.f32 %v1951, %v1989
  %v2019 = vadd.f32 %v1952, %v1989
  %v2020 = vadd.f32 %v1953, %v1989
  %v2021 = vadd.f32 %v1954, %v1989
  %v2022 = vadd.f32 %v1955, %v1989
  %v2023 = vadd.f32 %v1956, %v1989
  %v2024 = vadd.f32 %v1957, %v1989
  %v2025 = vadd.f32 %v1958, %v1989
  %v2026 = vadd.f32 %v1959, %v1989
  %v2027 = vadd.f32 %v1960, %v1989
  %v2028 = vadd.f32 %v1961, %v1989
  %v2029 = vadd.f32 %v1962, %v1989
  %v2030 = vadd.f32 %v1963, %v1989
  %v2031 = vadd.f32 %v1964, %v1989
  %v2032 = vadd.f32 %v1965, %v1989
  %v2033 = vadd.f32 %v1966, %v1989
  %v2034 = vadd.f32 %v1967, %v1989
  %v2035 = vadd.f32 %v1968, %v1989
  %v2036 = vadd.f32 %v1969, %v1989
  %v2037 = vadd.f32 %v1970, %v1989
  %v2038 = vadd.f32 %v1971, %v1989
  %v2039 = vadd.f32 %v1972, %v1989
  %v2040 = vadd.f32 %v1973, %v1989
  %v2041 = vadd.f32 %v1974, %v1989
  %v2042 = vadd.f32 %v1975, %v1989
  %v2043 = vadd.f32 %v1976, %v1989
  %v2044 = vadd.f32 %v1977, %v1989
  %v2045 = vadd.f32 %v1978, %v1989
  %v2046 = vadd.f32 %v1979, %v1989
  %v2047 = vadd.f32 %v1980, %v1989
  %v2048 = vadd.f32 %v1981, %v1989
  %v2049 = vadd.f32 %v1982, %v1989
  %v2050 = vadd.f32 %v1983, %v1989
  %v2051 = vmul.f32 %v1991, 0.01
  %v2052 = vmul.f32 %v1992, 0.01
  %v2053 = vmul.f32 %v1993, 0.01
  %v2054 = vmul.f32 %v1994, 0.01
  %v2055 = vmul.f32 %v1995, 0.01
  %v2056 = vmul.f32 %v1996, 0.01
  %v2057 = vmul.f32 %v1997, 0.01
  %v2058 = vmul.f32 %v1998, 0.01
  %v2059 = vmul.f32 %v1999, 0.01
  %v2060 = vmul.f32 %v2000, 0.01
  %v2061 = vmul.f32 %v2001, 0.01
  %v2062 = vmul.f32 %v2002, 0.01
  %v2063 = vmul.f32 %v2003, 0.01
  %v2064 = vmul.f32 %v2004, 0.01
  %v2065 = vmul.f32 %v2005, 0.01
  %v2066 = vmul.f32 %v2006, 0.01
  %v2067 = vmul.f32 %v2007, 0.01
  %v2068 = vmul.f32 %v2008, 0.01
  %v2069 = vmul.f32 %v2009, 0.01
  %v2070 = vmul.f32 %v2010, 0.01
  %v2071 = vmul.f32 %v2011, 0.01
  %v2072 = vmul.f32 %v2012, 0.01
  %v2073 = vmul.f32 %v2013, 0.01
  %v2074 = vmul.f32 %v2014, 0.01
  %v2075 = vmul.f32 %v2015, 0.01
  %v2076 = vmul.f32 %v2016, 0.01
  %v2077 = vmul.f32 %v2017, 0.01
  %v2078 = vmul.f32 %v2018, 0.01
  %v2079 = vmul.f32 %v2019, 0.01
  %v2080 = vmul.f32 %v2020, 0.01
  %v2081 = vmul.f32 %v2021, 0.01
  %v2082 = vmul.f32 %v2022, 0.01
  %v2083 = vmul.f32 %v2023, 0.01
  %v2084 = vmul.f32 %v2024, 0.01
  %v2085 = vmul.f32 %v2025, 0.01
  %v2086 = vmul.f32 %v2026, 0.01
  %v2087 = vmul.f32 %v2027, 0.01
  %v2088 = vmul.f32 %v2028, 0.01
  %v2089 = vmul.f32 %v2029, 0.01
  %v2090 = vmul.f32 %v2030, 0.01
  %v2091 = vmul.f32 %v2031, 0.01
  %v2092 = vmul.f32 %v2032, 0.01
  %v2093 = vmul.f32 %v2033, 0.01
  %v2094 = vmul.f32 %v2034, 0.01
  %v2095 = vmul.f32 %v2035, 0.01
  %v2096 = vmul.f32 %v2036, 0.01
  %v2097 = vmul.f32 %v2037, 0.01
  %v2098 = vmul.f32 %v2038, 0.01
  %v2099 = vmul.f32 %v2039, 0.01
  %v2100 = vmul.f32 %v2040, 0.01
  %v2101 = vmul.f32 %v2041, 0.01
  %v2102 = vmul.f32 %v2042, 0.01
  %v2103 = vmul.f32 %v2043, 0.01
  %v2104 = vmul.f32 %v2044, 0.01
  %v2105 = vmul.f32 %v2045, 0.01
  %v2106 = vmul.f32 %v2046, 0.01
  %v2107 = vmul.f32 %v2047, 0.01
  %v2108 = vmul.f32 %v2048, 0.01
  %v2109 = vmul.f32 %v2049, 0.01
  %v2110 = vmul.f32 %v2050, 0.01
  %v2111 = vmax.f32 %v1991, %v2051
  %v2112 = vmax.f32 %v1992, %v2052
  %v2113 = vmax.f32 %v1993, %v2053
  %v2114 = vmax.f32 %v1994, %v2054
  %v2115 = vmax.f32 %v1995, %v2055
  %v2116 = vmax.f32 %v1996, %v2056
  %v2117 = vmax.f32 %v1997, %v2057
  %v2118 = vmax.f32 %v1998, %v2058
  %v2119 = vmax.f32 %v1999, %v2059
  %v2120 = vmax.f32 %v2000, %v2060
  %v2121 = vmax.f32 %v2001, %v2061
  %v2122 = vmax.f32 %v2002, %v2062
  %v2123 = vmax.f32 %v2003, %v2063
  %v2124 = vmax.f32 %v2004, %v2064
  %v2125 = vmax.f32 %v2005, %v2065
  %v2126 = vmax.f32 %v2006, %v2066
  %v2127 = vmax.f32 %v2007, %v2067
  %v2128 = vmax.f32 %v2008, %v2068
  %v2129 = vmax.f32 %v2009, %v2069
  %v2130 = vmax.f32 %v2010, %v2070
  %v2131 = vmax.f32 %v2011, %v2071
  %v2132 = vmax.f32 %v2012, %v2072
  %v2133 = vmax.f32 %v2013, %v2073
  %v2134 = vmax.f32 %v2014, %v2074
  %v2135 = vmax.f32 %v2015, %v2075
  %v2136 = vmax.f32 %v2016, %v2076
  %v2137 = vmax.f32 %v2017, %v2077
  %v2138 = vmax.f32 %v2018, %v2078
  %v2139 = vmax.f32 %v2019, %v2079
  %v2140 = vmax.f32 %v2020, %v2080
  %v2141 = vmax.f32 %v2021, %v2081
  %v2142 = vmax.f32 %v2022, %v2082
  %v2143 = vmax.f32 %v2023, %v2083
  %v2144 = vmax.f32 %v2024, %v2084
  %v2145 = vmax.f32 %v2025, %v2085
  %v2146 = vmax.f32 %v2026, %v2086
  %v2147 = vmax.f32 %v2027, %v2087
  %v2148 = vmax.f32 %v2028, %v2088
  %v2149 = vmax.f32 %v2029, %v2089
  %v2150 = vmax.f32 %v2030, %v2090
  %v2151 = vmax.f32 %v2031, %v2091
  %v2152 = vmax.f32 %v2032, %v2092
  %v2153 = vmax.f32 %v2033, %v2093
  %v2154 = vmax.f32 %v2034, %v2094
  %v2155 = vmax.f32 %v2035, %v2095
  %v2156 = vmax.f32 %v2036, %v2096
  %v2157 = vmax.f32 %v2037, %v2097
  %v2158 = vmax.f32 %v2038, %v2098
  %v2159 = vmax.f32 %v2039, %v2099
  %v2160 = vmax.f32 %v2040, %v2100
  %v2161 = vmax.f32 %v2041, %v2101
  %v2162 = vmax.f32 %v2042, %v2102
  %v2163 = vmax.f32 %v2043, %v2103
  %v2164 = vmax.f32 %v2044, %v2104
  %v2165 = vmax.f32 %v2045, %v2105
  %v2166 = vmax.f32 %v2046, %v2106
  %v2167 = vmax.f32 %v2047, %v2107
  %v2168 = vmax.f32 %v2048, %v2108
  %v2169 = vmax.f32 %v2049, %v2109
  %v2170 = vmax.f32 %v2050, %v2110
  %vm2171 = vcmask 261120
  %2172 = vst.msk [vmem:[%s3] sm:$0xff] %vm2171, %v2111
  %2173 = vst.msk [vmem:[%s3 + $0x8] sm:$0xff] %vm2171, %v2112
  %2174 = vst.msk [vmem:[%s3 + $0x10] sm:$0xff] %vm2171, %v2113
  %2175 = vst.msk [vmem:[%s3 + $0x18] sm:$0xff] %vm2171, %v2114
  %2176 = vst.msk [vmem:[%s3 + $0x20] sm:$0xff] %vm2171, %v2115
  %2177 = vst.msk [vmem:[%s3 + $0x28] sm:$0xff] %vm2171, %v2116
  %2178 = vst.msk [vmem:[%s3 + $0x30] sm:$0xff] %vm2171, %v2117
  %2179 = vst.msk [vmem:[%s3 + $0x38] sm:$0xff] %vm2171, %v2118
  %2180 = vst.msk [vmem:[%s3 + $0x40] sm:$0xff] %vm2171, %v2119
  %2181 = vst.msk [vmem:[%s3 + $0x48] sm:$0xff] %vm2171, %v2120
  %2182 = vst.msk [vmem:[%s3 + $0x50] sm:$0xff] %vm2171, %v2121
  %2183 = vst.msk [vmem:[%s3 + $0x58] sm:$0xff] %vm2171, %v2122
  %2184 = vst.msk [vmem:[%s3 + $0x60] sm:$0xff] %vm2171, %v2123
  %2185 = vst.msk [vmem:[%s3 + $0x68] sm:$0xff] %vm2171, %v2124
  %2186 = vst.msk [vmem:[%s3 + $0x70] sm:$0xff] %vm2171, %v2125
  %2187 = vst.msk [vmem:[%s3 + $0x78] sm:$0xff] %vm2171, %v2126
  %2188 = vst.msk [vmem:[%s3 + $0x80] sm:$0xff] %vm2171, %v2127
  %2189 = vst.msk [vmem:[%s3 + $0x88] sm:$0xff] %vm2171, %v2128
  %2190 = vst.msk [vmem:[%s3 + $0x90] sm:$0xff] %vm2171, %v2129
  %2191 = vst.msk [vmem:[%s3 + $0x98] sm:$0xff] %vm2171, %v2130
  %2192 = vst.msk [vmem:[%s3 + $0xa0] sm:$0xff] %vm2171, %v2131
  %2193 = vst.msk [vmem:[%s3 + $0xa8] sm:$0xff] %vm2171, %v2132
  %2194 = vst.msk [vmem:[%s3 + $0xb0] sm:$0xff] %vm2171, %v2133
  %2195 = vst.msk [vmem:[%s3 + $0xb8] sm:$0xff] %vm2171, %v2134
  %2196 = vst.msk [vmem:[%s3 + $0xc0] sm:$0xff] %vm2171, %v2135
  %2197 = vst.msk [vmem:[%s3 + $0xc8] sm:$0xff] %vm2171, %v2136
  %2198 = vst.msk [vmem:[%s3 + $0xd0] sm:$0xff] %vm2171, %v2137
  %2199 = vst.msk [vmem:[%s3 + $0xd8] sm:$0xff] %vm2171, %v2138
  %2200 = vst.msk [vmem:[%s3 + $0xe0] sm:$0xff] %vm2171, %v2139
  %2201 = vst.msk [vmem:[%s3 + $0xe8] sm:$0xff] %vm2171, %v2140
  %2202 = vst.msk [vmem:[%s3 + $0xf0] sm:$0xff] %vm2171, %v2141
  %2203 = vst.msk [vmem:[%s3 + $0xf8] sm:$0xff] %vm2171, %v2142
  %2204 = vst.msk [vmem:[%s3 + $0x100] sm:$0xff] %vm2171, %v2143
  %2205 = vst.msk [vmem:[%s3 + $0x108] sm:$0xff] %vm2171, %v2144
  %2206 = vst.msk [vmem:[%s3 + $0x110] sm:$0xff] %vm2171, %v2145
  %2207 = vst.msk [vmem:[%s3 + $0x118] sm:$0xff] %vm2171, %v2146
  %2208 = vst.msk [vmem:[%s3 + $0x120] sm:$0xff] %vm2171, %v2147
  %2209 = vst.msk [vmem:[%s3 + $0x128] sm:$0xff] %vm2171, %v2148
  %2210 = vst.msk [vmem:[%s3 + $0x130] sm:$0xff] %vm2171, %v2149
  %2211 = vst.msk [vmem:[%s3 + $0x138] sm:$0xff] %vm2171, %v2150
  %2212 = vst.msk [vmem:[%s3 + $0x140] sm:$0xff] %vm2171, %v2151
  %2213 = vst.msk [vmem:[%s3 + $0x148] sm:$0xff] %vm2171, %v2152
  %2214 = vst.msk [vmem:[%s3 + $0x150] sm:$0xff] %vm2171, %v2153
  %2215 = vst.msk [vmem:[%s3 + $0x158] sm:$0xff] %vm2171, %v2154
  %2216 = vst.msk [vmem:[%s3 + $0x160] sm:$0xff] %vm2171, %v2155
  %2217 = vst.msk [vmem:[%s3 + $0x168] sm:$0xff] %vm2171, %v2156
  %2218 = vst.msk [vmem:[%s3 + $0x170] sm:$0xff] %vm2171, %v2157
  %2219 = vst.msk [vmem:[%s3 + $0x178] sm:$0xff] %vm2171, %v2158
  %2220 = vst.msk [vmem:[%s3 + $0x180] sm:$0xff] %vm2171, %v2159
  %2221 = vst.msk [vmem:[%s3 + $0x188] sm:$0xff] %vm2171, %v2160
  %2222 = vst.msk [vmem:[%s3 + $0x190] sm:$0xff] %vm2171, %v2161
  %2223 = vst.msk [vmem:[%s3 + $0x198] sm:$0xff] %vm2171, %v2162
  %2224 = vst.msk [vmem:[%s3 + $0x1a0] sm:$0xff] %vm2171, %v2163
  %2225 = vst.msk [vmem:[%s3 + $0x1a8] sm:$0xff] %vm2171, %v2164
  %2226 = vst.msk [vmem:[%s3 + $0x1b0] sm:$0xff] %vm2171, %v2165
  %2227 = vst.msk [vmem:[%s3 + $0x1b8] sm:$0xff] %vm2171, %v2166
  %2228 = vst.msk [vmem:[%s3 + $0x1c0] sm:$0xff] %vm2171, %v2167
  %2229 = vst.msk [vmem:[%s3 + $0x1c8] sm:$0xff] %vm2171, %v2168
  %2230 = vst.msk [vmem:[%s3 + $0x1d0] sm:$0xff] %vm2171, %v2169
  %2231 = vst.msk [vmem:[%s3 + $0x1d8] sm:$0xff] %vm2171, %v2170
  // Predicated region
  $region14: #{policy_forward.4} parent=0 // pred_check
    _
  $region15: #{policy_forward.4} parent=0 // pred_check_branch
    %2233 = sbr.rel (0) target = $region17
  $region16: #{policy_forward.4} parent=0 // pred_region
    _
  $region17: #{policy_forward.4} parent=0 // pred_fallthru
    _
  // Predicated region
  $region18: #{policy_forward.4} parent=0 // pred_check
    _
  $region19: #{policy_forward.4} parent=0 // pred_check_branch
    %2235 = sbr.rel (0) target = $region21
  $region20: #{policy_forward.4} parent=0 // pred_region
    _
  $region21: #{policy_forward.4} parent=0 // pred_fallthru
    _

// kernel: policy_forward.5
$region0: #{policy_forward.5}
  #allocation0 [shape = 'u32[]', space=smem, size = 0x4, offset = 0x4, fixed_abs, tag = 'smem constant byte address 0x4 - core index']
  #allocation1 [shape = 'u32[144,128]{1,0:T(1,128)}', space=vmem, size = 0x12000, scoped, tag = 'internal scratch']
  #allocation2 [shape = 'f32[2,6,16,64]{3,2,1,0:T(8,128)}', space=vmem, size = 0x18000, scoped, tag = 'scratch operand']
  %s0 = inlined_call_operand.vmem [shape: f32[2,8,9,128], index: 0, kind: input, shape index: {}]
  %s1 = inlined_call_operand.vmem [shape: bf16[4,128,64], index: 1, kind: input, shape index: {}]
  %s2 = inlined_call_operand.vmem [shape: f32[1,64], index: 2, kind: input, shape index: {}]
  %s3 = inlined_call_operand.vmem [shape: bf16[9,64,64], index: 3, kind: input, shape index: {}]
  %s4 = inlined_call_operand.vmem [shape: f32[1,64], index: 4, kind: input, shape index: {}]
  %s5 = inlined_call_operand.vmem [shape: f32[2,8], index: 5, kind: input, shape index: {}]
  %s6 = inlined_call_operand.vmem [shape: f32[8,16], index: 6, kind: input, shape index: {}]
  %s7 = inlined_call_operand.vmem [shape: f32[1,16], index: 7, kind: input, shape index: {}]
  %s8 = inlined_call_operand.vmem [shape: f32[16,4], index: 8, kind: input, shape index: {}]
  %s9 = inlined_call_operand.vmem [shape: f32[1,4], index: 9, kind: input, shape index: {}]
  %s10 = inlined_call_operand.vmem [shape: f32[16,64,2], index: 10, kind: input, shape index: {}]
  %s11 = inlined_call_operand.vmem [shape: f32[4,2], index: 11, kind: input, shape index: {}]
  %s12 = inlined_call_operand.vmem [shape: f32[1,2], index: 12, kind: input, shape index: {}]
  %s13 = inlined_call_operand.vmem [shape: f32[1,2], index: 13, kind: input, shape index: {}]
  %s14 = inlined_call_operand.hbm [shape: f32[2,2], index: 14, kind: output, shape index: {0}]
  %s15 = inlined_call_operand.hbm [shape: f32[2,2], index: 15, kind: output, shape index: {1}]
  %16 = xla_tuple %s14, %s15
  %s17 = sld [smem:[#allocation0]]
  $region74: #{policy_forward.5} parent=0
    _
  %s19 = ssub.s32 1, %s17
  %s20 = scalar_select 0, %s19, %s17
  $region1: #{policy_forward.5} parent=0
    #allocation3 [shape = 'u8[1024]{0}', space=vmem, size = 0x400, scoped, tag = 'output window, operand 0, single buffered']
    #allocation4 [shape = 's32[1]{0}', space=sflag, size = 0x4, scoped, tag = 'scoped memory for policy_forward.5']
    #allocation5 [shape = 'u8[1024]{0}', space=vmem, size = 0x400, scoped, tag = 'output window, operand 1, single buffered']
    #allocation6 [shape = 's32[1]{0}', space=sflag, size = 0x4, scoped, tag = 'scoped memory for policy_forward.5']
    %21 = vsyncpa [#allocation4], 0
    %22 = vsyncpa [#allocation6], 0
    // Predicated region
    $region2: #{policy_forward.5} parent=1 // pred_check
      _
    $region3: #{policy_forward.5} parent=1 // pred_check_branch
      %24 = sbr.rel (0) target = $region5
    $region4: #{policy_forward.5} parent=1 // pred_region
      _
    $region5: #{policy_forward.5} parent=1 // pred_fallthru
      _
    // Predicated region
    $region6: #{policy_forward.5} parent=1 // pred_check
      _
    $region7: #{policy_forward.5} parent=1 // pred_check_branch
      %26 = sbr.rel (0) target = $region9
    $region8: #{policy_forward.5} parent=1 // pred_region
      _
    $region9: #{policy_forward.5} parent=1 // pred_fallthru
      _
    // Predicated region
    $region10: #{policy_forward.5} parent=1 // pred_check
      _
    $region11: #{policy_forward.5} parent=1 // pred_check_branch
      %28 = sbr.rel (0) target = $region13
    $region12: #{policy_forward.5} parent=1 // pred_region
      _
    $region13: #{policy_forward.5} parent=1 // pred_fallthru
      _
    // Predicated region
    $region14: #{policy_forward.5} parent=1 // pred_check
      _
    $region15: #{policy_forward.5} parent=1 // pred_check_branch
      %30 = sbr.rel (0) target = $region17
    $region16: #{policy_forward.5} parent=1 // pred_region
      _
    $region17: #{policy_forward.5} parent=1 // pred_fallthru
      _
    // Predicated region
    $region18: #{policy_forward.5} parent=1 // pred_check
      _
    $region19: #{policy_forward.5} parent=1 // pred_check_branch
      %32 = sbr.rel (0) target = $region21
    $region20: #{policy_forward.5} parent=1 // pred_region
      _
    $region21: #{policy_forward.5} parent=1 // pred_fallthru
      _
    // Predicated region
    $region22: #{policy_forward.5} parent=1 // pred_check
      _
    $region23: #{policy_forward.5} parent=1 // pred_check_branch
      %34 = sbr.rel (0) target = $region25
    $region24: #{policy_forward.5} parent=1 // pred_region
      _
    $region25: #{policy_forward.5} parent=1 // pred_fallthru
      _
    // Predicated region
    $region26: #{policy_forward.5} parent=1 // pred_check
      _
    $region27: #{policy_forward.5} parent=1 // pred_check_branch
      %36 = sbr.rel (0) target = $region29
    $region28: #{policy_forward.5} parent=1 // pred_region
      _
    $region29: #{policy_forward.5} parent=1 // pred_fallthru
      _
    // Predicated region
    $region30: #{policy_forward.5} parent=1 // pred_check
      _
    $region31: #{policy_forward.5} parent=1 // pred_check_branch
      %38 = sbr.rel (0) target = $region33
    $region32: #{policy_forward.5} parent=1 // pred_region
      _
    $region33: #{policy_forward.5} parent=1 // pred_fallthru
      _
    // Predicated region
    $region34: #{policy_forward.5} parent=1 // pred_check
      _
    $region35: #{policy_forward.5} parent=1 // pred_check_branch
      %40 = sbr.rel (0) target = $region37
    $region36: #{policy_forward.5} parent=1 // pred_region
      _
    $region37: #{policy_forward.5} parent=1 // pred_fallthru
      _
    // Predicated region
    $region38: #{policy_forward.5} parent=1 // pred_check
      _
    $region39: #{policy_forward.5} parent=1 // pred_check_branch
      %42 = sbr.rel (0) target = $region41
    $region40: #{policy_forward.5} parent=1 // pred_region
      _
    $region41: #{policy_forward.5} parent=1 // pred_fallthru
      _
    // Predicated region
    $region42: #{policy_forward.5} parent=1 // pred_check
      _
    $region43: #{policy_forward.5} parent=1 // pred_check_branch
      %44 = sbr.rel (0) target = $region45
    $region44: #{policy_forward.5} parent=1 // pred_region
      _
    $region45: #{policy_forward.5} parent=1 // pred_fallthru
      _
    // Predicated region
    $region46: #{policy_forward.5} parent=1 // pred_check
      _
    $region47: #{policy_forward.5} parent=1 // pred_check_branch
      %46 = sbr.rel (0) target = $region49
    $region48: #{policy_forward.5} parent=1 // pred_region
      _
    $region49: #{policy_forward.5} parent=1 // pred_fallthru
      _
    // Predicated region
    $region50: #{policy_forward.5} parent=1 // pred_check
      _
    $region51: #{policy_forward.5} parent=1 // pred_check_branch
      %48 = sbr.rel (0) target = $region53
    $region52: #{policy_forward.5} parent=1 // pred_region
      _
    $region53: #{policy_forward.5} parent=1 // pred_fallthru
      _
    // Predicated region
    $region54: #{policy_forward.5} parent=1 // pred_check
      _
    $region55: #{policy_forward.5} parent=1 // pred_check_branch
      %50 = sbr.rel (0) target = $region57
    $region56: #{policy_forward.5} parent=1 // pred_region
      _
    $region57: #{policy_forward.5} parent=1 // pred_fallthru
      _
    %v52 = vld [vmem:[%s0] sm:$0xff]
    %v53 = vld [vmem:[%s0 + $0x10] sm:$0xff]
    %v54 = vld [vmem:[%s0 + $0x20] sm:$0xff]
    %v55 = vld [vmem:[%s0 + $0x30] sm:$0xff]
    %v56 = vld [vmem:[%s0 + $0x40] sm:$0xff]
    %v57 = vld [vmem:[%s0 + $0x50] sm:$0xff]
    %v58 = vld [vmem:[%s0 + $0x80] sm:$0xff]
    %v59 = vld [vmem:[%s0 + $0x90] sm:$0xff]
    %v60 = vld [vmem:[%s0 + $0xa0] sm:$0xff]
    %v61 = vld [vmem:[%s0 + $0xb0] sm:$0xff]
    %v62 = vld [vmem:[%s0 + $0xc0] sm:$0xff]
    %v63 = vld [vmem:[%s0 + $0xd0] sm:$0xff]
    %v64 = vpack.c.bf16 %v53, %v52
    %v65 = vpack.c.bf16 %v55, %v54
    %v66 = vpack.c.bf16 %v57, %v56
    %v67 = vpack.c.bf16 %v59, %v58
    %v68 = vpack.c.bf16 %v61, %v60
    %v69 = vpack.c.bf16 %v63, %v62
    %v70 = vld [vmem:[%s1] sm:$0xf]
    %v71 = vld [vmem:[%s1 + $0x4] sm:$0xf]
    %v72 = vld [vmem:[%s1 + $0x8] sm:$0xf]
    %v73 = vld [vmem:[%s1 + $0xc] sm:$0xf]
    %v74 = vld [vmem:[%s1 + $0x10] sm:$0xf]
    %v75 = vld [vmem:[%s1 + $0x14] sm:$0xf]
    %v76 = vld [vmem:[%s1 + $0x18] sm:$0xf]
    %v77 = vld [vmem:[%s1 + $0x1c] sm:$0xf]
    %v78 = vld [vmem:[%s1 + $0x20] sm:$0xf]
    %v79 = vld [vmem:[%s1 + $0x24] sm:$0xf]
    %v80 = vld [vmem:[%s1 + $0x28] sm:$0xf]
    %v81 = vld [vmem:[%s1 + $0x2c] sm:$0xf]
    %v82 = vld [vmem:[%s1 + $0x30] sm:$0xf]
    %v83 = vld [vmem:[%s1 + $0x34] sm:$0xf]
    %v84 = vld [vmem:[%s1 + $0x38] sm:$0xf]
    %v85 = vld [vmem:[%s1 + $0x3c] sm:$0xf]
    %v86 = vld [vmem:[%s0 + $0x1] sm:$0xff]
    %v87 = vld [vmem:[%s0 + $0x11] sm:$0xff]
    %v88 = vld [vmem:[%s0 + $0x21] sm:$0xff]
    %v89 = vld [vmem:[%s0 + $0x31] sm:$0xff]
    %v90 = vld [vmem:[%s0 + $0x41] sm:$0xff]
    %v91 = vld [vmem:[%s0 + $0x51] sm:$0xff]
    %v92 = vld [vmem:[%s0 + $0x81] sm:$0xff]
    %v93 = vld [vmem:[%s0 + $0x91] sm:$0xff]
    %v94 = vld [vmem:[%s0 + $0xa1] sm:$0xff]
    %v95 = vld [vmem:[%s0 + $0xb1] sm:$0xff]
    %v96 = vld [vmem:[%s0 + $0xc1] sm:$0xff]
    %v97 = vld [vmem:[%s0 + $0xd1] sm:$0xff]
    %v98 = vpack.c.bf16 %v87, %v86
    %v99 = vpack.c.bf16 %v89, %v88
    %v100 = vpack.c.bf16 %v91, %v90
    %v101 = vpack.c.bf16 %v93, %v92
    %v102 = vpack.c.bf16 %v95, %v94
    %v103 = vpack.c.bf16 %v97, %v96
    %s104 = scalar_lea.vmem %s1, 64
    %v105 = vld [vmem:[%s104] sm:$0xf]
    %v106 = vld [vmem:[%s104 + $0x4] sm:$0xf]
    %v107 = vld [vmem:[%s104 + $0x8] sm:$0xf]
    %v108 = vld [vmem:[%s104 + $0xc] sm:$0xf]
    %v109 = vld [vmem:[%s104 + $0x10] sm:$0xf]
    %v110 = vld [vmem:[%s104 + $0x14] sm:$0xf]
    %v111 = vld [vmem:[%s104 + $0x18] sm:$0xf]
    %v112 = vld [vmem:[%s104 + $0x1c] sm:$0xf]
    %v113 = vld [vmem:[%s104 + $0x20] sm:$0xf]
    %v114 = vld [vmem:[%s104 + $0x24] sm:$0xf]
    %v115 = vld [vmem:[%s104 + $0x28] sm:$0xf]
    %v116 = vld [vmem:[%s104 + $0x2c] sm:$0xf]
    %v117 = vld [vmem:[%s104 + $0x30] sm:$0xf]
    %v118 = vld [vmem:[%s104 + $0x34] sm:$0xf]
    %v119 = vld [vmem:[%s104 + $0x38] sm:$0xf]
    %v120 = vld [vmem:[%s104 + $0x3c] sm:$0xf]
    %v137 = vunpack.c.l.b16 %v105
    %v138 = vunpack.c.l.b16 %v106
    %v139 = vunpack.c.l.b16 %v107
    %v140 = vunpack.c.l.b16 %v108
    %v141 = vunpack.c.l.b16 %v109
    %v142 = vunpack.c.l.b16 %v110
    %v143 = vunpack.c.l.b16 %v111
    %v144 = vunpack.c.l.b16 %v112
    %v145 = vunpack.c.l.b16 %v113
    %v146 = vunpack.c.l.b16 %v114
    %v147 = vunpack.c.l.b16 %v115
    %v148 = vunpack.c.l.b16 %v116
    %v149 = vunpack.c.l.b16 %v117
    %v150 = vunpack.c.l.b16 %v118
    %v151 = vunpack.c.l.b16 %v119
    %v152 = vunpack.c.l.b16 %v120
    %v153 = vpack.c.b16 %v138, %v137
    %v154 = vpack.c.b16 %v140, %v139
    %v155 = vpack.c.b16 %v142, %v141
    %v156 = vpack.c.b16 %v144, %v143
    %v157 = vpack.c.b16 %v146, %v145
    %v158 = vpack.c.b16 %v148, %v147
    %v159 = vpack.c.b16 %v150, %v149
    %v160 = vpack.c.b16 %v152, %v151
    %169 = vmatprep.subr.bf16.mxu0 0
    %170 = vmatpush1.bf16.msra.mxu0 %v153
    %171 = vmatprep.subr.bf16.mxu0 0
    %172 = vmatpush1.bf16.msra.mxu0 %v154
    %173 = vmatprep.subr.bf16.mxu0 0
    %174 = vmatpush1.bf16.msra.mxu0 %v155
    %175 = vmatprep.subr.bf16.mxu0 0
    %176 = vmatpush1.bf16.msra.mxu0 %v156
    %177 = vmatprep.subr.bf16.mxu0 0
    %178 = vmatpush1.bf16.msra.mxu0 %v157
    %179 = vmatprep.subr.bf16.mxu0 0
    %180 = vmatpush1.bf16.msra.mxu0 %v158
    %181 = vmatprep.subr.bf16.mxu0 0
    %182 = vmatpush1.bf16.msra.mxu0 %v159
    %183 = vmatprep.subr.bf16.mxu0 0
    %184 = vmatpush1.bf16.msra.mxu0 %v160
    %185 = vmatprep.subr.bf16.mxu0 0
    %186 = vmatpush1.bf16.msra.mxu0 0
    %187 = vmatprep.subr.bf16.mxu0 0
    %188 = vmatpush1.bf16.msra.mxu0 0
    %189 = vmatprep.subr.bf16.mxu0 0
    %190 = vmatpush1.bf16.msra.mxu0 0
    %191 = vmatprep.subr.bf16.mxu0 0
    %192 = vmatpush1.bf16.msra.mxu0 0
    %193 = vmatprep.subr.bf16.mxu0 0
    %194 = vmatpush1.bf16.msra.mxu0 0
    %195 = vmatprep.subr.bf16.mxu0 0
    %196 = vmatpush1.bf16.msra.mxu0 0
    %197 = vmatprep.subr.bf16.mxu0 0
    %198 = vmatpush1.bf16.msra.mxu0 0
    %199 = vmatprep.subr.bf16.mxu0 0
    %200 = vmatpush1.bf16.msra.mxu0 0
    %201 = vmatprep.mubr.bf16.mxu0 0
    %202 = vmatmul.mubr.bf16.gmra.mrb[0].mxu0 %v98
    %v203 = vpop.f32.mrb[0].mxu0
    %v204 = vadd.f32 0.0, %v203
    %v205 = vpop.f32.mrb[0].mxu0
    %v206 = vpop.f32.mrb[0].mxu0
    %v207 = vadd.f32 0.0, %v206
    %v208 = vpop.f32.mrb[0].mxu0
    %209 = vmatprep.mubr.bf16.mxu0 0
    %210 = vmatmul.mubr.bf16.gmra.mrb[0].mxu0 %v99
    %v211 = vpop.f32.mrb[0].mxu0
    %v212 = vadd.f32 0.0, %v211
    %v213 = vpop.f32.mrb[0].mxu0
    %v214 = vpop.f32.mrb[0].mxu0
    %v215 = vadd.f32 0.0, %v214
    %v216 = vpop.f32.mrb[0].mxu0
    %217 = vmatprep.mubr.bf16.mxu0 0
    %218 = vmatmul.mubr.bf16.gmra.mrb[0].mxu0 %v100
    %v219 = vpop.f32.mrb[0].mxu0
    %v220 = vadd.f32 0.0, %v219
    %v221 = vpop.f32.mrb[0].mxu0
    %v222 = vpop.f32.mrb[0].mxu0
    %v223 = vadd.f32 0.0, %v222
    %v224 = vpop.f32.mrb[0].mxu0
    %225 = vmatprep.mubr.bf16.mxu0 0
    %226 = vmatmul.mubr.bf16.gmra.mrb[0].mxu0 %v101
    %v227 = vpop.f32.mrb[0].mxu0
    %v228 = vadd.f32 0.0, %v227
    %v229 = vpop.f32.mrb[0].mxu0
    %v230 = vpop.f32.mrb[0].mxu0
    %v231 = vadd.f32 0.0, %v230
    %v232 = vpop.f32.mrb[0].mxu0
    %233 = vmatprep.mubr.bf16.mxu0 0
    %234 = vmatmul.mubr.bf16.gmra.mrb[0].mxu0 %v102
    %v235 = vpop.f32.mrb[0].mxu0
    %v236 = vadd.f32 0.0, %v235
    %v237 = vpop.f32.mrb[0].mxu0
    %v238 = vpop.f32.mrb[0].mxu0
    %v239 = vadd.f32 0.0, %v238
    %v240 = vpop.f32.mrb[0].mxu0
    %241 = vmatprep.mubr.bf16.mxu0 0
    %242 = vmatmul.mubr.bf16.gmra.mrb[0].mxu0 %v103
    %v243 = vpop.f32.mrb[0].mxu0
    %v244 = vadd.f32 0.0, %v243
    %v245 = vpop.f32.mrb[0].mxu0
    %v246 = vpop.f32.mrb[0].mxu0
    %v247 = vadd.f32 0.0, %v246
    %v248 = vpop.f32.mrb[0].mxu0
    %249 = vdwg.mxu0
    %v266 = vunpack.c.l.b16 %v70
    %v267 = vunpack.c.l.b16 %v71
    %v268 = vunpack.c.l.b16 %v72
    %v269 = vunpack.c.l.b16 %v73
    %v270 = vunpack.c.l.b16 %v74
    %v271 = vunpack.c.l.b16 %v75
    %v272 = vunpack.c.l.b16 %v76
    %v273 = vunpack.c.l.b16 %v77
    %v274 = vunpack.c.l.b16 %v78
    %v275 = vunpack.c.l.b16 %v79
    %v276 = vunpack.c.l.b16 %v80
    %v277 = vunpack.c.l.b16 %v81
    %v278 = vunpack.c.l.b16 %v82
    %v279 = vunpack.c.l.b16 %v83
    %v280 = vunpack.c.l.b16 %v84
    %v281 = vunpack.c.l.b16 %v85
    %v282 = vpack.c.b16 %v267, %v266
    %v283 = vpack.c.b16 %v269, %v268
    %v284 = vpack.c.b16 %v271, %v270
    %v285 = vpack.c.b16 %v273, %v272
    %v286 = vpack.c.b16 %v275, %v274
    %v287 = vpack.c.b16 %v277, %v276
    %v288 = vpack.c.b16 %v279, %v278
    %v289 = vpack.c.b16 %v281, %v280
    %298 = vmatprep.subr.bf16.mxu0 0
    %299 = vmatpush1.bf16.msra.mxu0 %v282
    %300 = vmatprep.subr.bf16.mxu0 0
    %301 = vmatpush1.bf16.msra.mxu0 %v283
    %302 = vmatprep.subr.bf16.mxu0 0
    %303 = vmatpush1.bf16.msra.mxu0 %v284
    %304 = vmatprep.subr.bf16.mxu0 0
    %305 = vmatpush1.bf16.msra.mxu0 %v285
    %306 = vmatprep.subr.bf16.mxu0 0
    %307 = vmatpush1.bf16.msra.mxu0 %v286
    %308 = vmatprep.subr.bf16.mxu0 0
    %309 = vmatpush1.bf16.msra.mxu0 %v287
    %310 = vmatprep.subr.bf16.mxu0 0
    %311 = vmatpush1.bf16.msra.mxu0 %v288
    %312 = vmatprep.subr.bf16.mxu0 0
    %313 = vmatpush1.bf16.msra.mxu0 %v289
    %314 = vmatprep.subr.bf16.mxu0 0
    %315 = vmatpush1.bf16.msra.mxu0 0
    %316 = vmatprep.subr.bf16.mxu0 0
    %317 = vmatpush1.bf16.msra.mxu0 0
    %318 = vmatprep.subr.bf16.mxu0 0
    %319 = vmatpush1.bf16.msra.mxu0 0
    %320 = vmatprep.subr.bf16.mxu0 0
    %321 = vmatpush1.bf16.msra.mxu0 0
    %322 = vmatprep.subr.bf16.mxu0 0
    %323 = vmatpush1.bf16.msra.mxu0 0
    %324 = vmatprep.subr.bf16.mxu0 0
    %325 = vmatpush1.bf16.msra.mxu0 0
    %326 = vmatprep.subr.bf16.mxu0 0
    %327 = vmatpush1.bf16.msra.mxu0 0
    %328 = vmatprep.subr.bf16.mxu0 0
    %329 = vmatpush1.bf16.msra.mxu0 0
    %330 = vmatprep.mubr.bf16.mxu0 0
    %331 = vmatmul.mubr.bf16.gmra.mrb[0].mxu0 %v64
    %v332 = vpop.f32.mrb[0].mxu0
    %v333 = vadd.f32 %v204, %v332
    %v334 = vpop.f32.mrb[0].mxu0
    %v335 = vpop.f32.mrb[0].mxu0
    %v336 = vadd.f32 %v207, %v335
    %v337 = vpop.f32.mrb[0].mxu0
    %338 = vmatprep.mubr.bf16.mxu0 0
    %339 = vmatmul.mubr.bf16.gmra.mrb[0].mxu0 %v65
    %v340 = vpop.f32.mrb[0].mxu0
    %v341 = vadd.f32 %v212, %v340
    %v342 = vpop.f32.mrb[0].mxu0
    %v343 = vpop.f32.mrb[0].mxu0
    %v344 = vadd.f32 %v215, %v343
    %v345 = vpop.f32.mrb[0].mxu0
    %346 = vmatprep.mubr.bf16.mxu0 0
    %347 = vmatmul.mubr.bf16.gmra.mrb[0].mxu0 %v66
    %v348 = vpop.f32.mrb[0].mxu0
    %v349 = vadd.f32 %v220, %v348
    %v350 = vpop.f32.mrb[0].mxu0
    %v351 = vpop.f32.mrb[0].mxu0
    %v352 = vadd.f32 %v223, %v351
    %v353 = vpop.f32.mrb[0].mxu0
    %354 = vmatprep.mubr.bf16.mxu0 0
    %355 = vmatmul.mubr.bf16.gmra.mrb[0].mxu0 %v67
    %v356 = vpop.f32.mrb[0].mxu0
    %v357 = vadd.f32 %v228, %v356
    %v358 = vpop.f32.mrb[0].mxu0
    %v359 = vpop.f32.mrb[0].mxu0
    %v360 = vadd.f32 %v231, %v359
    %v361 = vpop.f32.mrb[0].mxu0
    %362 = vmatprep.mubr.bf16.mxu0 0
    %363 = vmatmul.mubr.bf16.gmra.mrb[0].mxu0 %v68
    %v364 = vpop.f32.mrb[0].mxu0
    %v365 = vadd.f32 %v236, %v364
    %v366 = vpop.f32.mrb[0].mxu0
    %v367 = vpop.f32.mrb[0].mxu0
    %v368 = vadd.f32 %v239, %v367
    %v369 = vpop.f32.mrb[0].mxu0
    %370 = vmatprep.mubr.bf16.mxu0 0
    %371 = vmatmul.mubr.bf16.gmra.mrb[0].mxu0 %v69
    %v372 = vpop.f32.mrb[0].mxu0
    %v373 = vadd.f32 %v244, %v372
    %v374 = vpop.f32.mrb[0].mxu0
    %v375 = vpop.f32.mrb[0].mxu0
    %v376 = vadd.f32 %v247, %v375
    %v377 = vpop.f32.mrb[0].mxu0
    %378 = vdwg.mxu0
    %s379 = scalar_lea.vmem %s0, 16
    %v380 = vld [vmem:[%s379] sm:$0xff]
    %v381 = vld [vmem:[%s379 + $0x10] sm:$0xff]
    %v382 = vld [vmem:[%s379 + $0x20] sm:$0xff]
    %v383 = vld [vmem:[%s379 + $0x30] sm:$0xff]
    %v384 = vld [vmem:[%s379 + $0x40] sm:$0xff]
    %v385 = vld [vmem:[%s379 + $0x50] sm:$0xff]
    %v386 = vld [vmem:[%s379 + $0x80] sm:$0xff]
    %v387 = vld [vmem:[%s379 + $0x90] sm:$0xff]
    %v388 = vld [vmem:[%s379 + $0xa0] sm:$0xff]
    %v389 = vld [vmem:[%s379 + $0xb0] sm:$0xff]
    %v390 = vld [vmem:[%s379 + $0xc0] sm:$0xff]
    %v391 = vld [vmem:[%s379 + $0xd0] sm:$0xff]
    %v392 = vpack.c.bf16 %v381, %v380
    %v393 = vpack.c.bf16 %v383, %v382
    %v394 = vpack.c.bf16 %v385, %v384
    %v395 = vpack.c.bf16 %v387, %v386
    %v396 = vpack.c.bf16 %v389, %v388
    %v397 = vpack.c.bf16 %v391, %v390
    %s398 = scalar_lea.vmem %s1, 128
    %v399 = vld [vmem:[%s398] sm:$0xf]
    %v400 = vld [vmem:[%s398 + $0x4] sm:$0xf]
    %v401 = vld [vmem:[%s398 + $0x8] sm:$0xf]
    %v402 = vld [vmem:[%s398 + $0xc] sm:$0xf]
    %v403 = vld [vmem:[%s398 + $0x10] sm:$0xf]
    %v404 = vld [vmem:[%s398 + $0x14] sm:$0xf]
    %v405 = vld [vmem:[%s398 + $0x18] sm:$0xf]
    %v406 = vld [vmem:[%s398 + $0x1c] sm:$0xf]
    %v407 = vld [vmem:[%s398 + $0x20] sm:$0xf]
    %v408 = vld [vmem:[%s398 + $0x24] sm:$0xf]
    %v409 = vld [vmem:[%s398 + $0x28] sm:$0xf]
    %v410 = vld [vmem:[%s398 + $0x2c] sm:$0xf]
    %v411 = vld [vmem:[%s398 + $0x30] sm:$0xf]
    %v412 = vld [vmem:[%s398 + $0x34] sm:$0xf]
    %v413 = vld [vmem:[%s398 + $0x38] sm:$0xf]
    %v414 = vld [vmem:[%s398 + $0x3c] sm:$0xf]
    %v431 = vunpack.c.l.b16 %v399
    %v432 = vunpack.c.l.b16 %v400
    %v433 = vunpack.c.l.b16 %v401
    %v434 = vunpack.c.l.b16 %v402
    %v435 = vunpack.c.l.b16 %v403
    %v436 = vunpack.c.l.b16 %v404
    %v437 = vunpack.c.l.b16 %v405
    %v438 = vunpack.c.l.b16 %v406
    %v439 = vunpack.c.l.b16 %v407
    %v440 = vunpack.c.l.b16 %v408
    %v441 = vunpack.c.l.b16 %v409
    %v442 = vunpack.c.l.b16 %v410
    %v443 = vunpack.c.l.b16 %v411
    %v444 = vunpack.c.l.b16 %v412
    %v445 = vunpack.c.l.b16 %v413
    %v446 = vunpack.c.l.b16 %v414
    %v447 = vpack.c.b16 %v432, %v431
    %v448 = vpack.c.b16 %v434, %v433
    %v449 = vpack.c.b16 %v436, %v435
    %v450 = vpack.c.b16 %v438, %v437
    %v451 = vpack.c.b16 %v440, %v439
    %v452 = vpack.c.b16 %v442, %v441
    %v453 = vpack.c.b16 %v444, %v443
    %v454 = vpack.c.b16 %v446, %v445
    %463 = vmatprep.subr.bf16.mxu0 0
    %464 = vmatpush1.bf16.msra.mxu0 %v447
    %465 = vmatprep.subr.bf16.mxu0 0
    %466 = vmatpush1.bf16.msra.mxu0 %v448
    %467 = vmatprep.subr.bf16.mxu0 0
    %468 = vmatpush1.bf16.msra.mxu0 %v449
    %469 = vmatprep.subr.bf16.mxu0 0
    %470 = vmatpush1.bf16.msra.mxu0 %v450
    %471 = vmatprep.subr.bf16.mxu0 0
    %472 = vmatpush1.bf16.msra.mxu0 %v451
    %473 = vmatprep.subr.bf16.mxu0 0
    %474 = vmatpush1.bf16.msra.mxu0 %v452
    %475 = vmatprep.subr.bf16.mxu0 0
    %476 = vmatpush1.bf16.msra.mxu0 %v453
    %477 = vmatprep.subr.bf16.mxu0 0
    %478 = vmatpush1.bf16.msra.mxu0 %v454
    %479 = vmatprep.subr.bf16.mxu0 0
    %480 = vmatpush1.bf16.msra.mxu0 0
    %481 = vmatprep.subr.bf16.mxu0 0
    %482 = vmatpush1.bf16.msra.mxu0 0
    %483 = vmatprep.subr.bf16.mxu0 0
    %484 = vmatpush1.bf16.msra.mxu0 0
    %485 = vmatprep.subr.bf16.mxu0 0
    %486 = vmatpush1.bf16.msra.mxu0 0
    %487 = vmatprep.subr.bf16.mxu0 0
    %488 = vmatpush1.bf16.msra.mxu0 0
    %489 = vmatprep.subr.bf16.mxu0 0
    %490 = vmatpush1.bf16.msra.mxu0 0
    %491 = vmatprep.subr.bf16.mxu0 0
    %492 = vmatpush1.bf16.msra.mxu0 0
    %493 = vmatprep.subr.bf16.mxu0 0
    %494 = vmatpush1.bf16.msra.mxu0 0
    %495 = vmatprep.mubr.bf16.mxu0 0
    %496 = vmatmul.mubr.bf16.gmra.mrb[0].mxu0 %v392
    %v497 = vpop.f32.mrb[0].mxu0
    %v498 = vadd.f32 0.0, %v497
    %v499 = vpop.f32.mrb[0].mxu0
    %v500 = vpop.f32.mrb[0].mxu0
    %v501 = vadd.f32 0.0, %v500
    %v502 = vpop.f32.mrb[0].mxu0
    %503 = vmatprep.mubr.bf16.mxu0 0
    %504 = vmatmul.mubr.bf16.gmra.mrb[0].mxu0 %v393
    %v505 = vpop.f32.mrb[0].mxu0
    %v506 = vadd.f32 0.0, %v505
    %v507 = vpop.f32.mrb[0].mxu0
    %v508 = vpop.f32.mrb[0].mxu0
    %v509 = vadd.f32 0.0, %v508
    %v510 = vpop.f32.mrb[0].mxu0
    %511 = vmatprep.mubr.bf16.mxu0 0
    %512 = vmatmul.mubr.bf16.gmra.mrb[0].mxu0 %v394
    %v513 = vpop.f32.mrb[0].mxu0
    %v514 = vadd.f32 0.0, %v513
    %v515 = vpop.f32.mrb[0].mxu0
    %v516 = vpop.f32.mrb[0].mxu0
    %v517 = vadd.f32 0.0, %v516
    %v518 = vpop.f32.mrb[0].mxu0
    %519 = vmatprep.mubr.bf16.mxu0 0
    %520 = vmatmul.mubr.bf16.gmra.mrb[0].mxu0 %v395
    %v521 = vpop.f32.mrb[0].mxu0
    %v522 = vadd.f32 0.0, %v521
    %v523 = vpop.f32.mrb[0].mxu0
    %v524 = vpop.f32.mrb[0].mxu0
    %v525 = vadd.f32 0.0, %v524
    %v526 = vpop.f32.mrb[0].mxu0
    %527 = vmatprep.mubr.bf16.mxu0 0
    %528 = vmatmul.mubr.bf16.gmra.mrb[0].mxu0 %v396
    %v529 = vpop.f32.mrb[0].mxu0
    %v530 = vadd.f32 0.0, %v529
    %v531 = vpop.f32.mrb[0].mxu0
    %v532 = vpop.f32.mrb[0].mxu0
    %v533 = vadd.f32 0.0, %v532
    %v534 = vpop.f32.mrb[0].mxu0
    %535 = vmatprep.mubr.bf16.mxu0 0
    %536 = vmatmul.mubr.bf16.gmra.mrb[0].mxu0 %v397
    %v537 = vpop.f32.mrb[0].mxu0
    %v538 = vadd.f32 0.0, %v537
    %v539 = vpop.f32.mrb[0].mxu0
    %v540 = vpop.f32.mrb[0].mxu0
    %v541 = vadd.f32 0.0, %v540
    %v542 = vpop.f32.mrb[0].mxu0
    %543 = vdwg.mxu0
    %v544 = vadd.f32 %v333, %v498
    %v545 = vadd.f32 %v336, %v501
    %v546 = vadd.f32 %v341, %v506
    %v547 = vadd.f32 %v344, %v509
    %v548 = vadd.f32 %v349, %v514
    %v549 = vadd.f32 %v352, %v517
    %v550 = vadd.f32 %v357, %v522
    %v551 = vadd.f32 %v360, %v525
    %v552 = vadd.f32 %v365, %v530
    %v553 = vadd.f32 %v368, %v533
    %v554 = vadd.f32 %v373, %v538
    %v555 = vadd.f32 %v376, %v541
    %v556 = vld [vmem:[%s379 + $0x1] sm:$0xff]
    %v557 = vld [vmem:[%s379 + $0x11] sm:$0xff]
    %v558 = vld [vmem:[%s379 + $0x21] sm:$0xff]
    %v559 = vld [vmem:[%s379 + $0x31] sm:$0xff]
    %v560 = vld [vmem:[%s379 + $0x41] sm:$0xff]
    %v561 = vld [vmem:[%s379 + $0x51] sm:$0xff]
    %v562 = vld [vmem:[%s379 + $0x81] sm:$0xff]
    %v563 = vld [vmem:[%s379 + $0x91] sm:$0xff]
    %v564 = vld [vmem:[%s379 + $0xa1] sm:$0xff]
    %v565 = vld [vmem:[%s379 + $0xb1] sm:$0xff]
    %v566 = vld [vmem:[%s379 + $0xc1] sm:$0xff]
    %v567 = vld [vmem:[%s379 + $0xd1] sm:$0xff]
    %v568 = vpack.c.bf16 %v557, %v556
    %v569 = vpack.c.bf16 %v559, %v558
    %v570 = vpack.c.bf16 %v561, %v560
    %v571 = vpack.c.bf16 %v563, %v562
    %v572 = vpack.c.bf16 %v565, %v564
    %v573 = vpack.c.bf16 %v567, %v566
    %s574 = scalar_lea.vmem %s1, 192
    %v575 = vld [vmem:[%s574] sm:$0xf]
    %v576 = vld [vmem:[%s574 + $0x4] sm:$0xf]
    %v577 = vld [vmem:[%s574 + $0x8] sm:$0xf]
    %v578 = vld [vmem:[%s574 + $0xc] sm:$0xf]
    %v579 = vld [vmem:[%s574 + $0x10] sm:$0xf]
    %v580 = vld [vmem:[%s574 + $0x14] sm:$0xf]
    %v581 = vld [vmem:[%s574 + $0x18] sm:$0xf]
    %v582 = vld [vmem:[%s574 + $0x1c] sm:$0xf]
    %v583 = vld [vmem:[%s574 + $0x20] sm:$0xf]
    %v584 = vld [vmem:[%s574 + $0x24] sm:$0xf]
    %v585 = vld [vmem:[%s574 + $0x28] sm:$0xf]
    %v586 = vld [vmem:[%s574 + $0x2c] sm:$0xf]
    %v587 = vld [vmem:[%s574 + $0x30] sm:$0xf]
    %v588 = vld [vmem:[%s574 + $0x34] sm:$0xf]
    %v589 = vld [vmem:[%s574 + $0x38] sm:$0xf]
    %v590 = vld [vmem:[%s574 + $0x3c] sm:$0xf]
    %v607 = vunpack.c.l.b16 %v575
    %v608 = vunpack.c.l.b16 %v576
    %v609 = vunpack.c.l.b16 %v577
    %v610 = vunpack.c.l.b16 %v578
    %v611 = vunpack.c.l.b16 %v579
    %v612 = vunpack.c.l.b16 %v580
    %v613 = vunpack.c.l.b16 %v581
    %v614 = vunpack.c.l.b16 %v582
    %v615 = vunpack.c.l.b16 %v583
    %v616 = vunpack.c.l.b16 %v584
    %v617 = vunpack.c.l.b16 %v585
    %v618 = vunpack.c.l.b16 %v586
    %v619 = vunpack.c.l.b16 %v587
    %v620 = vunpack.c.l.b16 %v588
    %v621 = vunpack.c.l.b16 %v589
    %v622 = vunpack.c.l.b16 %v590
    %v623 = vpack.c.b16 %v608, %v607
    %v624 = vpack.c.b16 %v610, %v609
    %v625 = vpack.c.b16 %v612, %v611
    %v626 = vpack.c.b16 %v614, %v613
    %v627 = vpack.c.b16 %v616, %v615
    %v628 = vpack.c.b16 %v618, %v617
    %v629 = vpack.c.b16 %v620, %v619
    %v630 = vpack.c.b16 %v622, %v621
    %639 = vmatprep.subr.bf16.mxu0 0
    %640 = vmatpush1.bf16.msra.mxu0 %v623
    %641 = vmatprep.subr.bf16.mxu0 0
    %642 = vmatpush1.bf16.msra.mxu0 %v624
    %643 = vmatprep.subr.bf16.mxu0 0
    %644 = vmatpush1.bf16.msra.mxu0 %v625
    %645 = vmatprep.subr.bf16.mxu0 0
    %646 = vmatpush1.bf16.msra.mxu0 %v626
    %647 = vmatprep.subr.bf16.mxu0 0
    %648 = vmatpush1.bf16.msra.mxu0 %v627
    %649 = vmatprep.subr.bf16.mxu0 0
    %650 = vmatpush1.bf16.msra.mxu0 %v628
    %651 = vmatprep.subr.bf16.mxu0 0
    %652 = vmatpush1.bf16.msra.mxu0 %v629
    %653 = vmatprep.subr.bf16.mxu0 0
    %654 = vmatpush1.bf16.msra.mxu0 %v630
    %655 = vmatprep.subr.bf16.mxu0 0
    %656 = vmatpush1.bf16.msra.mxu0 0
    %657 = vmatprep.subr.bf16.mxu0 0
    %658 = vmatpush1.bf16.msra.mxu0 0
    %659 = vmatprep.subr.bf16.mxu0 0
    %660 = vmatpush1.bf16.msra.mxu0 0
    %661 = vmatprep.subr.bf16.mxu0 0
    %662 = vmatpush1.bf16.msra.mxu0 0
    %663 = vmatprep.subr.bf16.mxu0 0
    %664 = vmatpush1.bf16.msra.mxu0 0
    %665 = vmatprep.subr.bf16.mxu0 0
    %666 = vmatpush1.bf16.msra.mxu0 0
    %667 = vmatprep.subr.bf16.mxu0 0
    %668 = vmatpush1.bf16.msra.mxu0 0
    %669 = vmatprep.subr.bf16.mxu0 0
    %670 = vmatpush1.bf16.msra.mxu0 0
    %671 = vmatprep.mubr.bf16.mxu0 0
    %672 = vmatmul.mubr.bf16.gmra.mrb[0].mxu0 %v568
    %v673 = vpop.f32.mrb[0].mxu0
    %v674 = vadd.f32 0.0, %v673
    %v675 = vpop.f32.mrb[0].mxu0
    %v676 = vpop.f32.mrb[0].mxu0
    %v677 = vadd.f32 0.0, %v676
    %v678 = vpop.f32.mrb[0].mxu0
    %679 = vmatprep.mubr.bf16.mxu0 0
    %680 = vmatmul.mubr.bf16.gmra.mrb[0].mxu0 %v569
    %v681 = vpop.f32.mrb[0].mxu0
    %v682 = vadd.f32 0.0, %v681
    %v683 = vpop.f32.mrb[0].mxu0
    %v684 = vpop.f32.mrb[0].mxu0
    %v685 = vadd.f32 0.0, %v684
    %v686 = vpop.f32.mrb[0].mxu0
    %687 = vmatprep.mubr.bf16.mxu0 0
    %688 = vmatmul.mubr.bf16.gmra.mrb[0].mxu0 %v570
    %v689 = vpop.f32.mrb[0].mxu0
    %v690 = vadd.f32 0.0, %v689
    %v691 = vpop.f32.mrb[0].mxu0
    %v692 = vpop.f32.mrb[0].mxu0
    %v693 = vadd.f32 0.0, %v692
    %v694 = vpop.f32.mrb[0].mxu0
    %695 = vmatprep.mubr.bf16.mxu0 0
    %696 = vmatmul.mubr.bf16.gmra.mrb[0].mxu0 %v571
    %v697 = vpop.f32.mrb[0].mxu0
    %v698 = vadd.f32 0.0, %v697
    %v699 = vpop.f32.mrb[0].mxu0
    %v700 = vpop.f32.mrb[0].mxu0
    %v701 = vadd.f32 0.0, %v700
    %v702 = vpop.f32.mrb[0].mxu0
    %703 = vmatprep.mubr.bf16.mxu0 0
    %704 = vmatmul.mubr.bf16.gmra.mrb[0].mxu0 %v572
    %v705 = vpop.f32.mrb[0].mxu0
    %v706 = vadd.f32 0.0, %v705
    %v707 = vpop.f32.mrb[0].mxu0
    %v708 = vpop.f32.mrb[0].mxu0
    %v709 = vadd.f32 0.0, %v708
    %v710 = vpop.f32.mrb[0].mxu0
    %711 = vmatprep.mubr.bf16.mxu0 0
    %712 = vmatmul.mubr.bf16.gmra.mrb[0].mxu0 %v573
    %v713 = vpop.f32.mrb[0].mxu0
    %v714 = vadd.f32 0.0, %v713
    %v715 = vpop.f32.mrb[0].mxu0
    %v716 = vpop.f32.mrb[0].mxu0
    %v717 = vadd.f32 0.0, %v716
    %v718 = vpop.f32.mrb[0].mxu0
    %719 = vdwg.mxu0
    %v720 = vadd.f32 %v544, %v674
    %v721 = vadd.f32 %v545, %v677
    %v722 = vadd.f32 %v546, %v682
    %v723 = vadd.f32 %v547, %v685
    %v724 = vadd.f32 %v548, %v690
    %v725 = vadd.f32 %v549, %v693
    %v726 = vadd.f32 %v550, %v698
    %v727 = vadd.f32 %v551, %v701
    %v728 = vadd.f32 %v552, %v706
    %v729 = vadd.f32 %v553, %v709
    %v730 = vadd.f32 %v554, %v714
    %v731 = vadd.f32 %v555, %v717
    %v732 = vld [vmem:[%s2] sm:$0x1]
    %v734 = vlaneseq
    %v735 = vshrl.u32 %v734, 7
    %v736 = vsub.s32 0, %v735
    %v737 = vrot.slane %v732, %v736
    %v739 = vadd.f32 %v720, %v737
    %v740 = vadd.f32 %v721, %v737
    %v741 = vadd.f32 %v722, %v737
    %v742 = vadd.f32 %v723, %v737
    %v743 = vadd.f32 %v724, %v737
    %v744 = vadd.f32 %v725, %v737
    %v745 = vadd.f32 %v726, %v737
    %v746 = vadd.f32 %v727, %v737
    %v747 = vadd.f32 %v728, %v737
    %v748 = vadd.f32 %v729, %v737
    %v749 = vadd.f32 %v730, %v737
    %v750 = vadd.f32 %v731, %v737
    %v751 = vmul.f32 %v739, 0.01
    %v752 = vmul.f32 %v740, 0.01
    %v753 = vmul.f32 %v741, 0.01
    %v754 = vmul.f32 %v742, 0.01
    %v755 = vmul.f32 %v743, 0.01
    %v756 = vmul.f32 %v744, 0.01
    %v757 = vmul.f32 %v745, 0.01
    %v758 = vmul.f32 %v746, 0.01
    %v759 = vmul.f32 %v747, 0.01
    %v760 = vmul.f32 %v748, 0.01
    %v761 = vmul.f32 %v749, 0.01
    %v762 = vmul.f32 %v750, 0.01
    %v763 = vmax.f32 %v739, %v751
    %v764 = vmax.f32 %v740, %v752
    %v765 = vmax.f32 %v741, %v753
    %v766 = vmax.f32 %v742, %v754
    %v767 = vmax.f32 %v743, %v755
    %v768 = vmax.f32 %v744, %v756
    %v769 = vmax.f32 %v745, %v757
    %v770 = vmax.f32 %v746, %v758
    %v771 = vmax.f32 %v747, %v759
    %v772 = vmax.f32 %v748, %v760
    %v773 = vmax.f32 %v749, %v761
    %v774 = vmax.f32 %v750, %v762
    %vm775 = vcmask 523264
    %776 = vst.msk [vmem:[#allocation2 + $0x8] sm:$0xff] %vm775, 0.0
    %777 = vst.msk [vmem:[#allocation2 + $0x18] sm:$0xff] %vm775, 0.0
    %778 = vst.msk [vmem:[#allocation2 + $0x28] sm:$0xff] %vm775, 0.0
    %779 = vst.msk [vmem:[#allocation2 + $0x38] sm:$0xff] %vm775, 0.0
    %780 = vst.msk [vmem:[#allocation2 + $0x48] sm:$0xff] %vm775, 0.0
    %781 = vst.msk [vmem:[#allocation2 + $0x58] sm:$0xff] %vm775, 0.0
    %782 = vst.msk [vmem:[#allocation2 + $0x68] sm:$0xff] %vm775, 0.0
    %783 = vst.msk [vmem:[#allocation2 + $0x78] sm:$0xff] %vm775, 0.0
    %784 = vst.msk [vmem:[#allocation2 + $0x88] sm:$0xff] %vm775, 0.0
    %785 = vst.msk [vmem:[#allocation2 + $0x98] sm:$0xff] %vm775, 0.0
    %786 = vst.msk [vmem:[#allocation2 + $0xa8] sm:$0xff] %vm775, 0.0
    %787 = vst.msk [vmem:[#allocation2 + $0xb8] sm:$0xff] %vm775, 0.0
    %788 = vst.msk [vmem:[#allocation2] sm:$0xff] %vm775, %v763
    %789 = vst.msk [vmem:[#allocation2 + $0x10] sm:$0xff] %vm775, %v764
    %790 = vst.msk [vmem:[#allocation2 + $0x20] sm:$0xff] %vm775, %v765
    %791 = vst.msk [vmem:[#allocation2 + $0x30] sm:$0xff] %vm775, %v766
    %792 = vst.msk [vmem:[#allocation2 + $0x40] sm:$0xff] %vm775, %v767
    %793 = vst.msk [vmem:[#allocation2 + $0x50] sm:$0xff] %vm775, %v768
    %794 = vst.msk [vmem:[#allocation2 + $0x60] sm:$0xff] %vm775, %v769
    %795 = vst.msk [vmem:[#allocation2 + $0x70] sm:$0xff] %vm775, %v770
    %796 = vst.msk [vmem:[#allocation2 + $0x80] sm:$0xff] %vm775, %v771
    %797 = vst.msk [vmem:[#allocation2 + $0x90] sm:$0xff] %vm775, %v772
    %798 = vst.msk [vmem:[#allocation2 + $0xa0] sm:$0xff] %vm775, %v773
    %799 = vst.msk [vmem:[#allocation2 + $0xb0] sm:$0xff] %vm775, %v774
    %v800 = vld [vmem:[#allocation2] sm:$0xff]
    %v801 = vld [vmem:[#allocation2 + $0x10] sm:$0xff]
    %v802 = vld [vmem:[#allocation2 + $0x20] sm:$0xff]
    %v803 = vld [vmem:[#allocation2 + $0x30] sm:$0xff]
    %v804 = vld [vmem:[#allocation2 + $0x60] sm:$0xff]
    %v805 = vld [vmem:[#allocation2 + $0x70] sm:$0xff]
    %v806 = vld [vmem:[#allocation2 + $0x80] sm:$0xff]
    %v807 = vld [vmem:[#allocation2 + $0x90] sm:$0xff]
    %v808 = vpack.c.bf16 %v801, %v800
    %v809 = vpack.c.bf16 %v803, %v802
    %v810 = vpack.c.bf16 %v805, %v804
    %v811 = vpack.c.bf16 %v807, %v806
    %v812 = vld [vmem:[%s3] sm:$0xf]
    %v813 = vld [vmem:[%s3 + $0x4] sm:$0xf]
    %v814 = vld [vmem:[%s3 + $0x8] sm:$0xf]
    %v815 = vld [vmem:[%s3 + $0xc] sm:$0xf]
    %v816 = vld [vmem:[%s3 + $0x10] sm:$0xf]
    %v817 = vld [vmem:[%s3 + $0x14] sm:$0xf]
    %v818 = vld [vmem:[%s3 + $0x18] sm:$0xf]
    %v819 = vld [vmem:[%s3 + $0x1c] sm:$0xf]
    %v820 = vld [vmem:[#allocation2 + $0x1] sm:$0xff]
    %v821 = vld [vmem:[#allocation2 + $0x11] sm:$0xff]
    %v822 = vld [vmem:[#allocation2 + $0x21] sm:$0xff]
    %v823 = vld [vmem:[#allocation2 + $0x31] sm:$0xff]
    %v824 = vld [vmem:[#allocation2 + $0x61] sm:$0xff]
    %v825 = vld [vmem:[#allocation2 + $0x71] sm:$0xff]
    %v826 = vld [vmem:[#allocation2 + $0x81] sm:$0xff]
    %v827 = vld [vmem:[#allocation2 + $0x91] sm:$0xff]
    %v828 = vpack.c.bf16 %v821, %v820
    %v829 = vpack.c.bf16 %v823, %v822
    %v830 = vpack.c.bf16 %v825, %v824
    %v831 = vpack.c.bf16 %v827, %v826
    %s832 = scalar_lea.vmem %s3, 32
    %v833 = vld [vmem:[%s832] sm:$0xf]
    %v834 = vld [vmem:[%s832 + $0x4] sm:$0xf]
    %v835 = vld [vmem:[%s832 + $0x8] sm:$0xf]
    %v836 = vld [vmem:[%s832 + $0xc] sm:$0xf]
    %v837 = vld [vmem:[%s832 + $0x10] sm:$0xf]
    %v838 = vld [vmem:[%s832 + $0x14] sm:$0xf]
    %v839 = vld [vmem:[%s832 + $0x18] sm:$0xf]
    %v840 = vld [vmem:[%s832 + $0x1c] sm:$0xf]
    %v849 = vunpack.c.l.b16 %v833
    %v850 = vunpack.c.l.b16 %v834
    %v851 = vunpack.c.l.b16 %v835
    %v852 = vunpack.c.l.b16 %v836
    %v853 = vunpack.c.l.b16 %v837
    %v854 = vunpack.c.l.b16 %v838
    %v855 = vunpack.c.l.b16 %v839
    %v856 = vunpack.c.l.b16 %v840
    %v857 = vpack.c.b16 %v850, %v849
    %v858 = vpack.c.b16 %v852, %v851
    %v859 = vpack.c.b16 %v854, %v853
    %v860 = vpack.c.b16 %v856, %v855
    %v866 = vsel %vm775, %v828, 0
    %v869 = vsel %vm775, %v829, 0
    %v872 = vsel %vm775, %v830, 0
    %v875 = vsel %vm775, %v831, 0
    %877 = vmatprep.subr.bf16.mxu0 0
    %878 = vmatpush1.bf16.msra.mxu0 %v857
    %879 = vmatprep.subr.bf16.mxu0 0
    %880 = vmatpush1.bf16.msra.mxu0 %v858
    %881 = vmatprep.subr.bf16.mxu0 0
    %882 = vmatpush1.bf16.msra.mxu0 %v859
    %883 = vmatprep.subr.bf16.mxu0 0
    %884 = vmatpush1.bf16.msra.mxu0 %v860
    %885 = vmatprep.subr.bf16.mxu0 0
    %886 = vmatpush1.bf16.msra.mxu0 0
    %887 = vmatprep.subr.bf16.mxu0 0
    %888 = vmatpush1.bf16.msra.mxu0 0
    %889 = vmatprep.subr.bf16.mxu0 0
    %890 = vmatpush1.bf16.msra.mxu0 0
    %891 = vmatprep.subr.bf16.mxu0 0
    %892 = vmatpush1.bf16.msra.mxu0 0
    %893 = vmatprep.subr.bf16.mxu0 0
    %894 = vmatpush1.bf16.msra.mxu0 0
    %895 = vmatprep.subr.bf16.mxu0 0
    %896 = vmatpush1.bf16.msra.mxu0 0
    %897 = vmatprep.subr.bf16.mxu0 0
    %898 = vmatpush1.bf16.msra.mxu0 0
    %899 = vmatprep.subr.bf16.mxu0 0
    %900 = vmatpush1.bf16.msra.mxu0 0
    %901 = vmatprep.subr.bf16.mxu0 0
    %902 = vmatpush1.bf16.msra.mxu0 0
    %903 = vmatprep.subr.bf16.mxu0 0
    %904 = vmatpush1.bf16.msra.mxu0 0
    %905 = vmatprep.subr.bf16.mxu0 0
    %906 = vmatpush1.bf16.msra.mxu0 0
    %907 = vmatprep.subr.bf16.mxu0 0
    %908 = vmatpush1.bf16.msra.mxu0 0
    %909 = vmatprep.mubr.bf16.mxu0 0
    %910 = vmatmul.mubr.bf16.gmra.mrb[0].mxu0 %v866
    %v911 = vpop.f32.mrb[0].mxu0
    %v912 = vadd.f32 0.0, %v911
    %v913 = vpop.f32.mrb[0].mxu0
    %v914 = vpop.f32.mrb[0].mxu0
    %v915 = vadd.f32 0.0, %v914
    %v916 = vpop.f32.mrb[0].mxu0
    %917 = vmatprep.mubr.bf16.mxu0 0
    %918 = vmatmul.mubr.bf16.gmra.mrb[0].mxu0 %v869
    %v919 = vpop.f32.mrb[0].mxu0
    %v920 = vadd.f32 0.0, %v919
    %v921 = vpop.f32.mrb[0].mxu0
    %v922 = vpop.f32.mrb[0].mxu0
    %v923 = vadd.f32 0.0, %v922
    %v924 = vpop.f32.mrb[0].mxu0
    %925 = vmatprep.mubr.bf16.mxu0 0
    %926 = vmatmul.mubr.bf16.gmra.mrb[0].mxu0 %v872
    %v927 = vpop.f32.mrb[0].mxu0
    %v928 = vadd.f32 0.0, %v927
    %v929 = vpop.f32.mrb[0].mxu0
    %v930 = vpop.f32.mrb[0].mxu0
    %v931 = vadd.f32 0.0, %v930
    %v932 = vpop.f32.mrb[0].mxu0
    %933 = vmatprep.mubr.bf16.mxu0 0
    %934 = vmatmul.mubr.bf16.gmra.mrb[0].mxu0 %v875
    %v935 = vpop.f32.mrb[0].mxu0
    %v936 = vadd.f32 0.0, %v935
    %v937 = vpop.f32.mrb[0].mxu0
    %v938 = vpop.f32.mrb[0].mxu0
    %v939 = vadd.f32 0.0, %v938
    %v940 = vpop.f32.mrb[0].mxu0
    %941 = vdwg.mxu0
    %v950 = vunpack.c.l.b16 %v812
    %v951 = vunpack.c.l.b16 %v813
    %v952 = vunpack.c.l.b16 %v814
    %v953 = vunpack.c.l.b16 %v815
    %v954 = vunpack.c.l.b16 %v816
    %v955 = vunpack.c.l.b16 %v817
    %v956 = vunpack.c.l.b16 %v818
    %v957 = vunpack.c.l.b16 %v819
    %v958 = vpack.c.b16 %v951, %v950
    %v959 = vpack.c.b16 %v953, %v952
    %v960 = vpack.c.b16 %v955, %v954
    %v961 = vpack.c.b16 %v957, %v956
    %v967 = vsel %vm775, %v808, 0
    %v970 = vsel %vm775, %v809, 0
    %v973 = vsel %vm775, %v810, 0
    %v976 = vsel %vm775, %v811, 0
    %978 = vmatprep.subr.bf16.mxu0 0
    %979 = vmatpush1.bf16.msra.mxu0 %v958
    %980 = vmatprep.subr.bf16.mxu0 0
    %981 = vmatpush1.bf16.msra.mxu0 %v959
    %982 = vmatprep.subr.bf16.mxu0 0
    %983 = vmatpush1.bf16.msra.mxu0 %v960
    %984 = vmatprep.subr.bf16.mxu0 0
    %985 = vmatpush1.bf16.msra.mxu0 %v961
    %986 = vmatprep.subr.bf16.mxu0 0
    %987 = vmatpush1.bf16.msra.mxu0 0
    %988 = vmatprep.subr.bf16.mxu0 0
    %989 = vmatpush1.bf16.msra.mxu0 0
    %990 = vmatprep.subr.bf16.mxu0 0
    %991 = vmatpush1.bf16.msra.mxu0 0
    %992 = vmatprep.subr.bf16.mxu0 0
    %993 = vmatpush1.bf16.msra.mxu0 0
    %994 = vmatprep.subr.bf16.mxu0 0
    %995 = vmatpush1.bf16.msra.mxu0 0
    %996 = vmatprep.subr.bf16.mxu0 0
    %997 = vmatpush1.bf16.msra.mxu0 0
    %998 = vmatprep.subr.bf16.mxu0 0
    %999 = vmatpush1.bf16.msra.mxu0 0
    %1000 = vmatprep.subr.bf16.mxu0 0
    %1001 = vmatpush1.bf16.msra.mxu0 0
    %1002 = vmatprep.subr.bf16.mxu0 0
    %1003 = vmatpush1.bf16.msra.mxu0 0
    %1004 = vmatprep.subr.bf16.mxu0 0
    %1005 = vmatpush1.bf16.msra.mxu0 0
    %1006 = vmatprep.subr.bf16.mxu0 0
    %1007 = vmatpush1.bf16.msra.mxu0 0
    %1008 = vmatprep.subr.bf16.mxu0 0
    %1009 = vmatpush1.bf16.msra.mxu0 0
    %1010 = vmatprep.mubr.bf16.mxu0 0
    %1011 = vmatmul.mubr.bf16.gmra.mrb[0].mxu0 %v967
    %v1012 = vpop.f32.mrb[0].mxu0
    %v1013 = vadd.f32 %v912, %v1012
    %v1014 = vpop.f32.mrb[0].mxu0
    %v1015 = vpop.f32.mrb[0].mxu0
    %v1016 = vadd.f32 %v915, %v1015
    %v1017 = vpop.f32.mrb[0].mxu0
    %1018 = vmatprep.mubr.bf16.mxu0 0
    %1019 = vmatmul.mubr.bf16.gmra.mrb[0].mxu0 %v970
    %v1020 = vpop.f32.mrb[0].mxu0
    %v1021 = vadd.f32 %v920, %v1020
    %v1022 = vpop.f32.mrb[0].mxu0
    %v1023 = vpop.f32.mrb[0].mxu0
    %v1024 = vadd.f32 %v923, %v1023
    %v1025 = vpop.f32.mrb[0].mxu0
    %1026 = vmatprep.mubr.bf16.mxu0 0
    %1027 = vmatmul.mubr.bf16.gmra.mrb[0].mxu0 %v973
    %v1028 = vpop.f32.mrb[0].mxu0
    %v1029 = vadd.f32 %v928, %v1028
    %v1030 = vpop.f32.mrb[0].mxu0
    %v1031 = vpop.f32.mrb[0].mxu0
    %v1032 = vadd.f32 %v931, %v1031
    %v1033 = vpop.f32.mrb[0].mxu0
    %1034 = vmatprep.mubr.bf16.mxu0 0
    %1035 = vmatmul.mubr.bf16.gmra.mrb[0].mxu0 %v976
    %v1036 = vpop.f32.mrb[0].mxu0
    %v1037 = vadd.f32 %v936, %v1036
    %v1038 = vpop.f32.mrb[0].mxu0
    %v1039 = vpop.f32.mrb[0].mxu0
    %v1040 = vadd.f32 %v939, %v1039
    %v1041 = vpop.f32.mrb[0].mxu0
    %1042 = vdwg.mxu0
    %v1043 = vld [vmem:[#allocation2 + $0x2] sm:$0xff]
    %v1044 = vld [vmem:[#allocation2 + $0x12] sm:$0xff]
    %v1045 = vld [vmem:[#allocation2 + $0x22] sm:$0xff]
    %v1046 = vld [vmem:[#allocation2 + $0x32] sm:$0xff]
    %v1047 = vld [vmem:[#allocation2 + $0x62] sm:$0xff]
    %v1048 = vld [vmem:[#allocation2 + $0x72] sm:$0xff]
    %v1049 = vld [vmem:[#allocation2 + $0x82] sm:$0xff]
    %v1050 = vld [vmem:[#allocation2 + $0x92] sm:$0xff]
    %v1051 = vpack.c.bf16 %v1044, %v1043
    %v1052 = vpack.c.bf16 %v1046, %v1045
    %v1053 = vpack.c.bf16 %v1048, %v1047
    %v1054 = vpack.c.bf16 %v1050, %v1049
    %s1055 = scalar_lea.vmem %s3, 64
    %v1056 = vld [vmem:[%s1055] sm:$0xf]
    %v1057 = vld [vmem:[%s1055 + $0x4] sm:$0xf]
    %v1058 = vld [vmem:[%s1055 + $0x8] sm:$0xf]
    %v1059 = vld [vmem:[%s1055 + $0xc] sm:$0xf]
    %v1060 = vld [vmem:[%s1055 + $0x10] sm:$0xf]
    %v1061 = vld [vmem:[%s1055 + $0x14] sm:$0xf]
    %v1062 = vld [vmem:[%s1055 + $0x18] sm:$0xf]
    %v1063 = vld [vmem:[%s1055 + $0x1c] sm:$0xf]
    %v1072 = vunpack.c.l.b16 %v1056
    %v1073 = vunpack.c.l.b16 %v1057
    %v1074 = vunpack.c.l.b16 %v1058
    %v1075 = vunpack.c.l.b16 %v1059
    %v1076 = vunpack.c.l.b16 %v1060
    %v1077 = vunpack.c.l.b16 %v1061
    %v1078 = vunpack.c.l.b16 %v1062
    %v1079 = vunpack.c.l.b16 %v1063
    %v1080 = vpack.c.b16 %v1073, %v1072
    %v1081 = vpack.c.b16 %v1075, %v1074
    %v1082 = vpack.c.b16 %v1077, %v1076
    %v1083 = vpack.c.b16 %v1079, %v1078
    %v1089 = vsel %vm775, %v1051, 0
    %v1092 = vsel %vm775, %v1052, 0
    %v1095 = vsel %vm775, %v1053, 0
    %v1098 = vsel %vm775, %v1054, 0
    %1100 = vmatprep.subr.bf16.mxu0 0
    %1101 = vmatpush1.bf16.msra.mxu0 %v1080
    %1102 = vmatprep.subr.bf16.mxu0 0
    %1103 = vmatpush1.bf16.msra.mxu0 %v1081
    %1104 = vmatprep.subr.bf16.mxu0 0
    %1105 = vmatpush1.bf16.msra.mxu0 %v1082
    %1106 = vmatprep.subr.bf16.mxu0 0
    %1107 = vmatpush1.bf16.msra.mxu0 %v1083
    %1108 = vmatprep.subr.bf16.mxu0 0
    %1109 = vmatpush1.bf16.msra.mxu0 0
    %1110 = vmatprep.subr.bf16.mxu0 0
    %1111 = vmatpush1.bf16.msra.mxu0 0
    %1112 = vmatprep.subr.bf16.mxu0 0
    %1113 = vmatpush1.bf16.msra.mxu0 0
    %1114 = vmatprep.subr.bf16.mxu0 0
    %1115 = vmatpush1.bf16.msra.mxu0 0
    %1116 = vmatprep.subr.bf16.mxu0 0
    %1117 = vmatpush1.bf16.msra.mxu0 0
    %1118 = vmatprep.subr.bf16.mxu0 0
    %1119 = vmatpush1.bf16.msra.mxu0 0
    %1120 = vmatprep.subr.bf16.mxu0 0
    %1121 = vmatpush1.bf16.msra.mxu0 0
    %1122 = vmatprep.subr.bf16.mxu0 0
    %1123 = vmatpush1.bf16.msra.mxu0 0
    %1124 = vmatprep.subr.bf16.mxu0 0
    %1125 = vmatpush1.bf16.msra.mxu0 0
    %1126 = vmatprep.subr.bf16.mxu0 0
    %1127 = vmatpush1.bf16.msra.mxu0 0
    %1128 = vmatprep.subr.bf16.mxu0 0
    %1129 = vmatpush1.bf16.msra.mxu0 0
    %1130 = vmatprep.subr.bf16.mxu0 0
    %1131 = vmatpush1.bf16.msra.mxu0 0
    %1132 = vmatprep.mubr.bf16.mxu0 0
    %1133 = vmatmul.mubr.bf16.gmra.mrb[0].mxu0 %v1089
    %v1134 = vpop.f32.mrb[0].mxu0
    %v1135 = vadd.f32 0.0, %v1134
    %v1136 = vpop.f32.mrb[0].mxu0
    %v1137 = vpop.f32.mrb[0].mxu0
    %v1138 = vadd.f32 0.0, %v1137
    %v1139 = vpop.f32.mrb[0].mxu0
    %1140 = vmatprep.mubr.bf16.mxu0 0
    %1141 = vmatmul.mubr.bf16.gmra.mrb[0].mxu0 %v1092
    %v1142 = vpop.f32.mrb[0].mxu0
    %v1143 = vadd.f32 0.0, %v1142
    %v1144 = vpop.f32.mrb[0].mxu0
    %v1145 = vpop.f32.mrb[0].mxu0
    %v1146 = vadd.f32 0.0, %v1145
    %v1147 = vpop.f32.mrb[0].mxu0
    %1148 = vmatprep.mubr.bf16.mxu0 0
    %1149 = vmatmul.mubr.bf16.gmra.mrb[0].mxu0 %v1095
    %v1150 = vpop.f32.mrb[0].mxu0
    %v1151 = vadd.f32 0.0, %v1150
    %v1152 = vpop.f32.mrb[0].mxu0
    %v1153 = vpop.f32.mrb[0].mxu0
    %v1154 = vadd.f32 0.0, %v1153
    %v1155 = vpop.f32.mrb[0].mxu0
    %1156 = vmatprep.mubr.bf16.mxu0 0
    %1157 = vmatmul.mubr.bf16.gmra.mrb[0].mxu0 %v1098
    %v1158 = vpop.f32.mrb[0].mxu0
    %v1159 = vadd.f32 0.0, %v1158
    %v1160 = vpop.f32.mrb[0].mxu0
    %v1161 = vpop.f32.mrb[0].mxu0
    %v1162 = vadd.f32 0.0, %v1161
    %v1163 = vpop.f32.mrb[0].mxu0
    %1164 = vdwg.mxu0
    %v1165 = vadd.f32 %v1013, %v1135
    %v1166 = vadd.f32 %v1016, %v1138
    %v1167 = vadd.f32 %v1021, %v1143
    %v1168 = vadd.f32 %v1024, %v1146
    %v1169 = vadd.f32 %v1029, %v1151
    %v1170 = vadd.f32 %v1032, %v1154
    %v1171 = vadd.f32 %v1037, %v1159
    %v1172 = vadd.f32 %v1040, %v1162
    %s1173 = scalar_lea.vmem [#allocation2], 16
    %v1174 = vld [vmem:[%s1173] sm:$0xff]
    %v1175 = vld [vmem:[%s1173 + $0x10] sm:$0xff]
    %v1176 = vld [vmem:[%s1173 + $0x20] sm:$0xff]
    %v1177 = vld [vmem:[%s1173 + $0x30] sm:$0xff]
    %v1178 = vld [vmem:[%s1173 + $0x60] sm:$0xff]
    %v1179 = vld [vmem:[%s1173 + $0x70] sm:$0xff]
    %v1180 = vld [vmem:[%s1173 + $0x80] sm:$0xff]
    %v1181 = vld [vmem:[%s1173 + $0x90] sm:$0xff]
    %v1182 = vpack.c.bf16 %v1175, %v1174
    %v1183 = vpack.c.bf16 %v1177, %v1176
    %v1184 = vpack.c.bf16 %v1179, %v1178
    %v1185 = vpack.c.bf16 %v1181, %v1180
    %s1186 = scalar_lea.vmem %s3, 96
    %v1187 = vld [vmem:[%s1186] sm:$0xf]
    %v1188 = vld [vmem:[%s1186 + $0x4] sm:$0xf]
    %v1189 = vld [vmem:[%s1186 + $0x8] sm:$0xf]
    %v1190 = vld [vmem:[%s1186 + $0xc] sm:$0xf]
    %v1191 = vld [vmem:[%s1186 + $0x10] sm:$0xf]
    %v1192 = vld [vmem:[%s1186 + $0x14] sm:$0xf]
    %v1193 = vld [vmem:[%s1186 + $0x18] sm:$0xf]
    %v1194 = vld [vmem:[%s1186 + $0x1c] sm:$0xf]
    %v1203 = vunpack.c.l.b16 %v1187
    %v1204 = vunpack.c.l.b16 %v1188
    %v1205 = vunpack.c.l.b16 %v1189
    %v1206 = vunpack.c.l.b16 %v1190
    %v1207 = vunpack.c.l.b16 %v1191
    %v1208 = vunpack.c.l.b16 %v1192
    %v1209 = vunpack.c.l.b16 %v1193
    %v1210 = vunpack.c.l.b16 %v1194
    %v1211 = vpack.c.b16 %v1204, %v1203
    %v1212 = vpack.c.b16 %v1206, %v1205
    %v1213 = vpack.c.b16 %v1208, %v1207
    %v1214 = vpack.c.b16 %v1210, %v1209
    %v1220 = vsel %vm775, %v1182, 0
    %v1223 = vsel %vm775, %v1183, 0
    %v1226 = vsel %vm775, %v1184, 0
    %v1229 = vsel %vm775, %v1185, 0
    %1231 = vmatprep.subr.bf16.mxu0 0
    %1232 = vmatpush1.bf16.msra.mxu0 %v1211
    %1233 = vmatprep.subr.bf16.mxu0 0
    %1234 = vmatpush1.bf16.msra.mxu0 %v1212
    %1235 = vmatprep.subr.bf16.mxu0 0
    %1236 = vmatpush1.bf16.msra.mxu0 %v1213
    %1237 = vmatprep.subr.bf16.mxu0 0
    %1238 = vmatpush1.bf16.msra.mxu0 %v1214
    %1239 = vmatprep.subr.bf16.mxu0 0
    %1240 = vmatpush1.bf16.msra.mxu0 0
    %1241 = vmatprep.subr.bf16.mxu0 0
    %1242 = vmatpush1.bf16.msra.mxu0 0
    %1243 = vmatprep.subr.bf16.mxu0 0
    %1244 = vmatpush1.bf16.msra.mxu0 0
    %1245 = vmatprep.subr.bf16.mxu0 0
    %1246 = vmatpush1.bf16.msra.mxu0 0
    %1247 = vmatprep.subr.bf16.mxu0 0
    %1248 = vmatpush1.bf16.msra.mxu0 0
    %1249 = vmatprep.subr.bf16.mxu0 0
    %1250 = vmatpush1.bf16.msra.mxu0 0
    %1251 = vmatprep.subr.bf16.mxu0 0
    %1252 = vmatpush1.bf16.msra.mxu0 0
    %1253 = vmatprep.subr.bf16.mxu0 0
    %1254 = vmatpush1.bf16.msra.mxu0 0
    %1255 = vmatprep.subr.bf16.mxu0 0
    %1256 = vmatpush1.bf16.msra.mxu0 0
    %1257 = vmatprep.subr.bf16.mxu0 0
    %1258 = vmatpush1.bf16.msra.mxu0 0
    %1259 = vmatprep.subr.bf16.mxu0 0
    %1260 = vmatpush1.bf16.msra.mxu0 0
    %1261 = vmatprep.subr.bf16.mxu0 0
    %1262 = vmatpush1.bf16.msra.mxu0 0
    %1263 = vmatprep.mubr.bf16.mxu0 0
    %1264 = vmatmul.mubr.bf16.gmra.mrb[0].mxu0 %v1220
    %v1265 = vpop.f32.mrb[0].mxu0
    %v1266 = vadd.f32 0.0, %v1265
    %v1267 = vpop.f32.mrb[0].mxu0
    %v1268 = vpop.f32.mrb[0].mxu0
    %v1269 = vadd.f32 0.0, %v1268
    %v1270 = vpop.f32.mrb[0].mxu0
    %1271 = vmatprep.mubr.bf16.mxu0 0
    %1272 = vmatmul.mubr.bf16.gmra.mrb[0].mxu0 %v1223
    %v1273 = vpop.f32.mrb[0].mxu0
    %v1274 = vadd.f32 0.0, %v1273
    %v1275 = vpop.f32.mrb[0].mxu0
    %v1276 = vpop.f32.mrb[0].mxu0
    %v1277 = vadd.f32 0.0, %v1276
    %v1278 = vpop.f32.mrb[0].mxu0
    %1279 = vmatprep.mubr.bf16.mxu0 0
    %1280 = vmatmul.mubr.bf16.gmra.mrb[0].mxu0 %v1226
    %v1281 = vpop.f32.mrb[0].mxu0
    %v1282 = vadd.f32 0.0, %v1281
    %v1283 = vpop.f32.mrb[0].mxu0
    %v1284 = vpop.f32.mrb[0].mxu0
    %v1285 = vadd.f32 0.0, %v1284
    %v1286 = vpop.f32.mrb[0].mxu0
    %1287 = vmatprep.mubr.bf16.mxu0 0
    %1288 = vmatmul.mubr.bf16.gmra.mrb[0].mxu0 %v1229
    %v1289 = vpop.f32.mrb[0].mxu0
    %v1290 = vadd.f32 0.0, %v1289
    %v1291 = vpop.f32.mrb[0].mxu0
    %v1292 = vpop.f32.mrb[0].mxu0
    %v1293 = vadd.f32 0.0, %v1292
    %v1294 = vpop.f32.mrb[0].mxu0
    %1295 = vdwg.mxu0
    %v1296 = vadd.f32 %v1165, %v1266
    %v1297 = vadd.f32 %v1166, %v1269
    %v1298 = vadd.f32 %v1167, %v1274
    %v1299 = vadd.f32 %v1168, %v1277
    %v1300 = vadd.f32 %v1169, %v1282
    %v1301 = vadd.f32 %v1170, %v1285
    %v1302 = vadd.f32 %v1171, %v1290
    %v1303 = vadd.f32 %v1172, %v1293
    %v1304 = vld [vmem:[%s1173 + $0x1] sm:$0xff]
    %v1305 = vld [vmem:[%s1173 + $0x11] sm:$0xff]
    %v1306 = vld [vmem:[%s1173 + $0x21] sm:$0xff]
    %v1307 = vld [vmem:[%s1173 + $0x31] sm:$0xff]
    %v1308 = vld [vmem:[%s1173 + $0x61] sm:$0xff]
    %v1309 = vld [vmem:[%s1173 + $0x71] sm:$0xff]
    %v1310 = vld [vmem:[%s1173 + $0x81] sm:$0xff]
    %v1311 = vld [vmem:[%s1173 + $0x91] sm:$0xff]
    %v1312 = vpack.c.bf16 %v1305, %v1304
    %v1313 = vpack.c.bf16 %v1307, %v1306
    %v1314 = vpack.c.bf16 %v1309, %v1308
    %v1315 = vpack.c.bf16 %v1311, %v1310
    %s1316 = scalar_lea.vmem %s3, 128
    %v1317 = vld [vmem:[%s1316] sm:$0xf]
    %v1318 = vld [vmem:[%s1316 + $0x4] sm:$0xf]
    %v1319 = vld [vmem:[%s1316 + $0x8] sm:$0xf]
    %v1320 = vld [vmem:[%s1316 + $0xc] sm:$0xf]
    %v1321 = vld [vmem:[%s1316 + $0x10] sm:$0xf]
    %v1322 = vld [vmem:[%s1316 + $0x14] sm:$0xf]
    %v1323 = vld [vmem:[%s1316 + $0x18] sm:$0xf]
    %v1324 = vld [vmem:[%s1316 + $0x1c] sm:$0xf]
    %v1333 = vunpack.c.l.b16 %v1317
    %v1334 = vunpack.c.l.b16 %v1318
    %v1335 = vunpack.c.l.b16 %v1319
    %v1336 = vunpack.c.l.b16 %v1320
    %v1337 = vunpack.c.l.b16 %v1321
    %v1338 = vunpack.c.l.b16 %v1322
    %v1339 = vunpack.c.l.b16 %v1323
    %v1340 = vunpack.c.l.b16 %v1324
    %v1341 = vpack.c.b16 %v1334, %v1333
    %v1342 = vpack.c.b16 %v1336, %v1335
    %v1343 = vpack.c.b16 %v1338, %v1337
    %v1344 = vpack.c.b16 %v1340, %v1339
    %v1350 = vsel %vm775, %v1312, 0
    %v1353 = vsel %vm775, %v1313, 0
    %v1356 = vsel %vm775, %v1314, 0
    %v1359 = vsel %vm775, %v1315, 0
    %1361 = vmatprep.subr.bf16.mxu0 0
    %1362 = vmatpush1.bf16.msra.mxu0 %v1341
    %1363 = vmatprep.subr.bf16.mxu0 0
    %1364 = vmatpush1.bf16.msra.mxu0 %v1342
    %1365 = vmatprep.subr.bf16.mxu0 0
    %1366 = vmatpush1.bf16.msra.mxu0 %v1343
    %1367 = vmatprep.subr.bf16.mxu0 0
    %1368 = vmatpush1.bf16.msra.mxu0 %v1344
    %1369 = vmatprep.subr.bf16.mxu0 0
    %1370 = vmatpush1.bf16.msra.mxu0 0
    %1371 = vmatprep.subr.bf16.mxu0 0
    %1372 = vmatpush1.bf16.msra.mxu0 0
    %1373 = vmatprep.subr.bf16.mxu0 0
    %1374 = vmatpush1.bf16.msra.mxu0 0
    %1375 = vmatprep.subr.bf16.mxu0 0
    %1376 = vmatpush1.bf16.msra.mxu0 0
    %1377 = vmatprep.subr.bf16.mxu0 0
    %1378 = vmatpush1.bf16.msra.mxu0 0
    %1379 = vmatprep.subr.bf16.mxu0 0
    %1380 = vmatpush1.bf16.msra.mxu0 0
    %1381 = vmatprep.subr.bf16.mxu0 0
    %1382 = vmatpush1.bf16.msra.mxu0 0
    %1383 = vmatprep.subr.bf16.mxu0 0
    %1384 = vmatpush1.bf16.msra.mxu0 0
    %1385 = vmatprep.subr.bf16.mxu0 0
    %1386 = vmatpush1.bf16.msra.mxu0 0
    %1387 = vmatprep.subr.bf16.mxu0 0
    %1388 = vmatpush1.bf16.msra.mxu0 0
    %1389 = vmatprep.subr.bf16.mxu0 0
    %1390 = vmatpush1.bf16.msra.mxu0 0
    %1391 = vmatprep.subr.bf16.mxu0 0
    %1392 = vmatpush1.bf16.msra.mxu0 0
    %1393 = vmatprep.mubr.bf16.mxu0 0
    %1394 = vmatmul.mubr.bf16.gmra.mrb[0].mxu0 %v1350
    %v1395 = vpop.f32.mrb[0].mxu0
    %v1396 = vadd.f32 0.0, %v1395
    %v1397 = vpop.f32.mrb[0].mxu0
    %v1398 = vpop.f32.mrb[0].mxu0
    %v1399 = vadd.f32 0.0, %v1398
    %v1400 = vpop.f32.mrb[0].mxu0
    %1401 = vmatprep.mubr.bf16.mxu0 0
    %1402 = vmatmul.mubr.bf16.gmra.mrb[0].mxu0 %v1353
    %v1403 = vpop.f32.mrb[0].mxu0
    %v1404 = vadd.f32 0.0, %v1403
    %v1405 = vpop.f32.mrb[0].mxu0
    %v1406 = vpop.f32.mrb[0].mxu0
    %v1407 = vadd.f32 0.0, %v1406
    %v1408 = vpop.f32.mrb[0].mxu0
    %1409 = vmatprep.mubr.bf16.mxu0 0
    %1410 = vmatmul.mubr.bf16.gmra.mrb[0].mxu0 %v1356
    %v1411 = vpop.f32.mrb[0].mxu0
    %v1412 = vadd.f32 0.0, %v1411
    %v1413 = vpop.f32.mrb[0].mxu0
    %v1414 = vpop.f32.mrb[0].mxu0
    %v1415 = vadd.f32 0.0, %v1414
    %v1416 = vpop.f32.mrb[0].mxu0
    %1417 = vmatprep.mubr.bf16.mxu0 0
    %1418 = vmatmul.mubr.bf16.gmra.mrb[0].mxu0 %v1359
    %v1419 = vpop.f32.mrb[0].mxu0
    %v1420 = vadd.f32 0.0, %v1419
    %v1421 = vpop.f32.mrb[0].mxu0
    %v1422 = vpop.f32.mrb[0].mxu0
    %v1423 = vadd.f32 0.0, %v1422
    %v1424 = vpop.f32.mrb[0].mxu0
    %1425 = vdwg.mxu0
    %v1426 = vadd.f32 %v1296, %v1396
    %v1427 = vadd.f32 %v1297, %v1399
    %v1428 = vadd.f32 %v1298, %v1404
    %v1429 = vadd.f32 %v1299, %v1407
    %v1430 = vadd.f32 %v1300, %v1412
    %v1431 = vadd.f32 %v1301, %v1415
    %v1432 = vadd.f32 %v1302, %v1420
    %v1433 = vadd.f32 %v1303, %v1423
    %v1434 = vld [vmem:[%s1173 + $0x2] sm:$0xff]
    %v1435 = vld [vmem:[%s1173 + $0x12] sm:$0xff]
    %v1436 = vld [vmem:[%s1173 + $0x22] sm:$0xff]
    %v1437 = vld [vmem:[%s1173 + $0x32] sm:$0xff]
    %v1438 = vld [vmem:[%s1173 + $0x62] sm:$0xff]
    %v1439 = vld [vmem:[%s1173 + $0x72] sm:$0xff]
    %v1440 = vld [vmem:[%s1173 + $0x82] sm:$0xff]
    %v1441 = vld [vmem:[%s1173 + $0x92] sm:$0xff]
    %v1442 = vpack.c.bf16 %v1435, %v1434
    %v1443 = vpack.c.bf16 %v1437, %v1436
    %v1444 = vpack.c.bf16 %v1439, %v1438
    %v1445 = vpack.c.bf16 %v1441, %v1440
    %s1446 = scalar_lea.vmem %s3, 160
    %v1447 = vld [vmem:[%s1446] sm:$0xf]
    %v1448 = vld [vmem:[%s1446 + $0x4] sm:$0xf]
    %v1449 = vld [vmem:[%s1446 + $0x8] sm:$0xf]
    %v1450 = vld [vmem:[%s1446 + $0xc] sm:$0xf]
    %v1451 = vld [vmem:[%s1446 + $0x10] sm:$0xf]
    %v1452 = vld [vmem:[%s1446 + $0x14] sm:$0xf]
    %v1453 = vld [vmem:[%s1446 + $0x18] sm:$0xf]
    %v1454 = vld [vmem:[%s1446 + $0x1c] sm:$0xf]
    %v1463 = vunpack.c.l.b16 %v1447
    %v1464 = vunpack.c.l.b16 %v1448
    %v1465 = vunpack.c.l.b16 %v1449
    %v1466 = vunpack.c.l.b16 %v1450
    %v1467 = vunpack.c.l.b16 %v1451
    %v1468 = vunpack.c.l.b16 %v1452
    %v1469 = vunpack.c.l.b16 %v1453
    %v1470 = vunpack.c.l.b16 %v1454
    %v1471 = vpack.c.b16 %v1464, %v1463
    %v1472 = vpack.c.b16 %v1466, %v1465
    %v1473 = vpack.c.b16 %v1468, %v1467
    %v1474 = vpack.c.b16 %v1470, %v1469
    %v1480 = vsel %vm775, %v1442, 0
    %v1483 = vsel %vm775, %v1443, 0
    %v1486 = vsel %vm775, %v1444, 0
    %v1489 = vsel %vm775, %v1445, 0
    %1491 = vmatprep.subr.bf16.mxu0 0
    %1492 = vmatpush1.bf16.msra.mxu0 %v1471
    %1493 = vmatprep.subr.bf16.mxu0 0
    %1494 = vmatpush1.bf16.msra.mxu0 %v1472
    %1495 = vmatprep.subr.bf16.mxu0 0
    %1496 = vmatpush1.bf16.msra.mxu0 %v1473
    %1497 = vmatprep.subr.bf16.mxu0 0
    %1498 = vmatpush1.bf16.msra.mxu0 %v1474
    %1499 = vmatprep.subr.bf16.mxu0 0
    %1500 = vmatpush1.bf16.msra.mxu0 0
    %1501 = vmatprep.subr.bf16.mxu0 0
    %1502 = vmatpush1.bf16.msra.mxu0 0
    %1503 = vmatprep.subr.bf16.mxu0 0
    %1504 = vmatpush1.bf16.msra.mxu0 0
    %1505 = vmatprep.subr.bf16.mxu0 0
    %1506 = vmatpush1.bf16.msra.mxu0 0
    %1507 = vmatprep.subr.bf16.mxu0 0
    %1508 = vmatpush1.bf16.msra.mxu0 0
    %1509 = vmatprep.subr.bf16.mxu0 0
    %1510 = vmatpush1.bf16.msra.mxu0 0
    %1511 = vmatprep.subr.bf16.mxu0 0
    %1512 = vmatpush1.bf16.msra.mxu0 0
    %1513 = vmatprep.subr.bf16.mxu0 0
    %1514 = vmatpush1.bf16.msra.mxu0 0
    %1515 = vmatprep.subr.bf16.mxu0 0
    %1516 = vmatpush1.bf16.msra.mxu0 0
    %1517 = vmatprep.subr.bf16.mxu0 0
    %1518 = vmatpush1.bf16.msra.mxu0 0
    %1519 = vmatprep.subr.bf16.mxu0 0
    %1520 = vmatpush1.bf16.msra.mxu0 0
    %1521 = vmatprep.subr.bf16.mxu0 0
    %1522 = vmatpush1.bf16.msra.mxu0 0
    %1523 = vmatprep.mubr.bf16.mxu0 0
    %1524 = vmatmul.mubr.bf16.gmra.mrb[0].mxu0 %v1480
    %v1525 = vpop.f32.mrb[0].mxu0
    %v1526 = vadd.f32 0.0, %v1525
    %v1527 = vpop.f32.mrb[0].mxu0
    %v1528 = vpop.f32.mrb[0].mxu0
    %v1529 = vadd.f32 0.0, %v1528
    %v1530 = vpop.f32.mrb[0].mxu0
    %1531 = vmatprep.mubr.bf16.mxu0 0
    %1532 = vmatmul.mubr.bf16.gmra.mrb[0].mxu0 %v1483
    %v1533 = vpop.f32.mrb[0].mxu0
    %v1534 = vadd.f32 0.0, %v1533
    %v1535 = vpop.f32.mrb[0].mxu0
    %v1536 = vpop.f32.mrb[0].mxu0
    %v1537 = vadd.f32 0.0, %v1536
    %v1538 = vpop.f32.mrb[0].mxu0
    %1539 = vmatprep.mubr.bf16.mxu0 0
    %1540 = vmatmul.mubr.bf16.gmra.mrb[0].mxu0 %v1486
    %v1541 = vpop.f32.mrb[0].mxu0
    %v1542 = vadd.f32 0.0, %v1541
    %v1543 = vpop.f32.mrb[0].mxu0
    %v1544 = vpop.f32.mrb[0].mxu0
    %v1545 = vadd.f32 0.0, %v1544
    %v1546 = vpop.f32.mrb[0].mxu0
    %1547 = vmatprep.mubr.bf16.mxu0 0
    %1548 = vmatmul.mubr.bf16.gmra.mrb[0].mxu0 %v1489
    %v1549 = vpop.f32.mrb[0].mxu0
    %v1550 = vadd.f32 0.0, %v1549
    %v1551 = vpop.f32.mrb[0].mxu0
    %v1552 = vpop.f32.mrb[0].mxu0
    %v1553 = vadd.f32 0.0, %v1552
    %v1554 = vpop.f32.mrb[0].mxu0
    %1555 = vdwg.mxu0
    %v1556 = vadd.f32 %v1426, %v1526
    %v1557 = vadd.f32 %v1427, %v1529
    %v1558 = vadd.f32 %v1428, %v1534
    %v1559 = vadd.f32 %v1429, %v1537
    %v1560 = vadd.f32 %v1430, %v1542
    %v1561 = vadd.f32 %v1431, %v1545
    %v1562 = vadd.f32 %v1432, %v1550
    %v1563 = vadd.f32 %v1433, %v1553
    %s1564 = scalar_lea.vmem [#allocation2], 32
    %v1565 = vld [vmem:[%s1564] sm:$0xff]
    %v1566 = vld [vmem:[%s1564 + $0x10] sm:$0xff]
    %v1567 = vld [vmem:[%s1564 + $0x20] sm:$0xff]
    %v1568 = vld [vmem:[%s1564 + $0x30] sm:$0xff]
    %v1569 = vld [vmem:[%s1564 + $0x60] sm:$0xff]
    %v1570 = vld [vmem:[%s1564 + $0x70] sm:$0xff]
    %v1571 = vld [vmem:[%s1564 + $0x80] sm:$0xff]
    %v1572 = vld [vmem:[%s1564 + $0x90] sm:$0xff]
    %v1573 = vpack.c.bf16 %v1566, %v1565
    %v1574 = vpack.c.bf16 %v1568, %v1567
    %v1575 = vpack.c.bf16 %v1570, %v1569
    %v1576 = vpack.c.bf16 %v1572, %v1571
    %s1577 = scalar_lea.vmem %s3, 192
    %v1578 = vld [vmem:[%s1577] sm:$0xf]
    %v1579 = vld [vmem:[%s1577 + $0x4] sm:$0xf]
    %v1580 = vld [vmem:[%s1577 + $0x8] sm:$0xf]
    %v1581 = vld [vmem:[%s1577 + $0xc] sm:$0xf]
    %v1582 = vld [vmem:[%s1577 + $0x10] sm:$0xf]
    %v1583 = vld [vmem:[%s1577 + $0x14] sm:$0xf]
    %v1584 = vld [vmem:[%s1577 + $0x18] sm:$0xf]
    %v1585 = vld [vmem:[%s1577 + $0x1c] sm:$0xf]
    %v1594 = vunpack.c.l.b16 %v1578
    %v1595 = vunpack.c.l.b16 %v1579
    %v1596 = vunpack.c.l.b16 %v1580
    %v1597 = vunpack.c.l.b16 %v1581
    %v1598 = vunpack.c.l.b16 %v1582
    %v1599 = vunpack.c.l.b16 %v1583
    %v1600 = vunpack.c.l.b16 %v1584
    %v1601 = vunpack.c.l.b16 %v1585
    %v1602 = vpack.c.b16 %v1595, %v1594
    %v1603 = vpack.c.b16 %v1597, %v1596
    %v1604 = vpack.c.b16 %v1599, %v1598
    %v1605 = vpack.c.b16 %v1601, %v1600
    %v1611 = vsel %vm775, %v1573, 0
    %v1614 = vsel %vm775, %v1574, 0
    %v1617 = vsel %vm775, %v1575, 0
    %v1620 = vsel %vm775, %v1576, 0
    %1622 = vmatprep.subr.bf16.mxu0 0
    %1623 = vmatpush1.bf16.msra.mxu0 %v1602
    %1624 = vmatprep.subr.bf16.mxu0 0
    %1625 = vmatpush1.bf16.msra.mxu0 %v1603
    %1626 = vmatprep.subr.bf16.mxu0 0
    %1627 = vmatpush1.bf16.msra.mxu0 %v1604
    %1628 = vmatprep.subr.bf16.mxu0 0
    %1629 = vmatpush1.bf16.msra.mxu0 %v1605
    %1630 = vmatprep.subr.bf16.mxu0 0
    %1631 = vmatpush1.bf16.msra.mxu0 0
    %1632 = vmatprep.subr.bf16.mxu0 0
    %1633 = vmatpush1.bf16.msra.mxu0 0
    %1634 = vmatprep.subr.bf16.mxu0 0
    %1635 = vmatpush1.bf16.msra.mxu0 0
    %1636 = vmatprep.subr.bf16.mxu0 0
    %1637 = vmatpush1.bf16.msra.mxu0 0
    %1638 = vmatprep.subr.bf16.mxu0 0
    %1639 = vmatpush1.bf16.msra.mxu0 0
    %1640 = vmatprep.subr.bf16.mxu0 0
    %1641 = vmatpush1.bf16.msra.mxu0 0
    %1642 = vmatprep.subr.bf16.mxu0 0
    %1643 = vmatpush1.bf16.msra.mxu0 0
    %1644 = vmatprep.subr.bf16.mxu0 0
    %1645 = vmatpush1.bf16.msra.mxu0 0
    %1646 = vmatprep.subr.bf16.mxu0 0
    %1647 = vmatpush1.bf16.msra.mxu0 0
    %1648 = vmatprep.subr.bf16.mxu0 0
    %1649 = vmatpush1.bf16.msra.mxu0 0
    %1650 = vmatprep.subr.bf16.mxu0 0
    %1651 = vmatpush1.bf16.msra.mxu0 0
    %1652 = vmatprep.subr.bf16.mxu0 0
    %1653 = vmatpush1.bf16.msra.mxu0 0
    %1654 = vmatprep.mubr.bf16.mxu0 0
    %1655 = vmatmul.mubr.bf16.gmra.mrb[0].mxu0 %v1611
    %v1656 = vpop.f32.mrb[0].mxu0
    %v1657 = vadd.f32 0.0, %v1656
    %v1658 = vpop.f32.mrb[0].mxu0
    %v1659 = vpop.f32.mrb[0].mxu0
    %v1660 = vadd.f32 0.0, %v1659
    %v1661 = vpop.f32.mrb[0].mxu0
    %1662 = vmatprep.mubr.bf16.mxu0 0
    %1663 = vmatmul.mubr.bf16.gmra.mrb[0].mxu0 %v1614
    %v1664 = vpop.f32.mrb[0].mxu0
    %v1665 = vadd.f32 0.0, %v1664
    %v1666 = vpop.f32.mrb[0].mxu0
    %v1667 = vpop.f32.mrb[0].mxu0
    %v1668 = vadd.f32 0.0, %v1667
    %v1669 = vpop.f32.mrb[0].mxu0
    %1670 = vmatprep.mubr.bf16.mxu0 0
    %1671 = vmatmul.mubr.bf16.gmra.mrb[0].mxu0 %v1617
    %v1672 = vpop.f32.mrb[0].mxu0
    %v1673 = vadd.f32 0.0, %v1672
    %v1674 = vpop.f32.mrb[0].mxu0
    %v1675 = vpop.f32.mrb[0].mxu0
    %v1676 = vadd.f32 0.0, %v1675
    %v1677 = vpop.f32.mrb[0].mxu0
    %1678 = vmatprep.mubr.bf16.mxu0 0
    %1679 = vmatmul.mubr.bf16.gmra.mrb[0].mxu0 %v1620
    %v1680 = vpop.f32.mrb[0].mxu0
    %v1681 = vadd.f32 0.0, %v1680
    %v1682 = vpop.f32.mrb[0].mxu0
    %v1683 = vpop.f32.mrb[0].mxu0
    %v1684 = vadd.f32 0.0, %v1683
    %v1685 = vpop.f32.mrb[0].mxu0
    %1686 = vdwg.mxu0
    %v1687 = vadd.f32 %v1556, %v1657
    %v1688 = vadd.f32 %v1557, %v1660
    %v1689 = vadd.f32 %v1558, %v1665
    %v1690 = vadd.f32 %v1559, %v1668
    %v1691 = vadd.f32 %v1560, %v1673
    %v1692 = vadd.f32 %v1561, %v1676
    %v1693 = vadd.f32 %v1562, %v1681
    %v1694 = vadd.f32 %v1563, %v1684
    %v1695 = vld [vmem:[%s1564 + $0x1] sm:$0xff]
    %v1696 = vld [vmem:[%s1564 + $0x11] sm:$0xff]
    %v1697 = vld [vmem:[%s1564 + $0x21] sm:$0xff]
    %v1698 = vld [vmem:[%s1564 + $0x31] sm:$0xff]
    %v1699 = vld [vmem:[%s1564 + $0x61] sm:$0xff]
    %v1700 = vld [vmem:[%s1564 + $0x71] sm:$0xff]
    %v1701 = vld [vmem:[%s1564 + $0x81] sm:$0xff]
    %v1702 = vld [vmem:[%s1564 + $0x91] sm:$0xff]
    %v1703 = vpack.c.bf16 %v1696, %v1695
    %v1704 = vpack.c.bf16 %v1698, %v1697
    %v1705 = vpack.c.bf16 %v1700, %v1699
    %v1706 = vpack.c.bf16 %v1702, %v1701
    %s1707 = scalar_lea.vmem %s3, 224
    %v1708 = vld [vmem:[%s1707] sm:$0xf]
    %v1709 = vld [vmem:[%s1707 + $0x4] sm:$0xf]
    %v1710 = vld [vmem:[%s1707 + $0x8] sm:$0xf]
    %v1711 = vld [vmem:[%s1707 + $0xc] sm:$0xf]
    %v1712 = vld [vmem:[%s1707 + $0x10] sm:$0xf]
    %v1713 = vld [vmem:[%s1707 + $0x14] sm:$0xf]
    %v1714 = vld [vmem:[%s1707 + $0x18] sm:$0xf]
    %v1715 = vld [vmem:[%s1707 + $0x1c] sm:$0xf]
    %v1724 = vunpack.c.l.b16 %v1708
    %v1725 = vunpack.c.l.b16 %v1709
    %v1726 = vunpack.c.l.b16 %v1710
    %v1727 = vunpack.c.l.b16 %v1711
    %v1728 = vunpack.c.l.b16 %v1712
    %v1729 = vunpack.c.l.b16 %v1713
    %v1730 = vunpack.c.l.b16 %v1714
    %v1731 = vunpack.c.l.b16 %v1715
    %v1732 = vpack.c.b16 %v1725, %v1724
    %v1733 = vpack.c.b16 %v1727, %v1726
    %v1734 = vpack.c.b16 %v1729, %v1728
    %v1735 = vpack.c.b16 %v1731, %v1730
    %v1741 = vsel %vm775, %v1703, 0
    %v1744 = vsel %vm775, %v1704, 0
    %v1747 = vsel %vm775, %v1705, 0
    %v1750 = vsel %vm775, %v1706, 0
    %1752 = vmatprep.subr.bf16.mxu0 0
    %1753 = vmatpush1.bf16.msra.mxu0 %v1732
    %1754 = vmatprep.subr.bf16.mxu0 0
    %1755 = vmatpush1.bf16.msra.mxu0 %v1733
    %1756 = vmatprep.subr.bf16.mxu0 0
    %1757 = vmatpush1.bf16.msra.mxu0 %v1734
    %1758 = vmatprep.subr.bf16.mxu0 0
    %1759 = vmatpush1.bf16.msra.mxu0 %v1735
    %1760 = vmatprep.subr.bf16.mxu0 0
    %1761 = vmatpush1.bf16.msra.mxu0 0
    %1762 = vmatprep.subr.bf16.mxu0 0
    %1763 = vmatpush1.bf16.msra.mxu0 0
    %1764 = vmatprep.subr.bf16.mxu0 0
    %1765 = vmatpush1.bf16.msra.mxu0 0
    %1766 = vmatprep.subr.bf16.mxu0 0
    %1767 = vmatpush1.bf16.msra.mxu0 0
    %1768 = vmatprep.subr.bf16.mxu0 0
    %1769 = vmatpush1.bf16.msra.mxu0 0
    %1770 = vmatprep.subr.bf16.mxu0 0
    %1771 = vmatpush1.bf16.msra.mxu0 0
    %1772 = vmatprep.subr.bf16.mxu0 0
    %1773 = vmatpush1.bf16.msra.mxu0 0
    %1774 = vmatprep.subr.bf16.mxu0 0
    %1775 = vmatpush1.bf16.msra.mxu0 0
    %1776 = vmatprep.subr.bf16.mxu0 0
    %1777 = vmatpush1.bf16.msra.mxu0 0
    %1778 = vmatprep.subr.bf16.mxu0 0
    %1779 = vmatpush1.bf16.msra.mxu0 0
    %1780 = vmatprep.subr.bf16.mxu0 0
    %1781 = vmatpush1.bf16.msra.mxu0 0
    %1782 = vmatprep.subr.bf16.mxu0 0
    %1783 = vmatpush1.bf16.msra.mxu0 0
    %1784 = vmatprep.mubr.bf16.mxu0 0
    %1785 = vmatmul.mubr.bf16.gmra.mrb[0].mxu0 %v1741
    %v1786 = vpop.f32.mrb[0].mxu0
    %v1787 = vadd.f32 0.0, %v1786
    %v1788 = vpop.f32.mrb[0].mxu0
    %v1789 = vpop.f32.mrb[0].mxu0
    %v1790 = vadd.f32 0.0, %v1789
    %v1791 = vpop.f32.mrb[0].mxu0
    %1792 = vmatprep.mubr.bf16.mxu0 0
    %1793 = vmatmul.mubr.bf16.gmra.mrb[0].mxu0 %v1744
    %v1794 = vpop.f32.mrb[0].mxu0
    %v1795 = vadd.f32 0.0, %v1794
    %v1796 = vpop.f32.mrb[0].mxu0
    %v1797 = vpop.f32.mrb[0].mxu0
    %v1798 = vadd.f32 0.0, %v1797
    %v1799 = vpop.f32.mrb[0].mxu0
    %1800 = vmatprep.mubr.bf16.mxu0 0
    %1801 = vmatmul.mubr.bf16.gmra.mrb[0].mxu0 %v1747
    %v1802 = vpop.f32.mrb[0].mxu0
    %v1803 = vadd.f32 0.0, %v1802
    %v1804 = vpop.f32.mrb[0].mxu0
    %v1805 = vpop.f32.mrb[0].mxu0
    %v1806 = vadd.f32 0.0, %v1805
    %v1807 = vpop.f32.mrb[0].mxu0
    %1808 = vmatprep.mubr.bf16.mxu0 0
    %1809 = vmatmul.mubr.bf16.gmra.mrb[0].mxu0 %v1750
    %v1810 = vpop.f32.mrb[0].mxu0
    %v1811 = vadd.f32 0.0, %v1810
    %v1812 = vpop.f32.mrb[0].mxu0
    %v1813 = vpop.f32.mrb[0].mxu0
    %v1814 = vadd.f32 0.0, %v1813
    %v1815 = vpop.f32.mrb[0].mxu0
    %1816 = vdwg.mxu0
    %v1817 = vadd.f32 %v1687, %v1787
    %v1818 = vadd.f32 %v1688, %v1790
    %v1819 = vadd.f32 %v1689, %v1795
    %v1820 = vadd.f32 %v1690, %v1798
    %v1821 = vadd.f32 %v1691, %v1803
    %v1822 = vadd.f32 %v1692, %v1806
    %v1823 = vadd.f32 %v1693, %v1811
    %v1824 = vadd.f32 %v1694, %v1814
    %v1825 = vld [vmem:[%s1564 + $0x2] sm:$0xff]
    %v1826 = vld [vmem:[%s1564 + $0x12] sm:$0xff]
    %v1827 = vld [vmem:[%s1564 + $0x22] sm:$0xff]
    %v1828 = vld [vmem:[%s1564 + $0x32] sm:$0xff]
    %v1829 = vld [vmem:[%s1564 + $0x62] sm:$0xff]
    %v1830 = vld [vmem:[%s1564 + $0x72] sm:$0xff]
    %v1831 = vld [vmem:[%s1564 + $0x82] sm:$0xff]
    %v1832 = vld [vmem:[%s1564 + $0x92] sm:$0xff]
    %v1833 = vpack.c.bf16 %v1826, %v1825
    %v1834 = vpack.c.bf16 %v1828, %v1827
    %v1835 = vpack.c.bf16 %v1830, %v1829
    %v1836 = vpack.c.bf16 %v1832, %v1831
    %s1837 = scalar_lea.vmem %s3, 256
    %v1838 = vld [vmem:[%s1837] sm:$0xf]
    %v1839 = vld [vmem:[%s1837 + $0x4] sm:$0xf]
    %v1840 = vld [vmem:[%s1837 + $0x8] sm:$0xf]
    %v1841 = vld [vmem:[%s1837 + $0xc] sm:$0xf]
    %v1842 = vld [vmem:[%s1837 + $0x10] sm:$0xf]
    %v1843 = vld [vmem:[%s1837 + $0x14] sm:$0xf]
    %v1844 = vld [vmem:[%s1837 + $0x18] sm:$0xf]
    %v1845 = vld [vmem:[%s1837 + $0x1c] sm:$0xf]
    %v1854 = vunpack.c.l.b16 %v1838
    %v1855 = vunpack.c.l.b16 %v1839
    %v1856 = vunpack.c.l.b16 %v1840
    %v1857 = vunpack.c.l.b16 %v1841
    %v1858 = vunpack.c.l.b16 %v1842
    %v1859 = vunpack.c.l.b16 %v1843
    %v1860 = vunpack.c.l.b16 %v1844
    %v1861 = vunpack.c.l.b16 %v1845
    %v1862 = vpack.c.b16 %v1855, %v1854
    %v1863 = vpack.c.b16 %v1857, %v1856
    %v1864 = vpack.c.b16 %v1859, %v1858
    %v1865 = vpack.c.b16 %v1861, %v1860
    %v1871 = vsel %vm775, %v1833, 0
    %v1874 = vsel %vm775, %v1834, 0
    %v1877 = vsel %vm775, %v1835, 0
    %v1880 = vsel %vm775, %v1836, 0
    %1882 = vmatprep.subr.bf16.mxu0 0
    %1883 = vmatpush1.bf16.msra.mxu0 %v1862
    %1884 = vmatprep.subr.bf16.mxu0 0
    %1885 = vmatpush1.bf16.msra.mxu0 %v1863
    %1886 = vmatprep.subr.bf16.mxu0 0
    %1887 = vmatpush1.bf16.msra.mxu0 %v1864
    %1888 = vmatprep.subr.bf16.mxu0 0
    %1889 = vmatpush1.bf16.msra.mxu0 %v1865
    %1890 = vmatprep.subr.bf16.mxu0 0
    %1891 = vmatpush1.bf16.msra.mxu0 0
    %1892 = vmatprep.subr.bf16.mxu0 0
    %1893 = vmatpush1.bf16.msra.mxu0 0
    %1894 = vmatprep.subr.bf16.mxu0 0
    %1895 = vmatpush1.bf16.msra.mxu0 0
    %1896 = vmatprep.subr.bf16.mxu0 0
    %1897 = vmatpush1.bf16.msra.mxu0 0
    %1898 = vmatprep.subr.bf16.mxu0 0
    %1899 = vmatpush1.bf16.msra.mxu0 0
    %1900 = vmatprep.subr.bf16.mxu0 0
    %1901 = vmatpush1.bf16.msra.mxu0 0
    %1902 = vmatprep.subr.bf16.mxu0 0
    %1903 = vmatpush1.bf16.msra.mxu0 0
    %1904 = vmatprep.subr.bf16.mxu0 0
    %1905 = vmatpush1.bf16.msra.mxu0 0
    %1906 = vmatprep.subr.bf16.mxu0 0
    %1907 = vmatpush1.bf16.msra.mxu0 0
    %1908 = vmatprep.subr.bf16.mxu0 0
    %1909 = vmatpush1.bf16.msra.mxu0 0
    %1910 = vmatprep.subr.bf16.mxu0 0
    %1911 = vmatpush1.bf16.msra.mxu0 0
    %1912 = vmatprep.subr.bf16.mxu0 0
    %1913 = vmatpush1.bf16.msra.mxu0 0
    %1914 = vmatprep.mubr.bf16.mxu0 0
    %1915 = vmatmul.mubr.bf16.gmra.mrb[0].mxu0 %v1871
    %v1916 = vpop.f32.mrb[0].mxu0
    %v1917 = vadd.f32 0.0, %v1916
    %v1918 = vpop.f32.mrb[0].mxu0
    %v1919 = vpop.f32.mrb[0].mxu0
    %v1920 = vadd.f32 0.0, %v1919
    %v1921 = vpop.f32.mrb[0].mxu0
    %1922 = vmatprep.mubr.bf16.mxu0 0
    %1923 = vmatmul.mubr.bf16.gmra.mrb[0].mxu0 %v1874
    %v1924 = vpop.f32.mrb[0].mxu0
    %v1925 = vadd.f32 0.0, %v1924
    %v1926 = vpop.f32.mrb[0].mxu0
    %v1927 = vpop.f32.mrb[0].mxu0
    %v1928 = vadd.f32 0.0, %v1927
    %v1929 = vpop.f32.mrb[0].mxu0
    %1930 = vmatprep.mubr.bf16.mxu0 0
    %1931 = vmatmul.mubr.bf16.gmra.mrb[0].mxu0 %v1877
    %v1932 = vpop.f32.mrb[0].mxu0
    %v1933 = vadd.f32 0.0, %v1932
    %v1934 = vpop.f32.mrb[0].mxu0
    %v1935 = vpop.f32.mrb[0].mxu0
    %v1936 = vadd.f32 0.0, %v1935
    %v1937 = vpop.f32.mrb[0].mxu0
    %1938 = vmatprep.mubr.bf16.mxu0 0
    %1939 = vmatmul.mubr.bf16.gmra.mrb[0].mxu0 %v1880
    %v1940 = vpop.f32.mrb[0].mxu0
    %v1941 = vadd.f32 0.0, %v1940
    %v1942 = vpop.f32.mrb[0].mxu0
    %v1943 = vpop.f32.mrb[0].mxu0
    %v1944 = vadd.f32 0.0, %v1943
    %v1945 = vpop.f32.mrb[0].mxu0
    %1946 = vdwg.mxu0
    %v1947 = vadd.f32 %v1817, %v1917
    %v1948 = vadd.f32 %v1818, %v1920
    %v1949 = vadd.f32 %v1819, %v1925
    %v1950 = vadd.f32 %v1820, %v1928
    %v1951 = vadd.f32 %v1821, %v1933
    %v1952 = vadd.f32 %v1822, %v1936
    %v1953 = vadd.f32 %v1823, %v1941
    %v1954 = vadd.f32 %v1824, %v1944
    %v1955 = vld [vmem:[%s4] sm:$0x1]
    %v1957 = vlaneseq
    %v1958 = vshrl.u32 %v1957, 7
    %v1959 = vsub.s32 0, %v1958
    %v1960 = vrot.slane %v1955, %v1959
    %v1962 = vadd.f32 %v1947, %v1960
    %v1963 = vadd.f32 %v1948, %v1960
    %v1964 = vadd.f32 %v1949, %v1960
    %v1965 = vadd.f32 %v1950, %v1960
    %v1966 = vadd.f32 %v1951, %v1960
    %v1967 = vadd.f32 %v1952, %v1960
    %v1968 = vadd.f32 %v1953, %v1960
    %v1969 = vadd.f32 %v1954, %v1960
    %v1970 = vmul.f32 %v1962, 0.01
    %v1971 = vmul.f32 %v1963, 0.01
    %v1972 = vmul.f32 %v1964, 0.01
    %v1973 = vmul.f32 %v1965, 0.01
    %v1974 = vmul.f32 %v1966, 0.01
    %v1975 = vmul.f32 %v1967, 0.01
    %v1976 = vmul.f32 %v1968, 0.01
    %v1977 = vmul.f32 %v1969, 0.01
    %v1978 = vmax.f32 %v1962, %v1970
    %v1979 = vmax.f32 %v1963, %v1971
    %v1980 = vmax.f32 %v1964, %v1972
    %v1981 = vmax.f32 %v1965, %v1973
    %v1982 = vmax.f32 %v1966, %v1974
    %v1983 = vmax.f32 %v1967, %v1975
    %v1984 = vmax.f32 %v1968, %v1976
    %v1985 = vmax.f32 %v1969, %v1977
    %v1986 = vld [vmem:[%s5] sm:$0x3]
    %v1987 = vld [vmem:[%s6] sm:$0xff]
    %v1988 = vld [vmem:[%s7] sm:$0x1]
    %v1990 = vlaneseq
    %v1991 = vshrl.u32 %v1990, 7
    %v1992 = vsub.s32 0, %v1991
    %v1993 = vrot.slane %v1988, %v1992
    %vm1995 = vcmask 64512
    %v1997 = vsel %vm1995, %v1986, 0
    %1999 = vmatprep.subr.mxu0 0.0
    %2000 = vmatpush1.msra.mxu0 %v1987
    %2001 = vmatprep.subr.mxu0 0.0
    %2002 = vmatpush1.msra.mxu0 0.0
    %2003 = vmatprep.subr.mxu0 0.0
    %2004 = vmatpush1.msra.mxu0 0.0
    %2005 = vmatprep.subr.mxu0 0.0
    %2006 = vmatpush1.msra.mxu0 0.0
    %2007 = vmatprep.subr.mxu0 0.0
    %2008 = vmatpush1.msra.mxu0 0.0
    %2009 = vmatprep.subr.mxu0 0.0
    %2010 = vmatpush1.msra.mxu0 0.0
    %2011 = vmatprep.subr.mxu0 0.0
    %2012 = vmatpush1.msra.mxu0 0.0
    %2013 = vmatprep.subr.mxu0 0.0
    %2014 = vmatpush1.msra.mxu0 0.0
    %2015 = vmatprep.subr.mxu0 0.0
    %2016 = vmatpush1.msra.mxu0 0.0
    %2017 = vmatprep.subr.mxu0 0.0
    %2018 = vmatpush1.msra.mxu0 0.0
    %2019 = vmatprep.subr.mxu0 0.0
    %2020 = vmatpush1.msra.mxu0 0.0
    %2021 = vmatprep.subr.mxu0 0.0
    %2022 = vmatpush1.msra.mxu0 0.0
    %2023 = vmatprep.subr.mxu0 0.0
    %2024 = vmatpush1.msra.mxu0 0.0
    %2025 = vmatprep.subr.mxu0 0.0
    %2026 = vmatpush1.msra.mxu0 0.0
    %2027 = vmatprep.subr.mxu0 0.0
    %2028 = vmatpush1.msra.mxu0 0.0
    %2029 = vmatprep.subr.mxu0 0.0
    %2030 = vmatpush1.msra.mxu0 0.0
    %2031 = vmatprep.subr.mxu0 0.0
    %2032 = vmatpush1.msra.mxu0 0.0
    %2033 = vmatprep.subr.mxu0 0.0
    %2034 = vmatpush1.msra.mxu0 0.0
    %2035 = vmatprep.subr.mxu0 0.0
    %2036 = vmatpush1.msra.mxu0 0.0
    %2037 = vmatprep.subr.mxu0 0.0
    %2038 = vmatpush1.msra.mxu0 0.0
    %2039 = vmatprep.subr.mxu0 0.0
    %2040 = vmatpush1.msra.mxu0 0.0
    %2041 = vmatprep.subr.mxu0 0.0
    %2042 = vmatpush1.msra.mxu0 0.0
    %2043 = vmatprep.subr.mxu0 0.0
    %2044 = vmatpush1.msra.mxu0 0.0
    %2045 = vmatprep.subr.mxu0 0.0
    %2046 = vmatpush1.msra.mxu0 0.0
    %2047 = vmatprep.subr.mxu0 0.0
    %2048 = vmatpush1.msra.mxu0 0.0
    %2049 = vmatprep.subr.mxu0 0.0
    %2050 = vmatpush1.msra.mxu0 0.0
    %2051 = vmatprep.subr.mxu0 0.0
    %2052 = vmatpush1.msra.mxu0 0.0
    %2053 = vmatprep.subr.mxu0 0.0
    %2054 = vmatpush1.msra.mxu0 0.0
    %2055 = vmatprep.subr.mxu0 0.0
    %2056 = vmatpush1.msra.mxu0 0.0
    %2057 = vmatprep.subr.mxu0 0.0
    %2058 = vmatpush1.msra.mxu0 0.0
    %2059 = vmatprep.subr.mxu0 0.0
    %2060 = vmatpush1.msra.mxu0 0.0
    %2061 = vmatprep.subr.mxu0 0.0
    %2062 = vmatpush1.msra.mxu0 0.0
    %2063 = vmatprep.mubr.f32.mxu0 0.0
    %2064 = vmatmul.mubr.f32.gmra.mrb[0].mxu0 %v1997
    %v2065 = vpop.f32.mrb[0].mxu0
    %v2066 = vadd.f32 %v1993, %v2065
    %v2067 = vpop.f32.mrb[0].mxu0
    %2068 = vdwg.mxu0
    %v2069 = vmul.f32 %v2066, 0.01
    %v2070 = vmax.f32 %v2066, %v2069
    %v2071 = vld [vmem:[%s8] sm:$0xff]
    %v2072 = vld [vmem:[%s8 + $0x8] sm:$0xff]
    %v2073 = vld [vmem:[%s9] sm:$0x1]
    %v2075 = vlaneseq
    %v2076 = vshrl.u32 %v2075, 7
    %v2077 = vsub.s32 0, %v2076
    %v2078 = vrot.slane %v2073, %v2077
    %vm2080 = vcmask 130048
    %v2082 = vsel %vm2080, %v2070, 0
    %2084 = vmatprep.subr.mxu0 0.0
    %2085 = vmatpush1.msra.mxu0 %v2071
    %2086 = vmatprep.subr.mxu0 0.0
    %2087 = vmatpush1.msra.mxu0 %v2072
    %2088 = vmatprep.subr.mxu0 0.0
    %2089 = vmatpush1.msra.mxu0 0.0
    %2090 = vmatprep.subr.mxu0 0.0
    %2091 = vmatpush1.msra.mxu0 0.0
    %2092 = vmatprep.subr.mxu0 0.0
    %2093 = vmatpush1.msra.mxu0 0.0
    %2094 = vmatprep.subr.mxu0 0.0
    %2095 = vmatpush1.msra.mxu0 0.0
    %2096 = vmatprep.subr.mxu0 0.0
    %2097 = vmatpush1.msra.mxu0 0.0
    %2098 = vmatprep.subr.mxu0 0.0
    %2099 = vmatpush1.msra.mxu0 0.0
    %2100 = vmatprep.subr.mxu0 0.0
    %2101 = vmatpush1.msra.mxu0 0.0
    %2102 = vmatprep.subr.mxu0 0.0
    %2103 = vmatpush1.msra.mxu0 0.0
    %2104 = vmatprep.subr.mxu0 0.0
    %2105 = vmatpush1.msra.mxu0 0.0
    %2106 = vmatprep.subr.mxu0 0.0
    %2107 = vmatpush1.msra.mxu0 0.0
    %2108 = vmatprep.subr.mxu0 0.0
    %2109 = vmatpush1.msra.mxu0 0.0
    %2110 = vmatprep.subr.mxu0 0.0
    %2111 = vmatpush1.msra.mxu0 0.0
    %2112 = vmatprep.subr.mxu0 0.0
    %2113 = vmatpush1.msra.mxu0 0.0
    %2114 = vmatprep.subr.mxu0 0.0
    %2115 = vmatpush1.msra.mxu0 0.0
    %2116 = vmatprep.subr.mxu0 0.0
    %2117 = vmatpush1.msra.mxu0 0.0
    %2118 = vmatprep.subr.mxu0 0.0
    %2119 = vmatpush1.msra.mxu0 0.0
    %2120 = vmatprep.subr.mxu0 0.0
    %2121 = vmatpush1.msra.mxu0 0.0
    %2122 = vmatprep.subr.mxu0 0.0
    %2123 = vmatpush1.msra.mxu0 0.0
    %2124 = vmatprep.subr.mxu0 0.0
    %2125 = vmatpush1.msra.mxu0 0.0
    %2126 = vmatprep.subr.mxu0 0.0
    %2127 = vmatpush1.msra.mxu0 0.0
    %2128 = vmatprep.subr.mxu0 0.0
    %2129 = vmatpush1.msra.mxu0 0.0
    %2130 = vmatprep.subr.mxu0 0.0
    %2131 = vmatpush1.msra.mxu0 0.0
    %2132 = vmatprep.subr.mxu0 0.0
    %2133 = vmatpush1.msra.mxu0 0.0
    %2134 = vmatprep.subr.mxu0 0.0
    %2135 = vmatpush1.msra.mxu0 0.0
    %2136 = vmatprep.subr.mxu0 0.0
    %2137 = vmatpush1.msra.mxu0 0.0
    %2138 = vmatprep.subr.mxu0 0.0
    %2139 = vmatpush1.msra.mxu0 0.0
    %2140 = vmatprep.subr.mxu0 0.0
    %2141 = vmatpush1.msra.mxu0 0.0
    %2142 = vmatprep.subr.mxu0 0.0
    %2143 = vmatpush1.msra.mxu0 0.0
    %2144 = vmatprep.subr.mxu0 0.0
    %2145 = vmatpush1.msra.mxu0 0.0
    %2146 = vmatprep.subr.mxu0 0.0
    %2147 = vmatpush1.msra.mxu0 0.0
    %2148 = vmatprep.mubr.f32.mxu0 0.0
    %2149 = vmatmul.mubr.f32.gmra.mrb[0].mxu0 %v2082
    %v2150 = vpop.f32.mrb[0].mxu0
    %v2151 = vadd.f32 %v2078, %v2150
    %v2152 = vpop.f32.mrb[0].mxu0
    %2153 = vdwg.mxu0
    %v2154 = vmul.f32 %v2151, 0.01
    %v2155 = vmax.f32 %v2151, %v2154
    %v2156 = vld [vmem:[%s11] sm:$0xf]
    %v2157 = vld [vmem:[%s12] sm:$0x1]
    %v2159 = vlaneseq
    %v2160 = vshrl.u32 %v2159, 7
    %v2161 = vsub.s32 0, %v2160
    %v2162 = vrot.slane %v2157, %v2161
    %vm2164 = vcmask 31744
    %v2166 = vsel %vm2164, %v2155, 0
    %vm2168 = vcmask 1043456
    %v2170 = vsel %vm2168, %v2156, 0
    %2172 = vmatprep.subr.mxu0 0.0
    %2173 = vmatpush1.msra.mxu0 %v2170
    %2174 = vmatprep.subr.mxu0 0.0
    %2175 = vmatpush1.msra.mxu0 0.0
    %2176 = vmatprep.subr.mxu0 0.0
    %2177 = vmatpush1.msra.mxu0 0.0
    %2178 = vmatprep.subr.mxu0 0.0
    %2179 = vmatpush1.msra.mxu0 0.0
    %2180 = vmatprep.subr.mxu0 0.0
    %2181 = vmatpush1.msra.mxu0 0.0
    %2182 = vmatprep.subr.mxu0 0.0
    %2183 = vmatpush1.msra.mxu0 0.0
    %2184 = vmatprep.subr.mxu0 0.0
    %2185 = vmatpush1.msra.mxu0 0.0
    %2186 = vmatprep.subr.mxu0 0.0
    %2187 = vmatpush1.msra.mxu0 0.0
    %2188 = vmatprep.subr.mxu0 0.0
    %2189 = vmatpush1.msra.mxu0 0.0
    %2190 = vmatprep.subr.mxu0 0.0
    %2191 = vmatpush1.msra.mxu0 0.0
    %2192 = vmatprep.subr.mxu0 0.0
    %2193 = vmatpush1.msra.mxu0 0.0
    %2194 = vmatprep.subr.mxu0 0.0
    %2195 = vmatpush1.msra.mxu0 0.0
    %2196 = vmatprep.subr.mxu0 0.0
    %2197 = vmatpush1.msra.mxu0 0.0
    %2198 = vmatprep.subr.mxu0 0.0
    %2199 = vmatpush1.msra.mxu0 0.0
    %2200 = vmatprep.subr.mxu0 0.0
    %2201 = vmatpush1.msra.mxu0 0.0
    %2202 = vmatprep.subr.mxu0 0.0
    %2203 = vmatpush1.msra.mxu0 0.0
    %2204 = vmatprep.subr.mxu0 0.0
    %2205 = vmatpush1.msra.mxu0 0.0
    %2206 = vmatprep.subr.mxu0 0.0
    %2207 = vmatpush1.msra.mxu0 0.0
    %2208 = vmatprep.subr.mxu0 0.0
    %2209 = vmatpush1.msra.mxu0 0.0
    %2210 = vmatprep.subr.mxu0 0.0
    %2211 = vmatpush1.msra.mxu0 0.0
    %2212 = vmatprep.subr.mxu0 0.0
    %2213 = vmatpush1.msra.mxu0 0.0
    %2214 = vmatprep.subr.mxu0 0.0
    %2215 = vmatpush1.msra.mxu0 0.0
    %2216 = vmatprep.subr.mxu0 0.0
    %2217 = vmatpush1.msra.mxu0 0.0
    %2218 = vmatprep.subr.mxu0 0.0
    %2219 = vmatpush1.msra.mxu0 0.0
    %2220 = vmatprep.subr.mxu0 0.0
    %2221 = vmatpush1.msra.mxu0 0.0
    %2222 = vmatprep.subr.mxu0 0.0
    %2223 = vmatpush1.msra.mxu0 0.0
    %2224 = vmatprep.subr.mxu0 0.0
    %2225 = vmatpush1.msra.mxu0 0.0
    %2226 = vmatprep.subr.mxu0 0.0
    %2227 = vmatpush1.msra.mxu0 0.0
    %2228 = vmatprep.subr.mxu0 0.0
    %2229 = vmatpush1.msra.mxu0 0.0
    %2230 = vmatprep.subr.mxu0 0.0
    %2231 = vmatpush1.msra.mxu0 0.0
    %2232 = vmatprep.subr.mxu0 0.0
    %2233 = vmatpush1.msra.mxu0 0.0
    %2234 = vmatprep.subr.mxu0 0.0
    %2235 = vmatpush1.msra.mxu0 0.0
    %2236 = vmatprep.mubr.f32.mxu0 0.0
    %2237 = vmatmul.mubr.f32.gmra.mrb[0].mxu0 %v2166
    %v2238 = vpop.f32.mrb[0].mxu0
    %v2239 = vadd.f32 %v2162, %v2238
    %v2240 = vpop.f32.mrb[0].mxu0
    %2241 = vdwg.mxu0
    %v2242 = vld [vmem:[%s10] sm:$0xff]
    %v2243 = vld [vmem:[%s10 + $0x8] sm:$0xff]
    %v2244 = vld [vmem:[%s10 + $0x10] sm:$0xff]
    %v2245 = vld [vmem:[%s10 + $0x18] sm:$0xff]
    %v2246 = vld [vmem:[%s10 + $0x20] sm:$0xff]
    %v2247 = vld [vmem:[%s10 + $0x28] sm:$0xff]
    %v2248 = vld [vmem:[%s10 + $0x30] sm:$0xff]
    %v2249 = vld [vmem:[%s10 + $0x38] sm:$0xff]
    %v2252 = vrot.slane %v1982, 7
    %vm2253 = vcmask 1041409
    %v2254 = vsel %vm2253, %v2252, %v1978
    %v2255 = vsel %vm775, %v2254, 0
    %2257 = vmatprep.subr.mxu0 0.0
    %2258 = vmatpush1.msra.mxu0 %v2242
    %2259 = vmatprep.subr.mxu0 0.0
    %2260 = vmatpush1.msra.mxu0 %v2243
    %2261 = vmatprep.subr.mxu0 0.0
    %2262 = vmatpush1.msra.mxu0 %v2244
    %2263 = vmatprep.subr.mxu0 0.0
    %2264 = vmatpush1.msra.mxu0 %v2245
    %2265 = vmatprep.subr.mxu0 0.0
    %2266 = vmatpush1.msra.mxu0 %v2246
    %2267 = vmatprep.subr.mxu0 0.0
    %2268 = vmatpush1.msra.mxu0 %v2247
    %2269 = vmatprep.subr.mxu0 0.0
    %2270 = vmatpush1.msra.mxu0 %v2248
    %2271 = vmatprep.subr.mxu0 0.0
    %2272 = vmatpush1.msra.mxu0 %v2249
    %2273 = vmatprep.subr.mxu0 0.0
    %2274 = vmatpush1.msra.mxu0 0.0
    %2275 = vmatprep.subr.mxu0 0.0
    %2276 = vmatpush1.msra.mxu0 0.0
    %2277 = vmatprep.subr.mxu0 0.0
    %2278 = vmatpush1.msra.mxu0 0.0
    %2279 = vmatprep.subr.mxu0 0.0
    %2280 = vmatpush1.msra.mxu0 0.0
    %2281 = vmatprep.subr.mxu0 0.0
    %2282 = vmatpush1.msra.mxu0 0.0
    %2283 = vmatprep.subr.mxu0 0.0
    %2284 = vmatpush1.msra.mxu0 0.0
    %2285 = vmatprep.subr.mxu0 0.0
    %2286 = vmatpush1.msra.mxu0 0.0
    %2287 = vmatprep.subr.mxu0 0.0
    %2288 = vmatpush1.msra.mxu0 0.0
    %2289 = vmatprep.subr.mxu0 0.0
    %2290 = vmatpush1.msra.mxu0 0.0
    %2291 = vmatprep.subr.mxu0 0.0
    %2292 = vmatpush1.msra.mxu0 0.0
    %2293 = vmatprep.subr.mxu0 0.0
    %2294 = vmatpush1.msra.mxu0 0.0
    %2295 = vmatprep.subr.mxu0 0.0
    %2296 = vmatpush1.msra.mxu0 0.0
    %2297 = vmatprep.subr.mxu0 0.0
    %2298 = vmatpush1.msra.mxu0 0.0
    %2299 = vmatprep.subr.mxu0 0.0
    %2300 = vmatpush1.msra.mxu0 0.0
    %2301 = vmatprep.subr.mxu0 0.0
    %2302 = vmatpush1.msra.mxu0 0.0
    %2303 = vmatprep.subr.mxu0 0.0
    %2304 = vmatpush1.msra.mxu0 0.0
    %2305 = vmatprep.subr.mxu0 0.0
    %2306 = vmatpush1.msra.mxu0 0.0
    %2307 = vmatprep.subr.mxu0 0.0
    %2308 = vmatpush1.msra.mxu0 0.0
    %2309 = vmatprep.subr.mxu0 0.0
    %2310 = vmatpush1.msra.mxu0 0.0
    %2311 = vmatprep.subr.mxu0 0.0
    %2312 = vmatpush1.msra.mxu0 0.0
    %2313 = vmatprep.subr.mxu0 0.0
    %2314 = vmatpush1.msra.mxu0 0.0
    %2315 = vmatprep.subr.mxu0 0.0
    %2316 = vmatpush1.msra.mxu0 0.0
    %2317 = vmatprep.subr.mxu0 0.0
    %2318 = vmatpush1.msra.mxu0 0.0
    %2319 = vmatprep.subr.mxu0 0.0
    %2320 = vmatpush1.msra.mxu0 0.0
    %2321 = vmatprep.mubr.f32.mxu0 0.0
    %2322 = vmatmul.mubr.f32.gmra.mrb[0].mxu0 %v2255
    %v2323 = vpop.f32.mrb[0].mxu0
    %v2324 = vadd.f32 0.0, %v2323
    %v2325 = vpop.f32.mrb[0].mxu0
    %2326 = vdwg.mxu0
    %v2327 = vadd.f32 %v2239, %v2324
    %s2328 = scalar_lea.vmem %s10, 64
    %v2329 = vld [vmem:[%s2328] sm:$0xff]
    %v2330 = vld [vmem:[%s2328 + $0x8] sm:$0xff]
    %v2331 = vld [vmem:[%s2328 + $0x10] sm:$0xff]
    %v2332 = vld [vmem:[%s2328 + $0x18] sm:$0xff]
    %v2333 = vld [vmem:[%s2328 + $0x20] sm:$0xff]
    %v2334 = vld [vmem:[%s2328 + $0x28] sm:$0xff]
    %v2335 = vld [vmem:[%s2328 + $0x30] sm:$0xff]
    %v2336 = vld [vmem:[%s2328 + $0x38] sm:$0xff]
    %v2337 = vrot.slane %v1978, 1
    %v2338 = vsel %vm2253, %v1982, %v2337
    %v2339 = vsel %vm775, %v2338, 0
    %2341 = vmatprep.subr.mxu0 0.0
    %2342 = vmatpush1.msra.mxu0 %v2329
    %2343 = vmatprep.subr.mxu0 0.0
    %2344 = vmatpush1.msra.mxu0 %v2330
    %2345 = vmatprep.subr.mxu0 0.0
    %2346 = vmatpush1.msra.mxu0 %v2331
    %2347 = vmatprep.subr.mxu0 0.0
    %2348 = vmatpush1.msra.mxu0 %v2332
    %2349 = vmatprep.subr.mxu0 0.0
    %2350 = vmatpush1.msra.mxu0 %v2333
    %2351 = vmatprep.subr.mxu0 0.0
    %2352 = vmatpush1.msra.mxu0 %v2334
    %2353 = vmatprep.subr.mxu0 0.0
    %2354 = vmatpush1.msra.mxu0 %v2335
    %2355 = vmatprep.subr.mxu0 0.0
    %2356 = vmatpush1.msra.mxu0 %v2336
    %2357 = vmatprep.subr.mxu0 0.0
    %2358 = vmatpush1.msra.mxu0 0.0
    %2359 = vmatprep.subr.mxu0 0.0
    %2360 = vmatpush1.msra.mxu0 0.0
    %2361 = vmatprep.subr.mxu0 0.0
    %2362 = vmatpush1.msra.mxu0 0.0
    %2363 = vmatprep.subr.mxu0 0.0
    %2364 = vmatpush1.msra.mxu0 0.0
    %2365 = vmatprep.subr.mxu0 0.0
    %2366 = vmatpush1.msra.mxu0 0.0
    %2367 = vmatprep.subr.mxu0 0.0
    %2368 = vmatpush1.msra.mxu0 0.0
    %2369 = vmatprep.subr.mxu0 0.0
    %2370 = vmatpush1.msra.mxu0 0.0
    %2371 = vmatprep.subr.mxu0 0.0
    %2372 = vmatpush1.msra.mxu0 0.0
    %2373 = vmatprep.subr.mxu0 0.0
    %2374 = vmatpush1.msra.mxu0 0.0
    %2375 = vmatprep.subr.mxu0 0.0
    %2376 = vmatpush1.msra.mxu0 0.0
    %2377 = vmatprep.subr.mxu0 0.0
    %2378 = vmatpush1.msra.mxu0 0.0
    %2379 = vmatprep.subr.mxu0 0.0
    %2380 = vmatpush1.msra.mxu0 0.0
    %2381 = vmatprep.subr.mxu0 0.0
    %2382 = vmatpush1.msra.mxu0 0.0
    %2383 = vmatprep.subr.mxu0 0.0
    %2384 = vmatpush1.msra.mxu0 0.0
    %2385 = vmatprep.subr.mxu0 0.0
    %2386 = vmatpush1.msra.mxu0 0.0
    %2387 = vmatprep.subr.mxu0 0.0
    %2388 = vmatpush1.msra.mxu0 0.0
    %2389 = vmatprep.subr.mxu0 0.0
    %2390 = vmatpush1.msra.mxu0 0.0
    %2391 = vmatprep.subr.mxu0 0.0
    %2392 = vmatpush1.msra.mxu0 0.0
    %2393 = vmatprep.subr.mxu0 0.0
    %2394 = vmatpush1.msra.mxu0 0.0
    %2395 = vmatprep.subr.mxu0 0.0
    %2396 = vmatpush1.msra.mxu0 0.0
    %2397 = vmatprep.subr.mxu0 0.0
    %2398 = vmatpush1.msra.mxu0 0.0
    %2399 = vmatprep.subr.mxu0 0.0
    %2400 = vmatpush1.msra.mxu0 0.0
    %2401 = vmatprep.subr.mxu0 0.0
    %2402 = vmatpush1.msra.mxu0 0.0
    %2403 = vmatprep.subr.mxu0 0.0
    %2404 = vmatpush1.msra.mxu0 0.0
    %2405 = vmatprep.mubr.f32.mxu0 0.0
    %2406 = vmatmul.mubr.f32.gmra.mrb[0].mxu0 %v2339
    %v2407 = vpop.f32.mrb[0].mxu0
    %v2408 = vadd.f32 0.0, %v2407
    %v2409 = vpop.f32.mrb[0].mxu0
    %2410 = vdwg.mxu0
    %v2411 = vadd.f32 %v2327, %v2408
    %s2412 = scalar_lea.vmem %s10, 128
    %v2413 = vld [vmem:[%s2412] sm:$0xff]
    %v2414 = vld [vmem:[%s2412 + $0x8] sm:$0xff]
    %v2415 = vld [vmem:[%s2412 + $0x10] sm:$0xff]
    %v2416 = vld [vmem:[%s2412 + $0x18] sm:$0xff]
    %v2417 = vld [vmem:[%s2412 + $0x20] sm:$0xff]
    %v2418 = vld [vmem:[%s2412 + $0x28] sm:$0xff]
    %v2419 = vld [vmem:[%s2412 + $0x30] sm:$0xff]
    %v2420 = vld [vmem:[%s2412 + $0x38] sm:$0xff]
    %v2421 = vrot.slane %v1978, 2
    %v2422 = vrot.slane %v1982, 1
    %v2423 = vsel %vm2253, %v2422, %v2421
    %v2424 = vsel %vm775, %v2423, 0
    %2426 = vmatprep.subr.mxu0 0.0
    %2427 = vmatpush1.msra.mxu0 %v2413
    %2428 = vmatprep.subr.mxu0 0.0
    %2429 = vmatpush1.msra.mxu0 %v2414
    %2430 = vmatprep.subr.mxu0 0.0
    %2431 = vmatpush1.msra.mxu0 %v2415
    %2432 = vmatprep.subr.mxu0 0.0
    %2433 = vmatpush1.msra.mxu0 %v2416
    %2434 = vmatprep.subr.mxu0 0.0
    %2435 = vmatpush1.msra.mxu0 %v2417
    %2436 = vmatprep.subr.mxu0 0.0
    %2437 = vmatpush1.msra.mxu0 %v2418
    %2438 = vmatprep.subr.mxu0 0.0
    %2439 = vmatpush1.msra.mxu0 %v2419
    %2440 = vmatprep.subr.mxu0 0.0
    %2441 = vmatpush1.msra.mxu0 %v2420
    %2442 = vmatprep.subr.mxu0 0.0
    %2443 = vmatpush1.msra.mxu0 0.0
    %2444 = vmatprep.subr.mxu0 0.0
    %2445 = vmatpush1.msra.mxu0 0.0
    %2446 = vmatprep.subr.mxu0 0.0
    %2447 = vmatpush1.msra.mxu0 0.0
    %2448 = vmatprep.subr.mxu0 0.0
    %2449 = vmatpush1.msra.mxu0 0.0
    %2450 = vmatprep.subr.mxu0 0.0
    %2451 = vmatpush1.msra.mxu0 0.0
    %2452 = vmatprep.subr.mxu0 0.0
    %2453 = vmatpush1.msra.mxu0 0.0
    %2454 = vmatprep.subr.mxu0 0.0
    %2455 = vmatpush1.msra.mxu0 0.0
    %2456 = vmatprep.subr.mxu0 0.0
    %2457 = vmatpush1.msra.mxu0 0.0
    %2458 = vmatprep.subr.mxu0 0.0
    %2459 = vmatpush1.msra.mxu0 0.0
    %2460 = vmatprep.subr.mxu0 0.0
    %2461 = vmatpush1.msra.mxu0 0.0
    %2462 = vmatprep.subr.mxu0 0.0
    %2463 = vmatpush1.msra.mxu0 0.0
    %2464 = vmatprep.subr.mxu0 0.0
    %2465 = vmatpush1.msra.mxu0 0.0
    %2466 = vmatprep.subr.mxu0 0.0
    %2467 = vmatpush1.msra.mxu0 0.0
    %2468 = vmatprep.subr.mxu0 0.0
    %2469 = vmatpush1.msra.mxu0 0.0
    %2470 = vmatprep.subr.mxu0 0.0
    %2471 = vmatpush1.msra.mxu0 0.0
    %2472 = vmatprep.subr.mxu0 0.0
    %2473 = vmatpush1.msra.mxu0 0.0
    %2474 = vmatprep.subr.mxu0 0.0
    %2475 = vmatpush1.msra.mxu0 0.0
    %2476 = vmatprep.subr.mxu0 0.0
    %2477 = vmatpush1.msra.mxu0 0.0
    %2478 = vmatprep.subr.mxu0 0.0
    %2479 = vmatpush1.msra.mxu0 0.0
    %2480 = vmatprep.subr.mxu0 0.0
    %2481 = vmatpush1.msra.mxu0 0.0
    %2482 = vmatprep.subr.mxu0 0.0
    %2483 = vmatpush1.msra.mxu0 0.0
    %2484 = vmatprep.subr.mxu0 0.0
    %2485 = vmatpush1.msra.mxu0 0.0
    %2486 = vmatprep.subr.mxu0 0.0
    %2487 = vmatpush1.msra.mxu0 0.0
    %2488 = vmatprep.subr.mxu0 0.0
    %2489 = vmatpush1.msra.mxu0 0.0
    %2490 = vmatprep.mubr.f32.mxu0 0.0
    %2491 = vmatmul.mubr.f32.gmra.mrb[0].mxu0 %v2424
    %v2492 = vpop.f32.mrb[0].mxu0
    %v2493 = vadd.f32 0.0, %v2492
    %v2494 = vpop.f32.mrb[0].mxu0
    %2495 = vdwg.mxu0
    %v2496 = vadd.f32 %v2411, %v2493
    %s2497 = scalar_lea.vmem %s10, 192
    %v2498 = vld [vmem:[%s2497] sm:$0xff]
    %v2499 = vld [vmem:[%s2497 + $0x8] sm:$0xff]
    %v2500 = vld [vmem:[%s2497 + $0x10] sm:$0xff]
    %v2501 = vld [vmem:[%s2497 + $0x18] sm:$0xff]
    %v2502 = vld [vmem:[%s2497 + $0x20] sm:$0xff]
    %v2503 = vld [vmem:[%s2497 + $0x28] sm:$0xff]
    %v2504 = vld [vmem:[%s2497 + $0x30] sm:$0xff]
    %v2505 = vld [vmem:[%s2497 + $0x38] sm:$0xff]
    %v2506 = vrot.slane %v1978, 3
    %v2507 = vrot.slane %v1982, 2
    %v2508 = vsel %vm2253, %v2507, %v2506
    %v2509 = vsel %vm775, %v2508, 0
    %2511 = vmatprep.subr.mxu0 0.0
    %2512 = vmatpush1.msra.mxu0 %v2498
    %2513 = vmatprep.subr.mxu0 0.0
    %2514 = vmatpush1.msra.mxu0 %v2499
    %2515 = vmatprep.subr.mxu0 0.0
    %2516 = vmatpush1.msra.mxu0 %v2500
    %2517 = vmatprep.subr.mxu0 0.0
    %2518 = vmatpush1.msra.mxu0 %v2501
    %2519 = vmatprep.subr.mxu0 0.0
    %2520 = vmatpush1.msra.mxu0 %v2502
    %2521 = vmatprep.subr.mxu0 0.0
    %2522 = vmatpush1.msra.mxu0 %v2503
    %2523 = vmatprep.subr.mxu0 0.0
    %2524 = vmatpush1.msra.mxu0 %v2504
    %2525 = vmatprep.subr.mxu0 0.0
    %2526 = vmatpush1.msra.mxu0 %v2505
    %2527 = vmatprep.subr.mxu0 0.0
    %2528 = vmatpush1.msra.mxu0 0.0
    %2529 = vmatprep.subr.mxu0 0.0
    %2530 = vmatpush1.msra.mxu0 0.0
    %2531 = vmatprep.subr.mxu0 0.0
    %2532 = vmatpush1.msra.mxu0 0.0
    %2533 = vmatprep.subr.mxu0 0.0
    %2534 = vmatpush1.msra.mxu0 0.0
    %2535 = vmatprep.subr.mxu0 0.0
    %2536 = vmatpush1.msra.mxu0 0.0
    %2537 = vmatprep.subr.mxu0 0.0
    %2538 = vmatpush1.msra.mxu0 0.0
    %2539 = vmatprep.subr.mxu0 0.0
    %2540 = vmatpush1.msra.mxu0 0.0
    %2541 = vmatprep.subr.mxu0 0.0
    %2542 = vmatpush1.msra.mxu0 0.0
    %2543 = vmatprep.subr.mxu0 0.0
    %2544 = vmatpush1.msra.mxu0 0.0
    %2545 = vmatprep.subr.mxu0 0.0
    %2546 = vmatpush1.msra.mxu0 0.0
    %2547 = vmatprep.subr.mxu0 0.0
    %2548 = vmatpush1.msra.mxu0 0.0
    %2549 = vmatprep.subr.mxu0 0.0
    %2550 = vmatpush1.msra.mxu0 0.0
    %2551 = vmatprep.subr.mxu0 0.0
    %2552 = vmatpush1.msra.mxu0 0.0
    %2553 = vmatprep.subr.mxu0 0.0
    %2554 = vmatpush1.msra.mxu0 0.0
    %2555 = vmatprep.subr.mxu0 0.0
    %2556 = vmatpush1.msra.mxu0 0.0
    %2557 = vmatprep.subr.mxu0 0.0
    %2558 = vmatpush1.msra.mxu0 0.0
    %2559 = vmatprep.subr.mxu0 0.0
    %2560 = vmatpush1.msra.mxu0 0.0
    %2561 = vmatprep.subr.mxu0 0.0
    %2562 = vmatpush1.msra.mxu0 0.0
    %2563 = vmatprep.subr.mxu0 0.0
    %2564 = vmatpush1.msra.mxu0 0.0
    %2565 = vmatprep.subr.mxu0 0.0
    %2566 = vmatpush1.msra.mxu0 0.0
    %2567 = vmatprep.subr.mxu0 0.0
    %2568 = vmatpush1.msra.mxu0 0.0
    %2569 = vmatprep.subr.mxu0 0.0
    %2570 = vmatpush1.msra.mxu0 0.0
    %2571 = vmatprep.subr.mxu0 0.0
    %2572 = vmatpush1.msra.mxu0 0.0
    %2573 = vmatprep.subr.mxu0 0.0
    %2574 = vmatpush1.msra.mxu0 0.0
    %2575 = vmatprep.mubr.f32.mxu0 0.0
    %2576 = vmatmul.mubr.f32.gmra.mrb[0].mxu0 %v2509
    %v2577 = vpop.f32.mrb[0].mxu0
    %v2578 = vadd.f32 0.0, %v2577
    %v2579 = vpop.f32.mrb[0].mxu0
    %2580 = vdwg.mxu0
    %v2581 = vadd.f32 %v2496, %v2578
    %s2582 = scalar_lea.vmem %s10, 256
    %v2583 = vld [vmem:[%s2582] sm:$0xff]
    %v2584 = vld [vmem:[%s2582 + $0x8] sm:$0xff]
    %v2585 = vld [vmem:[%s2582 + $0x10] sm:$0xff]
    %v2586 = vld [vmem:[%s2582 + $0x18] sm:$0xff]
    %v2587 = vld [vmem:[%s2582 + $0x20] sm:$0xff]
    %v2588 = vld [vmem:[%s2582 + $0x28] sm:$0xff]
    %v2589 = vld [vmem:[%s2582 + $0x30] sm:$0xff]
    %v2590 = vld [vmem:[%s2582 + $0x38] sm:$0xff]
    %v2593 = vrot.slane %v1983, 7
    %v2594 = vsel %vm2253, %v2593, %v1979
    %v2595 = vsel %vm775, %v2594, 0
    %2597 = vmatprep.subr.mxu0 0.0
    %2598 = vmatpush1.msra.mxu0 %v2583
    %2599 = vmatprep.subr.mxu0 0.0
    %2600 = vmatpush1.msra.mxu0 %v2584
    %2601 = vmatprep.subr.mxu0 0.0
    %2602 = vmatpush1.msra.mxu0 %v2585
    %2603 = vmatprep.subr.mxu0 0.0
    %2604 = vmatpush1.msra.mxu0 %v2586
    %2605 = vmatprep.subr.mxu0 0.0
    %2606 = vmatpush1.msra.mxu0 %v2587
    %2607 = vmatprep.subr.mxu0 0.0
    %2608 = vmatpush1.msra.mxu0 %v2588
    %2609 = vmatprep.subr.mxu0 0.0
    %2610 = vmatpush1.msra.mxu0 %v2589
    %2611 = vmatprep.subr.mxu0 0.0
    %2612 = vmatpush1.msra.mxu0 %v2590
    %2613 = vmatprep.subr.mxu0 0.0
    %2614 = vmatpush1.msra.mxu0 0.0
    %2615 = vmatprep.subr.mxu0 0.0
    %2616 = vmatpush1.msra.mxu0 0.0
    %2617 = vmatprep.subr.mxu0 0.0
    %2618 = vmatpush1.msra.mxu0 0.0
    %2619 = vmatprep.subr.mxu0 0.0
    %2620 = vmatpush1.msra.mxu0 0.0
    %2621 = vmatprep.subr.mxu0 0.0
    %2622 = vmatpush1.msra.mxu0 0.0
    %2623 = vmatprep.subr.mxu0 0.0
    %2624 = vmatpush1.msra.mxu0 0.0
    %2625 = vmatprep.subr.mxu0 0.0
    %2626 = vmatpush1.msra.mxu0 0.0
    %2627 = vmatprep.subr.mxu0 0.0
    %2628 = vmatpush1.msra.mxu0 0.0
    %2629 = vmatprep.subr.mxu0 0.0
    %2630 = vmatpush1.msra.mxu0 0.0
    %2631 = vmatprep.subr.mxu0 0.0
    %2632 = vmatpush1.msra.mxu0 0.0
    %2633 = vmatprep.subr.mxu0 0.0
    %2634 = vmatpush1.msra.mxu0 0.0
    %2635 = vmatprep.subr.mxu0 0.0
    %2636 = vmatpush1.msra.mxu0 0.0
    %2637 = vmatprep.subr.mxu0 0.0
    %2638 = vmatpush1.msra.mxu0 0.0
    %2639 = vmatprep.subr.mxu0 0.0
    %2640 = vmatpush1.msra.mxu0 0.0
    %2641 = vmatprep.subr.mxu0 0.0
    %2642 = vmatpush1.msra.mxu0 0.0
    %2643 = vmatprep.subr.mxu0 0.0
    %2644 = vmatpush1.msra.mxu0 0.0
    %2645 = vmatprep.subr.mxu0 0.0
    %2646 = vmatpush1.msra.mxu0 0.0
    %2647 = vmatprep.subr.mxu0 0.0
    %2648 = vmatpush1.msra.mxu0 0.0
    %2649 = vmatprep.subr.mxu0 0.0
    %2650 = vmatpush1.msra.mxu0 0.0
    %2651 = vmatprep.subr.mxu0 0.0
    %2652 = vmatpush1.msra.mxu0 0.0
    %2653 = vmatprep.subr.mxu0 0.0
    %2654 = vmatpush1.msra.mxu0 0.0
    %2655 = vmatprep.subr.mxu0 0.0
    %2656 = vmatpush1.msra.mxu0 0.0
    %2657 = vmatprep.subr.mxu0 0.0
    %2658 = vmatpush1.msra.mxu0 0.0
    %2659 = vmatprep.subr.mxu0 0.0
    %2660 = vmatpush1.msra.mxu0 0.0
    %2661 = vmatprep.mubr.f32.mxu0 0.0
    %2662 = vmatmul.mubr.f32.gmra.mrb[0].mxu0 %v2595
    %v2663 = vpop.f32.mrb[0].mxu0
    %v2664 = vadd.f32 0.0, %v2663
    %v2665 = vpop.f32.mrb[0].mxu0
    %2666 = vdwg.mxu0
    %v2667 = vadd.f32 %v2581, %v2664
    %s2668 = scalar_lea.vmem %s10, 320
    %v2669 = vld [vmem:[%s2668] sm:$0xff]
    %v2670 = vld [vmem:[%s2668 + $0x8] sm:$0xff]
    %v2671 = vld [vmem:[%s2668 + $0x10] sm:$0xff]
    %v2672 = vld [vmem:[%s2668 + $0x18] sm:$0xff]
    %v2673 = vld [vmem:[%s2668 + $0x20] sm:$0xff]
    %v2674 = vld [vmem:[%s2668 + $0x28] sm:$0xff]
    %v2675 = vld [vmem:[%s2668 + $0x30] sm:$0xff]
    %v2676 = vld [vmem:[%s2668 + $0x38] sm:$0xff]
    %v2677 = vrot.slane %v1979, 1
    %v2678 = vsel %vm2253, %v1983, %v2677
    %v2679 = vsel %vm775, %v2678, 0
    %2681 = vmatprep.subr.mxu0 0.0
    %2682 = vmatpush1.msra.mxu0 %v2669
    %2683 = vmatprep.subr.mxu0 0.0
    %2684 = vmatpush1.msra.mxu0 %v2670
    %2685 = vmatprep.subr.mxu0 0.0
    %2686 = vmatpush1.msra.mxu0 %v2671
    %2687 = vmatprep.subr.mxu0 0.0
    %2688 = vmatpush1.msra.mxu0 %v2672
    %2689 = vmatprep.subr.mxu0 0.0
    %2690 = vmatpush1.msra.mxu0 %v2673
    %2691 = vmatprep.subr.mxu0 0.0
    %2692 = vmatpush1.msra.mxu0 %v2674
    %2693 = vmatprep.subr.mxu0 0.0
    %2694 = vmatpush1.msra.mxu0 %v2675
    %2695 = vmatprep.subr.mxu0 0.0
    %2696 = vmatpush1.msra.mxu0 %v2676
    %2697 = vmatprep.subr.mxu0 0.0
    %2698 = vmatpush1.msra.mxu0 0.0
    %2699 = vmatprep.subr.mxu0 0.0
    %2700 = vmatpush1.msra.mxu0 0.0
    %2701 = vmatprep.subr.mxu0 0.0
    %2702 = vmatpush1.msra.mxu0 0.0
    %2703 = vmatprep.subr.mxu0 0.0
    %2704 = vmatpush1.msra.mxu0 0.0
    %2705 = vmatprep.subr.mxu0 0.0
    %2706 = vmatpush1.msra.mxu0 0.0
    %2707 = vmatprep.subr.mxu0 0.0
    %2708 = vmatpush1.msra.mxu0 0.0
    %2709 = vmatprep.subr.mxu0 0.0
    %2710 = vmatpush1.msra.mxu0 0.0
    %2711 = vmatprep.subr.mxu0 0.0
    %2712 = vmatpush1.msra.mxu0 0.0
    %2713 = vmatprep.subr.mxu0 0.0
    %2714 = vmatpush1.msra.mxu0 0.0
    %2715 = vmatprep.subr.mxu0 0.0
    %2716 = vmatpush1.msra.mxu0 0.0
    %2717 = vmatprep.subr.mxu0 0.0
    %2718 = vmatpush1.msra.mxu0 0.0
    %2719 = vmatprep.subr.mxu0 0.0
    %2720 = vmatpush1.msra.mxu0 0.0
    %2721 = vmatprep.subr.mxu0 0.0
    %2722 = vmatpush1.msra.mxu0 0.0
    %2723 = vmatprep.subr.mxu0 0.0
    %2724 = vmatpush1.msra.mxu0 0.0
    %2725 = vmatprep.subr.mxu0 0.0
    %2726 = vmatpush1.msra.mxu0 0.0
    %2727 = vmatprep.subr.mxu0 0.0
    %2728 = vmatpush1.msra.mxu0 0.0
    %2729 = vmatprep.subr.mxu0 0.0
    %2730 = vmatpush1.msra.mxu0 0.0
    %2731 = vmatprep.subr.mxu0 0.0
    %2732 = vmatpush1.msra.mxu0 0.0
    %2733 = vmatprep.subr.mxu0 0.0
    %2734 = vmatpush1.msra.mxu0 0.0
    %2735 = vmatprep.subr.mxu0 0.0
    %2736 = vmatpush1.msra.mxu0 0.0
    %2737 = vmatprep.subr.mxu0 0.0
    %2738 = vmatpush1.msra.mxu0 0.0
    %2739 = vmatprep.subr.mxu0 0.0
    %2740 = vmatpush1.msra.mxu0 0.0
    %2741 = vmatprep.subr.mxu0 0.0
    %2742 = vmatpush1.msra.mxu0 0.0
    %2743 = vmatprep.subr.mxu0 0.0
    %2744 = vmatpush1.msra.mxu0 0.0
    %2745 = vmatprep.mubr.f32.mxu0 0.0
    %2746 = vmatmul.mubr.f32.gmra.mrb[0].mxu0 %v2679
    %v2747 = vpop.f32.mrb[0].mxu0
    %v2748 = vadd.f32 0.0, %v2747
    %v2749 = vpop.f32.mrb[0].mxu0
    %2750 = vdwg.mxu0
    %v2751 = vadd.f32 %v2667, %v2748
    %s2752 = scalar_lea.vmem %s10, 384
    %v2753 = vld [vmem:[%s2752] sm:$0xff]
    %v2754 = vld [vmem:[%s2752 + $0x8] sm:$0xff]
    %v2755 = vld [vmem:[%s2752 + $0x10] sm:$0xff]
    %v2756 = vld [vmem:[%s2752 + $0x18] sm:$0xff]
    %v2757 = vld [vmem:[%s2752 + $0x20] sm:$0xff]
    %v2758 = vld [vmem:[%s2752 + $0x28] sm:$0xff]
    %v2759 = vld [vmem:[%s2752 + $0x30] sm:$0xff]
    %v2760 = vld [vmem:[%s2752 + $0x38] sm:$0xff]
    %v2761 = vrot.slane %v1979, 2
    %v2762 = vrot.slane %v1983, 1
    %v2763 = vsel %vm2253, %v2762, %v2761
    %v2764 = vsel %vm775, %v2763, 0
    %2766 = vmatprep.subr.mxu0 0.0
    %2767 = vmatpush1.msra.mxu0 %v2753
    %2768 = vmatprep.subr.mxu0 0.0
    %2769 = vmatpush1.msra.mxu0 %v2754
    %2770 = vmatprep.subr.mxu0 0.0
    %2771 = vmatpush1.msra.mxu0 %v2755
    %2772 = vmatprep.subr.mxu0 0.0
    %2773 = vmatpush1.msra.mxu0 %v2756
    %2774 = vmatprep.subr.mxu0 0.0
    %2775 = vmatpush1.msra.mxu0 %v2757
    %2776 = vmatprep.subr.mxu0 0.0
    %2777 = vmatpush1.msra.mxu0 %v2758
    %2778 = vmatprep.subr.mxu0 0.0
    %2779 = vmatpush1.msra.mxu0 %v2759
    %2780 = vmatprep.subr.mxu0 0.0
    %2781 = vmatpush1.msra.mxu0 %v2760
    %2782 = vmatprep.subr.mxu0 0.0
    %2783 = vmatpush1.msra.mxu0 0.0
    %2784 = vmatprep.subr.mxu0 0.0
    %2785 = vmatpush1.msra.mxu0 0.0
    %2786 = vmatprep.subr.mxu0 0.0
    %2787 = vmatpush1.msra.mxu0 0.0
    %2788 = vmatprep.subr.mxu0 0.0
    %2789 = vmatpush1.msra.mxu0 0.0
    %2790 = vmatprep.subr.mxu0 0.0
    %2791 = vmatpush1.msra.mxu0 0.0
    %2792 = vmatprep.subr.mxu0 0.0
    %2793 = vmatpush1.msra.mxu0 0.0
    %2794 = vmatprep.subr.mxu0 0.0
    %2795 = vmatpush1.msra.mxu0 0.0
    %2796 = vmatprep.subr.mxu0 0.0
    %2797 = vmatpush1.msra.mxu0 0.0
    %2798 = vmatprep.subr.mxu0 0.0
    %2799 = vmatpush1.msra.mxu0 0.0
    %2800 = vmatprep.subr.mxu0 0.0
    %2801 = vmatpush1.msra.mxu0 0.0
    %2802 = vmatprep.subr.mxu0 0.0
    %2803 = vmatpush1.msra.mxu0 0.0
    %2804 = vmatprep.subr.mxu0 0.0
    %2805 = vmatpush1.msra.mxu0 0.0
    %2806 = vmatprep.subr.mxu0 0.0
    %2807 = vmatpush1.msra.mxu0 0.0
    %2808 = vmatprep.subr.mxu0 0.0
    %2809 = vmatpush1.msra.mxu0 0.0
    %2810 = vmatprep.subr.mxu0 0.0
    %2811 = vmatpush1.msra.mxu0 0.0
    %2812 = vmatprep.subr.mxu0 0.0
    %2813 = vmatpush1.msra.mxu0 0.0
    %2814 = vmatprep.subr.mxu0 0.0
    %2815 = vmatpush1.msra.mxu0 0.0
    %2816 = vmatprep.subr.mxu0 0.0
    %2817 = vmatpush1.msra.mxu0 0.0
    %2818 = vmatprep.subr.mxu0 0.0
    %2819 = vmatpush1.msra.mxu0 0.0
    %2820 = vmatprep.subr.mxu0 0.0
    %2821 = vmatpush1.msra.mxu0 0.0
    %2822 = vmatprep.subr.mxu0 0.0
    %2823 = vmatpush1.msra.mxu0 0.0
    %2824 = vmatprep.subr.mxu0 0.0
    %2825 = vmatpush1.msra.mxu0 0.0
    %2826 = vmatprep.subr.mxu0 0.0
    %2827 = vmatpush1.msra.mxu0 0.0
    %2828 = vmatprep.subr.mxu0 0.0
    %2829 = vmatpush1.msra.mxu0 0.0
    %2830 = vmatprep.mubr.f32.mxu0 0.0
    %2831 = vmatmul.mubr.f32.gmra.mrb[0].mxu0 %v2764
    %v2832 = vpop.f32.mrb[0].mxu0
    %v2833 = vadd.f32 0.0, %v2832
    %v2834 = vpop.f32.mrb[0].mxu0
    %2835 = vdwg.mxu0
    %v2836 = vadd.f32 %v2751, %v2833
    %s2837 = scalar_lea.vmem %s10, 448
    %v2838 = vld [vmem:[%s2837] sm:$0xff]
    %v2839 = vld [vmem:[%s2837 + $0x8] sm:$0xff]
    %v2840 = vld [vmem:[%s2837 + $0x10] sm:$0xff]
    %v2841 = vld [vmem:[%s2837 + $0x18] sm:$0xff]
    %v2842 = vld [vmem:[%s2837 + $0x20] sm:$0xff]
    %v2843 = vld [vmem:[%s2837 + $0x28] sm:$0xff]
    %v2844 = vld [vmem:[%s2837 + $0x30] sm:$0xff]
    %v2845 = vld [vmem:[%s2837 + $0x38] sm:$0xff]
    %v2846 = vrot.slane %v1979, 3
    %v2847 = vrot.slane %v1983, 2
    %v2848 = vsel %vm2253, %v2847, %v2846
    %v2849 = vsel %vm775, %v2848, 0
    %2851 = vmatprep.subr.mxu0 0.0
    %2852 = vmatpush1.msra.mxu0 %v2838
    %2853 = vmatprep.subr.mxu0 0.0
    %2854 = vmatpush1.msra.mxu0 %v2839
    %2855 = vmatprep.subr.mxu0 0.0
    %2856 = vmatpush1.msra.mxu0 %v2840
    %2857 = vmatprep.subr.mxu0 0.0
    %2858 = vmatpush1.msra.mxu0 %v2841
    %2859 = vmatprep.subr.mxu0 0.0
    %2860 = vmatpush1.msra.mxu0 %v2842
    %2861 = vmatprep.subr.mxu0 0.0
    %2862 = vmatpush1.msra.mxu0 %v2843
    %2863 = vmatprep.subr.mxu0 0.0
    %2864 = vmatpush1.msra.mxu0 %v2844
    %2865 = vmatprep.subr.mxu0 0.0
    %2866 = vmatpush1.msra.mxu0 %v2845
    %2867 = vmatprep.subr.mxu0 0.0
    %2868 = vmatpush1.msra.mxu0 0.0
    %2869 = vmatprep.subr.mxu0 0.0
    %2870 = vmatpush1.msra.mxu0 0.0
    %2871 = vmatprep.subr.mxu0 0.0
    %2872 = vmatpush1.msra.mxu0 0.0
    %2873 = vmatprep.subr.mxu0 0.0
    %2874 = vmatpush1.msra.mxu0 0.0
    %2875 = vmatprep.subr.mxu0 0.0
    %2876 = vmatpush1.msra.mxu0 0.0
    %2877 = vmatprep.subr.mxu0 0.0
    %2878 = vmatpush1.msra.mxu0 0.0
    %2879 = vmatprep.subr.mxu0 0.0
    %2880 = vmatpush1.msra.mxu0 0.0
    %2881 = vmatprep.subr.mxu0 0.0
    %2882 = vmatpush1.msra.mxu0 0.0
    %2883 = vmatprep.subr.mxu0 0.0
    %2884 = vmatpush1.msra.mxu0 0.0
    %2885 = vmatprep.subr.mxu0 0.0
    %2886 = vmatpush1.msra.mxu0 0.0
    %2887 = vmatprep.subr.mxu0 0.0
    %2888 = vmatpush1.msra.mxu0 0.0
    %2889 = vmatprep.subr.mxu0 0.0
    %2890 = vmatpush1.msra.mxu0 0.0
    %2891 = vmatprep.subr.mxu0 0.0
    %2892 = vmatpush1.msra.mxu0 0.0
    %2893 = vmatprep.subr.mxu0 0.0
    %2894 = vmatpush1.msra.mxu0 0.0
    %2895 = vmatprep.subr.mxu0 0.0
    %2896 = vmatpush1.msra.mxu0 0.0
    %2897 = vmatprep.subr.mxu0 0.0
    %2898 = vmatpush1.msra.mxu0 0.0
    %2899 = vmatprep.subr.mxu0 0.0
    %2900 = vmatpush1.msra.mxu0 0.0
    %2901 = vmatprep.subr.mxu0 0.0
    %2902 = vmatpush1.msra.mxu0 0.0
    %2903 = vmatprep.subr.mxu0 0.0
    %2904 = vmatpush1.msra.mxu0 0.0
    %2905 = vmatprep.subr.mxu0 0.0
    %2906 = vmatpush1.msra.mxu0 0.0
    %2907 = vmatprep.subr.mxu0 0.0
    %2908 = vmatpush1.msra.mxu0 0.0
    %2909 = vmatprep.subr.mxu0 0.0
    %2910 = vmatpush1.msra.mxu0 0.0
    %2911 = vmatprep.subr.mxu0 0.0
    %2912 = vmatpush1.msra.mxu0 0.0
    %2913 = vmatprep.subr.mxu0 0.0
    %2914 = vmatpush1.msra.mxu0 0.0
    %2915 = vmatprep.mubr.f32.mxu0 0.0
    %2916 = vmatmul.mubr.f32.gmra.mrb[0].mxu0 %v2849
    %v2917 = vpop.f32.mrb[0].mxu0
    %v2918 = vadd.f32 0.0, %v2917
    %v2919 = vpop.f32.mrb[0].mxu0
    %2920 = vdwg.mxu0
    %v2921 = vadd.f32 %v2836, %v2918
    %s2922 = scalar_lea.vmem %s10, 512
    %v2923 = vld [vmem:[%s2922] sm:$0xff]
    %v2924 = vld [vmem:[%s2922 + $0x8] sm:$0xff]
    %v2925 = vld [vmem:[%s2922 + $0x10] sm:$0xff]
    %v2926 = vld [vmem:[%s2922 + $0x18] sm:$0xff]
    %v2927 = vld [vmem:[%s2922 + $0x20] sm:$0xff]
    %v2928 = vld [vmem:[%s2922 + $0x28] sm:$0xff]
    %v2929 = vld [vmem:[%s2922 + $0x30] sm:$0xff]
    %v2930 = vld [vmem:[%s2922 + $0x38] sm:$0xff]
    %v2933 = vrot.slane %v1984, 7
    %v2934 = vsel %vm2253, %v2933, %v1980
    %v2935 = vsel %vm775, %v2934, 0
    %2937 = vmatprep.subr.mxu0 0.0
    %2938 = vmatpush1.msra.mxu0 %v2923
    %2939 = vmatprep.subr.mxu0 0.0
    %2940 = vmatpush1.msra.mxu0 %v2924
    %2941 = vmatprep.subr.mxu0 0.0
    %2942 = vmatpush1.msra.mxu0 %v2925
    %2943 = vmatprep.subr.mxu0 0.0
    %2944 = vmatpush1.msra.mxu0 %v2926
    %2945 = vmatprep.subr.mxu0 0.0
    %2946 = vmatpush1.msra.mxu0 %v2927
    %2947 = vmatprep.subr.mxu0 0.0
    %2948 = vmatpush1.msra.mxu0 %v2928
    %2949 = vmatprep.subr.mxu0 0.0
    %2950 = vmatpush1.msra.mxu0 %v2929
    %2951 = vmatprep.subr.mxu0 0.0
    %2952 = vmatpush1.msra.mxu0 %v2930
    %2953 = vmatprep.subr.mxu0 0.0
    %2954 = vmatpush1.msra.mxu0 0.0
    %2955 = vmatprep.subr.mxu0 0.0
    %2956 = vmatpush1.msra.mxu0 0.0
    %2957 = vmatprep.subr.mxu0 0.0
    %2958 = vmatpush1.msra.mxu0 0.0
    %2959 = vmatprep.subr.mxu0 0.0
    %2960 = vmatpush1.msra.mxu0 0.0
    %2961 = vmatprep.subr.mxu0 0.0
    %2962 = vmatpush1.msra.mxu0 0.0
    %2963 = vmatprep.subr.mxu0 0.0
    %2964 = vmatpush1.msra.mxu0 0.0
    %2965 = vmatprep.subr.mxu0 0.0
    %2966 = vmatpush1.msra.mxu0 0.0
    %2967 = vmatprep.subr.mxu0 0.0
    %2968 = vmatpush1.msra.mxu0 0.0
    %2969 = vmatprep.subr.mxu0 0.0
    %2970 = vmatpush1.msra.mxu0 0.0
    %2971 = vmatprep.subr.mxu0 0.0
    %2972 = vmatpush1.msra.mxu0 0.0
    %2973 = vmatprep.subr.mxu0 0.0
    %2974 = vmatpush1.msra.mxu0 0.0
    %2975 = vmatprep.subr.mxu0 0.0
    %2976 = vmatpush1.msra.mxu0 0.0
    %2977 = vmatprep.subr.mxu0 0.0
    %2978 = vmatpush1.msra.mxu0 0.0
    %2979 = vmatprep.subr.mxu0 0.0
    %2980 = vmatpush1.msra.mxu0 0.0
    %2981 = vmatprep.subr.mxu0 0.0
    %2982 = vmatpush1.msra.mxu0 0.0
    %2983 = vmatprep.subr.mxu0 0.0
    %2984 = vmatpush1.msra.mxu0 0.0
    %2985 = vmatprep.subr.mxu0 0.0
    %2986 = vmatpush1.msra.mxu0 0.0
    %2987 = vmatprep.subr.mxu0 0.0
    %2988 = vmatpush1.msra.mxu0 0.0
    %2989 = vmatprep.subr.mxu0 0.0
    %2990 = vmatpush1.msra.mxu0 0.0
    %2991 = vmatprep.subr.mxu0 0.0
    %2992 = vmatpush1.msra.mxu0 0.0
    %2993 = vmatprep.subr.mxu0 0.0
    %2994 = vmatpush1.msra.mxu0 0.0
    %2995 = vmatprep.subr.mxu0 0.0
    %2996 = vmatpush1.msra.mxu0 0.0
    %2997 = vmatprep.subr.mxu0 0.0
    %2998 = vmatpush1.msra.mxu0 0.0
    %2999 = vmatprep.subr.mxu0 0.0
    %3000 = vmatpush1.msra.mxu0 0.0
    %3001 = vmatprep.mubr.f32.mxu0 0.0
    %3002 = vmatmul.mubr.f32.gmra.mrb[0].mxu0 %v2935
    %v3003 = vpop.f32.mrb[0].mxu0
    %v3004 = vadd.f32 0.0, %v3003
    %v3005 = vpop.f32.mrb[0].mxu0
    %3006 = vdwg.mxu0
    %v3007 = vadd.f32 %v2921, %v3004
    %s3008 = scalar_lea.vmem %s10, 576
    %v3009 = vld [vmem:[%s3008] sm:$0xff]
    %v3010 = vld [vmem:[%s3008 + $0x8] sm:$0xff]
    %v3011 = vld [vmem:[%s3008 + $0x10] sm:$0xff]
    %v3012 = vld [vmem:[%s3008 + $0x18] sm:$0xff]
    %v3013 = vld [vmem:[%s3008 + $0x20] sm:$0xff]
    %v3014 = vld [vmem:[%s3008 + $0x28] sm:$0xff]
    %v3015 = vld [vmem:[%s3008 + $0x30] sm:$0xff]
    %v3016 = vld [vmem:[%s3008 + $0x38] sm:$0xff]
    %v3017 = vrot.slane %v1980, 1
    %v3018 = vsel %vm2253, %v1984, %v3017
    %v3019 = vsel %vm775, %v3018, 0
    %3021 = vmatprep.subr.mxu0 0.0
    %3022 = vmatpush1.msra.mxu0 %v3009
    %3023 = vmatprep.subr.mxu0 0.0
    %3024 = vmatpush1.msra.mxu0 %v3010
    %3025 = vmatprep.subr.mxu0 0.0
    %3026 = vmatpush1.msra.mxu0 %v3011
    %3027 = vmatprep.subr.mxu0 0.0
    %3028 = vmatpush1.msra.mxu0 %v3012
    %3029 = vmatprep.subr.mxu0 0.0
    %3030 = vmatpush1.msra.mxu0 %v3013
    %3031 = vmatprep.subr.mxu0 0.0
    %3032 = vmatpush1.msra.mxu0 %v3014
    %3033 = vmatprep.subr.mxu0 0.0
    %3034 = vmatpush1.msra.mxu0 %v3015
    %3035 = vmatprep.subr.mxu0 0.0
    %3036 = vmatpush1.msra.mxu0 %v3016
    %3037 = vmatprep.subr.mxu0 0.0
    %3038 = vmatpush1.msra.mxu0 0.0
    %3039 = vmatprep.subr.mxu0 0.0
    %3040 = vmatpush1.msra.mxu0 0.0
    %3041 = vmatprep.subr.mxu0 0.0
    %3042 = vmatpush1.msra.mxu0 0.0
    %3043 = vmatprep.subr.mxu0 0.0
    %3044 = vmatpush1.msra.mxu0 0.0
    %3045 = vmatprep.subr.mxu0 0.0
    %3046 = vmatpush1.msra.mxu0 0.0
    %3047 = vmatprep.subr.mxu0 0.0
    %3048 = vmatpush1.msra.mxu0 0.0
    %3049 = vmatprep.subr.mxu0 0.0
    %3050 = vmatpush1.msra.mxu0 0.0
    %3051 = vmatprep.subr.mxu0 0.0
    %3052 = vmatpush1.msra.mxu0 0.0
    %3053 = vmatprep.subr.mxu0 0.0
    %3054 = vmatpush1.msra.mxu0 0.0
    %3055 = vmatprep.subr.mxu0 0.0
    %3056 = vmatpush1.msra.mxu0 0.0
    %3057 = vmatprep.subr.mxu0 0.0
    %3058 = vmatpush1.msra.mxu0 0.0
    %3059 = vmatprep.subr.mxu0 0.0
    %3060 = vmatpush1.msra.mxu0 0.0
    %3061 = vmatprep.subr.mxu0 0.0
    %3062 = vmatpush1.msra.mxu0 0.0
    %3063 = vmatprep.subr.mxu0 0.0
    %3064 = vmatpush1.msra.mxu0 0.0
    %3065 = vmatprep.subr.mxu0 0.0
    %3066 = vmatpush1.msra.mxu0 0.0
    %3067 = vmatprep.subr.mxu0 0.0
    %3068 = vmatpush1.msra.mxu0 0.0
    %3069 = vmatprep.subr.mxu0 0.0
    %3070 = vmatpush1.msra.mxu0 0.0
    %3071 = vmatprep.subr.mxu0 0.0
    %3072 = vmatpush1.msra.mxu0 0.0
    %3073 = vmatprep.subr.mxu0 0.0
    %3074 = vmatpush1.msra.mxu0 0.0
    %3075 = vmatprep.subr.mxu0 0.0
    %3076 = vmatpush1.msra.mxu0 0.0
    %3077 = vmatprep.subr.mxu0 0.0
    %3078 = vmatpush1.msra.mxu0 0.0
    %3079 = vmatprep.subr.mxu0 0.0
    %3080 = vmatpush1.msra.mxu0 0.0
    %3081 = vmatprep.subr.mxu0 0.0
    %3082 = vmatpush1.msra.mxu0 0.0
    %3083 = vmatprep.subr.mxu0 0.0
    %3084 = vmatpush1.msra.mxu0 0.0
    %3085 = vmatprep.mubr.f32.mxu0 0.0
    %3086 = vmatmul.mubr.f32.gmra.mrb[0].mxu0 %v3019
    %v3087 = vpop.f32.mrb[0].mxu0
    %v3088 = vadd.f32 0.0, %v3087
    %v3089 = vpop.f32.mrb[0].mxu0
    %3090 = vdwg.mxu0
    %v3091 = vadd.f32 %v3007, %v3088
    %s3092 = scalar_lea.vmem %s10, 640
    %v3093 = vld [vmem:[%s3092] sm:$0xff]
    %v3094 = vld [vmem:[%s3092 + $0x8] sm:$0xff]
    %v3095 = vld [vmem:[%s3092 + $0x10] sm:$0xff]
    %v3096 = vld [vmem:[%s3092 + $0x18] sm:$0xff]
    %v3097 = vld [vmem:[%s3092 + $0x20] sm:$0xff]
    %v3098 = vld [vmem:[%s3092 + $0x28] sm:$0xff]
    %v3099 = vld [vmem:[%s3092 + $0x30] sm:$0xff]
    %v3100 = vld [vmem:[%s3092 + $0x38] sm:$0xff]
    %v3101 = vrot.slane %v1980, 2
    %v3102 = vrot.slane %v1984, 1
    %v3103 = vsel %vm2253, %v3102, %v3101
    %v3104 = vsel %vm775, %v3103, 0
    %3106 = vmatprep.subr.mxu0 0.0
    %3107 = vmatpush1.msra.mxu0 %v3093
    %3108 = vmatprep.subr.mxu0 0.0
    %3109 = vmatpush1.msra.mxu0 %v3094
    %3110 = vmatprep.subr.mxu0 0.0
    %3111 = vmatpush1.msra.mxu0 %v3095
    %3112 = vmatprep.subr.mxu0 0.0
    %3113 = vmatpush1.msra.mxu0 %v3096
    %3114 = vmatprep.subr.mxu0 0.0
    %3115 = vmatpush1.msra.mxu0 %v3097
    %3116 = vmatprep.subr.mxu0 0.0
    %3117 = vmatpush1.msra.mxu0 %v3098
    %3118 = vmatprep.subr.mxu0 0.0
    %3119 = vmatpush1.msra.mxu0 %v3099
    %3120 = vmatprep.subr.mxu0 0.0
    %3121 = vmatpush1.msra.mxu0 %v3100
    %3122 = vmatprep.subr.mxu0 0.0
    %3123 = vmatpush1.msra.mxu0 0.0
    %3124 = vmatprep.subr.mxu0 0.0
    %3125 = vmatpush1.msra.mxu0 0.0
    %3126 = vmatprep.subr.mxu0 0.0
    %3127 = vmatpush1.msra.mxu0 0.0
    %3128 = vmatprep.subr.mxu0 0.0
    %3129 = vmatpush1.msra.mxu0 0.0
    %3130 = vmatprep.subr.mxu0 0.0
    %3131 = vmatpush1.msra.mxu0 0.0
    %3132 = vmatprep.subr.mxu0 0.0
    %3133 = vmatpush1.msra.mxu0 0.0
    %3134 = vmatprep.subr.mxu0 0.0
    %3135 = vmatpush1.msra.mxu0 0.0
    %3136 = vmatprep.subr.mxu0 0.0
    %3137 = vmatpush1.msra.mxu0 0.0
    %3138 = vmatprep.subr.mxu0 0.0
    %3139 = vmatpush1.msra.mxu0 0.0
    %3140 = vmatprep.subr.mxu0 0.0
    %3141 = vmatpush1.msra.mxu0 0.0
    %3142 = vmatprep.subr.mxu0 0.0
    %3143 = vmatpush1.msra.mxu0 0.0
    %3144 = vmatprep.subr.mxu0 0.0
    %3145 = vmatpush1.msra.mxu0 0.0
    %3146 = vmatprep.subr.mxu0 0.0
    %3147 = vmatpush1.msra.mxu0 0.0
    %3148 = vmatprep.subr.mxu0 0.0
    %3149 = vmatpush1.msra.mxu0 0.0
    %3150 = vmatprep.subr.mxu0 0.0
    %3151 = vmatpush1.msra.mxu0 0.0
    %3152 = vmatprep.subr.mxu0 0.0
    %3153 = vmatpush1.msra.mxu0 0.0
    %3154 = vmatprep.subr.mxu0 0.0
    %3155 = vmatpush1.msra.mxu0 0.0
    %3156 = vmatprep.subr.mxu0 0.0
    %3157 = vmatpush1.msra.mxu0 0.0
    %3158 = vmatprep.subr.mxu0 0.0
    %3159 = vmatpush1.msra.mxu0 0.0
    %3160 = vmatprep.subr.mxu0 0.0
    %3161 = vmatpush1.msra.mxu0 0.0
    %3162 = vmatprep.subr.mxu0 0.0
    %3163 = vmatpush1.msra.mxu0 0.0
    %3164 = vmatprep.subr.mxu0 0.0
    %3165 = vmatpush1.msra.mxu0 0.0
    %3166 = vmatprep.subr.mxu0 0.0
    %3167 = vmatpush1.msra.mxu0 0.0
    %3168 = vmatprep.subr.mxu0 0.0
    %3169 = vmatpush1.msra.mxu0 0.0
    %3170 = vmatprep.mubr.f32.mxu0 0.0
    %3171 = vmatmul.mubr.f32.gmra.mrb[0].mxu0 %v3104
    %v3172 = vpop.f32.mrb[0].mxu0
    %v3173 = vadd.f32 0.0, %v3172
    %v3174 = vpop.f32.mrb[0].mxu0
    %3175 = vdwg.mxu0
    %v3176 = vadd.f32 %v3091, %v3173
    %s3177 = scalar_lea.vmem %s10, 704
    %v3178 = vld [vmem:[%s3177] sm:$0xff]
    %v3179 = vld [vmem:[%s3177 + $0x8] sm:$0xff]
    %v3180 = vld [vmem:[%s3177 + $0x10] sm:$0xff]
    %v3181 = vld [vmem:[%s3177 + $0x18] sm:$0xff]
    %v3182 = vld [vmem:[%s3177 + $0x20] sm:$0xff]
    %v3183 = vld [vmem:[%s3177 + $0x28] sm:$0xff]
    %v3184 = vld [vmem:[%s3177 + $0x30] sm:$0xff]
    %v3185 = vld [vmem:[%s3177 + $0x38] sm:$0xff]
    %v3186 = vrot.slane %v1980, 3
    %v3187 = vrot.slane %v1984, 2
    %v3188 = vsel %vm2253, %v3187, %v3186
    %v3189 = vsel %vm775, %v3188, 0
    %3191 = vmatprep.subr.mxu0 0.0
    %3192 = vmatpush1.msra.mxu0 %v3178
    %3193 = vmatprep.subr.mxu0 0.0
    %3194 = vmatpush1.msra.mxu0 %v3179
    %3195 = vmatprep.subr.mxu0 0.0
    %3196 = vmatpush1.msra.mxu0 %v3180
    %3197 = vmatprep.subr.mxu0 0.0
    %3198 = vmatpush1.msra.mxu0 %v3181
    %3199 = vmatprep.subr.mxu0 0.0
    %3200 = vmatpush1.msra.mxu0 %v3182
    %3201 = vmatprep.subr.mxu0 0.0
    %3202 = vmatpush1.msra.mxu0 %v3183
    %3203 = vmatprep.subr.mxu0 0.0
    %3204 = vmatpush1.msra.mxu0 %v3184
    %3205 = vmatprep.subr.mxu0 0.0
    %3206 = vmatpush1.msra.mxu0 %v3185
    %3207 = vmatprep.subr.mxu0 0.0
    %3208 = vmatpush1.msra.mxu0 0.0
    %3209 = vmatprep.subr.mxu0 0.0
    %3210 = vmatpush1.msra.mxu0 0.0
    %3211 = vmatprep.subr.mxu0 0.0
    %3212 = vmatpush1.msra.mxu0 0.0
    %3213 = vmatprep.subr.mxu0 0.0
    %3214 = vmatpush1.msra.mxu0 0.0
    %3215 = vmatprep.subr.mxu0 0.0
    %3216 = vmatpush1.msra.mxu0 0.0
    %3217 = vmatprep.subr.mxu0 0.0
    %3218 = vmatpush1.msra.mxu0 0.0
    %3219 = vmatprep.subr.mxu0 0.0
    %3220 = vmatpush1.msra.mxu0 0.0
    %3221 = vmatprep.subr.mxu0 0.0
    %3222 = vmatpush1.msra.mxu0 0.0
    %3223 = vmatprep.subr.mxu0 0.0
    %3224 = vmatpush1.msra.mxu0 0.0
    %3225 = vmatprep.subr.mxu0 0.0
    %3226 = vmatpush1.msra.mxu0 0.0
    %3227 = vmatprep.subr.mxu0 0.0
    %3228 = vmatpush1.msra.mxu0 0.0
    %3229 = vmatprep.subr.mxu0 0.0
    %3230 = vmatpush1.msra.mxu0 0.0
    %3231 = vmatprep.subr.mxu0 0.0
    %3232 = vmatpush1.msra.mxu0 0.0
    %3233 = vmatprep.subr.mxu0 0.0
    %3234 = vmatpush1.msra.mxu0 0.0
    %3235 = vmatprep.subr.mxu0 0.0
    %3236 = vmatpush1.msra.mxu0 0.0
    %3237 = vmatprep.subr.mxu0 0.0
    %3238 = vmatpush1.msra.mxu0 0.0
    %3239 = vmatprep.subr.mxu0 0.0
    %3240 = vmatpush1.msra.mxu0 0.0
    %3241 = vmatprep.subr.mxu0 0.0
    %3242 = vmatpush1.msra.mxu0 0.0
    %3243 = vmatprep.subr.mxu0 0.0
    %3244 = vmatpush1.msra.mxu0 0.0
    %3245 = vmatprep.subr.mxu0 0.0
    %3246 = vmatpush1.msra.mxu0 0.0
    %3247 = vmatprep.subr.mxu0 0.0
    %3248 = vmatpush1.msra.mxu0 0.0
    %3249 = vmatprep.subr.mxu0 0.0
    %3250 = vmatpush1.msra.mxu0 0.0
    %3251 = vmatprep.subr.mxu0 0.0
    %3252 = vmatpush1.msra.mxu0 0.0
    %3253 = vmatprep.subr.mxu0 0.0
    %3254 = vmatpush1.msra.mxu0 0.0
    %3255 = vmatprep.mubr.f32.mxu0 0.0
    %3256 = vmatmul.mubr.f32.gmra.mrb[0].mxu0 %v3189
    %v3257 = vpop.f32.mrb[0].mxu0
    %v3258 = vadd.f32 0.0, %v3257
    %v3259 = vpop.f32.mrb[0].mxu0
    %3260 = vdwg.mxu0
    %v3261 = vadd.f32 %v3176, %v3258
    %s3262 = scalar_lea.vmem %s10, 768
    %v3263 = vld [vmem:[%s3262] sm:$0xff]
    %v3264 = vld [vmem:[%s3262 + $0x8] sm:$0xff]
    %v3265 = vld [vmem:[%s3262 + $0x10] sm:$0xff]
    %v3266 = vld [vmem:[%s3262 + $0x18] sm:$0xff]
    %v3267 = vld [vmem:[%s3262 + $0x20] sm:$0xff]
    %v3268 = vld [vmem:[%s3262 + $0x28] sm:$0xff]
    %v3269 = vld [vmem:[%s3262 + $0x30] sm:$0xff]
    %v3270 = vld [vmem:[%s3262 + $0x38] sm:$0xff]
    %v3273 = vrot.slane %v1985, 7
    %v3274 = vsel %vm2253, %v3273, %v1981
    %v3275 = vsel %vm775, %v3274, 0
    %3277 = vmatprep.subr.mxu0 0.0
    %3278 = vmatpush1.msra.mxu0 %v3263
    %3279 = vmatprep.subr.mxu0 0.0
    %3280 = vmatpush1.msra.mxu0 %v3264
    %3281 = vmatprep.subr.mxu0 0.0
    %3282 = vmatpush1.msra.mxu0 %v3265
    %3283 = vmatprep.subr.mxu0 0.0
    %3284 = vmatpush1.msra.mxu0 %v3266
    %3285 = vmatprep.subr.mxu0 0.0
    %3286 = vmatpush1.msra.mxu0 %v3267
    %3287 = vmatprep.subr.mxu0 0.0
    %3288 = vmatpush1.msra.mxu0 %v3268
    %3289 = vmatprep.subr.mxu0 0.0
    %3290 = vmatpush1.msra.mxu0 %v3269
    %3291 = vmatprep.subr.mxu0 0.0
    %3292 = vmatpush1.msra.mxu0 %v3270
    %3293 = vmatprep.subr.mxu0 0.0
    %3294 = vmatpush1.msra.mxu0 0.0
    %3295 = vmatprep.subr.mxu0 0.0
    %3296 = vmatpush1.msra.mxu0 0.0
    %3297 = vmatprep.subr.mxu0 0.0
    %3298 = vmatpush1.msra.mxu0 0.0
    %3299 = vmatprep.subr.mxu0 0.0
    %3300 = vmatpush1.msra.mxu0 0.0
    %3301 = vmatprep.subr.mxu0 0.0
    %3302 = vmatpush1.msra.mxu0 0.0
    %3303 = vmatprep.subr.mxu0 0.0
    %3304 = vmatpush1.msra.mxu0 0.0
    %3305 = vmatprep.subr.mxu0 0.0
    %3306 = vmatpush1.msra.mxu0 0.0
    %3307 = vmatprep.subr.mxu0 0.0
    %3308 = vmatpush1.msra.mxu0 0.0
    %3309 = vmatprep.subr.mxu0 0.0
    %3310 = vmatpush1.msra.mxu0 0.0
    %3311 = vmatprep.subr.mxu0 0.0
    %3312 = vmatpush1.msra.mxu0 0.0
    %3313 = vmatprep.subr.mxu0 0.0
    %3314 = vmatpush1.msra.mxu0 0.0
    %3315 = vmatprep.subr.mxu0 0.0
    %3316 = vmatpush1.msra.mxu0 0.0
    %3317 = vmatprep.subr.mxu0 0.0
    %3318 = vmatpush1.msra.mxu0 0.0
    %3319 = vmatprep.subr.mxu0 0.0
    %3320 = vmatpush1.msra.mxu0 0.0
    %3321 = vmatprep.subr.mxu0 0.0
    %3322 = vmatpush1.msra.mxu0 0.0
    %3323 = vmatprep.subr.mxu0 0.0
    %3324 = vmatpush1.msra.mxu0 0.0
    %3325 = vmatprep.subr.mxu0 0.0
    %3326 = vmatpush1.msra.mxu0 0.0
    %3327 = vmatprep.subr.mxu0 0.0
    %3328 = vmatpush1.msra.mxu0 0.0
    %3329 = vmatprep.subr.mxu0 0.0
    %3330 = vmatpush1.msra.mxu0 0.0
    %3331 = vmatprep.subr.mxu0 0.0
    %3332 = vmatpush1.msra.mxu0 0.0
    %3333 = vmatprep.subr.mxu0 0.0
    %3334 = vmatpush1.msra.mxu0 0.0
    %3335 = vmatprep.subr.mxu0 0.0
    %3336 = vmatpush1.msra.mxu0 0.0
    %3337 = vmatprep.subr.mxu0 0.0
    %3338 = vmatpush1.msra.mxu0 0.0
    %3339 = vmatprep.subr.mxu0 0.0
    %3340 = vmatpush1.msra.mxu0 0.0
    %3341 = vmatprep.mubr.f32.mxu0 0.0
    %3342 = vmatmul.mubr.f32.gmra.mrb[0].mxu0 %v3275
    %v3343 = vpop.f32.mrb[0].mxu0
    %v3344 = vadd.f32 0.0, %v3343
    %v3345 = vpop.f32.mrb[0].mxu0
    %3346 = vdwg.mxu0
    %v3347 = vadd.f32 %v3261, %v3344
    %s3348 = scalar_lea.vmem %s10, 832
    %v3349 = vld [vmem:[%s3348] sm:$0xff]
    %v3350 = vld [vmem:[%s3348 + $0x8] sm:$0xff]
    %v3351 = vld [vmem:[%s3348 + $0x10] sm:$0xff]
    %v3352 = vld [vmem:[%s3348 + $0x18] sm:$0xff]
    %v3353 = vld [vmem:[%s3348 + $0x20] sm:$0xff]
    %v3354 = vld [vmem:[%s3348 + $0x28] sm:$0xff]
    %v3355 = vld [vmem:[%s3348 + $0x30] sm:$0xff]
    %v3356 = vld [vmem:[%s3348 + $0x38] sm:$0xff]
    %v3357 = vrot.slane %v1981, 1
    %v3358 = vsel %vm2253, %v1985, %v3357
    %v3359 = vsel %vm775, %v3358, 0
    %3361 = vmatprep.subr.mxu0 0.0
    %3362 = vmatpush1.msra.mxu0 %v3349
    %3363 = vmatprep.subr.mxu0 0.0
    %3364 = vmatpush1.msra.mxu0 %v3350
    %3365 = vmatprep.subr.mxu0 0.0
    %3366 = vmatpush1.msra.mxu0 %v3351
    %3367 = vmatprep.subr.mxu0 0.0
    %3368 = vmatpush1.msra.mxu0 %v3352
    %3369 = vmatprep.subr.mxu0 0.0
    %3370 = vmatpush1.msra.mxu0 %v3353
    %3371 = vmatprep.subr.mxu0 0.0
    %3372 = vmatpush1.msra.mxu0 %v3354
    %3373 = vmatprep.subr.mxu0 0.0
    %3374 = vmatpush1.msra.mxu0 %v3355
    %3375 = vmatprep.subr.mxu0 0.0
    %3376 = vmatpush1.msra.mxu0 %v3356
    %3377 = vmatprep.subr.mxu0 0.0
    %3378 = vmatpush1.msra.mxu0 0.0
    %3379 = vmatprep.subr.mxu0 0.0
    %3380 = vmatpush1.msra.mxu0 0.0
    %3381 = vmatprep.subr.mxu0 0.0
    %3382 = vmatpush1.msra.mxu0 0.0
    %3383 = vmatprep.subr.mxu0 0.0
    %3384 = vmatpush1.msra.mxu0 0.0
    %3385 = vmatprep.subr.mxu0 0.0
    %3386 = vmatpush1.msra.mxu0 0.0
    %3387 = vmatprep.subr.mxu0 0.0
    %3388 = vmatpush1.msra.mxu0 0.0
    %3389 = vmatprep.subr.mxu0 0.0
    %3390 = vmatpush1.msra.mxu0 0.0
    %3391 = vmatprep.subr.mxu0 0.0
    %3392 = vmatpush1.msra.mxu0 0.0
    %3393 = vmatprep.subr.mxu0 0.0
    %3394 = vmatpush1.msra.mxu0 0.0
    %3395 = vmatprep.subr.mxu0 0.0
    %3396 = vmatpush1.msra.mxu0 0.0
    %3397 = vmatprep.subr.mxu0 0.0
    %3398 = vmatpush1.msra.mxu0 0.0
    %3399 = vmatprep.subr.mxu0 0.0
    %3400 = vmatpush1.msra.mxu0 0.0
    %3401 = vmatprep.subr.mxu0 0.0
    %3402 = vmatpush1.msra.mxu0 0.0
    %3403 = vmatprep.subr.mxu0 0.0
    %3404 = vmatpush1.msra.mxu0 0.0
    %3405 = vmatprep.subr.mxu0 0.0
    %3406 = vmatpush1.msra.mxu0 0.0
    %3407 = vmatprep.subr.mxu0 0.0
    %3408 = vmatpush1.msra.mxu0 0.0
    %3409 = vmatprep.subr.mxu0 0.0
    %3410 = vmatpush1.msra.mxu0 0.0
    %3411 = vmatprep.subr.mxu0 0.0
    %3412 = vmatpush1.msra.mxu0 0.0
    %3413 = vmatprep.subr.mxu0 0.0
    %3414 = vmatpush1.msra.mxu0 0.0
    %3415 = vmatprep.subr.mxu0 0.0
    %3416 = vmatpush1.msra.mxu0 0.0
    %3417 = vmatprep.subr.mxu0 0.0
    %3418 = vmatpush1.msra.mxu0 0.0
    %3419 = vmatprep.subr.mxu0 0.0
    %3420 = vmatpush1.msra.mxu0 0.0
    %3421 = vmatprep.subr.mxu0 0.0
    %3422 = vmatpush1.msra.mxu0 0.0
    %3423 = vmatprep.subr.mxu0 0.0
    %3424 = vmatpush1.msra.mxu0 0.0
    %3425 = vmatprep.mubr.f32.mxu0 0.0
    %3426 = vmatmul.mubr.f32.gmra.mrb[0].mxu0 %v3359
    %v3427 = vpop.f32.mrb[0].mxu0
    %v3428 = vadd.f32 0.0, %v3427
    %v3429 = vpop.f32.mrb[0].mxu0
    %3430 = vdwg.mxu0
    %v3431 = vadd.f32 %v3347, %v3428
    %s3432 = scalar_lea.vmem %s10, 896
    %v3433 = vld [vmem:[%s3432] sm:$0xff]
    %v3434 = vld [vmem:[%s3432 + $0x8] sm:$0xff]
    %v3435 = vld [vmem:[%s3432 + $0x10] sm:$0xff]
    %v3436 = vld [vmem:[%s3432 + $0x18] sm:$0xff]
    %v3437 = vld [vmem:[%s3432 + $0x20] sm:$0xff]
    %v3438 = vld [vmem:[%s3432 + $0x28] sm:$0xff]
    %v3439 = vld [vmem:[%s3432 + $0x30] sm:$0xff]
    %v3440 = vld [vmem:[%s3432 + $0x38] sm:$0xff]
    %v3441 = vrot.slane %v1981, 2
    %v3442 = vrot.slane %v1985, 1
    %v3443 = vsel %vm2253, %v3442, %v3441
    %v3444 = vsel %vm775, %v3443, 0
    %3446 = vmatprep.subr.mxu0 0.0
    %3447 = vmatpush1.msra.mxu0 %v3433
    %3448 = vmatprep.subr.mxu0 0.0
    %3449 = vmatpush1.msra.mxu0 %v3434
    %3450 = vmatprep.subr.mxu0 0.0
    %3451 = vmatpush1.msra.mxu0 %v3435
    %3452 = vmatprep.subr.mxu0 0.0
    %3453 = vmatpush1.msra.mxu0 %v3436
    %3454 = vmatprep.subr.mxu0 0.0
    %3455 = vmatpush1.msra.mxu0 %v3437
    %3456 = vmatprep.subr.mxu0 0.0
    %3457 = vmatpush1.msra.mxu0 %v3438
    %3458 = vmatprep.subr.mxu0 0.0
    %3459 = vmatpush1.msra.mxu0 %v3439
    %3460 = vmatprep.subr.mxu0 0.0
    %3461 = vmatpush1.msra.mxu0 %v3440
    %3462 = vmatprep.subr.mxu0 0.0
    %3463 = vmatpush1.msra.mxu0 0.0
    %3464 = vmatprep.subr.mxu0 0.0
    %3465 = vmatpush1.msra.mxu0 0.0
    %3466 = vmatprep.subr.mxu0 0.0
    %3467 = vmatpush1.msra.mxu0 0.0
    %3468 = vmatprep.subr.mxu0 0.0
    %3469 = vmatpush1.msra.mxu0 0.0
    %3470 = vmatprep.subr.mxu0 0.0
    %3471 = vmatpush1.msra.mxu0 0.0
    %3472 = vmatprep.subr.mxu0 0.0
    %3473 = vmatpush1.msra.mxu0 0.0
    %3474 = vmatprep.subr.mxu0 0.0
    %3475 = vmatpush1.msra.mxu0 0.0
    %3476 = vmatprep.subr.mxu0 0.0
    %3477 = vmatpush1.msra.mxu0 0.0
    %3478 = vmatprep.subr.mxu0 0.0
    %3479 = vmatpush1.msra.mxu0 0.0
    %3480 = vmatprep.subr.mxu0 0.0
    %3481 = vmatpush1.msra.mxu0 0.0
    %3482 = vmatprep.subr.mxu0 0.0
    %3483 = vmatpush1.msra.mxu0 0.0
    %3484 = vmatprep.subr.mxu0 0.0
    %3485 = vmatpush1.msra.mxu0 0.0
    %3486 = vmatprep.subr.mxu0 0.0
    %3487 = vmatpush1.msra.mxu0 0.0
    %3488 = vmatprep.subr.mxu0 0.0
    %3489 = vmatpush1.msra.mxu0 0.0
    %3490 = vmatprep.subr.mxu0 0.0
    %3491 = vmatpush1.msra.mxu0 0.0
    %3492 = vmatprep.subr.mxu0 0.0
    %3493 = vmatpush1.msra.mxu0 0.0
    %3494 = vmatprep.subr.mxu0 0.0
    %3495 = vmatpush1.msra.mxu0 0.0
    %3496 = vmatprep.subr.mxu0 0.0
    %3497 = vmatpush1.msra.mxu0 0.0
    %3498 = vmatprep.subr.mxu0 0.0
    %3499 = vmatpush1.msra.mxu0 0.0
    %3500 = vmatprep.subr.mxu0 0.0
    %3501 = vmatpush1.msra.mxu0 0.0
    %3502 = vmatprep.subr.mxu0 0.0
    %3503 = vmatpush1.msra.mxu0 0.0
    %3504 = vmatprep.subr.mxu0 0.0
    %3505 = vmatpush1.msra.mxu0 0.0
    %3506 = vmatprep.subr.mxu0 0.0
    %3507 = vmatpush1.msra.mxu0 0.0
    %3508 = vmatprep.subr.mxu0 0.0
    %3509 = vmatpush1.msra.mxu0 0.0
    %3510 = vmatprep.mubr.f32.mxu0 0.0
    %3511 = vmatmul.mubr.f32.gmra.mrb[0].mxu0 %v3444
    %v3512 = vpop.f32.mrb[0].mxu0
    %v3513 = vadd.f32 0.0, %v3512
    %v3514 = vpop.f32.mrb[0].mxu0
    %3515 = vdwg.mxu0
    %v3516 = vadd.f32 %v3431, %v3513
    %s3517 = scalar_lea.vmem %s10, 960
    %v3518 = vld [vmem:[%s3517] sm:$0xff]
    %v3519 = vld [vmem:[%s3517 + $0x8] sm:$0xff]
    %v3520 = vld [vmem:[%s3517 + $0x10] sm:$0xff]
    %v3521 = vld [vmem:[%s3517 + $0x18] sm:$0xff]
    %v3522 = vld [vmem:[%s3517 + $0x20] sm:$0xff]
    %v3523 = vld [vmem:[%s3517 + $0x28] sm:$0xff]
    %v3524 = vld [vmem:[%s3517 + $0x30] sm:$0xff]
    %v3525 = vld [vmem:[%s3517 + $0x38] sm:$0xff]
    %v3526 = vrot.slane %v1981, 3
    %v3527 = vrot.slane %v1985, 2
    %v3528 = vsel %vm2253, %v3527, %v3526
    %v3529 = vsel %vm775, %v3528, 0
    %3531 = vmatprep.subr.mxu0 0.0
    %3532 = vmatpush1.msra.mxu0 %v3518
    %3533 = vmatprep.subr.mxu0 0.0
    %3534 = vmatpush1.msra.mxu0 %v3519
    %3535 = vmatprep.subr.mxu0 0.0
    %3536 = vmatpush1.msra.mxu0 %v3520
    %3537 = vmatprep.subr.mxu0 0.0
    %3538 = vmatpush1.msra.mxu0 %v3521
    %3539 = vmatprep.subr.mxu0 0.0
    %3540 = vmatpush1.msra.mxu0 %v3522
    %3541 = vmatprep.subr.mxu0 0.0
    %3542 = vmatpush1.msra.mxu0 %v3523
    %3543 = vmatprep.subr.mxu0 0.0
    %3544 = vmatpush1.msra.mxu0 %v3524
    %3545 = vmatprep.subr.mxu0 0.0
    %3546 = vmatpush1.msra.mxu0 %v3525
    %3547 = vmatprep.subr.mxu0 0.0
    %3548 = vmatpush1.msra.mxu0 0.0
    %3549 = vmatprep.subr.mxu0 0.0
    %3550 = vmatpush1.msra.mxu0 0.0
    %3551 = vmatprep.subr.mxu0 0.0
    %3552 = vmatpush1.msra.mxu0 0.0
    %3553 = vmatprep.subr.mxu0 0.0
    %3554 = vmatpush1.msra.mxu0 0.0
    %3555 = vmatprep.subr.mxu0 0.0
    %3556 = vmatpush1.msra.mxu0 0.0
    %3557 = vmatprep.subr.mxu0 0.0
    %3558 = vmatpush1.msra.mxu0 0.0
    %3559 = vmatprep.subr.mxu0 0.0
    %3560 = vmatpush1.msra.mxu0 0.0
    %3561 = vmatprep.subr.mxu0 0.0
    %3562 = vmatpush1.msra.mxu0 0.0
    %3563 = vmatprep.subr.mxu0 0.0
    %3564 = vmatpush1.msra.mxu0 0.0
    %3565 = vmatprep.subr.mxu0 0.0
    %3566 = vmatpush1.msra.mxu0 0.0
    %3567 = vmatprep.subr.mxu0 0.0
    %3568 = vmatpush1.msra.mxu0 0.0
    %3569 = vmatprep.subr.mxu0 0.0
    %3570 = vmatpush1.msra.mxu0 0.0
    %3571 = vmatprep.subr.mxu0 0.0
    %3572 = vmatpush1.msra.mxu0 0.0
    %3573 = vmatprep.subr.mxu0 0.0
    %3574 = vmatpush1.msra.mxu0 0.0
    %3575 = vmatprep.subr.mxu0 0.0
    %3576 = vmatpush1.msra.mxu0 0.0
    %3577 = vmatprep.subr.mxu0 0.0
    %3578 = vmatpush1.msra.mxu0 0.0
    %3579 = vmatprep.subr.mxu0 0.0
    %3580 = vmatpush1.msra.mxu0 0.0
    %3581 = vmatprep.subr.mxu0 0.0
    %3582 = vmatpush1.msra.mxu0 0.0
    %3583 = vmatprep.subr.mxu0 0.0
    %3584 = vmatpush1.msra.mxu0 0.0
    %3585 = vmatprep.subr.mxu0 0.0
    %3586 = vmatpush1.msra.mxu0 0.0
    %3587 = vmatprep.subr.mxu0 0.0
    %3588 = vmatpush1.msra.mxu0 0.0
    %3589 = vmatprep.subr.mxu0 0.0
    %3590 = vmatpush1.msra.mxu0 0.0
    %3591 = vmatprep.subr.mxu0 0.0
    %3592 = vmatpush1.msra.mxu0 0.0
    %3593 = vmatprep.subr.mxu0 0.0
    %3594 = vmatpush1.msra.mxu0 0.0
    %3595 = vmatprep.mubr.f32.mxu0 0.0
    %3596 = vmatmul.mubr.f32.gmra.mrb[0].mxu0 %v3529
    %v3597 = vpop.f32.mrb[0].mxu0
    %v3598 = vadd.f32 0.0, %v3597
    %v3599 = vpop.f32.mrb[0].mxu0
    %3600 = vdwg.mxu0
    %v3601 = vadd.f32 %v3516, %v3598
    %vm3602 = vcmask 9216
    %3603 = vst.msk [vmem:[#allocation3] sm:$0x3] %vm3602, %v3601
    %v3604 = vld [vmem:[%s13] sm:$0x1]
    %v3605 = vmul.f32 %v3604, 2.0
    %v3606 = vmul.f32 %v3605, 1.442695
    %v3607 = vpow.pop %v3606
    %v3609 = vlaneseq
    %v3610 = vshrl.u32 %v3609, 7
    %v3611 = vsub.s32 0, %v3610
    %v3612 = vrot.slane %v3607, %v3611
    %3614 = vst.msk [vmem:[#allocation5] sm:$0x3] %vm3602, %v3612
    // Predicated region
    $region58: #{policy_forward.5} parent=1 // pred_check
      _
    $region59: #{policy_forward.5} parent=1 // pred_check_branch
      %3616 = sbr.rel (0) target = $region61
    $region60: #{policy_forward.5} parent=1 // pred_region
      %s3618 = ssub.s32 32, 32
      %3619 = vsyncadd [#allocation4], %s3618
      %s3621 = sshll.u32 [#allocation3], 4
      %s3622 = int_to_ptr.vmem [resolvable:$true] %s3621
      %3624 = dma.vmem_to_hbm [thread:$0]  %s3622, 32, %s14, [#allocation4]
    $region61: #{policy_forward.5} parent=1 // pred_fallthru
      _
    // Predicated region
    $region62: #{policy_forward.5} parent=1 // pred_check
      _
    $region63: #{policy_forward.5} parent=1 // pred_check_branch
      %3626 = sbr.rel (0) target = $region65
    $region64: #{policy_forward.5} parent=1 // pred_region
      %s3628 = ssub.s32 32, 32
      %3629 = vsyncadd [#allocation6], %s3628
      %s3631 = sshll.u32 [#allocation5], 4
      %s3632 = int_to_ptr.vmem [resolvable:$true] %s3631
      %3634 = dma.vmem_to_hbm [thread:$0]  %s3632, 32, %s15, [#allocation6]
    $region65: #{policy_forward.5} parent=1 // pred_fallthru
      _
    // Predicated region
    $region66: #{policy_forward.5} parent=1 // pred_check
      _
    $region67: #{policy_forward.5} parent=1 // pred_check_branch
      %3636 = sbr.rel (0) target = $region69
    $region68: #{policy_forward.5} parent=1 // pred_region
      %3637 = dma.done [#allocation4], 32
    $region69: #{policy_forward.5} parent=1 // pred_fallthru
      _
    // Predicated region
    $region70: #{policy_forward.5} parent=1 // pred_check
      _
    $region71: #{policy_forward.5} parent=1 // pred_check_branch
      %3639 = sbr.rel (0) target = $region73
    $region72: #{policy_forward.5} parent=1 // pred_region
      %3640 = dma.done [#allocation6], 32
    $region73: #{policy_forward.5} parent=1 // pred_fallthru
      _
    %3641 = vsyncpa [#allocation4], 1
    %3642 = vsyncpa [#allocation6], 1

</llo_original>
